<compile_context>
chip_gen: v7x
topology: tpu7x:2x2x1
jax: 0.10.0
libtpu: 0.0.40
codegen_flags: <defaults>
</compile_context>

<pallas_src>
import numpy as np

import jax
import jax.numpy as jnp
from jax.experimental import pallas as pl
from jax.experimental.pallas import tpu as pltpu


# ----------------------------------------------------------------------------
# Pallas kernels
# ----------------------------------------------------------------------------
def _conv_stack_kernel(x_ref, s_ref, bw1_ref, bs1_ref, bw2_ref, bs2_ref,
                       bw3_ref, bs3_ref, o_ref):
    """Fused 3x [reflect-pad-1 3x3 conv + ReLU + BatchNorm(eval)].

    Activation layout: (N*H, W*C) with W*C in the lane dimension.
    For each conv layer:   out = sum_kh  S[kh] @ (a @ BW[kh])
      * BW[kh]: banded (W*Cin, W*Cout) matrix absorbing the 3 w-taps + w reflection.
      * S[kh] : constant (N*H, N*H) 0/1 matrix doing the per-image row shift with
                h reflection (identity for kh == 1, skipped).
    BN scale is folded into BW/bias (checked > 0 at prepare time); only the BN shift
    remains after the ReLU.
    """
    def conv(a, bw_ref, bs_ref):
        acc = None
        for kh in range(3):
            t = jnp.dot(a, bw_ref[kh], preferred_element_type=jnp.float32)
            if kh != 1:                      # kh == 1 -> identity row map
                t = jnp.dot(s_ref[kh], t, preferred_element_type=jnp.float32)
            acc = t if acc is None else acc + t
        return jnp.maximum(acc + bs_ref[0:1, :], 0.0) + bs_ref[1:2, :]

    a = conv(x_ref[...], bw1_ref, bs1_ref)    # (N*H, W*4)
    a = conv(a, bw2_ref, bs2_ref)             # (N*H, W*8) = (64, 128), lane-dense
    a = conv(a, bw3_ref, bs3_ref)             # (64, 128)
    o_ref[...] = a.astype(o_ref.dtype)        # emit bf16 directly for the FC stack


def _fc_stack_kernel(x_ref, w1_ref, b1_ref, w2_ref, b2_ref, w3_ref, b3_ref, o_ref):
    """Fused Linear(2048->512p) + ReLU + Linear(512->512) + ReLU + Linear(512->128p)."""
    h = jnp.dot(x_ref[...], w1_ref[...], preferred_element_type=jnp.float32)
    h = jnp.maximum(h + b1_ref[...], 0.0).astype(jnp.bfloat16)
    h = jnp.dot(h, w2_ref[...], preferred_element_type=jnp.float32)
    h = jnp.maximum(h + b2_ref[...], 0.0).astype(jnp.bfloat16)
    out = jnp.dot(h, w3_ref[...], preferred_element_type=jnp.float32) + b3_ref[...]
    o_ref[...] = out.astype(o_ref.dtype)


# ----------------------------------------------------------------------------
# Pallas wrappers (single grid step each; everything is VMEM resident)
# ----------------------------------------------------------------------------
def _full_spec(arr):
    nd = arr.ndim
    return pl.BlockSpec(arr.shape, lambda i, _nd=nd: (0,) * _nd)


def conv_stack(x2d, srow, bw1, bs1, bw2, bs2, bw3, bs3):
    NH = x2d.shape[0]
    out_w = bw3.shape[2]
    args = (x2d, srow, bw1, bs1, bw2, bs2, bw3, bs3)
    return pl.pallas_call(
        _conv_stack_kernel,
        out_shape=jax.ShapeDtypeStruct((NH, out_w), jnp.bfloat16),
        grid_spec=pltpu.PrefetchScalarGridSpec(
            num_scalar_prefetch=0,
            grid=(1,),
            in_specs=[_full_spec(a) for a in args],
            out_specs=pl.BlockSpec((NH, out_w), lambda i: (0, 0)),
        ),
        compiler_params=pltpu.CompilerParams(dimension_semantics=("arbitrary",)),
    )(*args)


def fc_stack(flat_bf16, w1, b1, w2, b2, w3, b3):
    M = flat_bf16.shape[0]
    N3 = w3.shape[1]
    args = (flat_bf16, w1, b1.reshape(1, -1), w2, b2.reshape(1, -1),
            w3, b3.reshape(1, -1))
    return pl.pallas_call(
        _fc_stack_kernel,
        out_shape=jax.ShapeDtypeStruct((M, N3), jnp.float32),
        grid_spec=pltpu.PrefetchScalarGridSpec(
            num_scalar_prefetch=0,
            grid=(1,),
            in_specs=[_full_spec(a) for a in args],
            out_specs=pl.BlockSpec((M, N3), lambda i: (0, 0)),
        ),
        compiler_params=pltpu.CompilerParams(dimension_semantics=("arbitrary",)),
    )(*args)


# ----------------------------------------------------------------------------
# Constant structure matrices (trace/prepare time, plain numpy)
# ----------------------------------------------------------------------------
def _reflect(t, n):
    if t < 0:
        return -t
    if t >= n:
        return 2 * n - 2 - t
    return t


def _w_band_matrix(W, kw):
    """M[w_in, w_out] = 1 iff reflect(w_out + kw - 1) == w_in."""
    m = np.zeros((W, W), np.float32)
    for w_out in range(W):
        m[_reflect(w_out + kw - 1, W), w_out] += 1.0
    return m


def _row_shift_matrices(n_img, H):
    """S[kh][r_out, r_in] = 1 iff r_in == n*H + reflect(h + kh - 1), r_out = n*H + h."""
    NH = n_img * H
    s = np.zeros((3, NH, NH), np.float32)
    for kh in range(3):
        for n in range(n_img):
            for h in range(H):
                s[kh, n * H + h, n * H + _reflect(h + kh - 1, H)] = 1.0
    return jnp.asarray(s)


# ----------------------------------------------------------------------------
# Parameter construction (deterministic, synthetic) and preparation
# ----------------------------------------------------------------------------
def init_params(key, spatial):
    ks = jax.random.split(key, 16)
    p = {}

    def conv(kw, kb, cout, cin):
        return (0.1 * jax.random.normal(kw, (cout, cin, 3, 3), jnp.float32),
                0.1 * jax.random.normal(kb, (cout,), jnp.float32))

    def bn(kg, kb, c):
        # gamma kept strictly positive so the BN scale can be folded through ReLU.
        gamma = 1.0 + 0.1 * jnp.abs(jax.random.normal(kg, (c,), jnp.float32))
        beta = 0.1 * jax.random.normal(kb, (c,), jnp.float32)
        rmean = 0.05 * jnp.arange(c, dtype=jnp.float32)
        rvar = 1.0 + 0.01 * jnp.arange(c, dtype=jnp.float32)
        eps = 1e-5
        scale = gamma / jnp.sqrt(rvar + eps)
        shift = beta - rmean * scale
        return scale, shift

    p["w1"], p["b1"] = conv(ks[0], ks[1], 4, 1)
    p["bn1_scale"], p["bn1_shift"] = bn(ks[2], ks[3], 4)
    p["w2"], p["b2"] = conv(ks[4], ks[5], 8, 4)
    p["bn2_scale"], p["bn2_shift"] = bn(ks[6], ks[7], 8)
    p["w3"], p["b3"] = conv(ks[8], ks[9], 8, 8)
    p["bn3_scale"], p["bn3_shift"] = bn(ks[10], ks[11], 8)

    fc_in = 8 * spatial * spatial
    p["fcw1"] = 0.02 * jax.random.normal(ks[12], (fc_in, 500), jnp.float32)
    p["fcb1"] = jnp.zeros((500,), jnp.float32)
    p["fcw2"] = 0.05 * jax.random.normal(ks[13], (500, 500), jnp.float32)
    p["fcb2"] = jnp.zeros((500,), jnp.float32)
    p["fcw3"] = 0.05 * jax.random.normal(ks[14], (500, 5), jnp.float32)
    p["fcb3"] = jnp.zeros((5,), jnp.float32)
    return p


def prepare_params(p, spatial):
    """One-time prep: fold BN scale into banded conv weights (reflection-in-w absorbed),
    tile bias/shift to lane layout, permute fcw1 rows to NHWC-flatten order, pad FC dims
    to 512/128 lanes and cast FC weights to bf16."""
    H = W = spatial
    q = {}

    def banded_conv(w, b, scale, shift):
        # Folding the BN scale through the ReLU is only valid for scale > 0
        # (scale * relu(z) == relu(scale * z)); gate it explicitly.
        assert bool(jnp.all(scale > 0.0)), "BN scale must be > 0 to fold through ReLU"
        cout, cin = w.shape[0], w.shape[1]
        wf = w * scale[:, None, None, None]                     # (cout, cin, 3, 3)
        bws = []
        for kh in range(3):
            acc = jnp.zeros((W * cin, W * cout), jnp.float32)
            for kw in range(3):
                m = jnp.asarray(_w_band_matrix(W, kw))          # (W, W)
                acc = acc + jnp.kron(m, wf[:, :, kh, kw].T)     # (W*cin, W*cout)
            bws.append(acc)
        bw = jnp.stack(bws, axis=0)                             # (3, W*cin, W*cout)
        bs = jnp.stack([jnp.tile(b * scale, W), jnp.tile(shift, W)], axis=0)  # (2, W*cout)
        return bw.astype(jnp.float32), bs.astype(jnp.float32)

    q["bw1"], q["bs1"] = banded_conv(p["w1"], p["b1"], p["bn1_scale"], p["bn1_shift"])
    q["bw2"], q["bs2"] = banded_conv(p["w2"], p["b2"], p["bn2_scale"], p["bn2_shift"])
    q["bw3"], q["bs3"] = banded_conv(p["w3"], p["b3"], p["bn3_scale"], p["bn3_shift"])

    C3, n_out, n_pad, n3_pad = 8, 500, 512, 128
    # fcw1 rows: (c,h,w) order (torch NCHW flatten) -> (h,w,c) order (our NHWC flatten)
    w1 = p["fcw1"].reshape(C3, H, W, n_out).transpose(1, 2, 0, 3).reshape(C3 * H * W, n_out)
    q["fcw1"] = jnp.pad(w1, ((0, 0), (0, n_pad - n_out))).astype(jnp.bfloat16)
    q["fcb1"] = jnp.pad(p["fcb1"], (0, n_pad - n_out)).astype(jnp.float32)

    q["fcw2"] = jnp.pad(p["fcw2"], ((0, n_pad - n_out), (0, n_pad - n_out))).astype(jnp.bfloat16)
    q["fcb2"] = jnp.pad(p["fcb2"], (0, n_pad - n_out)).astype(jnp.float32)

    q["fcw3"] = jnp.pad(p["fcw3"], ((0, n_pad - n_out), (0, n3_pad - 5))).astype(jnp.bfloat16)
    q["fcb3"] = jnp.pad(p["fcb3"], (0, n3_pad - 5)).astype(jnp.float32)
    return q


# ----------------------------------------------------------------------------
# Forward pass (both branches in one batched pass, 2 pallas_calls total)
# ----------------------------------------------------------------------------
def forward_once_batch(q, x_nchw):
    Nb, _, H, W = x_nchw.shape
    x2d = x_nchw[:, 0, :, :].reshape(Nb * H, W)       # (N*H, W), Cin = 1
    srow = _row_shift_matrices(Nb, H)                 # constant, built at trace time
    a3 = conv_stack(x2d, srow, q["bw1"], q["bs1"], q["bw2"], q["bs2"],
                    q["bw3"], q["bs3"])               # (N*H, W*8) bf16, lane-dense
    flat = a3.reshape(Nb, H * W * 8)                  # NHWC flatten; fcw1 rows match
    out = fc_stack(flat, q["fcw1"], q["fcb1"], q["fcw2"], q["fcb2"],
                   q["fcw3"], q["fcb3"])              # (Nb, 128) f32
    return out[:, :5]


@jax.jit
def siamese_forward(q, x1, x2):
    B = x1.shape[0]
    x = jnp.concatenate([x1, x2], axis=0)             # shared weights -> single pass
    out = forward_once_batch(q, x)
    return out[:B], out[B:]


# ----------------------------------------------------------------------------
# Pure-JAX reference (unfolded BN, f32 convs; same bf16 policy for FC matmuls)
# ----------------------------------------------------------------------------
def _ref_conv(x, w, b, scale, shift):
    xp = jnp.pad(x, ((0, 0), (0, 0), (1, 1), (1, 1)), mode="reflect")
    y = jax.lax.conv_general_dilated(xp, w, (1, 1), "VALID",
                                     dimension_numbers=("NCHW", "OIHW", "NCHW"))
    y = jnp.maximum(y + b[None, :, None, None], 0.0)
    return y * scale[None, :, None, None] + shift[None, :, None, None]


def _bf16_dot(a, w):
    return jnp.dot(a.astype(jnp.bfloat16), w.astype(jnp.bfloat16),
                   preferred_element_type=jnp.float32)


def _ref_forward_once(p, x):
    Nb = x.shape[0]
    out = _ref_conv(x, p["w1"], p["b1"], p["bn1_scale"], p["bn1_shift"])
    out = _ref_conv(out, p["w2"], p["b2"], p["bn2_scale"], p["bn2_shift"])
    out = _ref_conv(out, p["w3"], p["b3"], p["bn3_scale"], p["bn3_shift"])
    h = out.reshape(Nb, -1)                           # NCHW flatten
    h = jnp.maximum(_bf16_dot(h, p["fcw1"]) + p["fcb1"], 0.0)
    h = jnp.maximum(_bf16_dot(h, p["fcw2"]) + p["fcb2"], 0.0)
    return _bf16_dot(h, p["fcw3"]) + p["fcb3"]


if __name__ == "__main__":
    batch, spatial = 2, 16
    key = jax.random.PRNGKey(0)
    k_x1, k_x2, k_params = jax.random.split(key, 3)

    x1 = jax.random.normal(k_x1, (batch, 1, spatial, spatial), jnp.float32)
    x2 = jax.random.normal(k_x2, (batch, 1, spatial, spatial), jnp.float32)
    params = init_params(k_params, spatial)
    prepped = prepare_params(params, spatial)

    out1, out2 = siamese_forward(prepped, x1, x2)
    jax.block_until_ready((out1, out2))

    ref1 = _ref_forward_once(params, x1)
    ref2 = _ref_forward_once(params, x2)
    assert out1.shape == (batch, 5) and out2.shape == (batch, 5)
    assert jnp.allclose(out1, ref1, atol=2e-3, rtol=2e-3)
    assert jnp.allclose(out2, ref2, atol=2e-3, rtol=2e-3)

    print("KERNEL_OK")
</pallas_src>

<mosaic_0001>
module attributes {stable_mosaic.version = 11 : i64} {
  func.func @_fc_stack_kernel(%arg0: i32, %arg1: memref<4x2048xbf16, #tpu.memory_space<vmem>>, %arg2: memref<2048x512xbf16, #tpu.memory_space<vmem>>, %arg3: memref<1x512xf32, #tpu.memory_space<vmem>>, %arg4: memref<512x512xbf16, #tpu.memory_space<vmem>>, %arg5: memref<1x512xf32, #tpu.memory_space<vmem>>, %arg6: memref<512x128xbf16, #tpu.memory_space<vmem>>, %arg7: memref<1x128xf32, #tpu.memory_space<vmem>>, %arg8: memref<4x128xf32, #tpu.memory_space<vmem>>) attributes {dimension_semantics = [#tpu.dimension_semantics<arbitrary>], iteration_bounds = array<i64: 1>, scalar_prefetch = 0 : i64, scratch_operands = 0 : i64, tpu.core_type = #tpu.core_type<tc>, window_params = [{pipeline_mode = #tpu.pipeline_mode<synchronous>, transform_indices = @transform_0, window_bounds = array<i64: 4, 2048>}, {pipeline_mode = #tpu.pipeline_mode<synchronous>, transform_indices = @transform_1, window_bounds = array<i64: 2048, 512>}, {pipeline_mode = #tpu.pipeline_mode<synchronous>, transform_indices = @transform_2, window_bounds = array<i64: 1, 512>}, {pipeline_mode = #tpu.pipeline_mode<synchronous>, transform_indices = @transform_3, window_bounds = array<i64: 512, 512>}, {pipeline_mode = #tpu.pipeline_mode<synchronous>, transform_indices = @transform_4, window_bounds = array<i64: 1, 512>}, {pipeline_mode = #tpu.pipeline_mode<synchronous>, transform_indices = @transform_5, window_bounds = array<i64: 512, 128>}, {pipeline_mode = #tpu.pipeline_mode<synchronous>, transform_indices = @transform_6, window_bounds = array<i64: 1, 128>}, {pipeline_mode = #tpu.pipeline_mode<synchronous>, transform_indices = @transform_7, window_bounds = array<i64: 4, 128>}]} {
    %c0 = arith.constant 0 : index
    %c0_0 = arith.constant 0 : index
    %0 = vector.load %arg1[%c0, %c0_0] : memref<4x2048xbf16, #tpu.memory_space<vmem>>, vector<4x2048xbf16>
    %c0_1 = arith.constant 0 : index
    %c0_2 = arith.constant 0 : index
    %1 = vector.load %arg2[%c0_1, %c0_2] : memref<2048x512xbf16, #tpu.memory_space<vmem>>, vector<2048x512xbf16>
    %cst = arith.constant dense<0.000000e+00> : vector<4x512xf32>
    %2 = tpu.matmul %0, %1, %cst {dimension_numbers = #tpu.dot_dimension_numbers<[1], [0], [0], [1], [0, 0, 1, 1], [], []>} : vector<4x2048xbf16>, vector<2048x512xbf16>, vector<4x512xf32> -> vector<4x512xf32>
    %c0_3 = arith.constant 0 : index
    %c0_4 = arith.constant 0 : index
    %3 = vector.load %arg3[%c0_3, %c0_4] : memref<1x512xf32, #tpu.memory_space<vmem>>, vector<1x512xf32>
    %4 = vector.broadcast %3 : vector<1x512xf32> to vector<4x512xf32>
    %5 = arith.addf %2, %4 : vector<4x512xf32>
    %cst_5 = arith.constant 0.000000e+00 : f32
    %6 = vector.broadcast %cst_5 : f32 to vector<4x512xf32>
    %7 = arith.maximumf %5, %6 : vector<4x512xf32>
    %8 = arith.truncf %7 : vector<4x512xf32> to vector<4x512xbf16>
    %c0_6 = arith.constant 0 : index
    %c0_7 = arith.constant 0 : index
    %9 = vector.load %arg4[%c0_6, %c0_7] : memref<512x512xbf16, #tpu.memory_space<vmem>>, vector<512x512xbf16>
    %cst_8 = arith.constant dense<0.000000e+00> : vector<4x512xf32>
    %10 = tpu.matmul %8, %9, %cst_8 {dimension_numbers = #tpu.dot_dimension_numbers<[1], [0], [0], [1], [0, 0, 1, 1], [], []>} : vector<4x512xbf16>, vector<512x512xbf16>, vector<4x512xf32> -> vector<4x512xf32>
    %c0_9 = arith.constant 0 : index
    %c0_10 = arith.constant 0 : index
    %11 = vector.load %arg5[%c0_9, %c0_10] : memref<1x512xf32, #tpu.memory_space<vmem>>, vector<1x512xf32>
    %12 = vector.broadcast %11 : vector<1x512xf32> to vector<4x512xf32>
    %13 = arith.addf %10, %12 : vector<4x512xf32>
    %cst_11 = arith.constant 0.000000e+00 : f32
    %14 = vector.broadcast %cst_11 : f32 to vector<4x512xf32>
    %15 = arith.maximumf %13, %14 : vector<4x512xf32>
    %16 = arith.truncf %15 : vector<4x512xf32> to vector<4x512xbf16>
    %c0_12 = arith.constant 0 : index
    %c0_13 = arith.constant 0 : index
    %17 = vector.load %arg6[%c0_12, %c0_13] : memref<512x128xbf16, #tpu.memory_space<vmem>>, vector<512x128xbf16>
    %cst_14 = arith.constant dense<0.000000e+00> : vector<4x128xf32>
    %18 = tpu.matmul %16, %17, %cst_14 {dimension_numbers = #tpu.dot_dimension_numbers<[1], [0], [0], [1], [0, 0, 1, 1], [], []>} : vector<4x512xbf16>, vector<512x128xbf16>, vector<4x128xf32> -> vector<4x128xf32>
    %c0_15 = arith.constant 0 : index
    %c0_16 = arith.constant 0 : index
    %19 = vector.load %arg7[%c0_15, %c0_16] : memref<1x128xf32, #tpu.memory_space<vmem>>, vector<1x128xf32>
    %20 = vector.broadcast %19 : vector<1x128xf32> to vector<4x128xf32>
    %21 = arith.addf %18, %20 : vector<4x128xf32>
    %c0_17 = arith.constant 0 : index
    %c0_18 = arith.constant 0 : index
    %22 = vector.load %arg8[%c0_17, %c0_18] : memref<4x128xf32, #tpu.memory_space<vmem>>, vector<4x128xf32>
    tpu.vector_store %arg8[%c0_17, %c0_18], %21 {strides = array<i32>} : memref<4x128xf32, #tpu.memory_space<vmem>>, vector<4x128xf32>,
    return
  }
  func.func @transform_0(%arg0: i32) -> (i32, i32) {
    %c0_i32 = arith.constant 0 : i32
    %c0_i32_0 = arith.constant 0 : i32
    %c0_i32_1 = arith.constant 0 : i32
    return %c0_i32, %c0_i32_0 : i32, i32
  }
  func.func @transform_1(%arg0: i32) -> (i32, i32) {
    %c0_i32 = arith.constant 0 : i32
    %c0_i32_0 = arith.constant 0 : i32
    %c0_i32_1 = arith.constant 0 : i32
    return %c0_i32, %c0_i32_0 : i32, i32
  }
  func.func @transform_2(%arg0: i32) -> (i32, i32) {
    %c0_i32 = arith.constant 0 : i32
    %c0_i32_0 = arith.constant 0 : i32
    %c0_i32_1 = arith.constant 0 : i32
    return %c0_i32, %c0_i32_0 : i32, i32
  }
  func.func @transform_3(%arg0: i32) -> (i32, i32) {
    %c0_i32 = arith.constant 0 : i32
    %c0_i32_0 = arith.constant 0 : i32
    %c0_i32_1 = arith.constant 0 : i32
    return %c0_i32, %c0_i32_0 : i32, i32
  }
  func.func @transform_4(%arg0: i32) -> (i32, i32) {
    %c0_i32 = arith.constant 0 : i32
    %c0_i32_0 = arith.constant 0 : i32
    %c0_i32_1 = arith.constant 0 : i32
    return %c0_i32, %c0_i32_0 : i32, i32
  }
  func.func @transform_5(%arg0: i32) -> (i32, i32) {
    %c0_i32 = arith.constant 0 : i32
    %c0_i32_0 = arith.constant 0 : i32
    %c0_i32_1 = arith.constant 0 : i32
    return %c0_i32, %c0_i32_0 : i32, i32
  }
  func.func @transform_6(%arg0: i32) -> (i32, i32) {
    %c0_i32 = arith.constant 0 : i32
    %c0_i32_0 = arith.constant 0 : i32
    %c0_i32_1 = arith.constant 0 : i32
    return %c0_i32, %c0_i32_0 : i32, i32
  }
  func.func @transform_7(%arg0: i32) -> (i32, i32) {
    %c0_i32 = arith.constant 0 : i32
    %c0_i32_0 = arith.constant 0 : i32
    %c0_i32_1 = arith.constant 0 : i32
    return %c0_i32, %c0_i32_0 : i32, i32
  }
}

module attributes {stable_mosaic.version = 11 : i64} {
  func.func @_conv_stack_kernel(%arg0: i32, %arg1: memref<64x16xf32, #tpu.memory_space<vmem>>, %arg2: memref<3x64x64xf32, #tpu.memory_space<vmem>>, %arg3: memref<3x16x64xf32, #tpu.memory_space<vmem>>, %arg4: memref<2x64xf32, #tpu.memory_space<vmem>>, %arg5: memref<3x64x128xf32, #tpu.memory_space<vmem>>, %arg6: memref<2x128xf32, #tpu.memory_space<vmem>>, %arg7: memref<3x128x128xf32, #tpu.memory_space<vmem>>, %arg8: memref<2x128xf32, #tpu.memory_space<vmem>>, %arg9: memref<64x128xbf16, #tpu.memory_space<vmem>>) attributes {dimension_semantics = [#tpu.dimension_semantics<arbitrary>], iteration_bounds = array<i64: 1>, scalar_prefetch = 0 : i64, scratch_operands = 0 : i64, tpu.core_type = #tpu.core_type<tc>, window_params = [{pipeline_mode = #tpu.pipeline_mode<synchronous>, transform_indices = @transform_0, window_bounds = array<i64: 64, 16>}, {pipeline_mode = #tpu.pipeline_mode<synchronous>, transform_indices = @transform_1, window_bounds = array<i64: 3, 64, 64>}, {pipeline_mode = #tpu.pipeline_mode<synchronous>, transform_indices = @transform_2, window_bounds = array<i64: 3, 16, 64>}, {pipeline_mode = #tpu.pipeline_mode<synchronous>, transform_indices = @transform_3, window_bounds = array<i64: 2, 64>}, {pipeline_mode = #tpu.pipeline_mode<synchronous>, transform_indices = @transform_4, window_bounds = array<i64: 3, 64, 128>}, {pipeline_mode = #tpu.pipeline_mode<synchronous>, transform_indices = @transform_5, window_bounds = array<i64: 2, 128>}, {pipeline_mode = #tpu.pipeline_mode<synchronous>, transform_indices = @transform_6, window_bounds = array<i64: 3, 128, 128>}, {pipeline_mode = #tpu.pipeline_mode<synchronous>, transform_indices = @transform_7, window_bounds = array<i64: 2, 128>}, {pipeline_mode = #tpu.pipeline_mode<synchronous>, transform_indices = @transform_8, window_bounds = array<i64: 64, 128>}]} {
    %c0 = arith.constant 0 : index
    %c0_0 = arith.constant 0 : index
    %0 = vector.load %arg1[%c0, %c0_0] : memref<64x16xf32, #tpu.memory_space<vmem>>, vector<64x16xf32>
    %c0_1 = arith.constant 0 : index
    %c0_2 = arith.constant 0 : index
    %c0_3 = arith.constant 0 : index
    %1 = vector.load %arg3[%c0_1, %c0_2, %c0_3] : memref<3x16x64xf32, #tpu.memory_space<vmem>>, vector<1x16x64xf32>
    %2 = vector.shape_cast %1 : vector<1x16x64xf32> to vector<16x64xf32>
    %cst = arith.constant dense<0.000000e+00> : vector<64x64xf32>
    %3 = tpu.matmul %0, %2, %cst {dimension_numbers = #tpu.dot_dimension_numbers<[1], [0], [0], [1], [0, 0, 1, 1], [], []>} : vector<64x16xf32>, vector<16x64xf32>, vector<64x64xf32> -> vector<64x64xf32>
    %c0_4 = arith.constant 0 : index
    %c0_5 = arith.constant 0 : index
    %c0_6 = arith.constant 0 : index
    %4 = vector.load %arg2[%c0_4, %c0_5, %c0_6] : memref<3x64x64xf32, #tpu.memory_space<vmem>>, vector<1x64x64xf32>
    %5 = vector.shape_cast %4 : vector<1x64x64xf32> to vector<64x64xf32>
    %cst_7 = arith.constant dense<0.000000e+00> : vector<64x64xf32>
    %6 = tpu.matmul %5, %3, %cst_7 {dimension_numbers = #tpu.dot_dimension_numbers<[1], [0], [0], [1], [0, 0, 1, 1], [], []>} : vector<64x64xf32>, vector<64x64xf32>, vector<64x64xf32> -> vector<64x64xf32>
    %c1 = arith.constant 1 : index
    %c0_8 = arith.constant 0 : index
    %c0_9 = arith.constant 0 : index
    %7 = vector.load %arg3[%c1, %c0_8, %c0_9] : memref<3x16x64xf32, #tpu.memory_space<vmem>>, vector<1x16x64xf32>
    %8 = vector.shape_cast %7 : vector<1x16x64xf32> to vector<16x64xf32>
    %cst_10 = arith.constant dense<0.000000e+00> : vector<64x64xf32>
    %9 = tpu.matmul %0, %8, %cst_10 {dimension_numbers = #tpu.dot_dimension_numbers<[1], [0], [0], [1], [0, 0, 1, 1], [], []>} : vector<64x16xf32>, vector<16x64xf32>, vector<64x64xf32> -> vector<64x64xf32>
    %10 = arith.addf %6, %9 : vector<64x64xf32>
    %c2 = arith.constant 2 : index
    %c0_11 = arith.constant 0 : index
    %c0_12 = arith.constant 0 : index
    %11 = vector.load %arg3[%c2, %c0_11, %c0_12] : memref<3x16x64xf32, #tpu.memory_space<vmem>>, vector<1x16x64xf32>
    %12 = vector.shape_cast %11 : vector<1x16x64xf32> to vector<16x64xf32>
    %cst_13 = arith.constant dense<0.000000e+00> : vector<64x64xf32>
    %13 = tpu.matmul %0, %12, %cst_13 {dimension_numbers = #tpu.dot_dimension_numbers<[1], [0], [0], [1], [0, 0, 1, 1], [], []>} : vector<64x16xf32>, vector<16x64xf32>, vector<64x64xf32> -> vector<64x64xf32>
    %c2_14 = arith.constant 2 : index
    %c0_15 = arith.constant 0 : index
    %c0_16 = arith.constant 0 : index
    %14 = vector.load %arg2[%c2_14, %c0_15, %c0_16] : memref<3x64x64xf32, #tpu.memory_space<vmem>>, vector<1x64x64xf32>
    %15 = vector.shape_cast %14 : vector<1x64x64xf32> to vector<64x64xf32>
    %cst_17 = arith.constant dense<0.000000e+00> : vector<64x64xf32>
    %16 = tpu.matmul %15, %13, %cst_17 {dimension_numbers = #tpu.dot_dimension_numbers<[1], [0], [0], [1], [0, 0, 1, 1], [], []>} : vector<64x64xf32>, vector<64x64xf32>, vector<64x64xf32> -> vector<64x64xf32>
    %17 = arith.addf %10, %16 : vector<64x64xf32>
    %c0_18 = arith.constant 0 : index
    %c0_19 = arith.constant 0 : index
    %18 = vector.load %arg4[%c0_18, %c0_19] : memref<2x64xf32, #tpu.memory_space<vmem>>, vector<1x64xf32>
    %19 = vector.broadcast %18 : vector<1x64xf32> to vector<64x64xf32>
    %20 = arith.addf %17, %19 : vector<64x64xf32>
    %cst_20 = arith.constant 0.000000e+00 : f32
    %21 = vector.broadcast %cst_20 : f32 to vector<64x64xf32>
    %22 = arith.maximumf %20, %21 : vector<64x64xf32>
    %c1_21 = arith.constant 1 : index
    %c0_22 = arith.constant 0 : index
    %23 = vector.load %arg4[%c1_21, %c0_22] : memref<2x64xf32, #tpu.memory_space<vmem>>, vector<1x64xf32>
    %24 = vector.broadcast %23 : vector<1x64xf32> to vector<64x64xf32>
    %25 = arith.addf %22, %24 : vector<64x64xf32>
    %c0_23 = arith.constant 0 : index
    %c0_24 = arith.constant 0 : index
    %c0_25 = arith.constant 0 : index
    %26 = vector.load %arg5[%c0_23, %c0_24, %c0_25] : memref<3x64x128xf32, #tpu.memory_space<vmem>>, vector<1x64x128xf32>
    %27 = vector.shape_cast %26 : vector<1x64x128xf32> to vector<64x128xf32>
    %cst_26 = arith.constant dense<0.000000e+00> : vector<64x128xf32>
    %28 = tpu.matmul %25, %27, %cst_26 {dimension_numbers = #tpu.dot_dimension_numbers<[1], [0], [0], [1], [0, 0, 1, 1], [], []>} : vector<64x64xf32>, vector<64x128xf32>, vector<64x128xf32> -> vector<64x128xf32>
    %c0_27 = arith.constant 0 : index
    %c0_28 = arith.constant 0 : index
    %c0_29 = arith.constant 0 : index
    %29 = vector.load %arg2[%c0_27, %c0_28, %c0_29] : memref<3x64x64xf32, #tpu.memory_space<vmem>>, vector<1x64x64xf32>
    %30 = vector.shape_cast %29 : vector<1x64x64xf32> to vector<64x64xf32>
    %cst_30 = arith.constant dense<0.000000e+00> : vector<64x128xf32>
    %31 = tpu.matmul %30, %28, %cst_30 {dimension_numbers = #tpu.dot_dimension_numbers<[1], [0], [0], [1], [0, 0, 1, 1], [], []>} : vector<64x64xf32>, vector<64x128xf32>, vector<64x128xf32> -> vector<64x128xf32>
    %c1_31 = arith.constant 1 : index
    %c0_32 = arith.constant 0 : index
    %c0_33 = arith.constant 0 : index
    %32 = vector.load %arg5[%c1_31, %c0_32, %c0_33] : memref<3x64x128xf32, #tpu.memory_space<vmem>>, vector<1x64x128xf32>
    %33 = vector.shape_cast %32 : vector<1x64x128xf32> to vector<64x128xf32>
    %cst_34 = arith.constant dense<0.000000e+00> : vector<64x128xf32>
    %34 = tpu.matmul %25, %33, %cst_34 {dimension_numbers = #tpu.dot_dimension_numbers<[1], [0], [0], [1], [0, 0, 1, 1], [], []>} : vector<64x64xf32>, vector<64x128xf32>, vector<64x128xf32> -> vector<64x128xf32>
    %35 = arith.addf %31, %34 : vector<64x128xf32>
    %c2_35 = arith.constant 2 : index
    %c0_36 = arith.constant 0 : index
    %c0_37 = arith.constant 0 : index
    %36 = vector.load %arg5[%c2_35, %c0_36, %c0_37] : memref<3x64x128xf32, #tpu.memory_space<vmem>>, vector<1x64x128xf32>
    %37 = vector.shape_cast %36 : vector<1x64x128xf32> to vector<64x128xf32>
    %cst_38 = arith.constant dense<0.000000e+00> : vector<64x128xf32>
    %38 = tpu.matmul %25, %37, %cst_38 {dimension_numbers = #tpu.dot_dimension_numbers<[1], [0], [0], [1], [0, 0, 1, 1], [], []>} : vector<64x64xf32>, vector<64x128xf32>, vector<64x128xf32> -> vector<64x128xf32>
    %c2_39 = arith.constant 2 : index
    %c0_40 = arith.constant 0 : index
    %c0_41 = arith.constant 0 : index
    %39 = vector.load %arg2[%c2_39, %c0_40, %c0_41] : memref<3x64x64xf32, #tpu.memory_space<vmem>>, vector<1x64x64xf32>
    %40 = vector.shape_cast %39 : vector<1x64x64xf32> to vector<64x64xf32>
    %cst_42 = arith.constant dense<0.000000e+00> : vector<64x128xf32>
    %41 = tpu.matmul %40, %38, %cst_42 {dimension_numbers = #tpu.dot_dimension_numbers<[1], [0], [0], [1], [0, 0, 1, 1], [], []>} : vector<64x64xf32>, vector<64x128xf32>, vector<64x128xf32> -> vector<64x128xf32>
    %42 = arith.addf %35, %41 : vector<64x128xf32>
    %c0_43 = arith.constant 0 : index
    %c0_44 = arith.constant 0 : index
    %43 = vector.load %arg6[%c0_43, %c0_44] : memref<2x128xf32, #tpu.memory_space<vmem>>, vector<1x128xf32>
    %44 = vector.broadcast %43 : vector<1x128xf32> to vector<64x128xf32>
    %45 = arith.addf %42, %44 : vector<64x128xf32>
    %cst_45 = arith.constant 0.000000e+00 : f32
    %46 = vector.broadcast %cst_45 : f32 to vector<64x128xf32>
    %47 = arith.maximumf %45, %46 : vector<64x128xf32>
    %c1_46 = arith.constant 1 : index
    %c0_47 = arith.constant 0 : index
    %48 = vector.load %arg6[%c1_46, %c0_47] : memref<2x128xf32, #tpu.memory_space<vmem>>, vector<1x128xf32>
    %49 = vector.broadcast %48 : vector<1x128xf32> to vector<64x128xf32>
    %50 = arith.addf %47, %49 : vector<64x128xf32>
    %c0_48 = arith.constant 0 : index
    %c0_49 = arith.constant 0 : index
    %c0_50 = arith.constant 0 : index
    %51 = vector.load %arg7[%c0_48, %c0_49, %c0_50] : memref<3x128x128xf32, #tpu.memory_space<vmem>>, vector<1x128x128xf32>
    %52 = vector.shape_cast %51 : vector<1x128x128xf32> to vector<128x128xf32>
    %cst_51 = arith.constant dense<0.000000e+00> : vector<64x128xf32>
    %53 = tpu.matmul %50, %52, %cst_51 {dimension_numbers = #tpu.dot_dimension_numbers<[1], [0], [0], [1], [0, 0, 1, 1], [], []>} : vector<64x128xf32>, vector<128x128xf32>, vector<64x128xf32> -> vector<64x128xf32>
    %c0_52 = arith.constant 0 : index
    %c0_53 = arith.constant 0 : index
    %c0_54 = arith.constant 0 : index
    %54 = vector.load %arg2[%c0_52, %c0_53, %c0_54] : memref<3x64x64xf32, #tpu.memory_space<vmem>>, vector<1x64x64xf32>
    %55 = vector.shape_cast %54 : vector<1x64x64xf32> to vector<64x64xf32>
    %cst_55 = arith.constant dense<0.000000e+00> : vector<64x128xf32>
    %56 = tpu.matmul %55, %53, %cst_55 {dimension_numbers = #tpu.dot_dimension_numbers<[1], [0], [0], [1], [0, 0, 1, 1], [], []>} : vector<64x64xf32>, vector<64x128xf32>, vector<64x128xf32> -> vector<64x128xf32>
    %c1_56 = arith.constant 1 : index
    %c0_57 = arith.constant 0 : index
    %c0_58 = arith.constant 0 : index
    %57 = vector.load %arg7[%c1_56, %c0_57, %c0_58] : memref<3x128x128xf32, #tpu.memory_space<vmem>>, vector<1x128x128xf32>
    %58 = vector.shape_cast %57 : vector<1x128x128xf32> to vector<128x128xf32>
    %cst_59 = arith.constant dense<0.000000e+00> : vector<64x128xf32>
    %59 = tpu.matmul %50, %58, %cst_59 {dimension_numbers = #tpu.dot_dimension_numbers<[1], [0], [0], [1], [0, 0, 1, 1], [], []>} : vector<64x128xf32>, vector<128x128xf32>, vector<64x128xf32> -> vector<64x128xf32>
    %60 = arith.addf %56, %59 : vector<64x128xf32>
    %c2_60 = arith.constant 2 : index
    %c0_61 = arith.constant 0 : index
    %c0_62 = arith.constant 0 : index
    %61 = vector.load %arg7[%c2_60, %c0_61, %c0_62] : memref<3x128x128xf32, #tpu.memory_space<vmem>>, vector<1x128x128xf32>
    %62 = vector.shape_cast %61 : vector<1x128x128xf32> to vector<128x128xf32>
    %cst_63 = arith.constant dense<0.000000e+00> : vector<64x128xf32>
    %63 = tpu.matmul %50, %62, %cst_63 {dimension_numbers = #tpu.dot_dimension_numbers<[1], [0], [0], [1], [0, 0, 1, 1], [], []>} : vector<64x128xf32>, vector<128x128xf32>, vector<64x128xf32> -> vector<64x128xf32>
    %c2_64 = arith.constant 2 : index
    %c0_65 = arith.constant 0 : index
    %c0_66 = arith.constant 0 : index
    %64 = vector.load %arg2[%c2_64, %c0_65, %c0_66] : memref<3x64x64xf32, #tpu.memory_space<vmem>>, vector<1x64x64xf32>
    %65 = vector.shape_cast %64 : vector<1x64x64xf32> to vector<64x64xf32>
    %cst_67 = arith.constant dense<0.000000e+00> : vector<64x128xf32>
    %66 = tpu.matmul %65, %63, %cst_67 {dimension_numbers = #tpu.dot_dimension_numbers<[1], [0], [0], [1], [0, 0, 1, 1], [], []>} : vector<64x64xf32>, vector<64x128xf32>, vector<64x128xf32> -> vector<64x128xf32>
    %67 = arith.addf %60, %66 : vector<64x128xf32>
    %c0_68 = arith.constant 0 : index
    %c0_69 = arith.constant 0 : index
    %68 = vector.load %arg8[%c0_68, %c0_69] : memref<2x128xf32, #tpu.memory_space<vmem>>, vector<1x128xf32>
    %69 = vector.broadcast %68 : vector<1x128xf32> to vector<64x128xf32>
    %70 = arith.addf %67, %69 : vector<64x128xf32>
    %cst_70 = arith.constant 0.000000e+00 : f32
    %71 = vector.broadcast %cst_70 : f32 to vector<64x128xf32>
    %72 = arith.maximumf %70, %71 : vector<64x128xf32>
    %c1_71 = arith.constant 1 : index
    %c0_72 = arith.constant 0 : index
    %73 = vector.load %arg8[%c1_71, %c0_72] : memref<2x128xf32, #tpu.memory_space<vmem>>, vector<1x128xf32>
    %74 = vector.broadcast %73 : vector<1x128xf32> to vector<64x128xf32>
    %75 = arith.addf %72, %74 : vector<64x128xf32>
    %76 = arith.truncf %75 : vector<64x128xf32> to vector<64x128xbf16>
    %c0_73 = arith.constant 0 : index
    %c0_74 = arith.constant 0 : index
    %77 = vector.load %arg9[%c0_73, %c0_74] : memref<64x128xbf16, #tpu.memory_space<vmem>>, vector<64x128xbf16>
    tpu.vector_store %arg9[%c0_73, %c0_74], %76 {strides = array<i32>} : memref<64x128xbf16, #tpu.memory_space<vmem>>, vector<64x128xbf16>,
    return
  }
  func.func @transform_0(%arg0: i32) -> (i32, i32) {
    %c0_i32 = arith.constant 0 : i32
    %c0_i32_0 = arith.constant 0 : i32
    %c0_i32_1 = arith.constant 0 : i32
    return %c0_i32, %c0_i32_0 : i32, i32
  }
  func.func @transform_1(%arg0: i32) -> (i32, i32, i32) {
    %c0_i32 = arith.constant 0 : i32
    %c0_i32_0 = arith.constant 0 : i32
    %c0_i32_1 = arith.constant 0 : i32
    %c0_i32_2 = arith.constant 0 : i32
    return %c0_i32, %c0_i32_0, %c0_i32_1 : i32, i32, i32
  }
  func.func @transform_2(%arg0: i32) -> (i32, i32, i32) {
    %c0_i32 = arith.constant 0 : i32
    %c0_i32_0 = arith.constant 0 : i32
    %c0_i32_1 = arith.constant 0 : i32
    %c0_i32_2 = arith.constant 0 : i32
    return %c0_i32, %c0_i32_0, %c0_i32_1 : i32, i32, i32
  }
  func.func @transform_3(%arg0: i32) -> (i32, i32) {
    %c0_i32 = arith.constant 0 : i32
    %c0_i32_0 = arith.constant 0 : i32
    %c0_i32_1 = arith.constant 0 : i32
    return %c0_i32, %c0_i32_0 : i32, i32
  }
  func.func @transform_4(%arg0: i32) -> (i32, i32, i32) {
    %c0_i32 = arith.constant 0 : i32
    %c0_i32_0 = arith.constant 0 : i32
    %c0_i32_1 = arith.constant 0 : i32
    %c0_i32_2 = arith.constant 0 : i32
    return %c0_i32, %c0_i32_0, %c0_i32_1 : i32, i32, i32
  }
  func.func @transform_5(%arg0: i32) -> (i32, i32) {
    %c0_i32 = arith.constant 0 : i32
    %c0_i32_0 = arith.constant 0 : i32
    %c0_i32_1 = arith.constant 0 : i32
    return %c0_i32, %c0_i32_0 : i32, i32
  }
  func.func @transform_6(%arg0: i32) -> (i32, i32, i32) {
    %c0_i32 = arith.constant 0 : i32
    %c0_i32_0 = arith.constant 0 : i32
    %c0_i32_1 = arith.constant 0 : i32
    %c0_i32_2 = arith.constant 0 : i32
    return %c0_i32, %c0_i32_0, %c0_i32_1 : i32, i32, i32
  }
  func.func @transform_7(%arg0: i32) -> (i32, i32) {
    %c0_i32 = arith.constant 0 : i32
    %c0_i32_0 = arith.constant 0 : i32
    %c0_i32_1 = arith.constant 0 : i32
    return %c0_i32, %c0_i32_0 : i32, i32
  }
  func.func @transform_8(%arg0: i32) -> (i32, i32) {
    %c0_i32 = arith.constant 0 : i32
    %c0_i32_0 = arith.constant 0 : i32
    %c0_i32_1 = arith.constant 0 : i32
    return %c0_i32, %c0_i32_0 : i32, i32
  }
}

</mosaic_0001>

<llo_original>
// kernel: siamese_forward.2
$region0: #{siamese_forward.2}
  #allocation0 [shape = 'u32[]', space=smem, size = 0x4, offset = 0x4, fixed_abs, tag = 'smem constant byte address 0x4 - core index']
  #allocation1 [shape = 'u32[144,128]{1,0:T(1,128)}', space=vmem, size = 0x12000, scoped, tag = 'internal scratch']
  %s0 = inlined_call_operand.vmem [shape: f32[64,16], index: 0, kind: input, shape index: {}]
  %s1 = inlined_call_operand.hbm [shape: f32[3,64,64], index: 1, kind: input, shape index: {}]
  %s2 = inlined_call_operand.hbm [shape: f32[3,16,64], index: 2, kind: input, shape index: {}]
  %s3 = inlined_call_operand.hbm [shape: f32[2,64], index: 3, kind: input, shape index: {}]
  %s4 = inlined_call_operand.hbm [shape: f32[3,64,128], index: 4, kind: input, shape index: {}]
  %s5 = inlined_call_operand.hbm [shape: f32[2,128], index: 5, kind: input, shape index: {}]
  %s6 = inlined_call_operand.hbm [shape: f32[3,128,128], index: 6, kind: input, shape index: {}]
  %s7 = inlined_call_operand.hbm [shape: f32[2,128], index: 7, kind: input, shape index: {}]
  %s8 = inlined_call_operand.vmem [shape: bf16[64,128], index: 8, kind: output, shape index: {}]
  %s9 = sld [smem:[#allocation0]]
  $region70: #{siamese_forward.2} parent=0
    _
  %s11 = ssub.s32 1, %s9
  %s12 = scalar_select 0, %s11, %s9
  $region1: #{siamese_forward.2} parent=0
    #allocation2 [shape = 'u8[98304]{0}', space=vmem, size = 0x18000, scoped, tag = 'input window, operand 1, single buffered']
    #allocation3 [shape = 's32[1]{0}', space=sflag, size = 0x4, scoped, tag = 'scoped memory for siamese_forward.2']
    #allocation4 [shape = 'u8[24576]{0}', space=vmem, size = 0x6000, scoped, tag = 'input window, operand 2, single buffered']
    #allocation5 [shape = 's32[1]{0}', space=sflag, size = 0x4, scoped, tag = 'scoped memory for siamese_forward.2']
    #allocation6 [shape = 'u8[1024]{0}', space=vmem, size = 0x400, scoped, tag = 'input window, operand 3, single buffered']
    #allocation7 [shape = 'u8[98304]{0}', space=vmem, size = 0x18000, scoped, tag = 'input window, operand 4, single buffered']
    #allocation8 [shape = 's32[1]{0}', space=sflag, size = 0x4, scoped, tag = 'scoped memory for siamese_forward.2']
    #allocation9 [shape = 'u8[1024]{0}', space=vmem, size = 0x400, scoped, tag = 'input window, operand 5, single buffered']
    #allocation10 [shape = 'u8[196608]{0}', space=vmem, size = 0x30000, scoped, tag = 'input window, operand 6, single buffered']
    #allocation11 [shape = 's32[1]{0}', space=sflag, size = 0x4, scoped, tag = 'scoped memory for siamese_forward.2']
    #allocation12 [shape = 'u8[1024]{0}', space=vmem, size = 0x400, scoped, tag = 'input window, operand 7, single buffered']
    %13 = vsyncpa [#allocation3], 0
    %14 = vsyncpa [#allocation5], 0
    %15 = vsyncpa [#allocation8], 0
    %16 = vsyncpa [#allocation11], 0
    // Predicated region
    $region2: #{siamese_forward.2} parent=1 // pred_check
      _
    $region3: #{siamese_forward.2} parent=1 // pred_check_branch
      %18 = sbr.rel (0) target = $region5
    $region4: #{siamese_forward.2} parent=1 // pred_region
      _
    $region5: #{siamese_forward.2} parent=1 // pred_fallthru
      _
    // Predicated region
    $region6: #{siamese_forward.2} parent=1 // pred_check
      _
    $region7: #{siamese_forward.2} parent=1 // pred_check_branch
      %20 = sbr.rel (0) target = $region9
    $region8: #{siamese_forward.2} parent=1 // pred_region
      %s22 = ssub.s32 3072, 3072
      %23 = vsyncadd [#allocation3], %s22
      %s24 = sshll.u32 [#allocation2], 4
      %s25 = int_to_ptr.vmem [resolvable:$true] %s24
      %30 = dma.hbm_to_vmem [thread:$0]  %s1, 3072, %s25, [#allocation3], 128, 128, 8
    $region9: #{siamese_forward.2} parent=1 // pred_fallthru
      _
    // Predicated region
    $region10: #{siamese_forward.2} parent=1 // pred_check
      _
    $region11: #{siamese_forward.2} parent=1 // pred_check_branch
      %32 = sbr.rel (0) target = $region13
    $region12: #{siamese_forward.2} parent=1 // pred_region
      %s34 = ssub.s32 768, 768
      %35 = vsyncadd [#allocation5], %s34
      %s36 = sshll.u32 [#allocation4], 4
      %s37 = int_to_ptr.vmem [resolvable:$true] %s36
      %42 = dma.hbm_to_vmem [thread:$0]  %s2, 768, %s37, [#allocation5], 128, 128, 8
    $region13: #{siamese_forward.2} parent=1 // pred_fallthru
      _
    // Predicated region
    $region14: #{siamese_forward.2} parent=1 // pred_check
      _
    $region15: #{siamese_forward.2} parent=1 // pred_check_branch
      %44 = sbr.rel (0) target = $region17
    $region16: #{siamese_forward.2} parent=1 // pred_region
      %s46 = ssub.s32 32, 32
      %47 = vsyncadd [#allocation5], %s46
      %s49 = sshll.u32 [#allocation6], 4
      %s50 = int_to_ptr.vmem [resolvable:$true] %s49
      %52 = dma.hbm_to_vmem [thread:$0]  %s3, 32, %s50, [#allocation5]
    $region17: #{siamese_forward.2} parent=1 // pred_fallthru
      _
    // Predicated region
    $region18: #{siamese_forward.2} parent=1 // pred_check
      _
    $region19: #{siamese_forward.2} parent=1 // pred_check_branch
      %54 = sbr.rel (0) target = $region21
    $region20: #{siamese_forward.2} parent=1 // pred_region
      %s56 = ssub.s32 3072, 3072
      %57 = vsyncadd [#allocation8], %s56
      %s58 = sshll.u32 [#allocation7], 4
      %s59 = int_to_ptr.vmem [resolvable:$true] %s58
      %64 = dma.hbm_to_vmem [thread:$0]  %s4, 3072, %s59, [#allocation8], 128, 128, 8
    $region21: #{siamese_forward.2} parent=1 // pred_fallthru
      _
    // Predicated region
    $region22: #{siamese_forward.2} parent=1 // pred_check
      _
    $region23: #{siamese_forward.2} parent=1 // pred_check_branch
      %66 = sbr.rel (0) target = $region25
    $region24: #{siamese_forward.2} parent=1 // pred_region
      %s68 = ssub.s32 32, 32
      %69 = vsyncadd [#allocation8], %s68
      %s71 = sshll.u32 [#allocation9], 4
      %s72 = int_to_ptr.vmem [resolvable:$true] %s71
      %74 = dma.hbm_to_vmem [thread:$0]  %s5, 32, %s72, [#allocation8]
    $region25: #{siamese_forward.2} parent=1 // pred_fallthru
      _
    // Predicated region
    $region26: #{siamese_forward.2} parent=1 // pred_check
      _
    $region27: #{siamese_forward.2} parent=1 // pred_check_branch
      %76 = sbr.rel (0) target = $region29
    $region28: #{siamese_forward.2} parent=1 // pred_region
      %s78 = ssub.s32 6144, 6144
      %79 = vsyncadd [#allocation11], %s78
      %s80 = sshll.u32 [#allocation10], 4
      %s81 = int_to_ptr.vmem [resolvable:$true] %s80
      %86 = dma.hbm_to_vmem [thread:$0]  %s6, 6144, %s81, [#allocation11], 128, 128, 8
    $region29: #{siamese_forward.2} parent=1 // pred_fallthru
      _
    // Predicated region
    $region30: #{siamese_forward.2} parent=1 // pred_check
      _
    $region31: #{siamese_forward.2} parent=1 // pred_check_branch
      %88 = sbr.rel (0) target = $region33
    $region32: #{siamese_forward.2} parent=1 // pred_region
      %s90 = ssub.s32 32, 32
      %91 = vsyncadd [#allocation11], %s90
      %s93 = sshll.u32 [#allocation12], 4
      %s94 = int_to_ptr.vmem [resolvable:$true] %s93
      %96 = dma.hbm_to_vmem [thread:$0]  %s7, 32, %s94, [#allocation11]
    $region33: #{siamese_forward.2} parent=1 // pred_fallthru
      _
    // Predicated region
    $region34: #{siamese_forward.2} parent=1 // pred_check
      _
    $region35: #{siamese_forward.2} parent=1 // pred_check_branch
      %98 = sbr.rel (0) target = $region37
    $region36: #{siamese_forward.2} parent=1 // pred_region
      %99 = dma.done [#allocation3], 3072
    $region37: #{siamese_forward.2} parent=1 // pred_fallthru
      _
    // Predicated region
    $region38: #{siamese_forward.2} parent=1 // pred_check
      _
    $region39: #{siamese_forward.2} parent=1 // pred_check_branch
      %101 = sbr.rel (0) target = $region41
    $region40: #{siamese_forward.2} parent=1 // pred_region
      %102 = dma.done [#allocation5], 768
    $region41: #{siamese_forward.2} parent=1 // pred_fallthru
      _
    // Predicated region
    $region42: #{siamese_forward.2} parent=1 // pred_check
      _
    $region43: #{siamese_forward.2} parent=1 // pred_check_branch
      %104 = sbr.rel (0) target = $region45
    $region44: #{siamese_forward.2} parent=1 // pred_region
      %105 = dma.done [#allocation5], 32
    $region45: #{siamese_forward.2} parent=1 // pred_fallthru
      _
    // Predicated region
    $region46: #{siamese_forward.2} parent=1 // pred_check
      _
    $region47: #{siamese_forward.2} parent=1 // pred_check_branch
      %107 = sbr.rel (0) target = $region49
    $region48: #{siamese_forward.2} parent=1 // pred_region
      %108 = dma.done [#allocation8], 3072
    $region49: #{siamese_forward.2} parent=1 // pred_fallthru
      _
    // Predicated region
    $region50: #{siamese_forward.2} parent=1 // pred_check
      _
    $region51: #{siamese_forward.2} parent=1 // pred_check_branch
      %110 = sbr.rel (0) target = $region53
    $region52: #{siamese_forward.2} parent=1 // pred_region
      %111 = dma.done [#allocation8], 32
    $region53: #{siamese_forward.2} parent=1 // pred_fallthru
      _
    // Predicated region
    $region54: #{siamese_forward.2} parent=1 // pred_check
      _
    $region55: #{siamese_forward.2} parent=1 // pred_check_branch
      %113 = sbr.rel (0) target = $region57
    $region56: #{siamese_forward.2} parent=1 // pred_region
      %114 = dma.done [#allocation11], 6144
    $region57: #{siamese_forward.2} parent=1 // pred_fallthru
      _
    // Predicated region
    $region58: #{siamese_forward.2} parent=1 // pred_check
      _
    $region59: #{siamese_forward.2} parent=1 // pred_check_branch
      %116 = sbr.rel (0) target = $region61
    $region60: #{siamese_forward.2} parent=1 // pred_region
      %117 = dma.done [#allocation11], 32
    $region61: #{siamese_forward.2} parent=1 // pred_fallthru
      _
    %v118 = vld [vmem:[%s0] sm:$0xff]
    %v119 = vld [vmem:[%s0 + $0x8] sm:$0xff]
    %v120 = vld [vmem:[%s0 + $0x10] sm:$0xff]
    %v121 = vld [vmem:[%s0 + $0x18] sm:$0xff]
    %v122 = vld [vmem:[%s0 + $0x20] sm:$0xff]
    %v123 = vld [vmem:[%s0 + $0x28] sm:$0xff]
    %v124 = vld [vmem:[%s0 + $0x30] sm:$0xff]
    %v125 = vld [vmem:[%s0 + $0x38] sm:$0xff]
    %v126 = vld [vmem:[#allocation4] sm:$0xff]
    %v127 = vld [vmem:[#allocation4 + $0x8] sm:$0xff]
    %vm128 = vcmask 130048
    %v130 = vsel %vm128, %v118, 0
    %v133 = vsel %vm128, %v119, 0
    %v136 = vsel %vm128, %v120, 0
    %v139 = vsel %vm128, %v121, 0
    %v142 = vsel %vm128, %v122, 0
    %v145 = vsel %vm128, %v123, 0
    %v148 = vsel %vm128, %v124, 0
    %v151 = vsel %vm128, %v125, 0
    %153 = vmatprep.subr.mxu0 0.0
    %154 = vmatpush1.msra.mxu0 %v126
    %155 = vmatprep.subr.mxu0 0.0
    %156 = vmatpush1.msra.mxu0 %v127
    %157 = vmatprep.subr.mxu0 0.0
    %158 = vmatpush1.msra.mxu0 0.0
    %159 = vmatprep.subr.mxu0 0.0
    %160 = vmatpush1.msra.mxu0 0.0
    %161 = vmatprep.subr.mxu0 0.0
    %162 = vmatpush1.msra.mxu0 0.0
    %163 = vmatprep.subr.mxu0 0.0
    %164 = vmatpush1.msra.mxu0 0.0
    %165 = vmatprep.subr.mxu0 0.0
    %166 = vmatpush1.msra.mxu0 0.0
    %167 = vmatprep.subr.mxu0 0.0
    %168 = vmatpush1.msra.mxu0 0.0
    %169 = vmatprep.subr.mxu0 0.0
    %170 = vmatpush1.msra.mxu0 0.0
    %171 = vmatprep.subr.mxu0 0.0
    %172 = vmatpush1.msra.mxu0 0.0
    %173 = vmatprep.subr.mxu0 0.0
    %174 = vmatpush1.msra.mxu0 0.0
    %175 = vmatprep.subr.mxu0 0.0
    %176 = vmatpush1.msra.mxu0 0.0
    %177 = vmatprep.subr.mxu0 0.0
    %178 = vmatpush1.msra.mxu0 0.0
    %179 = vmatprep.subr.mxu0 0.0
    %180 = vmatpush1.msra.mxu0 0.0
    %181 = vmatprep.subr.mxu0 0.0
    %182 = vmatpush1.msra.mxu0 0.0
    %183 = vmatprep.subr.mxu0 0.0
    %184 = vmatpush1.msra.mxu0 0.0
    %185 = vmatprep.subr.mxu0 0.0
    %186 = vmatpush1.msra.mxu0 0.0
    %187 = vmatprep.subr.mxu0 0.0
    %188 = vmatpush1.msra.mxu0 0.0
    %189 = vmatprep.subr.mxu0 0.0
    %190 = vmatpush1.msra.mxu0 0.0
    %191 = vmatprep.subr.mxu0 0.0
    %192 = vmatpush1.msra.mxu0 0.0
    %193 = vmatprep.subr.mxu0 0.0
    %194 = vmatpush1.msra.mxu0 0.0
    %195 = vmatprep.subr.mxu0 0.0
    %196 = vmatpush1.msra.mxu0 0.0
    %197 = vmatprep.subr.mxu0 0.0
    %198 = vmatpush1.msra.mxu0 0.0
    %199 = vmatprep.subr.mxu0 0.0
    %200 = vmatpush1.msra.mxu0 0.0
    %201 = vmatprep.subr.mxu0 0.0
    %202 = vmatpush1.msra.mxu0 0.0
    %203 = vmatprep.subr.mxu0 0.0
    %204 = vmatpush1.msra.mxu0 0.0
    %205 = vmatprep.subr.mxu0 0.0
    %206 = vmatpush1.msra.mxu0 0.0
    %207 = vmatprep.subr.mxu0 0.0
    %208 = vmatpush1.msra.mxu0 0.0
    %209 = vmatprep.subr.mxu0 0.0
    %210 = vmatpush1.msra.mxu0 0.0
    %211 = vmatprep.subr.mxu0 0.0
    %212 = vmatpush1.msra.mxu0 0.0
    %213 = vmatprep.subr.mxu0 0.0
    %214 = vmatpush1.msra.mxu0 0.0
    %215 = vmatprep.subr.mxu0 0.0
    %216 = vmatpush1.msra.mxu0 0.0
    %217 = vmatprep.mubr.f32.mxu0 0.0
    %218 = vmatmul.mubr.f32.gmra.mrb[0].mxu0 %v130
    %v219 = vpop.f32.mrb[0].mxu0
    %v220 = vadd.f32 0.0, %v219
    %v221 = vpop.f32.mrb[0].mxu0
    %222 = vmatprep.mubr.f32.mxu0 0.0
    %223 = vmatmul.mubr.f32.gmra.mrb[0].mxu0 %v133
    %v224 = vpop.f32.mrb[0].mxu0
    %v225 = vadd.f32 0.0, %v224
    %v226 = vpop.f32.mrb[0].mxu0
    %227 = vmatprep.mubr.f32.mxu0 0.0
    %228 = vmatmul.mubr.f32.gmra.mrb[0].mxu0 %v136
    %v229 = vpop.f32.mrb[0].mxu0
    %v230 = vadd.f32 0.0, %v229
    %v231 = vpop.f32.mrb[0].mxu0
    %232 = vmatprep.mubr.f32.mxu0 0.0
    %233 = vmatmul.mubr.f32.gmra.mrb[0].mxu0 %v139
    %v234 = vpop.f32.mrb[0].mxu0
    %v235 = vadd.f32 0.0, %v234
    %v236 = vpop.f32.mrb[0].mxu0
    %237 = vmatprep.mubr.f32.mxu0 0.0
    %238 = vmatmul.mubr.f32.gmra.mrb[0].mxu0 %v142
    %v239 = vpop.f32.mrb[0].mxu0
    %v240 = vadd.f32 0.0, %v239
    %v241 = vpop.f32.mrb[0].mxu0
    %242 = vmatprep.mubr.f32.mxu0 0.0
    %243 = vmatmul.mubr.f32.gmra.mrb[0].mxu0 %v145
    %v244 = vpop.f32.mrb[0].mxu0
    %v245 = vadd.f32 0.0, %v244
    %v246 = vpop.f32.mrb[0].mxu0
    %247 = vmatprep.mubr.f32.mxu0 0.0
    %248 = vmatmul.mubr.f32.gmra.mrb[0].mxu0 %v148
    %v249 = vpop.f32.mrb[0].mxu0
    %v250 = vadd.f32 0.0, %v249
    %v251 = vpop.f32.mrb[0].mxu0
    %252 = vmatprep.mubr.f32.mxu0 0.0
    %253 = vmatmul.mubr.f32.gmra.mrb[0].mxu0 %v151
    %v254 = vpop.f32.mrb[0].mxu0
    %v255 = vadd.f32 0.0, %v254
    %v256 = vpop.f32.mrb[0].mxu0
    %257 = vdwg.mxu0
    %v258 = vld [vmem:[#allocation2] sm:$0xff]
    %v259 = vld [vmem:[#allocation2 + $0x8] sm:$0xff]
    %v260 = vld [vmem:[#allocation2 + $0x10] sm:$0xff]
    %v261 = vld [vmem:[#allocation2 + $0x18] sm:$0xff]
    %v262 = vld [vmem:[#allocation2 + $0x20] sm:$0xff]
    %v263 = vld [vmem:[#allocation2 + $0x28] sm:$0xff]
    %v264 = vld [vmem:[#allocation2 + $0x30] sm:$0xff]
    %v265 = vld [vmem:[#allocation2 + $0x38] sm:$0xff]
    %s266 = scalar_lea.vmem [#allocation4], 16
    %v267 = vld [vmem:[%s266] sm:$0xff]
    %v268 = vld [vmem:[%s266 + $0x8] sm:$0xff]
    %269 = vmatprep.subr.mxu0 0.0
    %270 = vmatpush1.msra.mxu0 %v267
    %271 = vmatprep.subr.mxu0 0.0
    %272 = vmatpush1.msra.mxu0 %v268
    %273 = vmatprep.subr.mxu0 0.0
    %274 = vmatpush1.msra.mxu0 0.0
    %275 = vmatprep.subr.mxu0 0.0
    %276 = vmatpush1.msra.mxu0 0.0
    %277 = vmatprep.subr.mxu0 0.0
    %278 = vmatpush1.msra.mxu0 0.0
    %279 = vmatprep.subr.mxu0 0.0
    %280 = vmatpush1.msra.mxu0 0.0
    %281 = vmatprep.subr.mxu0 0.0
    %282 = vmatpush1.msra.mxu0 0.0
    %283 = vmatprep.subr.mxu0 0.0
    %284 = vmatpush1.msra.mxu0 0.0
    %285 = vmatprep.subr.mxu0 0.0
    %286 = vmatpush1.msra.mxu0 0.0
    %287 = vmatprep.subr.mxu0 0.0
    %288 = vmatpush1.msra.mxu0 0.0
    %289 = vmatprep.subr.mxu0 0.0
    %290 = vmatpush1.msra.mxu0 0.0
    %291 = vmatprep.subr.mxu0 0.0
    %292 = vmatpush1.msra.mxu0 0.0
    %293 = vmatprep.subr.mxu0 0.0
    %294 = vmatpush1.msra.mxu0 0.0
    %295 = vmatprep.subr.mxu0 0.0
    %296 = vmatpush1.msra.mxu0 0.0
    %297 = vmatprep.subr.mxu0 0.0
    %298 = vmatpush1.msra.mxu0 0.0
    %299 = vmatprep.subr.mxu0 0.0
    %300 = vmatpush1.msra.mxu0 0.0
    %301 = vmatprep.subr.mxu0 0.0
    %302 = vmatpush1.msra.mxu0 0.0
    %303 = vmatprep.subr.mxu0 0.0
    %304 = vmatpush1.msra.mxu0 0.0
    %305 = vmatprep.subr.mxu0 0.0
    %306 = vmatpush1.msra.mxu0 0.0
    %307 = vmatprep.subr.mxu0 0.0
    %308 = vmatpush1.msra.mxu0 0.0
    %309 = vmatprep.subr.mxu0 0.0
    %310 = vmatpush1.msra.mxu0 0.0
    %311 = vmatprep.subr.mxu0 0.0
    %312 = vmatpush1.msra.mxu0 0.0
    %313 = vmatprep.subr.mxu0 0.0
    %314 = vmatpush1.msra.mxu0 0.0
    %315 = vmatprep.subr.mxu0 0.0
    %316 = vmatpush1.msra.mxu0 0.0
    %317 = vmatprep.subr.mxu0 0.0
    %318 = vmatpush1.msra.mxu0 0.0
    %319 = vmatprep.subr.mxu0 0.0
    %320 = vmatpush1.msra.mxu0 0.0
    %321 = vmatprep.subr.mxu0 0.0
    %322 = vmatpush1.msra.mxu0 0.0
    %323 = vmatprep.subr.mxu0 0.0
    %324 = vmatpush1.msra.mxu0 0.0
    %325 = vmatprep.subr.mxu0 0.0
    %326 = vmatpush1.msra.mxu0 0.0
    %327 = vmatprep.subr.mxu0 0.0
    %328 = vmatpush1.msra.mxu0 0.0
    %329 = vmatprep.subr.mxu0 0.0
    %330 = vmatpush1.msra.mxu0 0.0
    %331 = vmatprep.subr.mxu0 0.0
    %332 = vmatpush1.msra.mxu0 0.0
    %333 = vmatprep.mubr.f32.mxu0 0.0
    %334 = vmatmul.mubr.f32.gmra.mrb[0].mxu0 %v130
    %v335 = vpop.f32.mrb[0].mxu0
    %v336 = vadd.f32 0.0, %v335
    %v337 = vpop.f32.mrb[0].mxu0
    %338 = vmatprep.mubr.f32.mxu0 0.0
    %339 = vmatmul.mubr.f32.gmra.mrb[0].mxu0 %v133
    %v340 = vpop.f32.mrb[0].mxu0
    %v341 = vadd.f32 0.0, %v340
    %v342 = vpop.f32.mrb[0].mxu0
    %343 = vmatprep.mubr.f32.mxu0 0.0
    %344 = vmatmul.mubr.f32.gmra.mrb[0].mxu0 %v136
    %v345 = vpop.f32.mrb[0].mxu0
    %v346 = vadd.f32 0.0, %v345
    %v347 = vpop.f32.mrb[0].mxu0
    %348 = vmatprep.mubr.f32.mxu0 0.0
    %349 = vmatmul.mubr.f32.gmra.mrb[0].mxu0 %v139
    %v350 = vpop.f32.mrb[0].mxu0
    %v351 = vadd.f32 0.0, %v350
    %v352 = vpop.f32.mrb[0].mxu0
    %353 = vmatprep.mubr.f32.mxu0 0.0
    %354 = vmatmul.mubr.f32.gmra.mrb[0].mxu0 %v142
    %v355 = vpop.f32.mrb[0].mxu0
    %v356 = vadd.f32 0.0, %v355
    %v357 = vpop.f32.mrb[0].mxu0
    %358 = vmatprep.mubr.f32.mxu0 0.0
    %359 = vmatmul.mubr.f32.gmra.mrb[0].mxu0 %v145
    %v360 = vpop.f32.mrb[0].mxu0
    %v361 = vadd.f32 0.0, %v360
    %v362 = vpop.f32.mrb[0].mxu0
    %363 = vmatprep.mubr.f32.mxu0 0.0
    %364 = vmatmul.mubr.f32.gmra.mrb[0].mxu0 %v148
    %v365 = vpop.f32.mrb[0].mxu0
    %v366 = vadd.f32 0.0, %v365
    %v367 = vpop.f32.mrb[0].mxu0
    %368 = vmatprep.mubr.f32.mxu0 0.0
    %369 = vmatmul.mubr.f32.gmra.mrb[0].mxu0 %v151
    %v370 = vpop.f32.mrb[0].mxu0
    %v371 = vadd.f32 0.0, %v370
    %v372 = vpop.f32.mrb[0].mxu0
    %373 = vdwg.mxu0
    %vm374 = vcmask 523264
    %v376 = vsel %vm374, %v258, 0
    %v379 = vsel %vm374, %v259, 0
    %v382 = vsel %vm374, %v260, 0
    %v385 = vsel %vm374, %v261, 0
    %v388 = vsel %vm374, %v262, 0
    %v391 = vsel %vm374, %v263, 0
    %v394 = vsel %vm374, %v264, 0
    %v397 = vsel %vm374, %v265, 0
    %399 = vmatprep.subr.mxu0 0.0
    %400 = vmatpush1.msra.mxu0 %v220
    %401 = vmatprep.subr.mxu0 0.0
    %402 = vmatpush1.msra.mxu0 %v225
    %403 = vmatprep.subr.mxu0 0.0
    %404 = vmatpush1.msra.mxu0 %v230
    %405 = vmatprep.subr.mxu0 0.0
    %406 = vmatpush1.msra.mxu0 %v235
    %407 = vmatprep.subr.mxu0 0.0
    %408 = vmatpush1.msra.mxu0 %v240
    %409 = vmatprep.subr.mxu0 0.0
    %410 = vmatpush1.msra.mxu0 %v245
    %411 = vmatprep.subr.mxu0 0.0
    %412 = vmatpush1.msra.mxu0 %v250
    %413 = vmatprep.subr.mxu0 0.0
    %414 = vmatpush1.msra.mxu0 %v255
    %415 = vmatprep.subr.mxu0 0.0
    %416 = vmatpush1.msra.mxu0 0.0
    %417 = vmatprep.subr.mxu0 0.0
    %418 = vmatpush1.msra.mxu0 0.0
    %419 = vmatprep.subr.mxu0 0.0
    %420 = vmatpush1.msra.mxu0 0.0
    %421 = vmatprep.subr.mxu0 0.0
    %422 = vmatpush1.msra.mxu0 0.0
    %423 = vmatprep.subr.mxu0 0.0
    %424 = vmatpush1.msra.mxu0 0.0
    %425 = vmatprep.subr.mxu0 0.0
    %426 = vmatpush1.msra.mxu0 0.0
    %427 = vmatprep.subr.mxu0 0.0
    %428 = vmatpush1.msra.mxu0 0.0
    %429 = vmatprep.subr.mxu0 0.0
    %430 = vmatpush1.msra.mxu0 0.0
    %431 = vmatprep.subr.mxu0 0.0
    %432 = vmatpush1.msra.mxu0 0.0
    %433 = vmatprep.subr.mxu0 0.0
    %434 = vmatpush1.msra.mxu0 0.0
    %435 = vmatprep.subr.mxu0 0.0
    %436 = vmatpush1.msra.mxu0 0.0
    %437 = vmatprep.subr.mxu0 0.0
    %438 = vmatpush1.msra.mxu0 0.0
    %439 = vmatprep.subr.mxu0 0.0
    %440 = vmatpush1.msra.mxu0 0.0
    %441 = vmatprep.subr.mxu0 0.0
    %442 = vmatpush1.msra.mxu0 0.0
    %443 = vmatprep.subr.mxu0 0.0
    %444 = vmatpush1.msra.mxu0 0.0
    %445 = vmatprep.subr.mxu0 0.0
    %446 = vmatpush1.msra.mxu0 0.0
    %447 = vmatprep.subr.mxu0 0.0
    %448 = vmatpush1.msra.mxu0 0.0
    %449 = vmatprep.subr.mxu0 0.0
    %450 = vmatpush1.msra.mxu0 0.0
    %451 = vmatprep.subr.mxu0 0.0
    %452 = vmatpush1.msra.mxu0 0.0
    %453 = vmatprep.subr.mxu0 0.0
    %454 = vmatpush1.msra.mxu0 0.0
    %455 = vmatprep.subr.mxu0 0.0
    %456 = vmatpush1.msra.mxu0 0.0
    %457 = vmatprep.subr.mxu0 0.0
    %458 = vmatpush1.msra.mxu0 0.0
    %459 = vmatprep.subr.mxu0 0.0
    %460 = vmatpush1.msra.mxu0 0.0
    %461 = vmatprep.subr.mxu0 0.0
    %462 = vmatpush1.msra.mxu0 0.0
    %463 = vmatprep.mubr.f32.mxu0 0.0
    %464 = vmatmul.mubr.f32.gmra.mrb[0].mxu0 %v376
    %v465 = vpop.f32.mrb[0].mxu0
    %v466 = vadd.f32 %v336, %v465
    %v467 = vpop.f32.mrb[0].mxu0
    %468 = vmatprep.mubr.f32.mxu0 0.0
    %469 = vmatmul.mubr.f32.gmra.mrb[0].mxu0 %v379
    %v470 = vpop.f32.mrb[0].mxu0
    %v471 = vadd.f32 %v341, %v470
    %v472 = vpop.f32.mrb[0].mxu0
    %473 = vmatprep.mubr.f32.mxu0 0.0
    %474 = vmatmul.mubr.f32.gmra.mrb[0].mxu0 %v382
    %v475 = vpop.f32.mrb[0].mxu0
    %v476 = vadd.f32 %v346, %v475
    %v477 = vpop.f32.mrb[0].mxu0
    %478 = vmatprep.mubr.f32.mxu0 0.0
    %479 = vmatmul.mubr.f32.gmra.mrb[0].mxu0 %v385
    %v480 = vpop.f32.mrb[0].mxu0
    %v481 = vadd.f32 %v351, %v480
    %v482 = vpop.f32.mrb[0].mxu0
    %483 = vmatprep.mubr.f32.mxu0 0.0
    %484 = vmatmul.mubr.f32.gmra.mrb[0].mxu0 %v388
    %v485 = vpop.f32.mrb[0].mxu0
    %v486 = vadd.f32 %v356, %v485
    %v487 = vpop.f32.mrb[0].mxu0
    %488 = vmatprep.mubr.f32.mxu0 0.0
    %489 = vmatmul.mubr.f32.gmra.mrb[0].mxu0 %v391
    %v490 = vpop.f32.mrb[0].mxu0
    %v491 = vadd.f32 %v361, %v490
    %v492 = vpop.f32.mrb[0].mxu0
    %493 = vmatprep.mubr.f32.mxu0 0.0
    %494 = vmatmul.mubr.f32.gmra.mrb[0].mxu0 %v394
    %v495 = vpop.f32.mrb[0].mxu0
    %v496 = vadd.f32 %v366, %v495
    %v497 = vpop.f32.mrb[0].mxu0
    %498 = vmatprep.mubr.f32.mxu0 0.0
    %499 = vmatmul.mubr.f32.gmra.mrb[0].mxu0 %v397
    %v500 = vpop.f32.mrb[0].mxu0
    %v501 = vadd.f32 %v371, %v500
    %v502 = vpop.f32.mrb[0].mxu0
    %503 = vdwg.mxu0
    %s504 = scalar_lea.vmem [#allocation4], 32
    %v505 = vld [vmem:[%s504] sm:$0xff]
    %v506 = vld [vmem:[%s504 + $0x8] sm:$0xff]
    %507 = vmatprep.subr.mxu0 0.0
    %508 = vmatpush1.msra.mxu0 %v505
    %509 = vmatprep.subr.mxu0 0.0
    %510 = vmatpush1.msra.mxu0 %v506
    %511 = vmatprep.subr.mxu0 0.0
    %512 = vmatpush1.msra.mxu0 0.0
    %513 = vmatprep.subr.mxu0 0.0
    %514 = vmatpush1.msra.mxu0 0.0
    %515 = vmatprep.subr.mxu0 0.0
    %516 = vmatpush1.msra.mxu0 0.0
    %517 = vmatprep.subr.mxu0 0.0
    %518 = vmatpush1.msra.mxu0 0.0
    %519 = vmatprep.subr.mxu0 0.0
    %520 = vmatpush1.msra.mxu0 0.0
    %521 = vmatprep.subr.mxu0 0.0
    %522 = vmatpush1.msra.mxu0 0.0
    %523 = vmatprep.subr.mxu0 0.0
    %524 = vmatpush1.msra.mxu0 0.0
    %525 = vmatprep.subr.mxu0 0.0
    %526 = vmatpush1.msra.mxu0 0.0
    %527 = vmatprep.subr.mxu0 0.0
    %528 = vmatpush1.msra.mxu0 0.0
    %529 = vmatprep.subr.mxu0 0.0
    %530 = vmatpush1.msra.mxu0 0.0
    %531 = vmatprep.subr.mxu0 0.0
    %532 = vmatpush1.msra.mxu0 0.0
    %533 = vmatprep.subr.mxu0 0.0
    %534 = vmatpush1.msra.mxu0 0.0
    %535 = vmatprep.subr.mxu0 0.0
    %536 = vmatpush1.msra.mxu0 0.0
    %537 = vmatprep.subr.mxu0 0.0
    %538 = vmatpush1.msra.mxu0 0.0
    %539 = vmatprep.subr.mxu0 0.0
    %540 = vmatpush1.msra.mxu0 0.0
    %541 = vmatprep.subr.mxu0 0.0
    %542 = vmatpush1.msra.mxu0 0.0
    %543 = vmatprep.subr.mxu0 0.0
    %544 = vmatpush1.msra.mxu0 0.0
    %545 = vmatprep.subr.mxu0 0.0
    %546 = vmatpush1.msra.mxu0 0.0
    %547 = vmatprep.subr.mxu0 0.0
    %548 = vmatpush1.msra.mxu0 0.0
    %549 = vmatprep.subr.mxu0 0.0
    %550 = vmatpush1.msra.mxu0 0.0
    %551 = vmatprep.subr.mxu0 0.0
    %552 = vmatpush1.msra.mxu0 0.0
    %553 = vmatprep.subr.mxu0 0.0
    %554 = vmatpush1.msra.mxu0 0.0
    %555 = vmatprep.subr.mxu0 0.0
    %556 = vmatpush1.msra.mxu0 0.0
    %557 = vmatprep.subr.mxu0 0.0
    %558 = vmatpush1.msra.mxu0 0.0
    %559 = vmatprep.subr.mxu0 0.0
    %560 = vmatpush1.msra.mxu0 0.0
    %561 = vmatprep.subr.mxu0 0.0
    %562 = vmatpush1.msra.mxu0 0.0
    %563 = vmatprep.subr.mxu0 0.0
    %564 = vmatpush1.msra.mxu0 0.0
    %565 = vmatprep.subr.mxu0 0.0
    %566 = vmatpush1.msra.mxu0 0.0
    %567 = vmatprep.subr.mxu0 0.0
    %568 = vmatpush1.msra.mxu0 0.0
    %569 = vmatprep.subr.mxu0 0.0
    %570 = vmatpush1.msra.mxu0 0.0
    %571 = vmatprep.mubr.f32.mxu0 0.0
    %572 = vmatmul.mubr.f32.gmra.mrb[0].mxu0 %v130
    %v573 = vpop.f32.mrb[0].mxu0
    %v574 = vadd.f32 0.0, %v573
    %v575 = vpop.f32.mrb[0].mxu0
    %576 = vmatprep.mubr.f32.mxu0 0.0
    %577 = vmatmul.mubr.f32.gmra.mrb[0].mxu0 %v133
    %v578 = vpop.f32.mrb[0].mxu0
    %v579 = vadd.f32 0.0, %v578
    %v580 = vpop.f32.mrb[0].mxu0
    %581 = vmatprep.mubr.f32.mxu0 0.0
    %582 = vmatmul.mubr.f32.gmra.mrb[0].mxu0 %v136
    %v583 = vpop.f32.mrb[0].mxu0
    %v584 = vadd.f32 0.0, %v583
    %v585 = vpop.f32.mrb[0].mxu0
    %586 = vmatprep.mubr.f32.mxu0 0.0
    %587 = vmatmul.mubr.f32.gmra.mrb[0].mxu0 %v139
    %v588 = vpop.f32.mrb[0].mxu0
    %v589 = vadd.f32 0.0, %v588
    %v590 = vpop.f32.mrb[0].mxu0
    %591 = vmatprep.mubr.f32.mxu0 0.0
    %592 = vmatmul.mubr.f32.gmra.mrb[0].mxu0 %v142
    %v593 = vpop.f32.mrb[0].mxu0
    %v594 = vadd.f32 0.0, %v593
    %v595 = vpop.f32.mrb[0].mxu0
    %596 = vmatprep.mubr.f32.mxu0 0.0
    %597 = vmatmul.mubr.f32.gmra.mrb[0].mxu0 %v145
    %v598 = vpop.f32.mrb[0].mxu0
    %v599 = vadd.f32 0.0, %v598
    %v600 = vpop.f32.mrb[0].mxu0
    %601 = vmatprep.mubr.f32.mxu0 0.0
    %602 = vmatmul.mubr.f32.gmra.mrb[0].mxu0 %v148
    %v603 = vpop.f32.mrb[0].mxu0
    %v604 = vadd.f32 0.0, %v603
    %v605 = vpop.f32.mrb[0].mxu0
    %606 = vmatprep.mubr.f32.mxu0 0.0
    %607 = vmatmul.mubr.f32.gmra.mrb[0].mxu0 %v151
    %v608 = vpop.f32.mrb[0].mxu0
    %v609 = vadd.f32 0.0, %v608
    %v610 = vpop.f32.mrb[0].mxu0
    %611 = vdwg.mxu0
    %s612 = scalar_lea.vmem [#allocation2], 128
    %v613 = vld [vmem:[%s612] sm:$0xff]
    %v614 = vld [vmem:[%s612 + $0x8] sm:$0xff]
    %v615 = vld [vmem:[%s612 + $0x10] sm:$0xff]
    %v616 = vld [vmem:[%s612 + $0x18] sm:$0xff]
    %v617 = vld [vmem:[%s612 + $0x20] sm:$0xff]
    %v618 = vld [vmem:[%s612 + $0x28] sm:$0xff]
    %v619 = vld [vmem:[%s612 + $0x30] sm:$0xff]
    %v620 = vld [vmem:[%s612 + $0x38] sm:$0xff]
    %v622 = vsel %vm374, %v613, 0
    %v625 = vsel %vm374, %v614, 0
    %v628 = vsel %vm374, %v615, 0
    %v631 = vsel %vm374, %v616, 0
    %v634 = vsel %vm374, %v617, 0
    %v637 = vsel %vm374, %v618, 0
    %v640 = vsel %vm374, %v619, 0
    %v643 = vsel %vm374, %v620, 0
    %645 = vmatprep.subr.mxu0 0.0
    %646 = vmatpush1.msra.mxu0 %v574
    %647 = vmatprep.subr.mxu0 0.0
    %648 = vmatpush1.msra.mxu0 %v579
    %649 = vmatprep.subr.mxu0 0.0
    %650 = vmatpush1.msra.mxu0 %v584
    %651 = vmatprep.subr.mxu0 0.0
    %652 = vmatpush1.msra.mxu0 %v589
    %653 = vmatprep.subr.mxu0 0.0
    %654 = vmatpush1.msra.mxu0 %v594
    %655 = vmatprep.subr.mxu0 0.0
    %656 = vmatpush1.msra.mxu0 %v599
    %657 = vmatprep.subr.mxu0 0.0
    %658 = vmatpush1.msra.mxu0 %v604
    %659 = vmatprep.subr.mxu0 0.0
    %660 = vmatpush1.msra.mxu0 %v609
    %661 = vmatprep.subr.mxu0 0.0
    %662 = vmatpush1.msra.mxu0 0.0
    %663 = vmatprep.subr.mxu0 0.0
    %664 = vmatpush1.msra.mxu0 0.0
    %665 = vmatprep.subr.mxu0 0.0
    %666 = vmatpush1.msra.mxu0 0.0
    %667 = vmatprep.subr.mxu0 0.0
    %668 = vmatpush1.msra.mxu0 0.0
    %669 = vmatprep.subr.mxu0 0.0
    %670 = vmatpush1.msra.mxu0 0.0
    %671 = vmatprep.subr.mxu0 0.0
    %672 = vmatpush1.msra.mxu0 0.0
    %673 = vmatprep.subr.mxu0 0.0
    %674 = vmatpush1.msra.mxu0 0.0
    %675 = vmatprep.subr.mxu0 0.0
    %676 = vmatpush1.msra.mxu0 0.0
    %677 = vmatprep.subr.mxu0 0.0
    %678 = vmatpush1.msra.mxu0 0.0
    %679 = vmatprep.subr.mxu0 0.0
    %680 = vmatpush1.msra.mxu0 0.0
    %681 = vmatprep.subr.mxu0 0.0
    %682 = vmatpush1.msra.mxu0 0.0
    %683 = vmatprep.subr.mxu0 0.0
    %684 = vmatpush1.msra.mxu0 0.0
    %685 = vmatprep.subr.mxu0 0.0
    %686 = vmatpush1.msra.mxu0 0.0
    %687 = vmatprep.subr.mxu0 0.0
    %688 = vmatpush1.msra.mxu0 0.0
    %689 = vmatprep.subr.mxu0 0.0
    %690 = vmatpush1.msra.mxu0 0.0
    %691 = vmatprep.subr.mxu0 0.0
    %692 = vmatpush1.msra.mxu0 0.0
    %693 = vmatprep.subr.mxu0 0.0
    %694 = vmatpush1.msra.mxu0 0.0
    %695 = vmatprep.subr.mxu0 0.0
    %696 = vmatpush1.msra.mxu0 0.0
    %697 = vmatprep.subr.mxu0 0.0
    %698 = vmatpush1.msra.mxu0 0.0
    %699 = vmatprep.subr.mxu0 0.0
    %700 = vmatpush1.msra.mxu0 0.0
    %701 = vmatprep.subr.mxu0 0.0
    %702 = vmatpush1.msra.mxu0 0.0
    %703 = vmatprep.subr.mxu0 0.0
    %704 = vmatpush1.msra.mxu0 0.0
    %705 = vmatprep.subr.mxu0 0.0
    %706 = vmatpush1.msra.mxu0 0.0
    %707 = vmatprep.subr.mxu0 0.0
    %708 = vmatpush1.msra.mxu0 0.0
    %709 = vmatprep.mubr.f32.mxu0 0.0
    %710 = vmatmul.mubr.f32.gmra.mrb[0].mxu0 %v622
    %v711 = vpop.f32.mrb[0].mxu0
    %v712 = vadd.f32 0.0, %v711
    %v713 = vpop.f32.mrb[0].mxu0
    %714 = vmatprep.mubr.f32.mxu0 0.0
    %715 = vmatmul.mubr.f32.gmra.mrb[0].mxu0 %v625
    %v716 = vpop.f32.mrb[0].mxu0
    %v717 = vadd.f32 0.0, %v716
    %v718 = vpop.f32.mrb[0].mxu0
    %719 = vmatprep.mubr.f32.mxu0 0.0
    %720 = vmatmul.mubr.f32.gmra.mrb[0].mxu0 %v628
    %v721 = vpop.f32.mrb[0].mxu0
    %v722 = vadd.f32 0.0, %v721
    %v723 = vpop.f32.mrb[0].mxu0
    %724 = vmatprep.mubr.f32.mxu0 0.0
    %725 = vmatmul.mubr.f32.gmra.mrb[0].mxu0 %v631
    %v726 = vpop.f32.mrb[0].mxu0
    %v727 = vadd.f32 0.0, %v726
    %v728 = vpop.f32.mrb[0].mxu0
    %729 = vmatprep.mubr.f32.mxu0 0.0
    %730 = vmatmul.mubr.f32.gmra.mrb[0].mxu0 %v634
    %v731 = vpop.f32.mrb[0].mxu0
    %v732 = vadd.f32 0.0, %v731
    %v733 = vpop.f32.mrb[0].mxu0
    %734 = vmatprep.mubr.f32.mxu0 0.0
    %735 = vmatmul.mubr.f32.gmra.mrb[0].mxu0 %v637
    %v736 = vpop.f32.mrb[0].mxu0
    %v737 = vadd.f32 0.0, %v736
    %v738 = vpop.f32.mrb[0].mxu0
    %739 = vmatprep.mubr.f32.mxu0 0.0
    %740 = vmatmul.mubr.f32.gmra.mrb[0].mxu0 %v640
    %v741 = vpop.f32.mrb[0].mxu0
    %v742 = vadd.f32 0.0, %v741
    %v743 = vpop.f32.mrb[0].mxu0
    %744 = vmatprep.mubr.f32.mxu0 0.0
    %745 = vmatmul.mubr.f32.gmra.mrb[0].mxu0 %v643
    %v746 = vpop.f32.mrb[0].mxu0
    %v747 = vadd.f32 0.0, %v746
    %v748 = vpop.f32.mrb[0].mxu0
    %749 = vdwg.mxu0
    %v750 = vadd.f32 %v466, %v712
    %v751 = vadd.f32 %v471, %v717
    %v752 = vadd.f32 %v476, %v722
    %v753 = vadd.f32 %v481, %v727
    %v754 = vadd.f32 %v486, %v732
    %v755 = vadd.f32 %v491, %v737
    %v756 = vadd.f32 %v496, %v742
    %v757 = vadd.f32 %v501, %v747
    %v758 = vld [vmem:[#allocation6] sm:$0x1]
    %v759 = vlaneseq
    %v760 = vshrl.u32 %v759, 7
    %v761 = vsub.s32 0, %v760
    %v762 = vrot.slane %v758, %v761
    %v763 = vadd.f32 %v750, %v762
    %v764 = vadd.f32 %v751, %v762
    %v765 = vadd.f32 %v752, %v762
    %v766 = vadd.f32 %v753, %v762
    %v767 = vadd.f32 %v754, %v762
    %v768 = vadd.f32 %v755, %v762
    %v769 = vadd.f32 %v756, %v762
    %v770 = vadd.f32 %v757, %v762
    %v771 = vmax.f32 %v763, 0.0
    %v772 = vmax.f32 %v764, 0.0
    %v773 = vmax.f32 %v765, 0.0
    %v774 = vmax.f32 %v766, 0.0
    %v775 = vmax.f32 %v767, 0.0
    %v776 = vmax.f32 %v768, 0.0
    %v777 = vmax.f32 %v769, 0.0
    %v778 = vmax.f32 %v770, 0.0
    %v779 = vld [vmem:[#allocation6 + $0x1] sm:$0x1]
    %v780 = vlaneseq
    %v781 = vshrl.u32 %v780, 7
    %v782 = vsub.s32 0, %v781
    %v783 = vrot.slane %v779, %v782
    %v784 = vadd.f32 %v771, %v783
    %v785 = vadd.f32 %v772, %v783
    %v786 = vadd.f32 %v773, %v783
    %v787 = vadd.f32 %v774, %v783
    %v788 = vadd.f32 %v775, %v783
    %v789 = vadd.f32 %v776, %v783
    %v790 = vadd.f32 %v777, %v783
    %v791 = vadd.f32 %v778, %v783
    %v792 = vld [vmem:[#allocation7] sm:$0xff]
    %v793 = vld [vmem:[#allocation7 + $0x8] sm:$0xff]
    %v794 = vld [vmem:[#allocation7 + $0x10] sm:$0xff]
    %v795 = vld [vmem:[#allocation7 + $0x18] sm:$0xff]
    %v796 = vld [vmem:[#allocation7 + $0x20] sm:$0xff]
    %v797 = vld [vmem:[#allocation7 + $0x28] sm:$0xff]
    %v798 = vld [vmem:[#allocation7 + $0x30] sm:$0xff]
    %v799 = vld [vmem:[#allocation7 + $0x38] sm:$0xff]
    %v801 = vsel %vm374, %v784, 0
    %v804 = vsel %vm374, %v785, 0
    %v807 = vsel %vm374, %v786, 0
    %v810 = vsel %vm374, %v787, 0
    %v813 = vsel %vm374, %v788, 0
    %v816 = vsel %vm374, %v789, 0
    %v819 = vsel %vm374, %v790, 0
    %v822 = vsel %vm374, %v791, 0
    %824 = vmatprep.subr.mxu0 0.0
    %825 = vmatpush1.msra.mxu0 %v792
    %826 = vmatprep.subr.mxu0 0.0
    %827 = vmatpush1.msra.mxu0 %v793
    %828 = vmatprep.subr.mxu0 0.0
    %829 = vmatpush1.msra.mxu0 %v794
    %830 = vmatprep.subr.mxu0 0.0
    %831 = vmatpush1.msra.mxu0 %v795
    %832 = vmatprep.subr.mxu0 0.0
    %833 = vmatpush1.msra.mxu0 %v796
    %834 = vmatprep.subr.mxu0 0.0
    %835 = vmatpush1.msra.mxu0 %v797
    %836 = vmatprep.subr.mxu0 0.0
    %837 = vmatpush1.msra.mxu0 %v798
    %838 = vmatprep.subr.mxu0 0.0
    %839 = vmatpush1.msra.mxu0 %v799
    %840 = vmatprep.subr.mxu0 0.0
    %841 = vmatpush1.msra.mxu0 0.0
    %842 = vmatprep.subr.mxu0 0.0
    %843 = vmatpush1.msra.mxu0 0.0
    %844 = vmatprep.subr.mxu0 0.0
    %845 = vmatpush1.msra.mxu0 0.0
    %846 = vmatprep.subr.mxu0 0.0
    %847 = vmatpush1.msra.mxu0 0.0
    %848 = vmatprep.subr.mxu0 0.0
    %849 = vmatpush1.msra.mxu0 0.0
    %850 = vmatprep.subr.mxu0 0.0
    %851 = vmatpush1.msra.mxu0 0.0
    %852 = vmatprep.subr.mxu0 0.0
    %853 = vmatpush1.msra.mxu0 0.0
    %854 = vmatprep.subr.mxu0 0.0
    %855 = vmatpush1.msra.mxu0 0.0
    %856 = vmatprep.subr.mxu0 0.0
    %857 = vmatpush1.msra.mxu0 0.0
    %858 = vmatprep.subr.mxu0 0.0
    %859 = vmatpush1.msra.mxu0 0.0
    %860 = vmatprep.subr.mxu0 0.0
    %861 = vmatpush1.msra.mxu0 0.0
    %862 = vmatprep.subr.mxu0 0.0
    %863 = vmatpush1.msra.mxu0 0.0
    %864 = vmatprep.subr.mxu0 0.0
    %865 = vmatpush1.msra.mxu0 0.0
    %866 = vmatprep.subr.mxu0 0.0
    %867 = vmatpush1.msra.mxu0 0.0
    %868 = vmatprep.subr.mxu0 0.0
    %869 = vmatpush1.msra.mxu0 0.0
    %870 = vmatprep.subr.mxu0 0.0
    %871 = vmatpush1.msra.mxu0 0.0
    %872 = vmatprep.subr.mxu0 0.0
    %873 = vmatpush1.msra.mxu0 0.0
    %874 = vmatprep.subr.mxu0 0.0
    %875 = vmatpush1.msra.mxu0 0.0
    %876 = vmatprep.subr.mxu0 0.0
    %877 = vmatpush1.msra.mxu0 0.0
    %878 = vmatprep.subr.mxu0 0.0
    %879 = vmatpush1.msra.mxu0 0.0
    %880 = vmatprep.subr.mxu0 0.0
    %881 = vmatpush1.msra.mxu0 0.0
    %882 = vmatprep.subr.mxu0 0.0
    %883 = vmatpush1.msra.mxu0 0.0
    %884 = vmatprep.subr.mxu0 0.0
    %885 = vmatpush1.msra.mxu0 0.0
    %886 = vmatprep.subr.mxu0 0.0
    %887 = vmatpush1.msra.mxu0 0.0
    %888 = vmatprep.mubr.f32.mxu0 0.0
    %889 = vmatmul.mubr.f32.gmra.mrb[0].mxu0 %v801
    %v890 = vpop.f32.mrb[0].mxu0
    %v891 = vadd.f32 0.0, %v890
    %v892 = vpop.f32.mrb[0].mxu0
    %893 = vmatprep.mubr.f32.mxu0 0.0
    %894 = vmatmul.mubr.f32.gmra.mrb[0].mxu0 %v804
    %v895 = vpop.f32.mrb[0].mxu0
    %v896 = vadd.f32 0.0, %v895
    %v897 = vpop.f32.mrb[0].mxu0
    %898 = vmatprep.mubr.f32.mxu0 0.0
    %899 = vmatmul.mubr.f32.gmra.mrb[0].mxu0 %v807
    %v900 = vpop.f32.mrb[0].mxu0
    %v901 = vadd.f32 0.0, %v900
    %v902 = vpop.f32.mrb[0].mxu0
    %903 = vmatprep.mubr.f32.mxu0 0.0
    %904 = vmatmul.mubr.f32.gmra.mrb[0].mxu0 %v810
    %v905 = vpop.f32.mrb[0].mxu0
    %v906 = vadd.f32 0.0, %v905
    %v907 = vpop.f32.mrb[0].mxu0
    %908 = vmatprep.mubr.f32.mxu0 0.0
    %909 = vmatmul.mubr.f32.gmra.mrb[0].mxu0 %v813
    %v910 = vpop.f32.mrb[0].mxu0
    %v911 = vadd.f32 0.0, %v910
    %v912 = vpop.f32.mrb[0].mxu0
    %913 = vmatprep.mubr.f32.mxu0 0.0
    %914 = vmatmul.mubr.f32.gmra.mrb[0].mxu0 %v816
    %v915 = vpop.f32.mrb[0].mxu0
    %v916 = vadd.f32 0.0, %v915
    %v917 = vpop.f32.mrb[0].mxu0
    %918 = vmatprep.mubr.f32.mxu0 0.0
    %919 = vmatmul.mubr.f32.gmra.mrb[0].mxu0 %v819
    %v920 = vpop.f32.mrb[0].mxu0
    %v921 = vadd.f32 0.0, %v920
    %v922 = vpop.f32.mrb[0].mxu0
    %923 = vmatprep.mubr.f32.mxu0 0.0
    %924 = vmatmul.mubr.f32.gmra.mrb[0].mxu0 %v822
    %v925 = vpop.f32.mrb[0].mxu0
    %v926 = vadd.f32 0.0, %v925
    %v927 = vpop.f32.mrb[0].mxu0
    %928 = vdwg.mxu0
    %s929 = scalar_lea.vmem [#allocation7], 64
    %v930 = vld [vmem:[%s929] sm:$0xff]
    %v931 = vld [vmem:[%s929 + $0x8] sm:$0xff]
    %v932 = vld [vmem:[%s929 + $0x10] sm:$0xff]
    %v933 = vld [vmem:[%s929 + $0x18] sm:$0xff]
    %v934 = vld [vmem:[%s929 + $0x20] sm:$0xff]
    %v935 = vld [vmem:[%s929 + $0x28] sm:$0xff]
    %v936 = vld [vmem:[%s929 + $0x30] sm:$0xff]
    %v937 = vld [vmem:[%s929 + $0x38] sm:$0xff]
    %938 = vmatprep.subr.mxu0 0.0
    %939 = vmatpush1.msra.mxu0 %v930
    %940 = vmatprep.subr.mxu0 0.0
    %941 = vmatpush1.msra.mxu0 %v931
    %942 = vmatprep.subr.mxu0 0.0
    %943 = vmatpush1.msra.mxu0 %v932
    %944 = vmatprep.subr.mxu0 0.0
    %945 = vmatpush1.msra.mxu0 %v933
    %946 = vmatprep.subr.mxu0 0.0
    %947 = vmatpush1.msra.mxu0 %v934
    %948 = vmatprep.subr.mxu0 0.0
    %949 = vmatpush1.msra.mxu0 %v935
    %950 = vmatprep.subr.mxu0 0.0
    %951 = vmatpush1.msra.mxu0 %v936
    %952 = vmatprep.subr.mxu0 0.0
    %953 = vmatpush1.msra.mxu0 %v937
    %954 = vmatprep.subr.mxu0 0.0
    %955 = vmatpush1.msra.mxu0 0.0
    %956 = vmatprep.subr.mxu0 0.0
    %957 = vmatpush1.msra.mxu0 0.0
    %958 = vmatprep.subr.mxu0 0.0
    %959 = vmatpush1.msra.mxu0 0.0
    %960 = vmatprep.subr.mxu0 0.0
    %961 = vmatpush1.msra.mxu0 0.0
    %962 = vmatprep.subr.mxu0 0.0
    %963 = vmatpush1.msra.mxu0 0.0
    %964 = vmatprep.subr.mxu0 0.0
    %965 = vmatpush1.msra.mxu0 0.0
    %966 = vmatprep.subr.mxu0 0.0
    %967 = vmatpush1.msra.mxu0 0.0
    %968 = vmatprep.subr.mxu0 0.0
    %969 = vmatpush1.msra.mxu0 0.0
    %970 = vmatprep.subr.mxu0 0.0
    %971 = vmatpush1.msra.mxu0 0.0
    %972 = vmatprep.subr.mxu0 0.0
    %973 = vmatpush1.msra.mxu0 0.0
    %974 = vmatprep.subr.mxu0 0.0
    %975 = vmatpush1.msra.mxu0 0.0
    %976 = vmatprep.subr.mxu0 0.0
    %977 = vmatpush1.msra.mxu0 0.0
    %978 = vmatprep.subr.mxu0 0.0
    %979 = vmatpush1.msra.mxu0 0.0
    %980 = vmatprep.subr.mxu0 0.0
    %981 = vmatpush1.msra.mxu0 0.0
    %982 = vmatprep.subr.mxu0 0.0
    %983 = vmatpush1.msra.mxu0 0.0
    %984 = vmatprep.subr.mxu0 0.0
    %985 = vmatpush1.msra.mxu0 0.0
    %986 = vmatprep.subr.mxu0 0.0
    %987 = vmatpush1.msra.mxu0 0.0
    %988 = vmatprep.subr.mxu0 0.0
    %989 = vmatpush1.msra.mxu0 0.0
    %990 = vmatprep.subr.mxu0 0.0
    %991 = vmatpush1.msra.mxu0 0.0
    %992 = vmatprep.subr.mxu0 0.0
    %993 = vmatpush1.msra.mxu0 0.0
    %994 = vmatprep.subr.mxu0 0.0
    %995 = vmatpush1.msra.mxu0 0.0
    %996 = vmatprep.subr.mxu0 0.0
    %997 = vmatpush1.msra.mxu0 0.0
    %998 = vmatprep.subr.mxu0 0.0
    %999 = vmatpush1.msra.mxu0 0.0
    %1000 = vmatprep.subr.mxu0 0.0
    %1001 = vmatpush1.msra.mxu0 0.0
    %1002 = vmatprep.mubr.f32.mxu0 0.0
    %1003 = vmatmul.mubr.f32.gmra.mrb[0].mxu0 %v801
    %v1004 = vpop.f32.mrb[0].mxu0
    %v1005 = vadd.f32 0.0, %v1004
    %v1006 = vpop.f32.mrb[0].mxu0
    %1007 = vmatprep.mubr.f32.mxu0 0.0
    %1008 = vmatmul.mubr.f32.gmra.mrb[0].mxu0 %v804
    %v1009 = vpop.f32.mrb[0].mxu0
    %v1010 = vadd.f32 0.0, %v1009
    %v1011 = vpop.f32.mrb[0].mxu0
    %1012 = vmatprep.mubr.f32.mxu0 0.0
    %1013 = vmatmul.mubr.f32.gmra.mrb[0].mxu0 %v807
    %v1014 = vpop.f32.mrb[0].mxu0
    %v1015 = vadd.f32 0.0, %v1014
    %v1016 = vpop.f32.mrb[0].mxu0
    %1017 = vmatprep.mubr.f32.mxu0 0.0
    %1018 = vmatmul.mubr.f32.gmra.mrb[0].mxu0 %v810
    %v1019 = vpop.f32.mrb[0].mxu0
    %v1020 = vadd.f32 0.0, %v1019
    %v1021 = vpop.f32.mrb[0].mxu0
    %1022 = vmatprep.mubr.f32.mxu0 0.0
    %1023 = vmatmul.mubr.f32.gmra.mrb[0].mxu0 %v813
    %v1024 = vpop.f32.mrb[0].mxu0
    %v1025 = vadd.f32 0.0, %v1024
    %v1026 = vpop.f32.mrb[0].mxu0
    %1027 = vmatprep.mubr.f32.mxu0 0.0
    %1028 = vmatmul.mubr.f32.gmra.mrb[0].mxu0 %v816
    %v1029 = vpop.f32.mrb[0].mxu0
    %v1030 = vadd.f32 0.0, %v1029
    %v1031 = vpop.f32.mrb[0].mxu0
    %1032 = vmatprep.mubr.f32.mxu0 0.0
    %1033 = vmatmul.mubr.f32.gmra.mrb[0].mxu0 %v819
    %v1034 = vpop.f32.mrb[0].mxu0
    %v1035 = vadd.f32 0.0, %v1034
    %v1036 = vpop.f32.mrb[0].mxu0
    %1037 = vmatprep.mubr.f32.mxu0 0.0
    %1038 = vmatmul.mubr.f32.gmra.mrb[0].mxu0 %v822
    %v1039 = vpop.f32.mrb[0].mxu0
    %v1040 = vadd.f32 0.0, %v1039
    %v1041 = vpop.f32.mrb[0].mxu0
    %1042 = vdwg.mxu0
    %1043 = vmatprep.subr.mxu0 0.0
    %1044 = vmatpush1.msra.mxu0 %v891
    %1045 = vmatprep.subr.mxu0 0.0
    %1046 = vmatpush1.msra.mxu0 %v896
    %1047 = vmatprep.subr.mxu0 0.0
    %1048 = vmatpush1.msra.mxu0 %v901
    %1049 = vmatprep.subr.mxu0 0.0
    %1050 = vmatpush1.msra.mxu0 %v906
    %1051 = vmatprep.subr.mxu0 0.0
    %1052 = vmatpush1.msra.mxu0 %v911
    %1053 = vmatprep.subr.mxu0 0.0
    %1054 = vmatpush1.msra.mxu0 %v916
    %1055 = vmatprep.subr.mxu0 0.0
    %1056 = vmatpush1.msra.mxu0 %v921
    %1057 = vmatprep.subr.mxu0 0.0
    %1058 = vmatpush1.msra.mxu0 %v926
    %1059 = vmatprep.subr.mxu0 0.0
    %1060 = vmatpush1.msra.mxu0 0.0
    %1061 = vmatprep.subr.mxu0 0.0
    %1062 = vmatpush1.msra.mxu0 0.0
    %1063 = vmatprep.subr.mxu0 0.0
    %1064 = vmatpush1.msra.mxu0 0.0
    %1065 = vmatprep.subr.mxu0 0.0
    %1066 = vmatpush1.msra.mxu0 0.0
    %1067 = vmatprep.subr.mxu0 0.0
    %1068 = vmatpush1.msra.mxu0 0.0
    %1069 = vmatprep.subr.mxu0 0.0
    %1070 = vmatpush1.msra.mxu0 0.0
    %1071 = vmatprep.subr.mxu0 0.0
    %1072 = vmatpush1.msra.mxu0 0.0
    %1073 = vmatprep.subr.mxu0 0.0
    %1074 = vmatpush1.msra.mxu0 0.0
    %1075 = vmatprep.subr.mxu0 0.0
    %1076 = vmatpush1.msra.mxu0 0.0
    %1077 = vmatprep.subr.mxu0 0.0
    %1078 = vmatpush1.msra.mxu0 0.0
    %1079 = vmatprep.subr.mxu0 0.0
    %1080 = vmatpush1.msra.mxu0 0.0
    %1081 = vmatprep.subr.mxu0 0.0
    %1082 = vmatpush1.msra.mxu0 0.0
    %1083 = vmatprep.subr.mxu0 0.0
    %1084 = vmatpush1.msra.mxu0 0.0
    %1085 = vmatprep.subr.mxu0 0.0
    %1086 = vmatpush1.msra.mxu0 0.0
    %1087 = vmatprep.subr.mxu0 0.0
    %1088 = vmatpush1.msra.mxu0 0.0
    %1089 = vmatprep.subr.mxu0 0.0
    %1090 = vmatpush1.msra.mxu0 0.0
    %1091 = vmatprep.subr.mxu0 0.0
    %1092 = vmatpush1.msra.mxu0 0.0
    %1093 = vmatprep.subr.mxu0 0.0
    %1094 = vmatpush1.msra.mxu0 0.0
    %1095 = vmatprep.subr.mxu0 0.0
    %1096 = vmatpush1.msra.mxu0 0.0
    %1097 = vmatprep.subr.mxu0 0.0
    %1098 = vmatpush1.msra.mxu0 0.0
    %1099 = vmatprep.subr.mxu0 0.0
    %1100 = vmatpush1.msra.mxu0 0.0
    %1101 = vmatprep.subr.mxu0 0.0
    %1102 = vmatpush1.msra.mxu0 0.0
    %1103 = vmatprep.subr.mxu0 0.0
    %1104 = vmatpush1.msra.mxu0 0.0
    %1105 = vmatprep.subr.mxu0 0.0
    %1106 = vmatpush1.msra.mxu0 0.0
    %1107 = vmatprep.mubr.f32.mxu0 0.0
    %1108 = vmatmul.mubr.f32.gmra.mrb[0].mxu0 %v376
    %v1109 = vpop.f32.mrb[0].mxu0
    %v1110 = vadd.f32 %v1005, %v1109
    %v1111 = vpop.f32.mrb[0].mxu0
    %1112 = vmatprep.mubr.f32.mxu0 0.0
    %1113 = vmatmul.mubr.f32.gmra.mrb[0].mxu0 %v379
    %v1114 = vpop.f32.mrb[0].mxu0
    %v1115 = vadd.f32 %v1010, %v1114
    %v1116 = vpop.f32.mrb[0].mxu0
    %1117 = vmatprep.mubr.f32.mxu0 0.0
    %1118 = vmatmul.mubr.f32.gmra.mrb[0].mxu0 %v382
    %v1119 = vpop.f32.mrb[0].mxu0
    %v1120 = vadd.f32 %v1015, %v1119
    %v1121 = vpop.f32.mrb[0].mxu0
    %1122 = vmatprep.mubr.f32.mxu0 0.0
    %1123 = vmatmul.mubr.f32.gmra.mrb[0].mxu0 %v385
    %v1124 = vpop.f32.mrb[0].mxu0
    %v1125 = vadd.f32 %v1020, %v1124
    %v1126 = vpop.f32.mrb[0].mxu0
    %1127 = vmatprep.mubr.f32.mxu0 0.0
    %1128 = vmatmul.mubr.f32.gmra.mrb[0].mxu0 %v388
    %v1129 = vpop.f32.mrb[0].mxu0
    %v1130 = vadd.f32 %v1025, %v1129
    %v1131 = vpop.f32.mrb[0].mxu0
    %1132 = vmatprep.mubr.f32.mxu0 0.0
    %1133 = vmatmul.mubr.f32.gmra.mrb[0].mxu0 %v391
    %v1134 = vpop.f32.mrb[0].mxu0
    %v1135 = vadd.f32 %v1030, %v1134
    %v1136 = vpop.f32.mrb[0].mxu0
    %1137 = vmatprep.mubr.f32.mxu0 0.0
    %1138 = vmatmul.mubr.f32.gmra.mrb[0].mxu0 %v394
    %v1139 = vpop.f32.mrb[0].mxu0
    %v1140 = vadd.f32 %v1035, %v1139
    %v1141 = vpop.f32.mrb[0].mxu0
    %1142 = vmatprep.mubr.f32.mxu0 0.0
    %1143 = vmatmul.mubr.f32.gmra.mrb[0].mxu0 %v397
    %v1144 = vpop.f32.mrb[0].mxu0
    %v1145 = vadd.f32 %v1040, %v1144
    %v1146 = vpop.f32.mrb[0].mxu0
    %1147 = vdwg.mxu0
    %s1148 = scalar_lea.vmem [#allocation7], 128
    %v1149 = vld [vmem:[%s1148] sm:$0xff]
    %v1150 = vld [vmem:[%s1148 + $0x8] sm:$0xff]
    %v1151 = vld [vmem:[%s1148 + $0x10] sm:$0xff]
    %v1152 = vld [vmem:[%s1148 + $0x18] sm:$0xff]
    %v1153 = vld [vmem:[%s1148 + $0x20] sm:$0xff]
    %v1154 = vld [vmem:[%s1148 + $0x28] sm:$0xff]
    %v1155 = vld [vmem:[%s1148 + $0x30] sm:$0xff]
    %v1156 = vld [vmem:[%s1148 + $0x38] sm:$0xff]
    %1157 = vmatprep.subr.mxu0 0.0
    %1158 = vmatpush1.msra.mxu0 %v1149
    %1159 = vmatprep.subr.mxu0 0.0
    %1160 = vmatpush1.msra.mxu0 %v1150
    %1161 = vmatprep.subr.mxu0 0.0
    %1162 = vmatpush1.msra.mxu0 %v1151
    %1163 = vmatprep.subr.mxu0 0.0
    %1164 = vmatpush1.msra.mxu0 %v1152
    %1165 = vmatprep.subr.mxu0 0.0
    %1166 = vmatpush1.msra.mxu0 %v1153
    %1167 = vmatprep.subr.mxu0 0.0
    %1168 = vmatpush1.msra.mxu0 %v1154
    %1169 = vmatprep.subr.mxu0 0.0
    %1170 = vmatpush1.msra.mxu0 %v1155
    %1171 = vmatprep.subr.mxu0 0.0
    %1172 = vmatpush1.msra.mxu0 %v1156
    %1173 = vmatprep.subr.mxu0 0.0
    %1174 = vmatpush1.msra.mxu0 0.0
    %1175 = vmatprep.subr.mxu0 0.0
    %1176 = vmatpush1.msra.mxu0 0.0
    %1177 = vmatprep.subr.mxu0 0.0
    %1178 = vmatpush1.msra.mxu0 0.0
    %1179 = vmatprep.subr.mxu0 0.0
    %1180 = vmatpush1.msra.mxu0 0.0
    %1181 = vmatprep.subr.mxu0 0.0
    %1182 = vmatpush1.msra.mxu0 0.0
    %1183 = vmatprep.subr.mxu0 0.0
    %1184 = vmatpush1.msra.mxu0 0.0
    %1185 = vmatprep.subr.mxu0 0.0
    %1186 = vmatpush1.msra.mxu0 0.0
    %1187 = vmatprep.subr.mxu0 0.0
    %1188 = vmatpush1.msra.mxu0 0.0
    %1189 = vmatprep.subr.mxu0 0.0
    %1190 = vmatpush1.msra.mxu0 0.0
    %1191 = vmatprep.subr.mxu0 0.0
    %1192 = vmatpush1.msra.mxu0 0.0
    %1193 = vmatprep.subr.mxu0 0.0
    %1194 = vmatpush1.msra.mxu0 0.0
    %1195 = vmatprep.subr.mxu0 0.0
    %1196 = vmatpush1.msra.mxu0 0.0
    %1197 = vmatprep.subr.mxu0 0.0
    %1198 = vmatpush1.msra.mxu0 0.0
    %1199 = vmatprep.subr.mxu0 0.0
    %1200 = vmatpush1.msra.mxu0 0.0
    %1201 = vmatprep.subr.mxu0 0.0
    %1202 = vmatpush1.msra.mxu0 0.0
    %1203 = vmatprep.subr.mxu0 0.0
    %1204 = vmatpush1.msra.mxu0 0.0
    %1205 = vmatprep.subr.mxu0 0.0
    %1206 = vmatpush1.msra.mxu0 0.0
    %1207 = vmatprep.subr.mxu0 0.0
    %1208 = vmatpush1.msra.mxu0 0.0
    %1209 = vmatprep.subr.mxu0 0.0
    %1210 = vmatpush1.msra.mxu0 0.0
    %1211 = vmatprep.subr.mxu0 0.0
    %1212 = vmatpush1.msra.mxu0 0.0
    %1213 = vmatprep.subr.mxu0 0.0
    %1214 = vmatpush1.msra.mxu0 0.0
    %1215 = vmatprep.subr.mxu0 0.0
    %1216 = vmatpush1.msra.mxu0 0.0
    %1217 = vmatprep.subr.mxu0 0.0
    %1218 = vmatpush1.msra.mxu0 0.0
    %1219 = vmatprep.subr.mxu0 0.0
    %1220 = vmatpush1.msra.mxu0 0.0
    %1221 = vmatprep.mubr.f32.mxu0 0.0
    %1222 = vmatmul.mubr.f32.gmra.mrb[0].mxu0 %v801
    %v1223 = vpop.f32.mrb[0].mxu0
    %v1224 = vadd.f32 0.0, %v1223
    %v1225 = vpop.f32.mrb[0].mxu0
    %1226 = vmatprep.mubr.f32.mxu0 0.0
    %1227 = vmatmul.mubr.f32.gmra.mrb[0].mxu0 %v804
    %v1228 = vpop.f32.mrb[0].mxu0
    %v1229 = vadd.f32 0.0, %v1228
    %v1230 = vpop.f32.mrb[0].mxu0
    %1231 = vmatprep.mubr.f32.mxu0 0.0
    %1232 = vmatmul.mubr.f32.gmra.mrb[0].mxu0 %v807
    %v1233 = vpop.f32.mrb[0].mxu0
    %v1234 = vadd.f32 0.0, %v1233
    %v1235 = vpop.f32.mrb[0].mxu0
    %1236 = vmatprep.mubr.f32.mxu0 0.0
    %1237 = vmatmul.mubr.f32.gmra.mrb[0].mxu0 %v810
    %v1238 = vpop.f32.mrb[0].mxu0
    %v1239 = vadd.f32 0.0, %v1238
    %v1240 = vpop.f32.mrb[0].mxu0
    %1241 = vmatprep.mubr.f32.mxu0 0.0
    %1242 = vmatmul.mubr.f32.gmra.mrb[0].mxu0 %v813
    %v1243 = vpop.f32.mrb[0].mxu0
    %v1244 = vadd.f32 0.0, %v1243
    %v1245 = vpop.f32.mrb[0].mxu0
    %1246 = vmatprep.mubr.f32.mxu0 0.0
    %1247 = vmatmul.mubr.f32.gmra.mrb[0].mxu0 %v816
    %v1248 = vpop.f32.mrb[0].mxu0
    %v1249 = vadd.f32 0.0, %v1248
    %v1250 = vpop.f32.mrb[0].mxu0
    %1251 = vmatprep.mubr.f32.mxu0 0.0
    %1252 = vmatmul.mubr.f32.gmra.mrb[0].mxu0 %v819
    %v1253 = vpop.f32.mrb[0].mxu0
    %v1254 = vadd.f32 0.0, %v1253
    %v1255 = vpop.f32.mrb[0].mxu0
    %1256 = vmatprep.mubr.f32.mxu0 0.0
    %1257 = vmatmul.mubr.f32.gmra.mrb[0].mxu0 %v822
    %v1258 = vpop.f32.mrb[0].mxu0
    %v1259 = vadd.f32 0.0, %v1258
    %v1260 = vpop.f32.mrb[0].mxu0
    %1261 = vdwg.mxu0
    %1262 = vmatprep.subr.mxu0 0.0
    %1263 = vmatpush1.msra.mxu0 %v1224
    %1264 = vmatprep.subr.mxu0 0.0
    %1265 = vmatpush1.msra.mxu0 %v1229
    %1266 = vmatprep.subr.mxu0 0.0
    %1267 = vmatpush1.msra.mxu0 %v1234
    %1268 = vmatprep.subr.mxu0 0.0
    %1269 = vmatpush1.msra.mxu0 %v1239
    %1270 = vmatprep.subr.mxu0 0.0
    %1271 = vmatpush1.msra.mxu0 %v1244
    %1272 = vmatprep.subr.mxu0 0.0
    %1273 = vmatpush1.msra.mxu0 %v1249
    %1274 = vmatprep.subr.mxu0 0.0
    %1275 = vmatpush1.msra.mxu0 %v1254
    %1276 = vmatprep.subr.mxu0 0.0
    %1277 = vmatpush1.msra.mxu0 %v1259
    %1278 = vmatprep.subr.mxu0 0.0
    %1279 = vmatpush1.msra.mxu0 0.0
    %1280 = vmatprep.subr.mxu0 0.0
    %1281 = vmatpush1.msra.mxu0 0.0
    %1282 = vmatprep.subr.mxu0 0.0
    %1283 = vmatpush1.msra.mxu0 0.0
    %1284 = vmatprep.subr.mxu0 0.0
    %1285 = vmatpush1.msra.mxu0 0.0
    %1286 = vmatprep.subr.mxu0 0.0
    %1287 = vmatpush1.msra.mxu0 0.0
    %1288 = vmatprep.subr.mxu0 0.0
    %1289 = vmatpush1.msra.mxu0 0.0
    %1290 = vmatprep.subr.mxu0 0.0
    %1291 = vmatpush1.msra.mxu0 0.0
    %1292 = vmatprep.subr.mxu0 0.0
    %1293 = vmatpush1.msra.mxu0 0.0
    %1294 = vmatprep.subr.mxu0 0.0
    %1295 = vmatpush1.msra.mxu0 0.0
    %1296 = vmatprep.subr.mxu0 0.0
    %1297 = vmatpush1.msra.mxu0 0.0
    %1298 = vmatprep.subr.mxu0 0.0
    %1299 = vmatpush1.msra.mxu0 0.0
    %1300 = vmatprep.subr.mxu0 0.0
    %1301 = vmatpush1.msra.mxu0 0.0
    %1302 = vmatprep.subr.mxu0 0.0
    %1303 = vmatpush1.msra.mxu0 0.0
    %1304 = vmatprep.subr.mxu0 0.0
    %1305 = vmatpush1.msra.mxu0 0.0
    %1306 = vmatprep.subr.mxu0 0.0
    %1307 = vmatpush1.msra.mxu0 0.0
    %1308 = vmatprep.subr.mxu0 0.0
    %1309 = vmatpush1.msra.mxu0 0.0
    %1310 = vmatprep.subr.mxu0 0.0
    %1311 = vmatpush1.msra.mxu0 0.0
    %1312 = vmatprep.subr.mxu0 0.0
    %1313 = vmatpush1.msra.mxu0 0.0
    %1314 = vmatprep.subr.mxu0 0.0
    %1315 = vmatpush1.msra.mxu0 0.0
    %1316 = vmatprep.subr.mxu0 0.0
    %1317 = vmatpush1.msra.mxu0 0.0
    %1318 = vmatprep.subr.mxu0 0.0
    %1319 = vmatpush1.msra.mxu0 0.0
    %1320 = vmatprep.subr.mxu0 0.0
    %1321 = vmatpush1.msra.mxu0 0.0
    %1322 = vmatprep.subr.mxu0 0.0
    %1323 = vmatpush1.msra.mxu0 0.0
    %1324 = vmatprep.subr.mxu0 0.0
    %1325 = vmatpush1.msra.mxu0 0.0
    %1326 = vmatprep.mubr.f32.mxu0 0.0
    %1327 = vmatmul.mubr.f32.gmra.mrb[0].mxu0 %v622
    %v1328 = vpop.f32.mrb[0].mxu0
    %v1329 = vadd.f32 0.0, %v1328
    %v1330 = vpop.f32.mrb[0].mxu0
    %1331 = vmatprep.mubr.f32.mxu0 0.0
    %1332 = vmatmul.mubr.f32.gmra.mrb[0].mxu0 %v625
    %v1333 = vpop.f32.mrb[0].mxu0
    %v1334 = vadd.f32 0.0, %v1333
    %v1335 = vpop.f32.mrb[0].mxu0
    %1336 = vmatprep.mubr.f32.mxu0 0.0
    %1337 = vmatmul.mubr.f32.gmra.mrb[0].mxu0 %v628
    %v1338 = vpop.f32.mrb[0].mxu0
    %v1339 = vadd.f32 0.0, %v1338
    %v1340 = vpop.f32.mrb[0].mxu0
    %1341 = vmatprep.mubr.f32.mxu0 0.0
    %1342 = vmatmul.mubr.f32.gmra.mrb[0].mxu0 %v631
    %v1343 = vpop.f32.mrb[0].mxu0
    %v1344 = vadd.f32 0.0, %v1343
    %v1345 = vpop.f32.mrb[0].mxu0
    %1346 = vmatprep.mubr.f32.mxu0 0.0
    %1347 = vmatmul.mubr.f32.gmra.mrb[0].mxu0 %v634
    %v1348 = vpop.f32.mrb[0].mxu0
    %v1349 = vadd.f32 0.0, %v1348
    %v1350 = vpop.f32.mrb[0].mxu0
    %1351 = vmatprep.mubr.f32.mxu0 0.0
    %1352 = vmatmul.mubr.f32.gmra.mrb[0].mxu0 %v637
    %v1353 = vpop.f32.mrb[0].mxu0
    %v1354 = vadd.f32 0.0, %v1353
    %v1355 = vpop.f32.mrb[0].mxu0
    %1356 = vmatprep.mubr.f32.mxu0 0.0
    %1357 = vmatmul.mubr.f32.gmra.mrb[0].mxu0 %v640
    %v1358 = vpop.f32.mrb[0].mxu0
    %v1359 = vadd.f32 0.0, %v1358
    %v1360 = vpop.f32.mrb[0].mxu0
    %1361 = vmatprep.mubr.f32.mxu0 0.0
    %1362 = vmatmul.mubr.f32.gmra.mrb[0].mxu0 %v643
    %v1363 = vpop.f32.mrb[0].mxu0
    %v1364 = vadd.f32 0.0, %v1363
    %v1365 = vpop.f32.mrb[0].mxu0
    %1366 = vdwg.mxu0
    %v1367 = vadd.f32 %v1110, %v1329
    %v1368 = vadd.f32 %v1115, %v1334
    %v1369 = vadd.f32 %v1120, %v1339
    %v1370 = vadd.f32 %v1125, %v1344
    %v1371 = vadd.f32 %v1130, %v1349
    %v1372 = vadd.f32 %v1135, %v1354
    %v1373 = vadd.f32 %v1140, %v1359
    %v1374 = vadd.f32 %v1145, %v1364
    %v1375 = vld [vmem:[#allocation9] sm:$0x1]
    %v1376 = vlaneseq
    %v1377 = vshrl.u32 %v1376, 7
    %v1378 = vsub.s32 0, %v1377
    %v1379 = vrot.slane %v1375, %v1378
    %v1380 = vadd.f32 %v1367, %v1379
    %v1381 = vadd.f32 %v1368, %v1379
    %v1382 = vadd.f32 %v1369, %v1379
    %v1383 = vadd.f32 %v1370, %v1379
    %v1384 = vadd.f32 %v1371, %v1379
    %v1385 = vadd.f32 %v1372, %v1379
    %v1386 = vadd.f32 %v1373, %v1379
    %v1387 = vadd.f32 %v1374, %v1379
    %v1388 = vmax.f32 %v1380, 0.0
    %v1389 = vmax.f32 %v1381, 0.0
    %v1390 = vmax.f32 %v1382, 0.0
    %v1391 = vmax.f32 %v1383, 0.0
    %v1392 = vmax.f32 %v1384, 0.0
    %v1393 = vmax.f32 %v1385, 0.0
    %v1394 = vmax.f32 %v1386, 0.0
    %v1395 = vmax.f32 %v1387, 0.0
    %v1396 = vld [vmem:[#allocation9 + $0x1] sm:$0x1]
    %v1397 = vlaneseq
    %v1398 = vshrl.u32 %v1397, 7
    %v1399 = vsub.s32 0, %v1398
    %v1400 = vrot.slane %v1396, %v1399
    %v1401 = vadd.f32 %v1388, %v1400
    %v1402 = vadd.f32 %v1389, %v1400
    %v1403 = vadd.f32 %v1390, %v1400
    %v1404 = vadd.f32 %v1391, %v1400
    %v1405 = vadd.f32 %v1392, %v1400
    %v1406 = vadd.f32 %v1393, %v1400
    %v1407 = vadd.f32 %v1394, %v1400
    %v1408 = vadd.f32 %v1395, %v1400
    %v1409 = vld [vmem:[#allocation10] sm:$0xff]
    %v1410 = vld [vmem:[#allocation10 + $0x8] sm:$0xff]
    %v1411 = vld [vmem:[#allocation10 + $0x10] sm:$0xff]
    %v1412 = vld [vmem:[#allocation10 + $0x18] sm:$0xff]
    %v1413 = vld [vmem:[#allocation10 + $0x20] sm:$0xff]
    %v1414 = vld [vmem:[#allocation10 + $0x28] sm:$0xff]
    %v1415 = vld [vmem:[#allocation10 + $0x30] sm:$0xff]
    %v1416 = vld [vmem:[#allocation10 + $0x38] sm:$0xff]
    %v1417 = vld [vmem:[#allocation10 + $0x40] sm:$0xff]
    %v1418 = vld [vmem:[#allocation10 + $0x48] sm:$0xff]
    %v1419 = vld [vmem:[#allocation10 + $0x50] sm:$0xff]
    %v1420 = vld [vmem:[#allocation10 + $0x58] sm:$0xff]
    %v1421 = vld [vmem:[#allocation10 + $0x60] sm:$0xff]
    %v1422 = vld [vmem:[#allocation10 + $0x68] sm:$0xff]
    %v1423 = vld [vmem:[#allocation10 + $0x70] sm:$0xff]
    %v1424 = vld [vmem:[#allocation10 + $0x78] sm:$0xff]
    %1425 = vmatprep.subr.mxu0 0.0
    %1426 = vmatpush1.msra.mxu0 %v1409
    %1427 = vmatprep.subr.mxu0 0.0
    %1428 = vmatpush1.msra.mxu0 %v1410
    %1429 = vmatprep.subr.mxu0 0.0
    %1430 = vmatpush1.msra.mxu0 %v1411
    %1431 = vmatprep.subr.mxu0 0.0
    %1432 = vmatpush1.msra.mxu0 %v1412
    %1433 = vmatprep.subr.mxu0 0.0
    %1434 = vmatpush1.msra.mxu0 %v1413
    %1435 = vmatprep.subr.mxu0 0.0
    %1436 = vmatpush1.msra.mxu0 %v1414
    %1437 = vmatprep.subr.mxu0 0.0
    %1438 = vmatpush1.msra.mxu0 %v1415
    %1439 = vmatprep.subr.mxu0 0.0
    %1440 = vmatpush1.msra.mxu0 %v1416
    %1441 = vmatprep.subr.mxu0 0.0
    %1442 = vmatpush1.msra.mxu0 %v1417
    %1443 = vmatprep.subr.mxu0 0.0
    %1444 = vmatpush1.msra.mxu0 %v1418
    %1445 = vmatprep.subr.mxu0 0.0
    %1446 = vmatpush1.msra.mxu0 %v1419
    %1447 = vmatprep.subr.mxu0 0.0
    %1448 = vmatpush1.msra.mxu0 %v1420
    %1449 = vmatprep.subr.mxu0 0.0
    %1450 = vmatpush1.msra.mxu0 %v1421
    %1451 = vmatprep.subr.mxu0 0.0
    %1452 = vmatpush1.msra.mxu0 %v1422
    %1453 = vmatprep.subr.mxu0 0.0
    %1454 = vmatpush1.msra.mxu0 %v1423
    %1455 = vmatprep.subr.mxu0 0.0
    %1456 = vmatpush1.msra.mxu0 %v1424
    %1457 = vmatprep.subr.mxu0 0.0
    %1458 = vmatpush1.msra.mxu0 0.0
    %1459 = vmatprep.subr.mxu0 0.0
    %1460 = vmatpush1.msra.mxu0 0.0
    %1461 = vmatprep.subr.mxu0 0.0
    %1462 = vmatpush1.msra.mxu0 0.0
    %1463 = vmatprep.subr.mxu0 0.0
    %1464 = vmatpush1.msra.mxu0 0.0
    %1465 = vmatprep.subr.mxu0 0.0
    %1466 = vmatpush1.msra.mxu0 0.0
    %1467 = vmatprep.subr.mxu0 0.0
    %1468 = vmatpush1.msra.mxu0 0.0
    %1469 = vmatprep.subr.mxu0 0.0
    %1470 = vmatpush1.msra.mxu0 0.0
    %1471 = vmatprep.subr.mxu0 0.0
    %1472 = vmatpush1.msra.mxu0 0.0
    %1473 = vmatprep.subr.mxu0 0.0
    %1474 = vmatpush1.msra.mxu0 0.0
    %1475 = vmatprep.subr.mxu0 0.0
    %1476 = vmatpush1.msra.mxu0 0.0
    %1477 = vmatprep.subr.mxu0 0.0
    %1478 = vmatpush1.msra.mxu0 0.0
    %1479 = vmatprep.subr.mxu0 0.0
    %1480 = vmatpush1.msra.mxu0 0.0
    %1481 = vmatprep.subr.mxu0 0.0
    %1482 = vmatpush1.msra.mxu0 0.0
    %1483 = vmatprep.subr.mxu0 0.0
    %1484 = vmatpush1.msra.mxu0 0.0
    %1485 = vmatprep.subr.mxu0 0.0
    %1486 = vmatpush1.msra.mxu0 0.0
    %1487 = vmatprep.subr.mxu0 0.0
    %1488 = vmatpush1.msra.mxu0 0.0
    %1489 = vmatprep.mubr.f32.mxu0 0.0
    %1490 = vmatmul.mubr.f32.gmra.mrb[0].mxu0 %v1401
    %v1491 = vpop.f32.mrb[0].mxu0
    %v1492 = vadd.f32 0.0, %v1491
    %v1493 = vpop.f32.mrb[0].mxu0
    %1494 = vmatprep.mubr.f32.mxu0 0.0
    %1495 = vmatmul.mubr.f32.gmra.mrb[0].mxu0 %v1402
    %v1496 = vpop.f32.mrb[0].mxu0
    %v1497 = vadd.f32 0.0, %v1496
    %v1498 = vpop.f32.mrb[0].mxu0
    %1499 = vmatprep.mubr.f32.mxu0 0.0
    %1500 = vmatmul.mubr.f32.gmra.mrb[0].mxu0 %v1403
    %v1501 = vpop.f32.mrb[0].mxu0
    %v1502 = vadd.f32 0.0, %v1501
    %v1503 = vpop.f32.mrb[0].mxu0
    %1504 = vmatprep.mubr.f32.mxu0 0.0
    %1505 = vmatmul.mubr.f32.gmra.mrb[0].mxu0 %v1404
    %v1506 = vpop.f32.mrb[0].mxu0
    %v1507 = vadd.f32 0.0, %v1506
    %v1508 = vpop.f32.mrb[0].mxu0
    %1509 = vmatprep.mubr.f32.mxu0 0.0
    %1510 = vmatmul.mubr.f32.gmra.mrb[0].mxu0 %v1405
    %v1511 = vpop.f32.mrb[0].mxu0
    %v1512 = vadd.f32 0.0, %v1511
    %v1513 = vpop.f32.mrb[0].mxu0
    %1514 = vmatprep.mubr.f32.mxu0 0.0
    %1515 = vmatmul.mubr.f32.gmra.mrb[0].mxu0 %v1406
    %v1516 = vpop.f32.mrb[0].mxu0
    %v1517 = vadd.f32 0.0, %v1516
    %v1518 = vpop.f32.mrb[0].mxu0
    %1519 = vmatprep.mubr.f32.mxu0 0.0
    %1520 = vmatmul.mubr.f32.gmra.mrb[0].mxu0 %v1407
    %v1521 = vpop.f32.mrb[0].mxu0
    %v1522 = vadd.f32 0.0, %v1521
    %v1523 = vpop.f32.mrb[0].mxu0
    %1524 = vmatprep.mubr.f32.mxu0 0.0
    %1525 = vmatmul.mubr.f32.gmra.mrb[0].mxu0 %v1408
    %v1526 = vpop.f32.mrb[0].mxu0
    %v1527 = vadd.f32 0.0, %v1526
    %v1528 = vpop.f32.mrb[0].mxu0
    %1529 = vdwg.mxu0
    %s1530 = scalar_lea.vmem [#allocation10], 128
    %v1531 = vld [vmem:[%s1530] sm:$0xff]
    %v1532 = vld [vmem:[%s1530 + $0x8] sm:$0xff]
    %v1533 = vld [vmem:[%s1530 + $0x10] sm:$0xff]
    %v1534 = vld [vmem:[%s1530 + $0x18] sm:$0xff]
    %v1535 = vld [vmem:[%s1530 + $0x20] sm:$0xff]
    %v1536 = vld [vmem:[%s1530 + $0x28] sm:$0xff]
    %v1537 = vld [vmem:[%s1530 + $0x30] sm:$0xff]
    %v1538 = vld [vmem:[%s1530 + $0x38] sm:$0xff]
    %v1539 = vld [vmem:[%s1530 + $0x40] sm:$0xff]
    %v1540 = vld [vmem:[%s1530 + $0x48] sm:$0xff]
    %v1541 = vld [vmem:[%s1530 + $0x50] sm:$0xff]
    %v1542 = vld [vmem:[%s1530 + $0x58] sm:$0xff]
    %v1543 = vld [vmem:[%s1530 + $0x60] sm:$0xff]
    %v1544 = vld [vmem:[%s1530 + $0x68] sm:$0xff]
    %v1545 = vld [vmem:[%s1530 + $0x70] sm:$0xff]
    %v1546 = vld [vmem:[%s1530 + $0x78] sm:$0xff]
    %1547 = vmatprep.subr.mxu0 0.0
    %1548 = vmatpush1.msra.mxu0 %v1531
    %1549 = vmatprep.subr.mxu0 0.0
    %1550 = vmatpush1.msra.mxu0 %v1532
    %1551 = vmatprep.subr.mxu0 0.0
    %1552 = vmatpush1.msra.mxu0 %v1533
    %1553 = vmatprep.subr.mxu0 0.0
    %1554 = vmatpush1.msra.mxu0 %v1534
    %1555 = vmatprep.subr.mxu0 0.0
    %1556 = vmatpush1.msra.mxu0 %v1535
    %1557 = vmatprep.subr.mxu0 0.0
    %1558 = vmatpush1.msra.mxu0 %v1536
    %1559 = vmatprep.subr.mxu0 0.0
    %1560 = vmatpush1.msra.mxu0 %v1537
    %1561 = vmatprep.subr.mxu0 0.0
    %1562 = vmatpush1.msra.mxu0 %v1538
    %1563 = vmatprep.subr.mxu0 0.0
    %1564 = vmatpush1.msra.mxu0 %v1539
    %1565 = vmatprep.subr.mxu0 0.0
    %1566 = vmatpush1.msra.mxu0 %v1540
    %1567 = vmatprep.subr.mxu0 0.0
    %1568 = vmatpush1.msra.mxu0 %v1541
    %1569 = vmatprep.subr.mxu0 0.0
    %1570 = vmatpush1.msra.mxu0 %v1542
    %1571 = vmatprep.subr.mxu0 0.0
    %1572 = vmatpush1.msra.mxu0 %v1543
    %1573 = vmatprep.subr.mxu0 0.0
    %1574 = vmatpush1.msra.mxu0 %v1544
    %1575 = vmatprep.subr.mxu0 0.0
    %1576 = vmatpush1.msra.mxu0 %v1545
    %1577 = vmatprep.subr.mxu0 0.0
    %1578 = vmatpush1.msra.mxu0 %v1546
    %1579 = vmatprep.subr.mxu0 0.0
    %1580 = vmatpush1.msra.mxu0 0.0
    %1581 = vmatprep.subr.mxu0 0.0
    %1582 = vmatpush1.msra.mxu0 0.0
    %1583 = vmatprep.subr.mxu0 0.0
    %1584 = vmatpush1.msra.mxu0 0.0
    %1585 = vmatprep.subr.mxu0 0.0
    %1586 = vmatpush1.msra.mxu0 0.0
    %1587 = vmatprep.subr.mxu0 0.0
    %1588 = vmatpush1.msra.mxu0 0.0
    %1589 = vmatprep.subr.mxu0 0.0
    %1590 = vmatpush1.msra.mxu0 0.0
    %1591 = vmatprep.subr.mxu0 0.0
    %1592 = vmatpush1.msra.mxu0 0.0
    %1593 = vmatprep.subr.mxu0 0.0
    %1594 = vmatpush1.msra.mxu0 0.0
    %1595 = vmatprep.subr.mxu0 0.0
    %1596 = vmatpush1.msra.mxu0 0.0
    %1597 = vmatprep.subr.mxu0 0.0
    %1598 = vmatpush1.msra.mxu0 0.0
    %1599 = vmatprep.subr.mxu0 0.0
    %1600 = vmatpush1.msra.mxu0 0.0
    %1601 = vmatprep.subr.mxu0 0.0
    %1602 = vmatpush1.msra.mxu0 0.0
    %1603 = vmatprep.subr.mxu0 0.0
    %1604 = vmatpush1.msra.mxu0 0.0
    %1605 = vmatprep.subr.mxu0 0.0
    %1606 = vmatpush1.msra.mxu0 0.0
    %1607 = vmatprep.subr.mxu0 0.0
    %1608 = vmatpush1.msra.mxu0 0.0
    %1609 = vmatprep.subr.mxu0 0.0
    %1610 = vmatpush1.msra.mxu0 0.0
    %1611 = vmatprep.mubr.f32.mxu0 0.0
    %1612 = vmatmul.mubr.f32.gmra.mrb[0].mxu0 %v1401
    %v1613 = vpop.f32.mrb[0].mxu0
    %v1614 = vadd.f32 0.0, %v1613
    %v1615 = vpop.f32.mrb[0].mxu0
    %1616 = vmatprep.mubr.f32.mxu0 0.0
    %1617 = vmatmul.mubr.f32.gmra.mrb[0].mxu0 %v1402
    %v1618 = vpop.f32.mrb[0].mxu0
    %v1619 = vadd.f32 0.0, %v1618
    %v1620 = vpop.f32.mrb[0].mxu0
    %1621 = vmatprep.mubr.f32.mxu0 0.0
    %1622 = vmatmul.mubr.f32.gmra.mrb[0].mxu0 %v1403
    %v1623 = vpop.f32.mrb[0].mxu0
    %v1624 = vadd.f32 0.0, %v1623
    %v1625 = vpop.f32.mrb[0].mxu0
    %1626 = vmatprep.mubr.f32.mxu0 0.0
    %1627 = vmatmul.mubr.f32.gmra.mrb[0].mxu0 %v1404
    %v1628 = vpop.f32.mrb[0].mxu0
    %v1629 = vadd.f32 0.0, %v1628
    %v1630 = vpop.f32.mrb[0].mxu0
    %1631 = vmatprep.mubr.f32.mxu0 0.0
    %1632 = vmatmul.mubr.f32.gmra.mrb[0].mxu0 %v1405
    %v1633 = vpop.f32.mrb[0].mxu0
    %v1634 = vadd.f32 0.0, %v1633
    %v1635 = vpop.f32.mrb[0].mxu0
    %1636 = vmatprep.mubr.f32.mxu0 0.0
    %1637 = vmatmul.mubr.f32.gmra.mrb[0].mxu0 %v1406
    %v1638 = vpop.f32.mrb[0].mxu0
    %v1639 = vadd.f32 0.0, %v1638
    %v1640 = vpop.f32.mrb[0].mxu0
    %1641 = vmatprep.mubr.f32.mxu0 0.0
    %1642 = vmatmul.mubr.f32.gmra.mrb[0].mxu0 %v1407
    %v1643 = vpop.f32.mrb[0].mxu0
    %v1644 = vadd.f32 0.0, %v1643
    %v1645 = vpop.f32.mrb[0].mxu0
    %1646 = vmatprep.mubr.f32.mxu0 0.0
    %1647 = vmatmul.mubr.f32.gmra.mrb[0].mxu0 %v1408
    %v1648 = vpop.f32.mrb[0].mxu0
    %v1649 = vadd.f32 0.0, %v1648
    %v1650 = vpop.f32.mrb[0].mxu0
    %1651 = vdwg.mxu0
    %1652 = vmatprep.subr.mxu0 0.0
    %1653 = vmatpush1.msra.mxu0 %v1492
    %1654 = vmatprep.subr.mxu0 0.0
    %1655 = vmatpush1.msra.mxu0 %v1497
    %1656 = vmatprep.subr.mxu0 0.0
    %1657 = vmatpush1.msra.mxu0 %v1502
    %1658 = vmatprep.subr.mxu0 0.0
    %1659 = vmatpush1.msra.mxu0 %v1507
    %1660 = vmatprep.subr.mxu0 0.0
    %1661 = vmatpush1.msra.mxu0 %v1512
    %1662 = vmatprep.subr.mxu0 0.0
    %1663 = vmatpush1.msra.mxu0 %v1517
    %1664 = vmatprep.subr.mxu0 0.0
    %1665 = vmatpush1.msra.mxu0 %v1522
    %1666 = vmatprep.subr.mxu0 0.0
    %1667 = vmatpush1.msra.mxu0 %v1527
    %1668 = vmatprep.subr.mxu0 0.0
    %1669 = vmatpush1.msra.mxu0 0.0
    %1670 = vmatprep.subr.mxu0 0.0
    %1671 = vmatpush1.msra.mxu0 0.0
    %1672 = vmatprep.subr.mxu0 0.0
    %1673 = vmatpush1.msra.mxu0 0.0
    %1674 = vmatprep.subr.mxu0 0.0
    %1675 = vmatpush1.msra.mxu0 0.0
    %1676 = vmatprep.subr.mxu0 0.0
    %1677 = vmatpush1.msra.mxu0 0.0
    %1678 = vmatprep.subr.mxu0 0.0
    %1679 = vmatpush1.msra.mxu0 0.0
    %1680 = vmatprep.subr.mxu0 0.0
    %1681 = vmatpush1.msra.mxu0 0.0
    %1682 = vmatprep.subr.mxu0 0.0
    %1683 = vmatpush1.msra.mxu0 0.0
    %1684 = vmatprep.subr.mxu0 0.0
    %1685 = vmatpush1.msra.mxu0 0.0
    %1686 = vmatprep.subr.mxu0 0.0
    %1687 = vmatpush1.msra.mxu0 0.0
    %1688 = vmatprep.subr.mxu0 0.0
    %1689 = vmatpush1.msra.mxu0 0.0
    %1690 = vmatprep.subr.mxu0 0.0
    %1691 = vmatpush1.msra.mxu0 0.0
    %1692 = vmatprep.subr.mxu0 0.0
    %1693 = vmatpush1.msra.mxu0 0.0
    %1694 = vmatprep.subr.mxu0 0.0
    %1695 = vmatpush1.msra.mxu0 0.0
    %1696 = vmatprep.subr.mxu0 0.0
    %1697 = vmatpush1.msra.mxu0 0.0
    %1698 = vmatprep.subr.mxu0 0.0
    %1699 = vmatpush1.msra.mxu0 0.0
    %1700 = vmatprep.subr.mxu0 0.0
    %1701 = vmatpush1.msra.mxu0 0.0
    %1702 = vmatprep.subr.mxu0 0.0
    %1703 = vmatpush1.msra.mxu0 0.0
    %1704 = vmatprep.subr.mxu0 0.0
    %1705 = vmatpush1.msra.mxu0 0.0
    %1706 = vmatprep.subr.mxu0 0.0
    %1707 = vmatpush1.msra.mxu0 0.0
    %1708 = vmatprep.subr.mxu0 0.0
    %1709 = vmatpush1.msra.mxu0 0.0
    %1710 = vmatprep.subr.mxu0 0.0
    %1711 = vmatpush1.msra.mxu0 0.0
    %1712 = vmatprep.subr.mxu0 0.0
    %1713 = vmatpush1.msra.mxu0 0.0
    %1714 = vmatprep.subr.mxu0 0.0
    %1715 = vmatpush1.msra.mxu0 0.0
    %1716 = vmatprep.mubr.f32.mxu0 0.0
    %1717 = vmatmul.mubr.f32.gmra.mrb[0].mxu0 %v376
    %v1718 = vpop.f32.mrb[0].mxu0
    %v1719 = vadd.f32 %v1614, %v1718
    %v1720 = vpop.f32.mrb[0].mxu0
    %1721 = vmatprep.mubr.f32.mxu0 0.0
    %1722 = vmatmul.mubr.f32.gmra.mrb[0].mxu0 %v379
    %v1723 = vpop.f32.mrb[0].mxu0
    %v1724 = vadd.f32 %v1619, %v1723
    %v1725 = vpop.f32.mrb[0].mxu0
    %1726 = vmatprep.mubr.f32.mxu0 0.0
    %1727 = vmatmul.mubr.f32.gmra.mrb[0].mxu0 %v382
    %v1728 = vpop.f32.mrb[0].mxu0
    %v1729 = vadd.f32 %v1624, %v1728
    %v1730 = vpop.f32.mrb[0].mxu0
    %1731 = vmatprep.mubr.f32.mxu0 0.0
    %1732 = vmatmul.mubr.f32.gmra.mrb[0].mxu0 %v385
    %v1733 = vpop.f32.mrb[0].mxu0
    %v1734 = vadd.f32 %v1629, %v1733
    %v1735 = vpop.f32.mrb[0].mxu0
    %1736 = vmatprep.mubr.f32.mxu0 0.0
    %1737 = vmatmul.mubr.f32.gmra.mrb[0].mxu0 %v388
    %v1738 = vpop.f32.mrb[0].mxu0
    %v1739 = vadd.f32 %v1634, %v1738
    %v1740 = vpop.f32.mrb[0].mxu0
    %1741 = vmatprep.mubr.f32.mxu0 0.0
    %1742 = vmatmul.mubr.f32.gmra.mrb[0].mxu0 %v391
    %v1743 = vpop.f32.mrb[0].mxu0
    %v1744 = vadd.f32 %v1639, %v1743
    %v1745 = vpop.f32.mrb[0].mxu0
    %1746 = vmatprep.mubr.f32.mxu0 0.0
    %1747 = vmatmul.mubr.f32.gmra.mrb[0].mxu0 %v394
    %v1748 = vpop.f32.mrb[0].mxu0
    %v1749 = vadd.f32 %v1644, %v1748
    %v1750 = vpop.f32.mrb[0].mxu0
    %1751 = vmatprep.mubr.f32.mxu0 0.0
    %1752 = vmatmul.mubr.f32.gmra.mrb[0].mxu0 %v397
    %v1753 = vpop.f32.mrb[0].mxu0
    %v1754 = vadd.f32 %v1649, %v1753
    %v1755 = vpop.f32.mrb[0].mxu0
    %1756 = vdwg.mxu0
    %s1757 = scalar_lea.vmem [#allocation10], 256
    %v1758 = vld [vmem:[%s1757] sm:$0xff]
    %v1759 = vld [vmem:[%s1757 + $0x8] sm:$0xff]
    %v1760 = vld [vmem:[%s1757 + $0x10] sm:$0xff]
    %v1761 = vld [vmem:[%s1757 + $0x18] sm:$0xff]
    %v1762 = vld [vmem:[%s1757 + $0x20] sm:$0xff]
    %v1763 = vld [vmem:[%s1757 + $0x28] sm:$0xff]
    %v1764 = vld [vmem:[%s1757 + $0x30] sm:$0xff]
    %v1765 = vld [vmem:[%s1757 + $0x38] sm:$0xff]
    %v1766 = vld [vmem:[%s1757 + $0x40] sm:$0xff]
    %v1767 = vld [vmem:[%s1757 + $0x48] sm:$0xff]
    %v1768 = vld [vmem:[%s1757 + $0x50] sm:$0xff]
    %v1769 = vld [vmem:[%s1757 + $0x58] sm:$0xff]
    %v1770 = vld [vmem:[%s1757 + $0x60] sm:$0xff]
    %v1771 = vld [vmem:[%s1757 + $0x68] sm:$0xff]
    %v1772 = vld [vmem:[%s1757 + $0x70] sm:$0xff]
    %v1773 = vld [vmem:[%s1757 + $0x78] sm:$0xff]
    %1774 = vmatprep.subr.mxu0 0.0
    %1775 = vmatpush1.msra.mxu0 %v1758
    %1776 = vmatprep.subr.mxu0 0.0
    %1777 = vmatpush1.msra.mxu0 %v1759
    %1778 = vmatprep.subr.mxu0 0.0
    %1779 = vmatpush1.msra.mxu0 %v1760
    %1780 = vmatprep.subr.mxu0 0.0
    %1781 = vmatpush1.msra.mxu0 %v1761
    %1782 = vmatprep.subr.mxu0 0.0
    %1783 = vmatpush1.msra.mxu0 %v1762
    %1784 = vmatprep.subr.mxu0 0.0
    %1785 = vmatpush1.msra.mxu0 %v1763
    %1786 = vmatprep.subr.mxu0 0.0
    %1787 = vmatpush1.msra.mxu0 %v1764
    %1788 = vmatprep.subr.mxu0 0.0
    %1789 = vmatpush1.msra.mxu0 %v1765
    %1790 = vmatprep.subr.mxu0 0.0
    %1791 = vmatpush1.msra.mxu0 %v1766
    %1792 = vmatprep.subr.mxu0 0.0
    %1793 = vmatpush1.msra.mxu0 %v1767
    %1794 = vmatprep.subr.mxu0 0.0
    %1795 = vmatpush1.msra.mxu0 %v1768
    %1796 = vmatprep.subr.mxu0 0.0
    %1797 = vmatpush1.msra.mxu0 %v1769
    %1798 = vmatprep.subr.mxu0 0.0
    %1799 = vmatpush1.msra.mxu0 %v1770
    %1800 = vmatprep.subr.mxu0 0.0
    %1801 = vmatpush1.msra.mxu0 %v1771
    %1802 = vmatprep.subr.mxu0 0.0
    %1803 = vmatpush1.msra.mxu0 %v1772
    %1804 = vmatprep.subr.mxu0 0.0
    %1805 = vmatpush1.msra.mxu0 %v1773
    %1806 = vmatprep.subr.mxu0 0.0
    %1807 = vmatpush1.msra.mxu0 0.0
    %1808 = vmatprep.subr.mxu0 0.0
    %1809 = vmatpush1.msra.mxu0 0.0
    %1810 = vmatprep.subr.mxu0 0.0
    %1811 = vmatpush1.msra.mxu0 0.0
    %1812 = vmatprep.subr.mxu0 0.0
    %1813 = vmatpush1.msra.mxu0 0.0
    %1814 = vmatprep.subr.mxu0 0.0
    %1815 = vmatpush1.msra.mxu0 0.0
    %1816 = vmatprep.subr.mxu0 0.0
    %1817 = vmatpush1.msra.mxu0 0.0
    %1818 = vmatprep.subr.mxu0 0.0
    %1819 = vmatpush1.msra.mxu0 0.0
    %1820 = vmatprep.subr.mxu0 0.0
    %1821 = vmatpush1.msra.mxu0 0.0
    %1822 = vmatprep.subr.mxu0 0.0
    %1823 = vmatpush1.msra.mxu0 0.0
    %1824 = vmatprep.subr.mxu0 0.0
    %1825 = vmatpush1.msra.mxu0 0.0
    %1826 = vmatprep.subr.mxu0 0.0
    %1827 = vmatpush1.msra.mxu0 0.0
    %1828 = vmatprep.subr.mxu0 0.0
    %1829 = vmatpush1.msra.mxu0 0.0
    %1830 = vmatprep.subr.mxu0 0.0
    %1831 = vmatpush1.msra.mxu0 0.0
    %1832 = vmatprep.subr.mxu0 0.0
    %1833 = vmatpush1.msra.mxu0 0.0
    %1834 = vmatprep.subr.mxu0 0.0
    %1835 = vmatpush1.msra.mxu0 0.0
    %1836 = vmatprep.subr.mxu0 0.0
    %1837 = vmatpush1.msra.mxu0 0.0
    %1838 = vmatprep.mubr.f32.mxu0 0.0
    %1839 = vmatmul.mubr.f32.gmra.mrb[0].mxu0 %v1401
    %v1840 = vpop.f32.mrb[0].mxu0
    %v1841 = vadd.f32 0.0, %v1840
    %v1842 = vpop.f32.mrb[0].mxu0
    %1843 = vmatprep.mubr.f32.mxu0 0.0
    %1844 = vmatmul.mubr.f32.gmra.mrb[0].mxu0 %v1402
    %v1845 = vpop.f32.mrb[0].mxu0
    %v1846 = vadd.f32 0.0, %v1845
    %v1847 = vpop.f32.mrb[0].mxu0
    %1848 = vmatprep.mubr.f32.mxu0 0.0
    %1849 = vmatmul.mubr.f32.gmra.mrb[0].mxu0 %v1403
    %v1850 = vpop.f32.mrb[0].mxu0
    %v1851 = vadd.f32 0.0, %v1850
    %v1852 = vpop.f32.mrb[0].mxu0
    %1853 = vmatprep.mubr.f32.mxu0 0.0
    %1854 = vmatmul.mubr.f32.gmra.mrb[0].mxu0 %v1404
    %v1855 = vpop.f32.mrb[0].mxu0
    %v1856 = vadd.f32 0.0, %v1855
    %v1857 = vpop.f32.mrb[0].mxu0
    %1858 = vmatprep.mubr.f32.mxu0 0.0
    %1859 = vmatmul.mubr.f32.gmra.mrb[0].mxu0 %v1405
    %v1860 = vpop.f32.mrb[0].mxu0
    %v1861 = vadd.f32 0.0, %v1860
    %v1862 = vpop.f32.mrb[0].mxu0
    %1863 = vmatprep.mubr.f32.mxu0 0.0
    %1864 = vmatmul.mubr.f32.gmra.mrb[0].mxu0 %v1406
    %v1865 = vpop.f32.mrb[0].mxu0
    %v1866 = vadd.f32 0.0, %v1865
    %v1867 = vpop.f32.mrb[0].mxu0
    %1868 = vmatprep.mubr.f32.mxu0 0.0
    %1869 = vmatmul.mubr.f32.gmra.mrb[0].mxu0 %v1407
    %v1870 = vpop.f32.mrb[0].mxu0
    %v1871 = vadd.f32 0.0, %v1870
    %v1872 = vpop.f32.mrb[0].mxu0
    %1873 = vmatprep.mubr.f32.mxu0 0.0
    %1874 = vmatmul.mubr.f32.gmra.mrb[0].mxu0 %v1408
    %v1875 = vpop.f32.mrb[0].mxu0
    %v1876 = vadd.f32 0.0, %v1875
    %v1877 = vpop.f32.mrb[0].mxu0
    %1878 = vdwg.mxu0
    %1879 = vmatprep.subr.mxu0 0.0
    %1880 = vmatpush1.msra.mxu0 %v1841
    %1881 = vmatprep.subr.mxu0 0.0
    %1882 = vmatpush1.msra.mxu0 %v1846
    %1883 = vmatprep.subr.mxu0 0.0
    %1884 = vmatpush1.msra.mxu0 %v1851
    %1885 = vmatprep.subr.mxu0 0.0
    %1886 = vmatpush1.msra.mxu0 %v1856
    %1887 = vmatprep.subr.mxu0 0.0
    %1888 = vmatpush1.msra.mxu0 %v1861
    %1889 = vmatprep.subr.mxu0 0.0
    %1890 = vmatpush1.msra.mxu0 %v1866
    %1891 = vmatprep.subr.mxu0 0.0
    %1892 = vmatpush1.msra.mxu0 %v1871
    %1893 = vmatprep.subr.mxu0 0.0
    %1894 = vmatpush1.msra.mxu0 %v1876
    %1895 = vmatprep.subr.mxu0 0.0
    %1896 = vmatpush1.msra.mxu0 0.0
    %1897 = vmatprep.subr.mxu0 0.0
    %1898 = vmatpush1.msra.mxu0 0.0
    %1899 = vmatprep.subr.mxu0 0.0
    %1900 = vmatpush1.msra.mxu0 0.0
    %1901 = vmatprep.subr.mxu0 0.0
    %1902 = vmatpush1.msra.mxu0 0.0
    %1903 = vmatprep.subr.mxu0 0.0
    %1904 = vmatpush1.msra.mxu0 0.0
    %1905 = vmatprep.subr.mxu0 0.0
    %1906 = vmatpush1.msra.mxu0 0.0
    %1907 = vmatprep.subr.mxu0 0.0
    %1908 = vmatpush1.msra.mxu0 0.0
    %1909 = vmatprep.subr.mxu0 0.0
    %1910 = vmatpush1.msra.mxu0 0.0
    %1911 = vmatprep.subr.mxu0 0.0
    %1912 = vmatpush1.msra.mxu0 0.0
    %1913 = vmatprep.subr.mxu0 0.0
    %1914 = vmatpush1.msra.mxu0 0.0
    %1915 = vmatprep.subr.mxu0 0.0
    %1916 = vmatpush1.msra.mxu0 0.0
    %1917 = vmatprep.subr.mxu0 0.0
    %1918 = vmatpush1.msra.mxu0 0.0
    %1919 = vmatprep.subr.mxu0 0.0
    %1920 = vmatpush1.msra.mxu0 0.0
    %1921 = vmatprep.subr.mxu0 0.0
    %1922 = vmatpush1.msra.mxu0 0.0
    %1923 = vmatprep.subr.mxu0 0.0
    %1924 = vmatpush1.msra.mxu0 0.0
    %1925 = vmatprep.subr.mxu0 0.0
    %1926 = vmatpush1.msra.mxu0 0.0
    %1927 = vmatprep.subr.mxu0 0.0
    %1928 = vmatpush1.msra.mxu0 0.0
    %1929 = vmatprep.subr.mxu0 0.0
    %1930 = vmatpush1.msra.mxu0 0.0
    %1931 = vmatprep.subr.mxu0 0.0
    %1932 = vmatpush1.msra.mxu0 0.0
    %1933 = vmatprep.subr.mxu0 0.0
    %1934 = vmatpush1.msra.mxu0 0.0
    %1935 = vmatprep.subr.mxu0 0.0
    %1936 = vmatpush1.msra.mxu0 0.0
    %1937 = vmatprep.subr.mxu0 0.0
    %1938 = vmatpush1.msra.mxu0 0.0
    %1939 = vmatprep.subr.mxu0 0.0
    %1940 = vmatpush1.msra.mxu0 0.0
    %1941 = vmatprep.subr.mxu0 0.0
    %1942 = vmatpush1.msra.mxu0 0.0
    %1943 = vmatprep.mubr.f32.mxu0 0.0
    %1944 = vmatmul.mubr.f32.gmra.mrb[0].mxu0 %v622
    %v1945 = vpop.f32.mrb[0].mxu0
    %v1946 = vadd.f32 0.0, %v1945
    %v1947 = vpop.f32.mrb[0].mxu0
    %1948 = vmatprep.mubr.f32.mxu0 0.0
    %1949 = vmatmul.mubr.f32.gmra.mrb[0].mxu0 %v625
    %v1950 = vpop.f32.mrb[0].mxu0
    %v1951 = vadd.f32 0.0, %v1950
    %v1952 = vpop.f32.mrb[0].mxu0
    %1953 = vmatprep.mubr.f32.mxu0 0.0
    %1954 = vmatmul.mubr.f32.gmra.mrb[0].mxu0 %v628
    %v1955 = vpop.f32.mrb[0].mxu0
    %v1956 = vadd.f32 0.0, %v1955
    %v1957 = vpop.f32.mrb[0].mxu0
    %1958 = vmatprep.mubr.f32.mxu0 0.0
    %1959 = vmatmul.mubr.f32.gmra.mrb[0].mxu0 %v631
    %v1960 = vpop.f32.mrb[0].mxu0
    %v1961 = vadd.f32 0.0, %v1960
    %v1962 = vpop.f32.mrb[0].mxu0
    %1963 = vmatprep.mubr.f32.mxu0 0.0
    %1964 = vmatmul.mubr.f32.gmra.mrb[0].mxu0 %v634
    %v1965 = vpop.f32.mrb[0].mxu0
    %v1966 = vadd.f32 0.0, %v1965
    %v1967 = vpop.f32.mrb[0].mxu0
    %1968 = vmatprep.mubr.f32.mxu0 0.0
    %1969 = vmatmul.mubr.f32.gmra.mrb[0].mxu0 %v637
    %v1970 = vpop.f32.mrb[0].mxu0
    %v1971 = vadd.f32 0.0, %v1970
    %v1972 = vpop.f32.mrb[0].mxu0
    %1973 = vmatprep.mubr.f32.mxu0 0.0
    %1974 = vmatmul.mubr.f32.gmra.mrb[0].mxu0 %v640
    %v1975 = vpop.f32.mrb[0].mxu0
    %v1976 = vadd.f32 0.0, %v1975
    %v1977 = vpop.f32.mrb[0].mxu0
    %1978 = vmatprep.mubr.f32.mxu0 0.0
    %1979 = vmatmul.mubr.f32.gmra.mrb[0].mxu0 %v643
    %v1980 = vpop.f32.mrb[0].mxu0
    %v1981 = vadd.f32 0.0, %v1980
    %v1982 = vpop.f32.mrb[0].mxu0
    %1983 = vdwg.mxu0
    %v1984 = vadd.f32 %v1719, %v1946
    %v1985 = vadd.f32 %v1724, %v1951
    %v1986 = vadd.f32 %v1729, %v1956
    %v1987 = vadd.f32 %v1734, %v1961
    %v1988 = vadd.f32 %v1739, %v1966
    %v1989 = vadd.f32 %v1744, %v1971
    %v1990 = vadd.f32 %v1749, %v1976
    %v1991 = vadd.f32 %v1754, %v1981
    %v1992 = vld [vmem:[#allocation12] sm:$0x1]
    %v1993 = vlaneseq
    %v1994 = vshrl.u32 %v1993, 7
    %v1995 = vsub.s32 0, %v1994
    %v1996 = vrot.slane %v1992, %v1995
    %v1997 = vadd.f32 %v1984, %v1996
    %v1998 = vadd.f32 %v1985, %v1996
    %v1999 = vadd.f32 %v1986, %v1996
    %v2000 = vadd.f32 %v1987, %v1996
    %v2001 = vadd.f32 %v1988, %v1996
    %v2002 = vadd.f32 %v1989, %v1996
    %v2003 = vadd.f32 %v1990, %v1996
    %v2004 = vadd.f32 %v1991, %v1996
    %v2005 = vmax.f32 %v1997, 0.0
    %v2006 = vmax.f32 %v1998, 0.0
    %v2007 = vmax.f32 %v1999, 0.0
    %v2008 = vmax.f32 %v2000, 0.0
    %v2009 = vmax.f32 %v2001, 0.0
    %v2010 = vmax.f32 %v2002, 0.0
    %v2011 = vmax.f32 %v2003, 0.0
    %v2012 = vmax.f32 %v2004, 0.0
    %v2013 = vld [vmem:[#allocation12 + $0x1] sm:$0x1]
    %v2014 = vlaneseq
    %v2015 = vshrl.u32 %v2014, 7
    %v2016 = vsub.s32 0, %v2015
    %v2017 = vrot.slane %v2013, %v2016
    %v2018 = vadd.f32 %v2005, %v2017
    %v2019 = vadd.f32 %v2006, %v2017
    %v2020 = vadd.f32 %v2007, %v2017
    %v2021 = vadd.f32 %v2008, %v2017
    %v2022 = vadd.f32 %v2009, %v2017
    %v2023 = vadd.f32 %v2010, %v2017
    %v2024 = vadd.f32 %v2011, %v2017
    %v2025 = vadd.f32 %v2012, %v2017
    %v2026 = vpack.c.bf16 %v2019, %v2018
    %v2027 = vpack.c.bf16 %v2021, %v2020
    %v2028 = vpack.c.bf16 %v2023, %v2022
    %v2029 = vpack.c.bf16 %v2025, %v2024
    %v2034 = vunpack.c.l.b16 %v2026
    %v2035 = vunpack.c.h.b16 %v2026
    %v2036 = vunpack.c.l.b16 %v2027
    %v2037 = vunpack.c.h.b16 %v2027
    %v2038 = vunpack.c.l.b16 %v2028
    %v2039 = vunpack.c.h.b16 %v2028
    %v2040 = vunpack.c.l.b16 %v2029
    %v2041 = vunpack.c.h.b16 %v2029
    %v2042 = vpack.c.b16 %v2034, %v2034
    %v2043 = vpack.c.b16 %v2035, %v2035
    %v2044 = vpack.c.b16 %v2036, %v2036
    %v2045 = vpack.c.b16 %v2037, %v2037
    %v2046 = vpack.c.b16 %v2038, %v2038
    %v2047 = vpack.c.b16 %v2039, %v2039
    %v2048 = vpack.c.b16 %v2040, %v2040
    %v2049 = vpack.c.b16 %v2041, %v2041
    %2058 = vst [vmem:[%s8] sm:$0xf] %v2042
    %2059 = vst [vmem:[%s8 + $0x4] sm:$0xf] %v2043
    %2060 = vst [vmem:[%s8 + $0x8] sm:$0xf] %v2044
    %2061 = vst [vmem:[%s8 + $0xc] sm:$0xf] %v2045
    %2062 = vst [vmem:[%s8 + $0x10] sm:$0xf] %v2046
    %2063 = vst [vmem:[%s8 + $0x14] sm:$0xf] %v2047
    %2064 = vst [vmem:[%s8 + $0x18] sm:$0xf] %v2048
    %2065 = vst [vmem:[%s8 + $0x1c] sm:$0xf] %v2049
    // Predicated region
    $region62: #{siamese_forward.2} parent=1 // pred_check
      _
    $region63: #{siamese_forward.2} parent=1 // pred_check_branch
      %2067 = sbr.rel (0) target = $region65
    $region64: #{siamese_forward.2} parent=1 // pred_region
      _
    $region65: #{siamese_forward.2} parent=1 // pred_fallthru
      _
    // Predicated region
    $region66: #{siamese_forward.2} parent=1 // pred_check
      _
    $region67: #{siamese_forward.2} parent=1 // pred_check_branch
      %2069 = sbr.rel (0) target = $region69
    $region68: #{siamese_forward.2} parent=1 // pred_region
      _
    $region69: #{siamese_forward.2} parent=1 // pred_fallthru
      _
    %2070 = vsyncpa [#allocation3], 1
    %2071 = vsyncpa [#allocation5], 1
    %2072 = vsyncpa [#allocation8], 1
    %2073 = vsyncpa [#allocation11], 1

// kernel: siamese_forward.3
$region0: #{siamese_forward.3}
  #allocation0 [shape = 'u32[]', space=smem, size = 0x4, offset = 0x4, fixed_abs, tag = 'smem constant byte address 0x4 - core index']
  #allocation1 [shape = 'u32[144,128]{1,0:T(1,128)}', space=vmem, size = 0x12000, scoped, tag = 'internal scratch']
  %s0 = inlined_call_operand.vmem [shape: bf16[4,2048], index: 0, kind: input, shape index: {}]
  %s1 = inlined_call_operand.hbm [shape: bf16[2048,512], index: 1, kind: input, shape index: {}]
  %s2 = inlined_call_operand.hbm [shape: f32[1,512], index: 2, kind: input, shape index: {}]
  %s3 = inlined_call_operand.hbm [shape: bf16[512,512], index: 3, kind: input, shape index: {}]
  %s4 = inlined_call_operand.hbm [shape: f32[1,512], index: 4, kind: input, shape index: {}]
  %s5 = inlined_call_operand.hbm [shape: bf16[512,128], index: 5, kind: input, shape index: {}]
  %s6 = inlined_call_operand.hbm [shape: f32[1,128], index: 6, kind: input, shape index: {}]
  %s7 = inlined_call_operand.vmem [shape: f32[4,128], index: 7, kind: output, shape index: {}]
  %s8 = sld [smem:[#allocation0]]
  $region62: #{siamese_forward.3} parent=0
    _
  %s10 = ssub.s32 1, %s8
  %s11 = scalar_select 0, %s10, %s8
  $region1: #{siamese_forward.3} parent=0
    #allocation2 [shape = 'u8[2097152]{0}', space=vmem, size = 0x200000, scoped, tag = 'input window, operand 1, single buffered']
    #allocation3 [shape = 's32[1]{0}', space=sflag, size = 0x4, scoped, tag = 'scoped memory for siamese_forward.3']
    #allocation4 [shape = 'u8[2048]{0}', space=vmem, size = 0x800, scoped, tag = 'input window, operand 2, single buffered']
    #allocation5 [shape = 's32[1]{0}', space=sflag, size = 0x4, scoped, tag = 'scoped memory for siamese_forward.3']
    #allocation6 [shape = 'u8[524288]{0}', space=vmem, size = 0x80000, scoped, tag = 'input window, operand 3, single buffered']
    #allocation7 [shape = 'u8[2048]{0}', space=vmem, size = 0x800, scoped, tag = 'input window, operand 4, single buffered']
    #allocation8 [shape = 's32[1]{0}', space=sflag, size = 0x4, scoped, tag = 'scoped memory for siamese_forward.3']
    #allocation9 [shape = 'u8[131072]{0}', space=vmem, size = 0x20000, scoped, tag = 'input window, operand 5, single buffered']
    #allocation10 [shape = 'u8[512]{0}', space=vmem, size = 0x400, scoped, tag = 'input window, operand 6, single buffered']
    #allocation11 [shape = 's32[1]{0}', space=sflag, size = 0x4, scoped, tag = 'scoped memory for siamese_forward.3']
    %12 = vsyncpa [#allocation3], 0
    %13 = vsyncpa [#allocation5], 0
    %14 = vsyncpa [#allocation8], 0
    %15 = vsyncpa [#allocation11], 0
    // Predicated region
    $region2: #{siamese_forward.3} parent=1 // pred_check
      _
    $region3: #{siamese_forward.3} parent=1 // pred_check_branch
      %17 = sbr.rel (0) target = $region5
    $region4: #{siamese_forward.3} parent=1 // pred_region
      _
    $region5: #{siamese_forward.3} parent=1 // pred_fallthru
      _
    // Predicated region
    $region6: #{siamese_forward.3} parent=1 // pred_check
      _
    $region7: #{siamese_forward.3} parent=1 // pred_check_branch
      %19 = sbr.rel (0) target = $region9
    $region8: #{siamese_forward.3} parent=1 // pred_region
      %s21 = ssub.s32 65536, 65536
      %22 = vsyncadd [#allocation3], %s21
      %s23 = sshll.u32 [#allocation2], 4
      %s24 = int_to_ptr.vmem [resolvable:$true] %s23
      %29 = dma.hbm_to_vmem [thread:$0]  %s1, 65536, %s24, [#allocation3], 256, 256, 16
    $region9: #{siamese_forward.3} parent=1 // pred_fallthru
      _
    // Predicated region
    $region10: #{siamese_forward.3} parent=1 // pred_check
      _
    $region11: #{siamese_forward.3} parent=1 // pred_check_branch
      %31 = sbr.rel (0) target = $region13
    $region12: #{siamese_forward.3} parent=1 // pred_region
      %s33 = ssub.s32 64, 64
      %34 = vsyncadd [#allocation5], %s33
      %s36 = sshll.u32 [#allocation4], 4
      %s37 = int_to_ptr.vmem [resolvable:$true] %s36
      %39 = dma.hbm_to_vmem [thread:$0]  %s2, 64, %s37, [#allocation5]
    $region13: #{siamese_forward.3} parent=1 // pred_fallthru
      _
    // Predicated region
    $region14: #{siamese_forward.3} parent=1 // pred_check
      _
    $region15: #{siamese_forward.3} parent=1 // pred_check_branch
      %41 = sbr.rel (0) target = $region17
    $region16: #{siamese_forward.3} parent=1 // pred_region
      %s43 = ssub.s32 16384, 16384
      %44 = vsyncadd [#allocation5], %s43
      %s45 = sshll.u32 [#allocation6], 4
      %s46 = int_to_ptr.vmem [resolvable:$true] %s45
      %51 = dma.hbm_to_vmem [thread:$0]  %s3, 16384, %s46, [#allocation5], 256, 256, 16
    $region17: #{siamese_forward.3} parent=1 // pred_fallthru
      _
    // Predicated region
    $region18: #{siamese_forward.3} parent=1 // pred_check
      _
    $region19: #{siamese_forward.3} parent=1 // pred_check_branch
      %53 = sbr.rel (0) target = $region21
    $region20: #{siamese_forward.3} parent=1 // pred_region
      %s55 = ssub.s32 64, 64
      %56 = vsyncadd [#allocation8], %s55
      %s58 = sshll.u32 [#allocation7], 4
      %s59 = int_to_ptr.vmem [resolvable:$true] %s58
      %61 = dma.hbm_to_vmem [thread:$0]  %s4, 64, %s59, [#allocation8]
    $region21: #{siamese_forward.3} parent=1 // pred_fallthru
      _
    // Predicated region
    $region22: #{siamese_forward.3} parent=1 // pred_check
      _
    $region23: #{siamese_forward.3} parent=1 // pred_check_branch
      %63 = sbr.rel (0) target = $region25
    $region24: #{siamese_forward.3} parent=1 // pred_region
      %s65 = ssub.s32 4096, 4096
      %66 = vsyncadd [#allocation8], %s65
      %s67 = sshll.u32 [#allocation9], 4
      %s68 = int_to_ptr.vmem [resolvable:$true] %s67
      %73 = dma.hbm_to_vmem [thread:$0]  %s5, 4096, %s68, [#allocation8], 64, 64, 4
    $region25: #{siamese_forward.3} parent=1 // pred_fallthru
      _
    // Predicated region
    $region26: #{siamese_forward.3} parent=1 // pred_check
      _
    $region27: #{siamese_forward.3} parent=1 // pred_check_branch
      %75 = sbr.rel (0) target = $region29
    $region28: #{siamese_forward.3} parent=1 // pred_region
      %s77 = ssub.s32 16, 16
      %78 = vsyncadd [#allocation11], %s77
      %s80 = sshll.u32 [#allocation10], 4
      %s81 = int_to_ptr.vmem [resolvable:$true] %s80
      %83 = dma.hbm_to_vmem [thread:$0]  %s6, 16, %s81, [#allocation11]
    $region29: #{siamese_forward.3} parent=1 // pred_fallthru
      _
    // Predicated region
    $region30: #{siamese_forward.3} parent=1 // pred_check
      _
    $region31: #{siamese_forward.3} parent=1 // pred_check_branch
      %85 = sbr.rel (0) target = $region33
    $region32: #{siamese_forward.3} parent=1 // pred_region
      %86 = dma.done [#allocation3], 65536
    $region33: #{siamese_forward.3} parent=1 // pred_fallthru
      _
    // Predicated region
    $region34: #{siamese_forward.3} parent=1 // pred_check
      _
    $region35: #{siamese_forward.3} parent=1 // pred_check_branch
      %88 = sbr.rel (0) target = $region37
    $region36: #{siamese_forward.3} parent=1 // pred_region
      %89 = dma.done [#allocation5], 64
    $region37: #{siamese_forward.3} parent=1 // pred_fallthru
      _
    // Predicated region
    $region38: #{siamese_forward.3} parent=1 // pred_check
      _
    $region39: #{siamese_forward.3} parent=1 // pred_check_branch
      %91 = sbr.rel (0) target = $region41
    $region40: #{siamese_forward.3} parent=1 // pred_region
      %92 = dma.done [#allocation5], 16384
    $region41: #{siamese_forward.3} parent=1 // pred_fallthru
      _
    // Predicated region
    $region42: #{siamese_forward.3} parent=1 // pred_check
      _
    $region43: #{siamese_forward.3} parent=1 // pred_check_branch
      %94 = sbr.rel (0) target = $region45
    $region44: #{siamese_forward.3} parent=1 // pred_region
      %95 = dma.done [#allocation8], 64
    $region45: #{siamese_forward.3} parent=1 // pred_fallthru
      _
    // Predicated region
    $region46: #{siamese_forward.3} parent=1 // pred_check
      _
    $region47: #{siamese_forward.3} parent=1 // pred_check_branch
      %97 = sbr.rel (0) target = $region49
    $region48: #{siamese_forward.3} parent=1 // pred_region
      %98 = dma.done [#allocation8], 4096
    $region49: #{siamese_forward.3} parent=1 // pred_fallthru
      _
    // Predicated region
    $region50: #{siamese_forward.3} parent=1 // pred_check
      _
    $region51: #{siamese_forward.3} parent=1 // pred_check_branch
      %100 = sbr.rel (0) target = $region53
    $region52: #{siamese_forward.3} parent=1 // pred_region
      %101 = dma.done [#allocation11], 16
    $region53: #{siamese_forward.3} parent=1 // pred_fallthru
      _
    %v103 = vld [vmem:[%s0] sm:$0xff]
    %v104 = vld [vmem:[%s0 + $0x8] sm:$0xff]
    %v105 = vld [vmem:[%s0 + $0x10] sm:$0xff]
    %v106 = vld [vmem:[%s0 + $0x18] sm:$0xff]
    %v107 = vld [vmem:[#allocation2] sm:$0xff]
    %v108 = vld [vmem:[#allocation2 + $0x8] sm:$0xff]
    %v109 = vld [vmem:[#allocation2 + $0x10] sm:$0xff]
    %v110 = vld [vmem:[#allocation2 + $0x18] sm:$0xff]
    %v111 = vld [vmem:[#allocation2 + $0x20] sm:$0xff]
    %v112 = vld [vmem:[#allocation2 + $0x28] sm:$0xff]
    %v113 = vld [vmem:[#allocation2 + $0x30] sm:$0xff]
    %v114 = vld [vmem:[#allocation2 + $0x38] sm:$0xff]
    %v115 = vld [vmem:[#allocation2 + $0x40] sm:$0xff]
    %v116 = vld [vmem:[#allocation2 + $0x48] sm:$0xff]
    %v117 = vld [vmem:[#allocation2 + $0x50] sm:$0xff]
    %v118 = vld [vmem:[#allocation2 + $0x58] sm:$0xff]
    %v119 = vld [vmem:[#allocation2 + $0x60] sm:$0xff]
    %v120 = vld [vmem:[#allocation2 + $0x68] sm:$0xff]
    %v121 = vld [vmem:[#allocation2 + $0x70] sm:$0xff]
    %v122 = vld [vmem:[#allocation2 + $0x78] sm:$0xff]
    %v123 = vld [vmem:[#allocation2 + $0x80] sm:$0xff]
    %v124 = vld [vmem:[#allocation2 + $0x88] sm:$0xff]
    %v125 = vld [vmem:[#allocation2 + $0x90] sm:$0xff]
    %v126 = vld [vmem:[#allocation2 + $0x98] sm:$0xff]
    %v127 = vld [vmem:[#allocation2 + $0xa0] sm:$0xff]
    %v128 = vld [vmem:[#allocation2 + $0xa8] sm:$0xff]
    %v129 = vld [vmem:[#allocation2 + $0xb0] sm:$0xff]
    %v130 = vld [vmem:[#allocation2 + $0xb8] sm:$0xff]
    %v131 = vld [vmem:[#allocation2 + $0xc0] sm:$0xff]
    %v132 = vld [vmem:[#allocation2 + $0xc8] sm:$0xff]
    %v133 = vld [vmem:[#allocation2 + $0xd0] sm:$0xff]
    %v134 = vld [vmem:[#allocation2 + $0xd8] sm:$0xff]
    %v135 = vld [vmem:[#allocation2 + $0xe0] sm:$0xff]
    %v136 = vld [vmem:[#allocation2 + $0xe8] sm:$0xff]
    %v137 = vld [vmem:[#allocation2 + $0xf0] sm:$0xff]
    %v138 = vld [vmem:[#allocation2 + $0xf8] sm:$0xff]
    %v139 = vld [vmem:[#allocation2 + $0x100] sm:$0xff]
    %v140 = vld [vmem:[#allocation2 + $0x108] sm:$0xff]
    %v141 = vld [vmem:[#allocation2 + $0x110] sm:$0xff]
    %v142 = vld [vmem:[#allocation2 + $0x118] sm:$0xff]
    %v143 = vld [vmem:[#allocation2 + $0x120] sm:$0xff]
    %v144 = vld [vmem:[#allocation2 + $0x128] sm:$0xff]
    %v145 = vld [vmem:[#allocation2 + $0x130] sm:$0xff]
    %v146 = vld [vmem:[#allocation2 + $0x138] sm:$0xff]
    %v147 = vld [vmem:[#allocation2 + $0x140] sm:$0xff]
    %v148 = vld [vmem:[#allocation2 + $0x148] sm:$0xff]
    %v149 = vld [vmem:[#allocation2 + $0x150] sm:$0xff]
    %v150 = vld [vmem:[#allocation2 + $0x158] sm:$0xff]
    %v151 = vld [vmem:[#allocation2 + $0x160] sm:$0xff]
    %v152 = vld [vmem:[#allocation2 + $0x168] sm:$0xff]
    %v153 = vld [vmem:[#allocation2 + $0x170] sm:$0xff]
    %v154 = vld [vmem:[#allocation2 + $0x178] sm:$0xff]
    %v155 = vld [vmem:[#allocation2 + $0x180] sm:$0xff]
    %v156 = vld [vmem:[#allocation2 + $0x188] sm:$0xff]
    %v157 = vld [vmem:[#allocation2 + $0x190] sm:$0xff]
    %v158 = vld [vmem:[#allocation2 + $0x198] sm:$0xff]
    %v159 = vld [vmem:[#allocation2 + $0x1a0] sm:$0xff]
    %v160 = vld [vmem:[#allocation2 + $0x1a8] sm:$0xff]
    %v161 = vld [vmem:[#allocation2 + $0x1b0] sm:$0xff]
    %v162 = vld [vmem:[#allocation2 + $0x1b8] sm:$0xff]
    %v163 = vld [vmem:[#allocation2 + $0x1c0] sm:$0xff]
    %v164 = vld [vmem:[#allocation2 + $0x1c8] sm:$0xff]
    %v165 = vld [vmem:[#allocation2 + $0x1d0] sm:$0xff]
    %v166 = vld [vmem:[#allocation2 + $0x1d8] sm:$0xff]
    %v167 = vld [vmem:[#allocation2 + $0x1e0] sm:$0xff]
    %v168 = vld [vmem:[#allocation2 + $0x1e8] sm:$0xff]
    %v169 = vld [vmem:[#allocation2 + $0x1f0] sm:$0xff]
    %v170 = vld [vmem:[#allocation2 + $0x1f8] sm:$0xff]
    %v171 = vld [vmem:[#allocation2 + $0x200] sm:$0xff]
    %v172 = vld [vmem:[#allocation2 + $0x208] sm:$0xff]
    %v173 = vld [vmem:[#allocation2 + $0x210] sm:$0xff]
    %v174 = vld [vmem:[#allocation2 + $0x218] sm:$0xff]
    %v175 = vld [vmem:[#allocation2 + $0x220] sm:$0xff]
    %v176 = vld [vmem:[#allocation2 + $0x228] sm:$0xff]
    %v177 = vld [vmem:[#allocation2 + $0x230] sm:$0xff]
    %v178 = vld [vmem:[#allocation2 + $0x238] sm:$0xff]
    %v179 = vld [vmem:[#allocation2 + $0x240] sm:$0xff]
    %v180 = vld [vmem:[#allocation2 + $0x248] sm:$0xff]
    %v181 = vld [vmem:[#allocation2 + $0x250] sm:$0xff]
    %v182 = vld [vmem:[#allocation2 + $0x258] sm:$0xff]
    %v183 = vld [vmem:[#allocation2 + $0x260] sm:$0xff]
    %v184 = vld [vmem:[#allocation2 + $0x268] sm:$0xff]
    %v185 = vld [vmem:[#allocation2 + $0x270] sm:$0xff]
    %v186 = vld [vmem:[#allocation2 + $0x278] sm:$0xff]
    %v187 = vld [vmem:[#allocation2 + $0x280] sm:$0xff]
    %v188 = vld [vmem:[#allocation2 + $0x288] sm:$0xff]
    %v189 = vld [vmem:[#allocation2 + $0x290] sm:$0xff]
    %v190 = vld [vmem:[#allocation2 + $0x298] sm:$0xff]
    %v191 = vld [vmem:[#allocation2 + $0x2a0] sm:$0xff]
    %v192 = vld [vmem:[#allocation2 + $0x2a8] sm:$0xff]
    %v193 = vld [vmem:[#allocation2 + $0x2b0] sm:$0xff]
    %v194 = vld [vmem:[#allocation2 + $0x2b8] sm:$0xff]
    %v195 = vld [vmem:[#allocation2 + $0x2c0] sm:$0xff]
    %v196 = vld [vmem:[#allocation2 + $0x2c8] sm:$0xff]
    %v197 = vld [vmem:[#allocation2 + $0x2d0] sm:$0xff]
    %v198 = vld [vmem:[#allocation2 + $0x2d8] sm:$0xff]
    %v199 = vld [vmem:[#allocation2 + $0x2e0] sm:$0xff]
    %v200 = vld [vmem:[#allocation2 + $0x2e8] sm:$0xff]
    %v201 = vld [vmem:[#allocation2 + $0x2f0] sm:$0xff]
    %v202 = vld [vmem:[#allocation2 + $0x2f8] sm:$0xff]
    %v203 = vld [vmem:[#allocation2 + $0x300] sm:$0xff]
    %v204 = vld [vmem:[#allocation2 + $0x308] sm:$0xff]
    %v205 = vld [vmem:[#allocation2 + $0x310] sm:$0xff]
    %v206 = vld [vmem:[#allocation2 + $0x318] sm:$0xff]
    %v207 = vld [vmem:[#allocation2 + $0x320] sm:$0xff]
    %v208 = vld [vmem:[#allocation2 + $0x328] sm:$0xff]
    %v209 = vld [vmem:[#allocation2 + $0x330] sm:$0xff]
    %v210 = vld [vmem:[#allocation2 + $0x338] sm:$0xff]
    %v211 = vld [vmem:[#allocation2 + $0x340] sm:$0xff]
    %v212 = vld [vmem:[#allocation2 + $0x348] sm:$0xff]
    %v213 = vld [vmem:[#allocation2 + $0x350] sm:$0xff]
    %v214 = vld [vmem:[#allocation2 + $0x358] sm:$0xff]
    %v215 = vld [vmem:[#allocation2 + $0x360] sm:$0xff]
    %v216 = vld [vmem:[#allocation2 + $0x368] sm:$0xff]
    %v217 = vld [vmem:[#allocation2 + $0x370] sm:$0xff]
    %v218 = vld [vmem:[#allocation2 + $0x378] sm:$0xff]
    %v219 = vld [vmem:[#allocation2 + $0x380] sm:$0xff]
    %v220 = vld [vmem:[#allocation2 + $0x388] sm:$0xff]
    %v221 = vld [vmem:[#allocation2 + $0x390] sm:$0xff]
    %v222 = vld [vmem:[#allocation2 + $0x398] sm:$0xff]
    %v223 = vld [vmem:[#allocation2 + $0x3a0] sm:$0xff]
    %v224 = vld [vmem:[#allocation2 + $0x3a8] sm:$0xff]
    %v225 = vld [vmem:[#allocation2 + $0x3b0] sm:$0xff]
    %v226 = vld [vmem:[#allocation2 + $0x3b8] sm:$0xff]
    %v227 = vld [vmem:[#allocation2 + $0x3c0] sm:$0xff]
    %v228 = vld [vmem:[#allocation2 + $0x3c8] sm:$0xff]
    %v229 = vld [vmem:[#allocation2 + $0x3d0] sm:$0xff]
    %v230 = vld [vmem:[#allocation2 + $0x3d8] sm:$0xff]
    %v231 = vld [vmem:[#allocation2 + $0x3e0] sm:$0xff]
    %v232 = vld [vmem:[#allocation2 + $0x3e8] sm:$0xff]
    %v233 = vld [vmem:[#allocation2 + $0x3f0] sm:$0xff]
    %v234 = vld [vmem:[#allocation2 + $0x3f8] sm:$0xff]
    %v235 = vld [vmem:[#allocation2 + $0x400] sm:$0xff]
    %v236 = vld [vmem:[#allocation2 + $0x408] sm:$0xff]
    %v237 = vld [vmem:[#allocation2 + $0x410] sm:$0xff]
    %v238 = vld [vmem:[#allocation2 + $0x418] sm:$0xff]
    %v239 = vld [vmem:[#allocation2 + $0x420] sm:$0xff]
    %v240 = vld [vmem:[#allocation2 + $0x428] sm:$0xff]
    %v241 = vld [vmem:[#allocation2 + $0x430] sm:$0xff]
    %v242 = vld [vmem:[#allocation2 + $0x438] sm:$0xff]
    %v243 = vld [vmem:[#allocation2 + $0x440] sm:$0xff]
    %v244 = vld [vmem:[#allocation2 + $0x448] sm:$0xff]
    %v245 = vld [vmem:[#allocation2 + $0x450] sm:$0xff]
    %v246 = vld [vmem:[#allocation2 + $0x458] sm:$0xff]
    %v247 = vld [vmem:[#allocation2 + $0x460] sm:$0xff]
    %v248 = vld [vmem:[#allocation2 + $0x468] sm:$0xff]
    %v249 = vld [vmem:[#allocation2 + $0x470] sm:$0xff]
    %v250 = vld [vmem:[#allocation2 + $0x478] sm:$0xff]
    %v251 = vld [vmem:[#allocation2 + $0x480] sm:$0xff]
    %v252 = vld [vmem:[#allocation2 + $0x488] sm:$0xff]
    %v253 = vld [vmem:[#allocation2 + $0x490] sm:$0xff]
    %v254 = vld [vmem:[#allocation2 + $0x498] sm:$0xff]
    %v255 = vld [vmem:[#allocation2 + $0x4a0] sm:$0xff]
    %v256 = vld [vmem:[#allocation2 + $0x4a8] sm:$0xff]
    %v257 = vld [vmem:[#allocation2 + $0x4b0] sm:$0xff]
    %v258 = vld [vmem:[#allocation2 + $0x4b8] sm:$0xff]
    %v259 = vld [vmem:[#allocation2 + $0x4c0] sm:$0xff]
    %v260 = vld [vmem:[#allocation2 + $0x4c8] sm:$0xff]
    %v261 = vld [vmem:[#allocation2 + $0x4d0] sm:$0xff]
    %v262 = vld [vmem:[#allocation2 + $0x4d8] sm:$0xff]
    %v263 = vld [vmem:[#allocation2 + $0x4e0] sm:$0xff]
    %v264 = vld [vmem:[#allocation2 + $0x4e8] sm:$0xff]
    %v265 = vld [vmem:[#allocation2 + $0x4f0] sm:$0xff]
    %v266 = vld [vmem:[#allocation2 + $0x4f8] sm:$0xff]
    %v267 = vld [vmem:[#allocation2 + $0x500] sm:$0xff]
    %v268 = vld [vmem:[#allocation2 + $0x508] sm:$0xff]
    %v269 = vld [vmem:[#allocation2 + $0x510] sm:$0xff]
    %v270 = vld [vmem:[#allocation2 + $0x518] sm:$0xff]
    %v271 = vld [vmem:[#allocation2 + $0x520] sm:$0xff]
    %v272 = vld [vmem:[#allocation2 + $0x528] sm:$0xff]
    %v273 = vld [vmem:[#allocation2 + $0x530] sm:$0xff]
    %v274 = vld [vmem:[#allocation2 + $0x538] sm:$0xff]
    %v275 = vld [vmem:[#allocation2 + $0x540] sm:$0xff]
    %v276 = vld [vmem:[#allocation2 + $0x548] sm:$0xff]
    %v277 = vld [vmem:[#allocation2 + $0x550] sm:$0xff]
    %v278 = vld [vmem:[#allocation2 + $0x558] sm:$0xff]
    %v279 = vld [vmem:[#allocation2 + $0x560] sm:$0xff]
    %v280 = vld [vmem:[#allocation2 + $0x568] sm:$0xff]
    %v281 = vld [vmem:[#allocation2 + $0x570] sm:$0xff]
    %v282 = vld [vmem:[#allocation2 + $0x578] sm:$0xff]
    %v283 = vld [vmem:[#allocation2 + $0x580] sm:$0xff]
    %v284 = vld [vmem:[#allocation2 + $0x588] sm:$0xff]
    %v285 = vld [vmem:[#allocation2 + $0x590] sm:$0xff]
    %v286 = vld [vmem:[#allocation2 + $0x598] sm:$0xff]
    %v287 = vld [vmem:[#allocation2 + $0x5a0] sm:$0xff]
    %v288 = vld [vmem:[#allocation2 + $0x5a8] sm:$0xff]
    %v289 = vld [vmem:[#allocation2 + $0x5b0] sm:$0xff]
    %v290 = vld [vmem:[#allocation2 + $0x5b8] sm:$0xff]
    %v291 = vld [vmem:[#allocation2 + $0x5c0] sm:$0xff]
    %v292 = vld [vmem:[#allocation2 + $0x5c8] sm:$0xff]
    %v293 = vld [vmem:[#allocation2 + $0x5d0] sm:$0xff]
    %v294 = vld [vmem:[#allocation2 + $0x5d8] sm:$0xff]
    %v295 = vld [vmem:[#allocation2 + $0x5e0] sm:$0xff]
    %v296 = vld [vmem:[#allocation2 + $0x5e8] sm:$0xff]
    %v297 = vld [vmem:[#allocation2 + $0x5f0] sm:$0xff]
    %v298 = vld [vmem:[#allocation2 + $0x5f8] sm:$0xff]
    %v299 = vld [vmem:[#allocation2 + $0x600] sm:$0xff]
    %v300 = vld [vmem:[#allocation2 + $0x608] sm:$0xff]
    %v301 = vld [vmem:[#allocation2 + $0x610] sm:$0xff]
    %v302 = vld [vmem:[#allocation2 + $0x618] sm:$0xff]
    %v303 = vld [vmem:[#allocation2 + $0x620] sm:$0xff]
    %v304 = vld [vmem:[#allocation2 + $0x628] sm:$0xff]
    %v305 = vld [vmem:[#allocation2 + $0x630] sm:$0xff]
    %v306 = vld [vmem:[#allocation2 + $0x638] sm:$0xff]
    %v307 = vld [vmem:[#allocation2 + $0x640] sm:$0xff]
    %v308 = vld [vmem:[#allocation2 + $0x648] sm:$0xff]
    %v309 = vld [vmem:[#allocation2 + $0x650] sm:$0xff]
    %v310 = vld [vmem:[#allocation2 + $0x658] sm:$0xff]
    %v311 = vld [vmem:[#allocation2 + $0x660] sm:$0xff]
    %v312 = vld [vmem:[#allocation2 + $0x668] sm:$0xff]
    %v313 = vld [vmem:[#allocation2 + $0x670] sm:$0xff]
    %v314 = vld [vmem:[#allocation2 + $0x678] sm:$0xff]
    %v315 = vld [vmem:[#allocation2 + $0x680] sm:$0xff]
    %v316 = vld [vmem:[#allocation2 + $0x688] sm:$0xff]
    %v317 = vld [vmem:[#allocation2 + $0x690] sm:$0xff]
    %v318 = vld [vmem:[#allocation2 + $0x698] sm:$0xff]
    %v319 = vld [vmem:[#allocation2 + $0x6a0] sm:$0xff]
    %v320 = vld [vmem:[#allocation2 + $0x6a8] sm:$0xff]
    %v321 = vld [vmem:[#allocation2 + $0x6b0] sm:$0xff]
    %v322 = vld [vmem:[#allocation2 + $0x6b8] sm:$0xff]
    %v323 = vld [vmem:[#allocation2 + $0x6c0] sm:$0xff]
    %v324 = vld [vmem:[#allocation2 + $0x6c8] sm:$0xff]
    %v325 = vld [vmem:[#allocation2 + $0x6d0] sm:$0xff]
    %v326 = vld [vmem:[#allocation2 + $0x6d8] sm:$0xff]
    %v327 = vld [vmem:[#allocation2 + $0x6e0] sm:$0xff]
    %v328 = vld [vmem:[#allocation2 + $0x6e8] sm:$0xff]
    %v329 = vld [vmem:[#allocation2 + $0x6f0] sm:$0xff]
    %v330 = vld [vmem:[#allocation2 + $0x6f8] sm:$0xff]
    %v331 = vld [vmem:[#allocation2 + $0x700] sm:$0xff]
    %v332 = vld [vmem:[#allocation2 + $0x708] sm:$0xff]
    %v333 = vld [vmem:[#allocation2 + $0x710] sm:$0xff]
    %v334 = vld [vmem:[#allocation2 + $0x718] sm:$0xff]
    %v335 = vld [vmem:[#allocation2 + $0x720] sm:$0xff]
    %v336 = vld [vmem:[#allocation2 + $0x728] sm:$0xff]
    %v337 = vld [vmem:[#allocation2 + $0x730] sm:$0xff]
    %v338 = vld [vmem:[#allocation2 + $0x738] sm:$0xff]
    %v339 = vld [vmem:[#allocation2 + $0x740] sm:$0xff]
    %v340 = vld [vmem:[#allocation2 + $0x748] sm:$0xff]
    %v341 = vld [vmem:[#allocation2 + $0x750] sm:$0xff]
    %v342 = vld [vmem:[#allocation2 + $0x758] sm:$0xff]
    %v343 = vld [vmem:[#allocation2 + $0x760] sm:$0xff]
    %v344 = vld [vmem:[#allocation2 + $0x768] sm:$0xff]
    %v345 = vld [vmem:[#allocation2 + $0x770] sm:$0xff]
    %v346 = vld [vmem:[#allocation2 + $0x778] sm:$0xff]
    %v347 = vld [vmem:[#allocation2 + $0x780] sm:$0xff]
    %v348 = vld [vmem:[#allocation2 + $0x788] sm:$0xff]
    %v349 = vld [vmem:[#allocation2 + $0x790] sm:$0xff]
    %v350 = vld [vmem:[#allocation2 + $0x798] sm:$0xff]
    %v351 = vld [vmem:[#allocation2 + $0x7a0] sm:$0xff]
    %v352 = vld [vmem:[#allocation2 + $0x7a8] sm:$0xff]
    %v353 = vld [vmem:[#allocation2 + $0x7b0] sm:$0xff]
    %v354 = vld [vmem:[#allocation2 + $0x7b8] sm:$0xff]
    %v355 = vld [vmem:[#allocation2 + $0x7c0] sm:$0xff]
    %v356 = vld [vmem:[#allocation2 + $0x7c8] sm:$0xff]
    %v357 = vld [vmem:[#allocation2 + $0x7d0] sm:$0xff]
    %v358 = vld [vmem:[#allocation2 + $0x7d8] sm:$0xff]
    %v359 = vld [vmem:[#allocation2 + $0x7e0] sm:$0xff]
    %v360 = vld [vmem:[#allocation2 + $0x7e8] sm:$0xff]
    %v361 = vld [vmem:[#allocation2 + $0x7f0] sm:$0xff]
    %v362 = vld [vmem:[#allocation2 + $0x7f8] sm:$0xff]
    %v363 = vld [vmem:[#allocation2 + $0x800] sm:$0xff]
    %v364 = vld [vmem:[#allocation2 + $0x808] sm:$0xff]
    %v365 = vld [vmem:[#allocation2 + $0x810] sm:$0xff]
    %v366 = vld [vmem:[#allocation2 + $0x818] sm:$0xff]
    %v367 = vld [vmem:[#allocation2 + $0x820] sm:$0xff]
    %v368 = vld [vmem:[#allocation2 + $0x828] sm:$0xff]
    %v369 = vld [vmem:[#allocation2 + $0x830] sm:$0xff]
    %v370 = vld [vmem:[#allocation2 + $0x838] sm:$0xff]
    %v371 = vld [vmem:[#allocation2 + $0x840] sm:$0xff]
    %v372 = vld [vmem:[#allocation2 + $0x848] sm:$0xff]
    %v373 = vld [vmem:[#allocation2 + $0x850] sm:$0xff]
    %v374 = vld [vmem:[#allocation2 + $0x858] sm:$0xff]
    %v375 = vld [vmem:[#allocation2 + $0x860] sm:$0xff]
    %v376 = vld [vmem:[#allocation2 + $0x868] sm:$0xff]
    %v377 = vld [vmem:[#allocation2 + $0x870] sm:$0xff]
    %v378 = vld [vmem:[#allocation2 + $0x878] sm:$0xff]
    %v379 = vld [vmem:[#allocation2 + $0x880] sm:$0xff]
    %v380 = vld [vmem:[#allocation2 + $0x888] sm:$0xff]
    %v381 = vld [vmem:[#allocation2 + $0x890] sm:$0xff]
    %v382 = vld [vmem:[#allocation2 + $0x898] sm:$0xff]
    %v383 = vld [vmem:[#allocation2 + $0x8a0] sm:$0xff]
    %v384 = vld [vmem:[#allocation2 + $0x8a8] sm:$0xff]
    %v385 = vld [vmem:[#allocation2 + $0x8b0] sm:$0xff]
    %v386 = vld [vmem:[#allocation2 + $0x8b8] sm:$0xff]
    %v387 = vld [vmem:[#allocation2 + $0x8c0] sm:$0xff]
    %v388 = vld [vmem:[#allocation2 + $0x8c8] sm:$0xff]
    %v389 = vld [vmem:[#allocation2 + $0x8d0] sm:$0xff]
    %v390 = vld [vmem:[#allocation2 + $0x8d8] sm:$0xff]
    %v391 = vld [vmem:[#allocation2 + $0x8e0] sm:$0xff]
    %v392 = vld [vmem:[#allocation2 + $0x8e8] sm:$0xff]
    %v393 = vld [vmem:[#allocation2 + $0x8f0] sm:$0xff]
    %v394 = vld [vmem:[#allocation2 + $0x8f8] sm:$0xff]
    %v395 = vld [vmem:[#allocation2 + $0x900] sm:$0xff]
    %v396 = vld [vmem:[#allocation2 + $0x908] sm:$0xff]
    %v397 = vld [vmem:[#allocation2 + $0x910] sm:$0xff]
    %v398 = vld [vmem:[#allocation2 + $0x918] sm:$0xff]
    %v399 = vld [vmem:[#allocation2 + $0x920] sm:$0xff]
    %v400 = vld [vmem:[#allocation2 + $0x928] sm:$0xff]
    %v401 = vld [vmem:[#allocation2 + $0x930] sm:$0xff]
    %v402 = vld [vmem:[#allocation2 + $0x938] sm:$0xff]
    %v403 = vld [vmem:[#allocation2 + $0x940] sm:$0xff]
    %v404 = vld [vmem:[#allocation2 + $0x948] sm:$0xff]
    %v405 = vld [vmem:[#allocation2 + $0x950] sm:$0xff]
    %v406 = vld [vmem:[#allocation2 + $0x958] sm:$0xff]
    %v407 = vld [vmem:[#allocation2 + $0x960] sm:$0xff]
    %v408 = vld [vmem:[#allocation2 + $0x968] sm:$0xff]
    %v409 = vld [vmem:[#allocation2 + $0x970] sm:$0xff]
    %v410 = vld [vmem:[#allocation2 + $0x978] sm:$0xff]
    %v411 = vld [vmem:[#allocation2 + $0x980] sm:$0xff]
    %v412 = vld [vmem:[#allocation2 + $0x988] sm:$0xff]
    %v413 = vld [vmem:[#allocation2 + $0x990] sm:$0xff]
    %v414 = vld [vmem:[#allocation2 + $0x998] sm:$0xff]
    %v415 = vld [vmem:[#allocation2 + $0x9a0] sm:$0xff]
    %v416 = vld [vmem:[#allocation2 + $0x9a8] sm:$0xff]
    %v417 = vld [vmem:[#allocation2 + $0x9b0] sm:$0xff]
    %v418 = vld [vmem:[#allocation2 + $0x9b8] sm:$0xff]
    %v419 = vld [vmem:[#allocation2 + $0x9c0] sm:$0xff]
    %v420 = vld [vmem:[#allocation2 + $0x9c8] sm:$0xff]
    %v421 = vld [vmem:[#allocation2 + $0x9d0] sm:$0xff]
    %v422 = vld [vmem:[#allocation2 + $0x9d8] sm:$0xff]
    %v423 = vld [vmem:[#allocation2 + $0x9e0] sm:$0xff]
    %v424 = vld [vmem:[#allocation2 + $0x9e8] sm:$0xff]
    %v425 = vld [vmem:[#allocation2 + $0x9f0] sm:$0xff]
    %v426 = vld [vmem:[#allocation2 + $0x9f8] sm:$0xff]
    %v427 = vld [vmem:[#allocation2 + $0xa00] sm:$0xff]
    %v428 = vld [vmem:[#allocation2 + $0xa08] sm:$0xff]
    %v429 = vld [vmem:[#allocation2 + $0xa10] sm:$0xff]
    %v430 = vld [vmem:[#allocation2 + $0xa18] sm:$0xff]
    %v431 = vld [vmem:[#allocation2 + $0xa20] sm:$0xff]
    %v432 = vld [vmem:[#allocation2 + $0xa28] sm:$0xff]
    %v433 = vld [vmem:[#allocation2 + $0xa30] sm:$0xff]
    %v434 = vld [vmem:[#allocation2 + $0xa38] sm:$0xff]
    %v435 = vld [vmem:[#allocation2 + $0xa40] sm:$0xff]
    %v436 = vld [vmem:[#allocation2 + $0xa48] sm:$0xff]
    %v437 = vld [vmem:[#allocation2 + $0xa50] sm:$0xff]
    %v438 = vld [vmem:[#allocation2 + $0xa58] sm:$0xff]
    %v439 = vld [vmem:[#allocation2 + $0xa60] sm:$0xff]
    %v440 = vld [vmem:[#allocation2 + $0xa68] sm:$0xff]
    %v441 = vld [vmem:[#allocation2 + $0xa70] sm:$0xff]
    %v442 = vld [vmem:[#allocation2 + $0xa78] sm:$0xff]
    %v443 = vld [vmem:[#allocation2 + $0xa80] sm:$0xff]
    %v444 = vld [vmem:[#allocation2 + $0xa88] sm:$0xff]
    %v445 = vld [vmem:[#allocation2 + $0xa90] sm:$0xff]
    %v446 = vld [vmem:[#allocation2 + $0xa98] sm:$0xff]
    %v447 = vld [vmem:[#allocation2 + $0xaa0] sm:$0xff]
    %v448 = vld [vmem:[#allocation2 + $0xaa8] sm:$0xff]
    %v449 = vld [vmem:[#allocation2 + $0xab0] sm:$0xff]
    %v450 = vld [vmem:[#allocation2 + $0xab8] sm:$0xff]
    %v451 = vld [vmem:[#allocation2 + $0xac0] sm:$0xff]
    %v452 = vld [vmem:[#allocation2 + $0xac8] sm:$0xff]
    %v453 = vld [vmem:[#allocation2 + $0xad0] sm:$0xff]
    %v454 = vld [vmem:[#allocation2 + $0xad8] sm:$0xff]
    %v455 = vld [vmem:[#allocation2 + $0xae0] sm:$0xff]
    %v456 = vld [vmem:[#allocation2 + $0xae8] sm:$0xff]
    %v457 = vld [vmem:[#allocation2 + $0xaf0] sm:$0xff]
    %v458 = vld [vmem:[#allocation2 + $0xaf8] sm:$0xff]
    %v459 = vld [vmem:[#allocation2 + $0xb00] sm:$0xff]
    %v460 = vld [vmem:[#allocation2 + $0xb08] sm:$0xff]
    %v461 = vld [vmem:[#allocation2 + $0xb10] sm:$0xff]
    %v462 = vld [vmem:[#allocation2 + $0xb18] sm:$0xff]
    %v463 = vld [vmem:[#allocation2 + $0xb20] sm:$0xff]
    %v464 = vld [vmem:[#allocation2 + $0xb28] sm:$0xff]
    %v465 = vld [vmem:[#allocation2 + $0xb30] sm:$0xff]
    %v466 = vld [vmem:[#allocation2 + $0xb38] sm:$0xff]
    %v467 = vld [vmem:[#allocation2 + $0xb40] sm:$0xff]
    %v468 = vld [vmem:[#allocation2 + $0xb48] sm:$0xff]
    %v469 = vld [vmem:[#allocation2 + $0xb50] sm:$0xff]
    %v470 = vld [vmem:[#allocation2 + $0xb58] sm:$0xff]
    %v471 = vld [vmem:[#allocation2 + $0xb60] sm:$0xff]
    %v472 = vld [vmem:[#allocation2 + $0xb68] sm:$0xff]
    %v473 = vld [vmem:[#allocation2 + $0xb70] sm:$0xff]
    %v474 = vld [vmem:[#allocation2 + $0xb78] sm:$0xff]
    %v475 = vld [vmem:[#allocation2 + $0xb80] sm:$0xff]
    %v476 = vld [vmem:[#allocation2 + $0xb88] sm:$0xff]
    %v477 = vld [vmem:[#allocation2 + $0xb90] sm:$0xff]
    %v478 = vld [vmem:[#allocation2 + $0xb98] sm:$0xff]
    %v479 = vld [vmem:[#allocation2 + $0xba0] sm:$0xff]
    %v480 = vld [vmem:[#allocation2 + $0xba8] sm:$0xff]
    %v481 = vld [vmem:[#allocation2 + $0xbb0] sm:$0xff]
    %v482 = vld [vmem:[#allocation2 + $0xbb8] sm:$0xff]
    %v483 = vld [vmem:[#allocation2 + $0xbc0] sm:$0xff]
    %v484 = vld [vmem:[#allocation2 + $0xbc8] sm:$0xff]
    %v485 = vld [vmem:[#allocation2 + $0xbd0] sm:$0xff]
    %v486 = vld [vmem:[#allocation2 + $0xbd8] sm:$0xff]
    %v487 = vld [vmem:[#allocation2 + $0xbe0] sm:$0xff]
    %v488 = vld [vmem:[#allocation2 + $0xbe8] sm:$0xff]
    %v489 = vld [vmem:[#allocation2 + $0xbf0] sm:$0xff]
    %v490 = vld [vmem:[#allocation2 + $0xbf8] sm:$0xff]
    %v491 = vld [vmem:[#allocation2 + $0xc00] sm:$0xff]
    %v492 = vld [vmem:[#allocation2 + $0xc08] sm:$0xff]
    %v493 = vld [vmem:[#allocation2 + $0xc10] sm:$0xff]
    %v494 = vld [vmem:[#allocation2 + $0xc18] sm:$0xff]
    %v495 = vld [vmem:[#allocation2 + $0xc20] sm:$0xff]
    %v496 = vld [vmem:[#allocation2 + $0xc28] sm:$0xff]
    %v497 = vld [vmem:[#allocation2 + $0xc30] sm:$0xff]
    %v498 = vld [vmem:[#allocation2 + $0xc38] sm:$0xff]
    %v499 = vld [vmem:[#allocation2 + $0xc40] sm:$0xff]
    %v500 = vld [vmem:[#allocation2 + $0xc48] sm:$0xff]
    %v501 = vld [vmem:[#allocation2 + $0xc50] sm:$0xff]
    %v502 = vld [vmem:[#allocation2 + $0xc58] sm:$0xff]
    %v503 = vld [vmem:[#allocation2 + $0xc60] sm:$0xff]
    %v504 = vld [vmem:[#allocation2 + $0xc68] sm:$0xff]
    %v505 = vld [vmem:[#allocation2 + $0xc70] sm:$0xff]
    %v506 = vld [vmem:[#allocation2 + $0xc78] sm:$0xff]
    %v507 = vld [vmem:[#allocation2 + $0xc80] sm:$0xff]
    %v508 = vld [vmem:[#allocation2 + $0xc88] sm:$0xff]
    %v509 = vld [vmem:[#allocation2 + $0xc90] sm:$0xff]
    %v510 = vld [vmem:[#allocation2 + $0xc98] sm:$0xff]
    %v511 = vld [vmem:[#allocation2 + $0xca0] sm:$0xff]
    %v512 = vld [vmem:[#allocation2 + $0xca8] sm:$0xff]
    %v513 = vld [vmem:[#allocation2 + $0xcb0] sm:$0xff]
    %v514 = vld [vmem:[#allocation2 + $0xcb8] sm:$0xff]
    %v515 = vld [vmem:[#allocation2 + $0xcc0] sm:$0xff]
    %v516 = vld [vmem:[#allocation2 + $0xcc8] sm:$0xff]
    %v517 = vld [vmem:[#allocation2 + $0xcd0] sm:$0xff]
    %v518 = vld [vmem:[#allocation2 + $0xcd8] sm:$0xff]
    %v519 = vld [vmem:[#allocation2 + $0xce0] sm:$0xff]
    %v520 = vld [vmem:[#allocation2 + $0xce8] sm:$0xff]
    %v521 = vld [vmem:[#allocation2 + $0xcf0] sm:$0xff]
    %v522 = vld [vmem:[#allocation2 + $0xcf8] sm:$0xff]
    %v523 = vld [vmem:[#allocation2 + $0xd00] sm:$0xff]
    %v524 = vld [vmem:[#allocation2 + $0xd08] sm:$0xff]
    %v525 = vld [vmem:[#allocation2 + $0xd10] sm:$0xff]
    %v526 = vld [vmem:[#allocation2 + $0xd18] sm:$0xff]
    %v527 = vld [vmem:[#allocation2 + $0xd20] sm:$0xff]
    %v528 = vld [vmem:[#allocation2 + $0xd28] sm:$0xff]
    %v529 = vld [vmem:[#allocation2 + $0xd30] sm:$0xff]
    %v530 = vld [vmem:[#allocation2 + $0xd38] sm:$0xff]
    %v531 = vld [vmem:[#allocation2 + $0xd40] sm:$0xff]
    %v532 = vld [vmem:[#allocation2 + $0xd48] sm:$0xff]
    %v533 = vld [vmem:[#allocation2 + $0xd50] sm:$0xff]
    %v534 = vld [vmem:[#allocation2 + $0xd58] sm:$0xff]
    %v535 = vld [vmem:[#allocation2 + $0xd60] sm:$0xff]
    %v536 = vld [vmem:[#allocation2 + $0xd68] sm:$0xff]
    %v537 = vld [vmem:[#allocation2 + $0xd70] sm:$0xff]
    %v538 = vld [vmem:[#allocation2 + $0xd78] sm:$0xff]
    %v539 = vld [vmem:[#allocation2 + $0xd80] sm:$0xff]
    %v540 = vld [vmem:[#allocation2 + $0xd88] sm:$0xff]
    %v541 = vld [vmem:[#allocation2 + $0xd90] sm:$0xff]
    %v542 = vld [vmem:[#allocation2 + $0xd98] sm:$0xff]
    %v543 = vld [vmem:[#allocation2 + $0xda0] sm:$0xff]
    %v544 = vld [vmem:[#allocation2 + $0xda8] sm:$0xff]
    %v545 = vld [vmem:[#allocation2 + $0xdb0] sm:$0xff]
    %v546 = vld [vmem:[#allocation2 + $0xdb8] sm:$0xff]
    %v547 = vld [vmem:[#allocation2 + $0xdc0] sm:$0xff]
    %v548 = vld [vmem:[#allocation2 + $0xdc8] sm:$0xff]
    %v549 = vld [vmem:[#allocation2 + $0xdd0] sm:$0xff]
    %v550 = vld [vmem:[#allocation2 + $0xdd8] sm:$0xff]
    %v551 = vld [vmem:[#allocation2 + $0xde0] sm:$0xff]
    %v552 = vld [vmem:[#allocation2 + $0xde8] sm:$0xff]
    %v553 = vld [vmem:[#allocation2 + $0xdf0] sm:$0xff]
    %v554 = vld [vmem:[#allocation2 + $0xdf8] sm:$0xff]
    %v555 = vld [vmem:[#allocation2 + $0xe00] sm:$0xff]
    %v556 = vld [vmem:[#allocation2 + $0xe08] sm:$0xff]
    %v557 = vld [vmem:[#allocation2 + $0xe10] sm:$0xff]
    %v558 = vld [vmem:[#allocation2 + $0xe18] sm:$0xff]
    %v559 = vld [vmem:[#allocation2 + $0xe20] sm:$0xff]
    %v560 = vld [vmem:[#allocation2 + $0xe28] sm:$0xff]
    %v561 = vld [vmem:[#allocation2 + $0xe30] sm:$0xff]
    %v562 = vld [vmem:[#allocation2 + $0xe38] sm:$0xff]
    %v563 = vld [vmem:[#allocation2 + $0xe40] sm:$0xff]
    %v564 = vld [vmem:[#allocation2 + $0xe48] sm:$0xff]
    %v565 = vld [vmem:[#allocation2 + $0xe50] sm:$0xff]
    %v566 = vld [vmem:[#allocation2 + $0xe58] sm:$0xff]
    %v567 = vld [vmem:[#allocation2 + $0xe60] sm:$0xff]
    %v568 = vld [vmem:[#allocation2 + $0xe68] sm:$0xff]
    %v569 = vld [vmem:[#allocation2 + $0xe70] sm:$0xff]
    %v570 = vld [vmem:[#allocation2 + $0xe78] sm:$0xff]
    %v571 = vld [vmem:[#allocation2 + $0xe80] sm:$0xff]
    %v572 = vld [vmem:[#allocation2 + $0xe88] sm:$0xff]
    %v573 = vld [vmem:[#allocation2 + $0xe90] sm:$0xff]
    %v574 = vld [vmem:[#allocation2 + $0xe98] sm:$0xff]
    %v575 = vld [vmem:[#allocation2 + $0xea0] sm:$0xff]
    %v576 = vld [vmem:[#allocation2 + $0xea8] sm:$0xff]
    %v577 = vld [vmem:[#allocation2 + $0xeb0] sm:$0xff]
    %v578 = vld [vmem:[#allocation2 + $0xeb8] sm:$0xff]
    %v579 = vld [vmem:[#allocation2 + $0xec0] sm:$0xff]
    %v580 = vld [vmem:[#allocation2 + $0xec8] sm:$0xff]
    %v581 = vld [vmem:[#allocation2 + $0xed0] sm:$0xff]
    %v582 = vld [vmem:[#allocation2 + $0xed8] sm:$0xff]
    %v583 = vld [vmem:[#allocation2 + $0xee0] sm:$0xff]
    %v584 = vld [vmem:[#allocation2 + $0xee8] sm:$0xff]
    %v585 = vld [vmem:[#allocation2 + $0xef0] sm:$0xff]
    %v586 = vld [vmem:[#allocation2 + $0xef8] sm:$0xff]
    %v587 = vld [vmem:[#allocation2 + $0xf00] sm:$0xff]
    %v588 = vld [vmem:[#allocation2 + $0xf08] sm:$0xff]
    %v589 = vld [vmem:[#allocation2 + $0xf10] sm:$0xff]
    %v590 = vld [vmem:[#allocation2 + $0xf18] sm:$0xff]
    %v591 = vld [vmem:[#allocation2 + $0xf20] sm:$0xff]
    %v592 = vld [vmem:[#allocation2 + $0xf28] sm:$0xff]
    %v593 = vld [vmem:[#allocation2 + $0xf30] sm:$0xff]
    %v594 = vld [vmem:[#allocation2 + $0xf38] sm:$0xff]
    %v595 = vld [vmem:[#allocation2 + $0xf40] sm:$0xff]
    %v596 = vld [vmem:[#allocation2 + $0xf48] sm:$0xff]
    %v597 = vld [vmem:[#allocation2 + $0xf50] sm:$0xff]
    %v598 = vld [vmem:[#allocation2 + $0xf58] sm:$0xff]
    %v599 = vld [vmem:[#allocation2 + $0xf60] sm:$0xff]
    %v600 = vld [vmem:[#allocation2 + $0xf68] sm:$0xff]
    %v601 = vld [vmem:[#allocation2 + $0xf70] sm:$0xff]
    %v602 = vld [vmem:[#allocation2 + $0xf78] sm:$0xff]
    %v603 = vld [vmem:[#allocation2 + $0xf80] sm:$0xff]
    %v604 = vld [vmem:[#allocation2 + $0xf88] sm:$0xff]
    %v605 = vld [vmem:[#allocation2 + $0xf90] sm:$0xff]
    %v606 = vld [vmem:[#allocation2 + $0xf98] sm:$0xff]
    %v607 = vld [vmem:[#allocation2 + $0xfa0] sm:$0xff]
    %v608 = vld [vmem:[#allocation2 + $0xfa8] sm:$0xff]
    %v609 = vld [vmem:[#allocation2 + $0xfb0] sm:$0xff]
    %v610 = vld [vmem:[#allocation2 + $0xfb8] sm:$0xff]
    %v611 = vld [vmem:[#allocation2 + $0xfc0] sm:$0xff]
    %v612 = vld [vmem:[#allocation2 + $0xfc8] sm:$0xff]
    %v613 = vld [vmem:[#allocation2 + $0xfd0] sm:$0xff]
    %v614 = vld [vmem:[#allocation2 + $0xfd8] sm:$0xff]
    %v615 = vld [vmem:[#allocation2 + $0xfe0] sm:$0xff]
    %v616 = vld [vmem:[#allocation2 + $0xfe8] sm:$0xff]
    %v617 = vld [vmem:[#allocation2 + $0xff0] sm:$0xff]
    %v618 = vld [vmem:[#allocation2 + $0xff8] sm:$0xff]
    %v619 = vld [vmem:[#allocation4] sm:$0xf]
    %v621 = vlaneseq
    %v622 = vshrl.u32 %v621, 7
    %v623 = vsub.s32 0, %v622
    %v624 = vrot.slane %v619, %v623
    %v625 = vlaneseq
    %v626 = vshrl.u32 %v625, 7
    %v627 = vsub.s32 1, %v626
    %v628 = vrot.slane %v619, %v627
    %v629 = vlaneseq
    %v630 = vshrl.u32 %v629, 7
    %v631 = vsub.s32 2, %v630
    %v632 = vrot.slane %v619, %v631
    %v633 = vlaneseq
    %v634 = vshrl.u32 %v633, 7
    %v635 = vsub.s32 3, %v634
    %v636 = vrot.slane %v619, %v635
    %v645 = vcombine.high %v103, %v103
    %v647 = vunpack.c.l.s4 1983009808
    %v648 = vunpack.c.0.s8 %v647
    %v649 = vlaneseq
    %v650 = vshrl.u32 %v649, 7
    %v651 = vsub.s32 %v648, %v650
    %v652 = vrot.slane %v103, %v651
    %v654 = vunpack.c.l.s4 1983009808
    %v655 = vunpack.c.0.s8 %v654
    %v656 = vlaneseq
    %v657 = vshrl.u32 %v656, 7
    %v658 = vsub.s32 %v655, %v657
    %v659 = vrot.slane %v645, %v658
    %v660 = vcombine.high %v652, %v652
    %v661 = vcombine.high %v659, %v659
    %v662 = vcombine.high %v104, %v104
    %v664 = vunpack.c.l.s4 1983009808
    %v665 = vunpack.c.0.s8 %v664
    %v666 = vlaneseq
    %v667 = vshrl.u32 %v666, 7
    %v668 = vsub.s32 %v665, %v667
    %v669 = vrot.slane %v104, %v668
    %v671 = vunpack.c.l.s4 1983009808
    %v672 = vunpack.c.0.s8 %v671
    %v673 = vlaneseq
    %v674 = vshrl.u32 %v673, 7
    %v675 = vsub.s32 %v672, %v674
    %v676 = vrot.slane %v662, %v675
    %v677 = vcombine.high %v669, %v669
    %v678 = vcombine.high %v676, %v676
    %v679 = vcombine.high %v105, %v105
    %v681 = vunpack.c.l.s4 1983009808
    %v682 = vunpack.c.0.s8 %v681
    %v683 = vlaneseq
    %v684 = vshrl.u32 %v683, 7
    %v685 = vsub.s32 %v682, %v684
    %v686 = vrot.slane %v105, %v685
    %v688 = vunpack.c.l.s4 1983009808
    %v689 = vunpack.c.0.s8 %v688
    %v690 = vlaneseq
    %v691 = vshrl.u32 %v690, 7
    %v692 = vsub.s32 %v689, %v691
    %v693 = vrot.slane %v679, %v692
    %v694 = vcombine.high %v686, %v686
    %v695 = vcombine.high %v693, %v693
    %v696 = vcombine.high %v106, %v106
    %v698 = vunpack.c.l.s4 1983009808
    %v699 = vunpack.c.0.s8 %v698
    %v700 = vlaneseq
    %v701 = vshrl.u32 %v700, 7
    %v702 = vsub.s32 %v699, %v701
    %v703 = vrot.slane %v106, %v702
    %v705 = vunpack.c.l.s4 1983009808
    %v706 = vunpack.c.0.s8 %v705
    %v707 = vlaneseq
    %v708 = vshrl.u32 %v707, 7
    %v709 = vsub.s32 %v706, %v708
    %v710 = vrot.slane %v696, %v709
    %v711 = vcombine.high %v703, %v703
    %v712 = vcombine.high %v710, %v710
    %v1241 = vunpack.c.l.b16 %v107
    %v1242 = vunpack.c.h.b16 %v107
    %v1243 = vunpack.c.l.b16 %v108
    %v1244 = vunpack.c.h.b16 %v108
    %v1245 = vunpack.c.l.b16 %v109
    %v1246 = vunpack.c.h.b16 %v109
    %v1247 = vunpack.c.l.b16 %v110
    %v1248 = vunpack.c.h.b16 %v110
    %v1249 = vunpack.c.l.b16 %v111
    %v1250 = vunpack.c.h.b16 %v111
    %v1251 = vunpack.c.l.b16 %v112
    %v1252 = vunpack.c.h.b16 %v112
    %v1253 = vunpack.c.l.b16 %v113
    %v1254 = vunpack.c.h.b16 %v113
    %v1255 = vunpack.c.l.b16 %v114
    %v1256 = vunpack.c.h.b16 %v114
    %v1257 = vunpack.c.l.b16 %v115
    %v1258 = vunpack.c.h.b16 %v115
    %v1259 = vunpack.c.l.b16 %v116
    %v1260 = vunpack.c.h.b16 %v116
    %v1261 = vunpack.c.l.b16 %v117
    %v1262 = vunpack.c.h.b16 %v117
    %v1263 = vunpack.c.l.b16 %v118
    %v1264 = vunpack.c.h.b16 %v118
    %v1265 = vunpack.c.l.b16 %v119
    %v1266 = vunpack.c.h.b16 %v119
    %v1267 = vunpack.c.l.b16 %v120
    %v1268 = vunpack.c.h.b16 %v120
    %v1269 = vunpack.c.l.b16 %v121
    %v1270 = vunpack.c.h.b16 %v121
    %v1271 = vunpack.c.l.b16 %v122
    %v1272 = vunpack.c.h.b16 %v122
    %v1273 = vunpack.c.l.b16 %v123
    %v1274 = vunpack.c.h.b16 %v123
    %v1275 = vunpack.c.l.b16 %v124
    %v1276 = vunpack.c.h.b16 %v124
    %v1277 = vunpack.c.l.b16 %v125
    %v1278 = vunpack.c.h.b16 %v125
    %v1279 = vunpack.c.l.b16 %v126
    %v1280 = vunpack.c.h.b16 %v126
    %v1281 = vunpack.c.l.b16 %v127
    %v1282 = vunpack.c.h.b16 %v127
    %v1283 = vunpack.c.l.b16 %v128
    %v1284 = vunpack.c.h.b16 %v128
    %v1285 = vunpack.c.l.b16 %v129
    %v1286 = vunpack.c.h.b16 %v129
    %v1287 = vunpack.c.l.b16 %v130
    %v1288 = vunpack.c.h.b16 %v130
    %v1289 = vunpack.c.l.b16 %v131
    %v1290 = vunpack.c.h.b16 %v131
    %v1291 = vunpack.c.l.b16 %v132
    %v1292 = vunpack.c.h.b16 %v132
    %v1293 = vunpack.c.l.b16 %v133
    %v1294 = vunpack.c.h.b16 %v133
    %v1295 = vunpack.c.l.b16 %v134
    %v1296 = vunpack.c.h.b16 %v134
    %v1297 = vunpack.c.l.b16 %v135
    %v1298 = vunpack.c.h.b16 %v135
    %v1299 = vunpack.c.l.b16 %v136
    %v1300 = vunpack.c.h.b16 %v136
    %v1301 = vunpack.c.l.b16 %v137
    %v1302 = vunpack.c.h.b16 %v137
    %v1303 = vunpack.c.l.b16 %v138
    %v1304 = vunpack.c.h.b16 %v138
    %v1305 = vunpack.c.l.b16 %v139
    %v1306 = vunpack.c.h.b16 %v139
    %v1307 = vunpack.c.l.b16 %v140
    %v1308 = vunpack.c.h.b16 %v140
    %v1309 = vunpack.c.l.b16 %v141
    %v1310 = vunpack.c.h.b16 %v141
    %v1311 = vunpack.c.l.b16 %v142
    %v1312 = vunpack.c.h.b16 %v142
    %v1313 = vunpack.c.l.b16 %v143
    %v1314 = vunpack.c.h.b16 %v143
    %v1315 = vunpack.c.l.b16 %v144
    %v1316 = vunpack.c.h.b16 %v144
    %v1317 = vunpack.c.l.b16 %v145
    %v1318 = vunpack.c.h.b16 %v145
    %v1319 = vunpack.c.l.b16 %v146
    %v1320 = vunpack.c.h.b16 %v146
    %v1321 = vunpack.c.l.b16 %v147
    %v1322 = vunpack.c.h.b16 %v147
    %v1323 = vunpack.c.l.b16 %v148
    %v1324 = vunpack.c.h.b16 %v148
    %v1325 = vunpack.c.l.b16 %v149
    %v1326 = vunpack.c.h.b16 %v149
    %v1327 = vunpack.c.l.b16 %v150
    %v1328 = vunpack.c.h.b16 %v150
    %v1329 = vunpack.c.l.b16 %v151
    %v1330 = vunpack.c.h.b16 %v151
    %v1331 = vunpack.c.l.b16 %v152
    %v1332 = vunpack.c.h.b16 %v152
    %v1333 = vunpack.c.l.b16 %v153
    %v1334 = vunpack.c.h.b16 %v153
    %v1335 = vunpack.c.l.b16 %v154
    %v1336 = vunpack.c.h.b16 %v154
    %v1337 = vunpack.c.l.b16 %v155
    %v1338 = vunpack.c.h.b16 %v155
    %v1339 = vunpack.c.l.b16 %v156
    %v1340 = vunpack.c.h.b16 %v156
    %v1341 = vunpack.c.l.b16 %v157
    %v1342 = vunpack.c.h.b16 %v157
    %v1343 = vunpack.c.l.b16 %v158
    %v1344 = vunpack.c.h.b16 %v158
    %v1345 = vunpack.c.l.b16 %v159
    %v1346 = vunpack.c.h.b16 %v159
    %v1347 = vunpack.c.l.b16 %v160
    %v1348 = vunpack.c.h.b16 %v160
    %v1349 = vunpack.c.l.b16 %v161
    %v1350 = vunpack.c.h.b16 %v161
    %v1351 = vunpack.c.l.b16 %v162
    %v1352 = vunpack.c.h.b16 %v162
    %v1353 = vunpack.c.l.b16 %v163
    %v1354 = vunpack.c.h.b16 %v163
    %v1355 = vunpack.c.l.b16 %v164
    %v1356 = vunpack.c.h.b16 %v164
    %v1357 = vunpack.c.l.b16 %v165
    %v1358 = vunpack.c.h.b16 %v165
    %v1359 = vunpack.c.l.b16 %v166
    %v1360 = vunpack.c.h.b16 %v166
    %v1361 = vunpack.c.l.b16 %v167
    %v1362 = vunpack.c.h.b16 %v167
    %v1363 = vunpack.c.l.b16 %v168
    %v1364 = vunpack.c.h.b16 %v168
    %v1365 = vunpack.c.l.b16 %v169
    %v1366 = vunpack.c.h.b16 %v169
    %v1367 = vunpack.c.l.b16 %v170
    %v1368 = vunpack.c.h.b16 %v170
    %v1369 = vunpack.c.l.b16 %v171
    %v1370 = vunpack.c.h.b16 %v171
    %v1371 = vunpack.c.l.b16 %v172
    %v1372 = vunpack.c.h.b16 %v172
    %v1373 = vunpack.c.l.b16 %v173
    %v1374 = vunpack.c.h.b16 %v173
    %v1375 = vunpack.c.l.b16 %v174
    %v1376 = vunpack.c.h.b16 %v174
    %v1377 = vunpack.c.l.b16 %v175
    %v1378 = vunpack.c.h.b16 %v175
    %v1379 = vunpack.c.l.b16 %v176
    %v1380 = vunpack.c.h.b16 %v176
    %v1381 = vunpack.c.l.b16 %v177
    %v1382 = vunpack.c.h.b16 %v177
    %v1383 = vunpack.c.l.b16 %v178
    %v1384 = vunpack.c.h.b16 %v178
    %v1385 = vunpack.c.l.b16 %v179
    %v1386 = vunpack.c.h.b16 %v179
    %v1387 = vunpack.c.l.b16 %v180
    %v1388 = vunpack.c.h.b16 %v180
    %v1389 = vunpack.c.l.b16 %v181
    %v1390 = vunpack.c.h.b16 %v181
    %v1391 = vunpack.c.l.b16 %v182
    %v1392 = vunpack.c.h.b16 %v182
    %v1393 = vunpack.c.l.b16 %v183
    %v1394 = vunpack.c.h.b16 %v183
    %v1395 = vunpack.c.l.b16 %v184
    %v1396 = vunpack.c.h.b16 %v184
    %v1397 = vunpack.c.l.b16 %v185
    %v1398 = vunpack.c.h.b16 %v185
    %v1399 = vunpack.c.l.b16 %v186
    %v1400 = vunpack.c.h.b16 %v186
    %v1401 = vunpack.c.l.b16 %v187
    %v1402 = vunpack.c.h.b16 %v187
    %v1403 = vunpack.c.l.b16 %v188
    %v1404 = vunpack.c.h.b16 %v188
    %v1405 = vunpack.c.l.b16 %v189
    %v1406 = vunpack.c.h.b16 %v189
    %v1407 = vunpack.c.l.b16 %v190
    %v1408 = vunpack.c.h.b16 %v190
    %v1409 = vunpack.c.l.b16 %v191
    %v1410 = vunpack.c.h.b16 %v191
    %v1411 = vunpack.c.l.b16 %v192
    %v1412 = vunpack.c.h.b16 %v192
    %v1413 = vunpack.c.l.b16 %v193
    %v1414 = vunpack.c.h.b16 %v193
    %v1415 = vunpack.c.l.b16 %v194
    %v1416 = vunpack.c.h.b16 %v194
    %v1417 = vunpack.c.l.b16 %v195
    %v1418 = vunpack.c.h.b16 %v195
    %v1419 = vunpack.c.l.b16 %v196
    %v1420 = vunpack.c.h.b16 %v196
    %v1421 = vunpack.c.l.b16 %v197
    %v1422 = vunpack.c.h.b16 %v197
    %v1423 = vunpack.c.l.b16 %v198
    %v1424 = vunpack.c.h.b16 %v198
    %v1425 = vunpack.c.l.b16 %v199
    %v1426 = vunpack.c.h.b16 %v199
    %v1427 = vunpack.c.l.b16 %v200
    %v1428 = vunpack.c.h.b16 %v200
    %v1429 = vunpack.c.l.b16 %v201
    %v1430 = vunpack.c.h.b16 %v201
    %v1431 = vunpack.c.l.b16 %v202
    %v1432 = vunpack.c.h.b16 %v202
    %v1433 = vunpack.c.l.b16 %v203
    %v1434 = vunpack.c.h.b16 %v203
    %v1435 = vunpack.c.l.b16 %v204
    %v1436 = vunpack.c.h.b16 %v204
    %v1437 = vunpack.c.l.b16 %v205
    %v1438 = vunpack.c.h.b16 %v205
    %v1439 = vunpack.c.l.b16 %v206
    %v1440 = vunpack.c.h.b16 %v206
    %v1441 = vunpack.c.l.b16 %v207
    %v1442 = vunpack.c.h.b16 %v207
    %v1443 = vunpack.c.l.b16 %v208
    %v1444 = vunpack.c.h.b16 %v208
    %v1445 = vunpack.c.l.b16 %v209
    %v1446 = vunpack.c.h.b16 %v209
    %v1447 = vunpack.c.l.b16 %v210
    %v1448 = vunpack.c.h.b16 %v210
    %v1449 = vunpack.c.l.b16 %v211
    %v1450 = vunpack.c.h.b16 %v211
    %v1451 = vunpack.c.l.b16 %v212
    %v1452 = vunpack.c.h.b16 %v212
    %v1453 = vunpack.c.l.b16 %v213
    %v1454 = vunpack.c.h.b16 %v213
    %v1455 = vunpack.c.l.b16 %v214
    %v1456 = vunpack.c.h.b16 %v214
    %v1457 = vunpack.c.l.b16 %v215
    %v1458 = vunpack.c.h.b16 %v215
    %v1459 = vunpack.c.l.b16 %v216
    %v1460 = vunpack.c.h.b16 %v216
    %v1461 = vunpack.c.l.b16 %v217
    %v1462 = vunpack.c.h.b16 %v217
    %v1463 = vunpack.c.l.b16 %v218
    %v1464 = vunpack.c.h.b16 %v218
    %v1465 = vunpack.c.l.b16 %v219
    %v1466 = vunpack.c.h.b16 %v219
    %v1467 = vunpack.c.l.b16 %v220
    %v1468 = vunpack.c.h.b16 %v220
    %v1469 = vunpack.c.l.b16 %v221
    %v1470 = vunpack.c.h.b16 %v221
    %v1471 = vunpack.c.l.b16 %v222
    %v1472 = vunpack.c.h.b16 %v222
    %v1473 = vunpack.c.l.b16 %v223
    %v1474 = vunpack.c.h.b16 %v223
    %v1475 = vunpack.c.l.b16 %v224
    %v1476 = vunpack.c.h.b16 %v224
    %v1477 = vunpack.c.l.b16 %v225
    %v1478 = vunpack.c.h.b16 %v225
    %v1479 = vunpack.c.l.b16 %v226
    %v1480 = vunpack.c.h.b16 %v226
    %v1481 = vunpack.c.l.b16 %v227
    %v1482 = vunpack.c.h.b16 %v227
    %v1483 = vunpack.c.l.b16 %v228
    %v1484 = vunpack.c.h.b16 %v228
    %v1485 = vunpack.c.l.b16 %v229
    %v1486 = vunpack.c.h.b16 %v229
    %v1487 = vunpack.c.l.b16 %v230
    %v1488 = vunpack.c.h.b16 %v230
    %v1489 = vunpack.c.l.b16 %v231
    %v1490 = vunpack.c.h.b16 %v231
    %v1491 = vunpack.c.l.b16 %v232
    %v1492 = vunpack.c.h.b16 %v232
    %v1493 = vunpack.c.l.b16 %v233
    %v1494 = vunpack.c.h.b16 %v233
    %v1495 = vunpack.c.l.b16 %v234
    %v1496 = vunpack.c.h.b16 %v234
    %v1497 = vunpack.c.l.b16 %v235
    %v1498 = vunpack.c.h.b16 %v235
    %v1499 = vunpack.c.l.b16 %v236
    %v1500 = vunpack.c.h.b16 %v236
    %v1501 = vunpack.c.l.b16 %v237
    %v1502 = vunpack.c.h.b16 %v237
    %v1503 = vunpack.c.l.b16 %v238
    %v1504 = vunpack.c.h.b16 %v238
    %v1505 = vunpack.c.l.b16 %v239
    %v1506 = vunpack.c.h.b16 %v239
    %v1507 = vunpack.c.l.b16 %v240
    %v1508 = vunpack.c.h.b16 %v240
    %v1509 = vunpack.c.l.b16 %v241
    %v1510 = vunpack.c.h.b16 %v241
    %v1511 = vunpack.c.l.b16 %v242
    %v1512 = vunpack.c.h.b16 %v242
    %v1513 = vunpack.c.l.b16 %v243
    %v1514 = vunpack.c.h.b16 %v243
    %v1515 = vunpack.c.l.b16 %v244
    %v1516 = vunpack.c.h.b16 %v244
    %v1517 = vunpack.c.l.b16 %v245
    %v1518 = vunpack.c.h.b16 %v245
    %v1519 = vunpack.c.l.b16 %v246
    %v1520 = vunpack.c.h.b16 %v246
    %v1521 = vunpack.c.l.b16 %v247
    %v1522 = vunpack.c.h.b16 %v247
    %v1523 = vunpack.c.l.b16 %v248
    %v1524 = vunpack.c.h.b16 %v248
    %v1525 = vunpack.c.l.b16 %v249
    %v1526 = vunpack.c.h.b16 %v249
    %v1527 = vunpack.c.l.b16 %v250
    %v1528 = vunpack.c.h.b16 %v250
    %v1529 = vunpack.c.l.b16 %v251
    %v1530 = vunpack.c.h.b16 %v251
    %v1531 = vunpack.c.l.b16 %v252
    %v1532 = vunpack.c.h.b16 %v252
    %v1533 = vunpack.c.l.b16 %v253
    %v1534 = vunpack.c.h.b16 %v253
    %v1535 = vunpack.c.l.b16 %v254
    %v1536 = vunpack.c.h.b16 %v254
    %v1537 = vunpack.c.l.b16 %v255
    %v1538 = vunpack.c.h.b16 %v255
    %v1539 = vunpack.c.l.b16 %v256
    %v1540 = vunpack.c.h.b16 %v256
    %v1541 = vunpack.c.l.b16 %v257
    %v1542 = vunpack.c.h.b16 %v257
    %v1543 = vunpack.c.l.b16 %v258
    %v1544 = vunpack.c.h.b16 %v258
    %v1545 = vunpack.c.l.b16 %v259
    %v1546 = vunpack.c.h.b16 %v259
    %v1547 = vunpack.c.l.b16 %v260
    %v1548 = vunpack.c.h.b16 %v260
    %v1549 = vunpack.c.l.b16 %v261
    %v1550 = vunpack.c.h.b16 %v261
    %v1551 = vunpack.c.l.b16 %v262
    %v1552 = vunpack.c.h.b16 %v262
    %v1553 = vunpack.c.l.b16 %v263
    %v1554 = vunpack.c.h.b16 %v263
    %v1555 = vunpack.c.l.b16 %v264
    %v1556 = vunpack.c.h.b16 %v264
    %v1557 = vunpack.c.l.b16 %v265
    %v1558 = vunpack.c.h.b16 %v265
    %v1559 = vunpack.c.l.b16 %v266
    %v1560 = vunpack.c.h.b16 %v266
    %v1561 = vunpack.c.l.b16 %v267
    %v1562 = vunpack.c.h.b16 %v267
    %v1563 = vunpack.c.l.b16 %v268
    %v1564 = vunpack.c.h.b16 %v268
    %v1565 = vunpack.c.l.b16 %v269
    %v1566 = vunpack.c.h.b16 %v269
    %v1567 = vunpack.c.l.b16 %v270
    %v1568 = vunpack.c.h.b16 %v270
    %v1569 = vunpack.c.l.b16 %v271
    %v1570 = vunpack.c.h.b16 %v271
    %v1571 = vunpack.c.l.b16 %v272
    %v1572 = vunpack.c.h.b16 %v272
    %v1573 = vunpack.c.l.b16 %v273
    %v1574 = vunpack.c.h.b16 %v273
    %v1575 = vunpack.c.l.b16 %v274
    %v1576 = vunpack.c.h.b16 %v274
    %v1577 = vunpack.c.l.b16 %v275
    %v1578 = vunpack.c.h.b16 %v275
    %v1579 = vunpack.c.l.b16 %v276
    %v1580 = vunpack.c.h.b16 %v276
    %v1581 = vunpack.c.l.b16 %v277
    %v1582 = vunpack.c.h.b16 %v277
    %v1583 = vunpack.c.l.b16 %v278
    %v1584 = vunpack.c.h.b16 %v278
    %v1585 = vunpack.c.l.b16 %v279
    %v1586 = vunpack.c.h.b16 %v279
    %v1587 = vunpack.c.l.b16 %v280
    %v1588 = vunpack.c.h.b16 %v280
    %v1589 = vunpack.c.l.b16 %v281
    %v1590 = vunpack.c.h.b16 %v281
    %v1591 = vunpack.c.l.b16 %v282
    %v1592 = vunpack.c.h.b16 %v282
    %v1593 = vunpack.c.l.b16 %v283
    %v1594 = vunpack.c.h.b16 %v283
    %v1595 = vunpack.c.l.b16 %v284
    %v1596 = vunpack.c.h.b16 %v284
    %v1597 = vunpack.c.l.b16 %v285
    %v1598 = vunpack.c.h.b16 %v285
    %v1599 = vunpack.c.l.b16 %v286
    %v1600 = vunpack.c.h.b16 %v286
    %v1601 = vunpack.c.l.b16 %v287
    %v1602 = vunpack.c.h.b16 %v287
    %v1603 = vunpack.c.l.b16 %v288
    %v1604 = vunpack.c.h.b16 %v288
    %v1605 = vunpack.c.l.b16 %v289
    %v1606 = vunpack.c.h.b16 %v289
    %v1607 = vunpack.c.l.b16 %v290
    %v1608 = vunpack.c.h.b16 %v290
    %v1609 = vunpack.c.l.b16 %v291
    %v1610 = vunpack.c.h.b16 %v291
    %v1611 = vunpack.c.l.b16 %v292
    %v1612 = vunpack.c.h.b16 %v292
    %v1613 = vunpack.c.l.b16 %v293
    %v1614 = vunpack.c.h.b16 %v293
    %v1615 = vunpack.c.l.b16 %v294
    %v1616 = vunpack.c.h.b16 %v294
    %v1617 = vunpack.c.l.b16 %v295
    %v1618 = vunpack.c.h.b16 %v295
    %v1619 = vunpack.c.l.b16 %v296
    %v1620 = vunpack.c.h.b16 %v296
    %v1621 = vunpack.c.l.b16 %v297
    %v1622 = vunpack.c.h.b16 %v297
    %v1623 = vunpack.c.l.b16 %v298
    %v1624 = vunpack.c.h.b16 %v298
    %v1625 = vunpack.c.l.b16 %v299
    %v1626 = vunpack.c.h.b16 %v299
    %v1627 = vunpack.c.l.b16 %v300
    %v1628 = vunpack.c.h.b16 %v300
    %v1629 = vunpack.c.l.b16 %v301
    %v1630 = vunpack.c.h.b16 %v301
    %v1631 = vunpack.c.l.b16 %v302
    %v1632 = vunpack.c.h.b16 %v302
    %v1633 = vunpack.c.l.b16 %v303
    %v1634 = vunpack.c.h.b16 %v303
    %v1635 = vunpack.c.l.b16 %v304
    %v1636 = vunpack.c.h.b16 %v304
    %v1637 = vunpack.c.l.b16 %v305
    %v1638 = vunpack.c.h.b16 %v305
    %v1639 = vunpack.c.l.b16 %v306
    %v1640 = vunpack.c.h.b16 %v306
    %v1641 = vunpack.c.l.b16 %v307
    %v1642 = vunpack.c.h.b16 %v307
    %v1643 = vunpack.c.l.b16 %v308
    %v1644 = vunpack.c.h.b16 %v308
    %v1645 = vunpack.c.l.b16 %v309
    %v1646 = vunpack.c.h.b16 %v309
    %v1647 = vunpack.c.l.b16 %v310
    %v1648 = vunpack.c.h.b16 %v310
    %v1649 = vunpack.c.l.b16 %v311
    %v1650 = vunpack.c.h.b16 %v311
    %v1651 = vunpack.c.l.b16 %v312
    %v1652 = vunpack.c.h.b16 %v312
    %v1653 = vunpack.c.l.b16 %v313
    %v1654 = vunpack.c.h.b16 %v313
    %v1655 = vunpack.c.l.b16 %v314
    %v1656 = vunpack.c.h.b16 %v314
    %v1657 = vunpack.c.l.b16 %v315
    %v1658 = vunpack.c.h.b16 %v315
    %v1659 = vunpack.c.l.b16 %v316
    %v1660 = vunpack.c.h.b16 %v316
    %v1661 = vunpack.c.l.b16 %v317
    %v1662 = vunpack.c.h.b16 %v317
    %v1663 = vunpack.c.l.b16 %v318
    %v1664 = vunpack.c.h.b16 %v318
    %v1665 = vunpack.c.l.b16 %v319
    %v1666 = vunpack.c.h.b16 %v319
    %v1667 = vunpack.c.l.b16 %v320
    %v1668 = vunpack.c.h.b16 %v320
    %v1669 = vunpack.c.l.b16 %v321
    %v1670 = vunpack.c.h.b16 %v321
    %v1671 = vunpack.c.l.b16 %v322
    %v1672 = vunpack.c.h.b16 %v322
    %v1673 = vunpack.c.l.b16 %v323
    %v1674 = vunpack.c.h.b16 %v323
    %v1675 = vunpack.c.l.b16 %v324
    %v1676 = vunpack.c.h.b16 %v324
    %v1677 = vunpack.c.l.b16 %v325
    %v1678 = vunpack.c.h.b16 %v325
    %v1679 = vunpack.c.l.b16 %v326
    %v1680 = vunpack.c.h.b16 %v326
    %v1681 = vunpack.c.l.b16 %v327
    %v1682 = vunpack.c.h.b16 %v327
    %v1683 = vunpack.c.l.b16 %v328
    %v1684 = vunpack.c.h.b16 %v328
    %v1685 = vunpack.c.l.b16 %v329
    %v1686 = vunpack.c.h.b16 %v329
    %v1687 = vunpack.c.l.b16 %v330
    %v1688 = vunpack.c.h.b16 %v330
    %v1689 = vunpack.c.l.b16 %v331
    %v1690 = vunpack.c.h.b16 %v331
    %v1691 = vunpack.c.l.b16 %v332
    %v1692 = vunpack.c.h.b16 %v332
    %v1693 = vunpack.c.l.b16 %v333
    %v1694 = vunpack.c.h.b16 %v333
    %v1695 = vunpack.c.l.b16 %v334
    %v1696 = vunpack.c.h.b16 %v334
    %v1697 = vunpack.c.l.b16 %v335
    %v1698 = vunpack.c.h.b16 %v335
    %v1699 = vunpack.c.l.b16 %v336
    %v1700 = vunpack.c.h.b16 %v336
    %v1701 = vunpack.c.l.b16 %v337
    %v1702 = vunpack.c.h.b16 %v337
    %v1703 = vunpack.c.l.b16 %v338
    %v1704 = vunpack.c.h.b16 %v338
    %v1705 = vunpack.c.l.b16 %v339
    %v1706 = vunpack.c.h.b16 %v339
    %v1707 = vunpack.c.l.b16 %v340
    %v1708 = vunpack.c.h.b16 %v340
    %v1709 = vunpack.c.l.b16 %v341
    %v1710 = vunpack.c.h.b16 %v341
    %v1711 = vunpack.c.l.b16 %v342
    %v1712 = vunpack.c.h.b16 %v342
    %v1713 = vunpack.c.l.b16 %v343
    %v1714 = vunpack.c.h.b16 %v343
    %v1715 = vunpack.c.l.b16 %v344
    %v1716 = vunpack.c.h.b16 %v344
    %v1717 = vunpack.c.l.b16 %v345
    %v1718 = vunpack.c.h.b16 %v345
    %v1719 = vunpack.c.l.b16 %v346
    %v1720 = vunpack.c.h.b16 %v346
    %v1721 = vunpack.c.l.b16 %v347
    %v1722 = vunpack.c.h.b16 %v347
    %v1723 = vunpack.c.l.b16 %v348
    %v1724 = vunpack.c.h.b16 %v348
    %v1725 = vunpack.c.l.b16 %v349
    %v1726 = vunpack.c.h.b16 %v349
    %v1727 = vunpack.c.l.b16 %v350
    %v1728 = vunpack.c.h.b16 %v350
    %v1729 = vunpack.c.l.b16 %v351
    %v1730 = vunpack.c.h.b16 %v351
    %v1731 = vunpack.c.l.b16 %v352
    %v1732 = vunpack.c.h.b16 %v352
    %v1733 = vunpack.c.l.b16 %v353
    %v1734 = vunpack.c.h.b16 %v353
    %v1735 = vunpack.c.l.b16 %v354
    %v1736 = vunpack.c.h.b16 %v354
    %v1737 = vunpack.c.l.b16 %v355
    %v1738 = vunpack.c.h.b16 %v355
    %v1739 = vunpack.c.l.b16 %v356
    %v1740 = vunpack.c.h.b16 %v356
    %v1741 = vunpack.c.l.b16 %v357
    %v1742 = vunpack.c.h.b16 %v357
    %v1743 = vunpack.c.l.b16 %v358
    %v1744 = vunpack.c.h.b16 %v358
    %v1745 = vunpack.c.l.b16 %v359
    %v1746 = vunpack.c.h.b16 %v359
    %v1747 = vunpack.c.l.b16 %v360
    %v1748 = vunpack.c.h.b16 %v360
    %v1749 = vunpack.c.l.b16 %v361
    %v1750 = vunpack.c.h.b16 %v361
    %v1751 = vunpack.c.l.b16 %v362
    %v1752 = vunpack.c.h.b16 %v362
    %v1753 = vunpack.c.l.b16 %v363
    %v1754 = vunpack.c.h.b16 %v363
    %v1755 = vunpack.c.l.b16 %v364
    %v1756 = vunpack.c.h.b16 %v364
    %v1757 = vunpack.c.l.b16 %v365
    %v1758 = vunpack.c.h.b16 %v365
    %v1759 = vunpack.c.l.b16 %v366
    %v1760 = vunpack.c.h.b16 %v366
    %v1761 = vunpack.c.l.b16 %v367
    %v1762 = vunpack.c.h.b16 %v367
    %v1763 = vunpack.c.l.b16 %v368
    %v1764 = vunpack.c.h.b16 %v368
    %v1765 = vunpack.c.l.b16 %v369
    %v1766 = vunpack.c.h.b16 %v369
    %v1767 = vunpack.c.l.b16 %v370
    %v1768 = vunpack.c.h.b16 %v370
    %v1769 = vunpack.c.l.b16 %v371
    %v1770 = vunpack.c.h.b16 %v371
    %v1771 = vunpack.c.l.b16 %v372
    %v1772 = vunpack.c.h.b16 %v372
    %v1773 = vunpack.c.l.b16 %v373
    %v1774 = vunpack.c.h.b16 %v373
    %v1775 = vunpack.c.l.b16 %v374
    %v1776 = vunpack.c.h.b16 %v374
    %v1777 = vunpack.c.l.b16 %v375
    %v1778 = vunpack.c.h.b16 %v375
    %v1779 = vunpack.c.l.b16 %v376
    %v1780 = vunpack.c.h.b16 %v376
    %v1781 = vunpack.c.l.b16 %v377
    %v1782 = vunpack.c.h.b16 %v377
    %v1783 = vunpack.c.l.b16 %v378
    %v1784 = vunpack.c.h.b16 %v378
    %v1785 = vunpack.c.l.b16 %v379
    %v1786 = vunpack.c.h.b16 %v379
    %v1787 = vunpack.c.l.b16 %v380
    %v1788 = vunpack.c.h.b16 %v380
    %v1789 = vunpack.c.l.b16 %v381
    %v1790 = vunpack.c.h.b16 %v381
    %v1791 = vunpack.c.l.b16 %v382
    %v1792 = vunpack.c.h.b16 %v382
    %v1793 = vunpack.c.l.b16 %v383
    %v1794 = vunpack.c.h.b16 %v383
    %v1795 = vunpack.c.l.b16 %v384
    %v1796 = vunpack.c.h.b16 %v384
    %v1797 = vunpack.c.l.b16 %v385
    %v1798 = vunpack.c.h.b16 %v385
    %v1799 = vunpack.c.l.b16 %v386
    %v1800 = vunpack.c.h.b16 %v386
    %v1801 = vunpack.c.l.b16 %v387
    %v1802 = vunpack.c.h.b16 %v387
    %v1803 = vunpack.c.l.b16 %v388
    %v1804 = vunpack.c.h.b16 %v388
    %v1805 = vunpack.c.l.b16 %v389
    %v1806 = vunpack.c.h.b16 %v389
    %v1807 = vunpack.c.l.b16 %v390
    %v1808 = vunpack.c.h.b16 %v390
    %v1809 = vunpack.c.l.b16 %v391
    %v1810 = vunpack.c.h.b16 %v391
    %v1811 = vunpack.c.l.b16 %v392
    %v1812 = vunpack.c.h.b16 %v392
    %v1813 = vunpack.c.l.b16 %v393
    %v1814 = vunpack.c.h.b16 %v393
    %v1815 = vunpack.c.l.b16 %v394
    %v1816 = vunpack.c.h.b16 %v394
    %v1817 = vunpack.c.l.b16 %v395
    %v1818 = vunpack.c.h.b16 %v395
    %v1819 = vunpack.c.l.b16 %v396
    %v1820 = vunpack.c.h.b16 %v396
    %v1821 = vunpack.c.l.b16 %v397
    %v1822 = vunpack.c.h.b16 %v397
    %v1823 = vunpack.c.l.b16 %v398
    %v1824 = vunpack.c.h.b16 %v398
    %v1825 = vunpack.c.l.b16 %v399
    %v1826 = vunpack.c.h.b16 %v399
    %v1827 = vunpack.c.l.b16 %v400
    %v1828 = vunpack.c.h.b16 %v400
    %v1829 = vunpack.c.l.b16 %v401
    %v1830 = vunpack.c.h.b16 %v401
    %v1831 = vunpack.c.l.b16 %v402
    %v1832 = vunpack.c.h.b16 %v402
    %v1833 = vunpack.c.l.b16 %v403
    %v1834 = vunpack.c.h.b16 %v403
    %v1835 = vunpack.c.l.b16 %v404
    %v1836 = vunpack.c.h.b16 %v404
    %v1837 = vunpack.c.l.b16 %v405
    %v1838 = vunpack.c.h.b16 %v405
    %v1839 = vunpack.c.l.b16 %v406
    %v1840 = vunpack.c.h.b16 %v406
    %v1841 = vunpack.c.l.b16 %v407
    %v1842 = vunpack.c.h.b16 %v407
    %v1843 = vunpack.c.l.b16 %v408
    %v1844 = vunpack.c.h.b16 %v408
    %v1845 = vunpack.c.l.b16 %v409
    %v1846 = vunpack.c.h.b16 %v409
    %v1847 = vunpack.c.l.b16 %v410
    %v1848 = vunpack.c.h.b16 %v410
    %v1849 = vunpack.c.l.b16 %v411
    %v1850 = vunpack.c.h.b16 %v411
    %v1851 = vunpack.c.l.b16 %v412
    %v1852 = vunpack.c.h.b16 %v412
    %v1853 = vunpack.c.l.b16 %v413
    %v1854 = vunpack.c.h.b16 %v413
    %v1855 = vunpack.c.l.b16 %v414
    %v1856 = vunpack.c.h.b16 %v414
    %v1857 = vunpack.c.l.b16 %v415
    %v1858 = vunpack.c.h.b16 %v415
    %v1859 = vunpack.c.l.b16 %v416
    %v1860 = vunpack.c.h.b16 %v416
    %v1861 = vunpack.c.l.b16 %v417
    %v1862 = vunpack.c.h.b16 %v417
    %v1863 = vunpack.c.l.b16 %v418
    %v1864 = vunpack.c.h.b16 %v418
    %v1865 = vunpack.c.l.b16 %v419
    %v1866 = vunpack.c.h.b16 %v419
    %v1867 = vunpack.c.l.b16 %v420
    %v1868 = vunpack.c.h.b16 %v420
    %v1869 = vunpack.c.l.b16 %v421
    %v1870 = vunpack.c.h.b16 %v421
    %v1871 = vunpack.c.l.b16 %v422
    %v1872 = vunpack.c.h.b16 %v422
    %v1873 = vunpack.c.l.b16 %v423
    %v1874 = vunpack.c.h.b16 %v423
    %v1875 = vunpack.c.l.b16 %v424
    %v1876 = vunpack.c.h.b16 %v424
    %v1877 = vunpack.c.l.b16 %v425
    %v1878 = vunpack.c.h.b16 %v425
    %v1879 = vunpack.c.l.b16 %v426
    %v1880 = vunpack.c.h.b16 %v426
    %v1881 = vunpack.c.l.b16 %v427
    %v1882 = vunpack.c.h.b16 %v427
    %v1883 = vunpack.c.l.b16 %v428
    %v1884 = vunpack.c.h.b16 %v428
    %v1885 = vunpack.c.l.b16 %v429
    %v1886 = vunpack.c.h.b16 %v429
    %v1887 = vunpack.c.l.b16 %v430
    %v1888 = vunpack.c.h.b16 %v430
    %v1889 = vunpack.c.l.b16 %v431
    %v1890 = vunpack.c.h.b16 %v431
    %v1891 = vunpack.c.l.b16 %v432
    %v1892 = vunpack.c.h.b16 %v432
    %v1893 = vunpack.c.l.b16 %v433
    %v1894 = vunpack.c.h.b16 %v433
    %v1895 = vunpack.c.l.b16 %v434
    %v1896 = vunpack.c.h.b16 %v434
    %v1897 = vunpack.c.l.b16 %v435
    %v1898 = vunpack.c.h.b16 %v435
    %v1899 = vunpack.c.l.b16 %v436
    %v1900 = vunpack.c.h.b16 %v436
    %v1901 = vunpack.c.l.b16 %v437
    %v1902 = vunpack.c.h.b16 %v437
    %v1903 = vunpack.c.l.b16 %v438
    %v1904 = vunpack.c.h.b16 %v438
    %v1905 = vunpack.c.l.b16 %v439
    %v1906 = vunpack.c.h.b16 %v439
    %v1907 = vunpack.c.l.b16 %v440
    %v1908 = vunpack.c.h.b16 %v440
    %v1909 = vunpack.c.l.b16 %v441
    %v1910 = vunpack.c.h.b16 %v441
    %v1911 = vunpack.c.l.b16 %v442
    %v1912 = vunpack.c.h.b16 %v442
    %v1913 = vunpack.c.l.b16 %v443
    %v1914 = vunpack.c.h.b16 %v443
    %v1915 = vunpack.c.l.b16 %v444
    %v1916 = vunpack.c.h.b16 %v444
    %v1917 = vunpack.c.l.b16 %v445
    %v1918 = vunpack.c.h.b16 %v445
    %v1919 = vunpack.c.l.b16 %v446
    %v1920 = vunpack.c.h.b16 %v446
    %v1921 = vunpack.c.l.b16 %v447
    %v1922 = vunpack.c.h.b16 %v447
    %v1923 = vunpack.c.l.b16 %v448
    %v1924 = vunpack.c.h.b16 %v448
    %v1925 = vunpack.c.l.b16 %v449
    %v1926 = vunpack.c.h.b16 %v449
    %v1927 = vunpack.c.l.b16 %v450
    %v1928 = vunpack.c.h.b16 %v450
    %v1929 = vunpack.c.l.b16 %v451
    %v1930 = vunpack.c.h.b16 %v451
    %v1931 = vunpack.c.l.b16 %v452
    %v1932 = vunpack.c.h.b16 %v452
    %v1933 = vunpack.c.l.b16 %v453
    %v1934 = vunpack.c.h.b16 %v453
    %v1935 = vunpack.c.l.b16 %v454
    %v1936 = vunpack.c.h.b16 %v454
    %v1937 = vunpack.c.l.b16 %v455
    %v1938 = vunpack.c.h.b16 %v455
    %v1939 = vunpack.c.l.b16 %v456
    %v1940 = vunpack.c.h.b16 %v456
    %v1941 = vunpack.c.l.b16 %v457
    %v1942 = vunpack.c.h.b16 %v457
    %v1943 = vunpack.c.l.b16 %v458
    %v1944 = vunpack.c.h.b16 %v458
    %v1945 = vunpack.c.l.b16 %v459
    %v1946 = vunpack.c.h.b16 %v459
    %v1947 = vunpack.c.l.b16 %v460
    %v1948 = vunpack.c.h.b16 %v460
    %v1949 = vunpack.c.l.b16 %v461
    %v1950 = vunpack.c.h.b16 %v461
    %v1951 = vunpack.c.l.b16 %v462
    %v1952 = vunpack.c.h.b16 %v462
    %v1953 = vunpack.c.l.b16 %v463
    %v1954 = vunpack.c.h.b16 %v463
    %v1955 = vunpack.c.l.b16 %v464
    %v1956 = vunpack.c.h.b16 %v464
    %v1957 = vunpack.c.l.b16 %v465
    %v1958 = vunpack.c.h.b16 %v465
    %v1959 = vunpack.c.l.b16 %v466
    %v1960 = vunpack.c.h.b16 %v466
    %v1961 = vunpack.c.l.b16 %v467
    %v1962 = vunpack.c.h.b16 %v467
    %v1963 = vunpack.c.l.b16 %v468
    %v1964 = vunpack.c.h.b16 %v468
    %v1965 = vunpack.c.l.b16 %v469
    %v1966 = vunpack.c.h.b16 %v469
    %v1967 = vunpack.c.l.b16 %v470
    %v1968 = vunpack.c.h.b16 %v470
    %v1969 = vunpack.c.l.b16 %v471
    %v1970 = vunpack.c.h.b16 %v471
    %v1971 = vunpack.c.l.b16 %v472
    %v1972 = vunpack.c.h.b16 %v472
    %v1973 = vunpack.c.l.b16 %v473
    %v1974 = vunpack.c.h.b16 %v473
    %v1975 = vunpack.c.l.b16 %v474
    %v1976 = vunpack.c.h.b16 %v474
    %v1977 = vunpack.c.l.b16 %v475
    %v1978 = vunpack.c.h.b16 %v475
    %v1979 = vunpack.c.l.b16 %v476
    %v1980 = vunpack.c.h.b16 %v476
    %v1981 = vunpack.c.l.b16 %v477
    %v1982 = vunpack.c.h.b16 %v477
    %v1983 = vunpack.c.l.b16 %v478
    %v1984 = vunpack.c.h.b16 %v478
    %v1985 = vunpack.c.l.b16 %v479
    %v1986 = vunpack.c.h.b16 %v479
    %v1987 = vunpack.c.l.b16 %v480
    %v1988 = vunpack.c.h.b16 %v480
    %v1989 = vunpack.c.l.b16 %v481
    %v1990 = vunpack.c.h.b16 %v481
    %v1991 = vunpack.c.l.b16 %v482
    %v1992 = vunpack.c.h.b16 %v482
    %v1993 = vunpack.c.l.b16 %v483
    %v1994 = vunpack.c.h.b16 %v483
    %v1995 = vunpack.c.l.b16 %v484
    %v1996 = vunpack.c.h.b16 %v484
    %v1997 = vunpack.c.l.b16 %v485
    %v1998 = vunpack.c.h.b16 %v485
    %v1999 = vunpack.c.l.b16 %v486
    %v2000 = vunpack.c.h.b16 %v486
    %v2001 = vunpack.c.l.b16 %v487
    %v2002 = vunpack.c.h.b16 %v487
    %v2003 = vunpack.c.l.b16 %v488
    %v2004 = vunpack.c.h.b16 %v488
    %v2005 = vunpack.c.l.b16 %v489
    %v2006 = vunpack.c.h.b16 %v489
    %v2007 = vunpack.c.l.b16 %v490
    %v2008 = vunpack.c.h.b16 %v490
    %v2009 = vunpack.c.l.b16 %v491
    %v2010 = vunpack.c.h.b16 %v491
    %v2011 = vunpack.c.l.b16 %v492
    %v2012 = vunpack.c.h.b16 %v492
    %v2013 = vunpack.c.l.b16 %v493
    %v2014 = vunpack.c.h.b16 %v493
    %v2015 = vunpack.c.l.b16 %v494
    %v2016 = vunpack.c.h.b16 %v494
    %v2017 = vunpack.c.l.b16 %v495
    %v2018 = vunpack.c.h.b16 %v495
    %v2019 = vunpack.c.l.b16 %v496
    %v2020 = vunpack.c.h.b16 %v496
    %v2021 = vunpack.c.l.b16 %v497
    %v2022 = vunpack.c.h.b16 %v497
    %v2023 = vunpack.c.l.b16 %v498
    %v2024 = vunpack.c.h.b16 %v498
    %v2025 = vunpack.c.l.b16 %v499
    %v2026 = vunpack.c.h.b16 %v499
    %v2027 = vunpack.c.l.b16 %v500
    %v2028 = vunpack.c.h.b16 %v500
    %v2029 = vunpack.c.l.b16 %v501
    %v2030 = vunpack.c.h.b16 %v501
    %v2031 = vunpack.c.l.b16 %v502
    %v2032 = vunpack.c.h.b16 %v502
    %v2033 = vunpack.c.l.b16 %v503
    %v2034 = vunpack.c.h.b16 %v503
    %v2035 = vunpack.c.l.b16 %v504
    %v2036 = vunpack.c.h.b16 %v504
    %v2037 = vunpack.c.l.b16 %v505
    %v2038 = vunpack.c.h.b16 %v505
    %v2039 = vunpack.c.l.b16 %v506
    %v2040 = vunpack.c.h.b16 %v506
    %v2041 = vunpack.c.l.b16 %v507
    %v2042 = vunpack.c.h.b16 %v507
    %v2043 = vunpack.c.l.b16 %v508
    %v2044 = vunpack.c.h.b16 %v508
    %v2045 = vunpack.c.l.b16 %v509
    %v2046 = vunpack.c.h.b16 %v509
    %v2047 = vunpack.c.l.b16 %v510
    %v2048 = vunpack.c.h.b16 %v510
    %v2049 = vunpack.c.l.b16 %v511
    %v2050 = vunpack.c.h.b16 %v511
    %v2051 = vunpack.c.l.b16 %v512
    %v2052 = vunpack.c.h.b16 %v512
    %v2053 = vunpack.c.l.b16 %v513
    %v2054 = vunpack.c.h.b16 %v513
    %v2055 = vunpack.c.l.b16 %v514
    %v2056 = vunpack.c.h.b16 %v514
    %v2057 = vunpack.c.l.b16 %v515
    %v2058 = vunpack.c.h.b16 %v515
    %v2059 = vunpack.c.l.b16 %v516
    %v2060 = vunpack.c.h.b16 %v516
    %v2061 = vunpack.c.l.b16 %v517
    %v2062 = vunpack.c.h.b16 %v517
    %v2063 = vunpack.c.l.b16 %v518
    %v2064 = vunpack.c.h.b16 %v518
    %v2065 = vunpack.c.l.b16 %v519
    %v2066 = vunpack.c.h.b16 %v519
    %v2067 = vunpack.c.l.b16 %v520
    %v2068 = vunpack.c.h.b16 %v520
    %v2069 = vunpack.c.l.b16 %v521
    %v2070 = vunpack.c.h.b16 %v521
    %v2071 = vunpack.c.l.b16 %v522
    %v2072 = vunpack.c.h.b16 %v522
    %v2073 = vunpack.c.l.b16 %v523
    %v2074 = vunpack.c.h.b16 %v523
    %v2075 = vunpack.c.l.b16 %v524
    %v2076 = vunpack.c.h.b16 %v524
    %v2077 = vunpack.c.l.b16 %v525
    %v2078 = vunpack.c.h.b16 %v525
    %v2079 = vunpack.c.l.b16 %v526
    %v2080 = vunpack.c.h.b16 %v526
    %v2081 = vunpack.c.l.b16 %v527
    %v2082 = vunpack.c.h.b16 %v527
    %v2083 = vunpack.c.l.b16 %v528
    %v2084 = vunpack.c.h.b16 %v528
    %v2085 = vunpack.c.l.b16 %v529
    %v2086 = vunpack.c.h.b16 %v529
    %v2087 = vunpack.c.l.b16 %v530
    %v2088 = vunpack.c.h.b16 %v530
    %v2089 = vunpack.c.l.b16 %v531
    %v2090 = vunpack.c.h.b16 %v531
    %v2091 = vunpack.c.l.b16 %v532
    %v2092 = vunpack.c.h.b16 %v532
    %v2093 = vunpack.c.l.b16 %v533
    %v2094 = vunpack.c.h.b16 %v533
    %v2095 = vunpack.c.l.b16 %v534
    %v2096 = vunpack.c.h.b16 %v534
    %v2097 = vunpack.c.l.b16 %v535
    %v2098 = vunpack.c.h.b16 %v535
    %v2099 = vunpack.c.l.b16 %v536
    %v2100 = vunpack.c.h.b16 %v536
    %v2101 = vunpack.c.l.b16 %v537
    %v2102 = vunpack.c.h.b16 %v537
    %v2103 = vunpack.c.l.b16 %v538
    %v2104 = vunpack.c.h.b16 %v538
    %v2105 = vunpack.c.l.b16 %v539
    %v2106 = vunpack.c.h.b16 %v539
    %v2107 = vunpack.c.l.b16 %v540
    %v2108 = vunpack.c.h.b16 %v540
    %v2109 = vunpack.c.l.b16 %v541
    %v2110 = vunpack.c.h.b16 %v541
    %v2111 = vunpack.c.l.b16 %v542
    %v2112 = vunpack.c.h.b16 %v542
    %v2113 = vunpack.c.l.b16 %v543
    %v2114 = vunpack.c.h.b16 %v543
    %v2115 = vunpack.c.l.b16 %v544
    %v2116 = vunpack.c.h.b16 %v544
    %v2117 = vunpack.c.l.b16 %v545
    %v2118 = vunpack.c.h.b16 %v545
    %v2119 = vunpack.c.l.b16 %v546
    %v2120 = vunpack.c.h.b16 %v546
    %v2121 = vunpack.c.l.b16 %v547
    %v2122 = vunpack.c.h.b16 %v547
    %v2123 = vunpack.c.l.b16 %v548
    %v2124 = vunpack.c.h.b16 %v548
    %v2125 = vunpack.c.l.b16 %v549
    %v2126 = vunpack.c.h.b16 %v549
    %v2127 = vunpack.c.l.b16 %v550
    %v2128 = vunpack.c.h.b16 %v550
    %v2129 = vunpack.c.l.b16 %v551
    %v2130 = vunpack.c.h.b16 %v551
    %v2131 = vunpack.c.l.b16 %v552
    %v2132 = vunpack.c.h.b16 %v552
    %v2133 = vunpack.c.l.b16 %v553
    %v2134 = vunpack.c.h.b16 %v553
    %v2135 = vunpack.c.l.b16 %v554
    %v2136 = vunpack.c.h.b16 %v554
    %v2137 = vunpack.c.l.b16 %v555
    %v2138 = vunpack.c.h.b16 %v555
    %v2139 = vunpack.c.l.b16 %v556
    %v2140 = vunpack.c.h.b16 %v556
    %v2141 = vunpack.c.l.b16 %v557
    %v2142 = vunpack.c.h.b16 %v557
    %v2143 = vunpack.c.l.b16 %v558
    %v2144 = vunpack.c.h.b16 %v558
    %v2145 = vunpack.c.l.b16 %v559
    %v2146 = vunpack.c.h.b16 %v559
    %v2147 = vunpack.c.l.b16 %v560
    %v2148 = vunpack.c.h.b16 %v560
    %v2149 = vunpack.c.l.b16 %v561
    %v2150 = vunpack.c.h.b16 %v561
    %v2151 = vunpack.c.l.b16 %v562
    %v2152 = vunpack.c.h.b16 %v562
    %v2153 = vunpack.c.l.b16 %v563
    %v2154 = vunpack.c.h.b16 %v563
    %v2155 = vunpack.c.l.b16 %v564
    %v2156 = vunpack.c.h.b16 %v564
    %v2157 = vunpack.c.l.b16 %v565
    %v2158 = vunpack.c.h.b16 %v565
    %v2159 = vunpack.c.l.b16 %v566
    %v2160 = vunpack.c.h.b16 %v566
    %v2161 = vunpack.c.l.b16 %v567
    %v2162 = vunpack.c.h.b16 %v567
    %v2163 = vunpack.c.l.b16 %v568
    %v2164 = vunpack.c.h.b16 %v568
    %v2165 = vunpack.c.l.b16 %v569
    %v2166 = vunpack.c.h.b16 %v569
    %v2167 = vunpack.c.l.b16 %v570
    %v2168 = vunpack.c.h.b16 %v570
    %v2169 = vunpack.c.l.b16 %v571
    %v2170 = vunpack.c.h.b16 %v571
    %v2171 = vunpack.c.l.b16 %v572
    %v2172 = vunpack.c.h.b16 %v572
    %v2173 = vunpack.c.l.b16 %v573
    %v2174 = vunpack.c.h.b16 %v573
    %v2175 = vunpack.c.l.b16 %v574
    %v2176 = vunpack.c.h.b16 %v574
    %v2177 = vunpack.c.l.b16 %v575
    %v2178 = vunpack.c.h.b16 %v575
    %v2179 = vunpack.c.l.b16 %v576
    %v2180 = vunpack.c.h.b16 %v576
    %v2181 = vunpack.c.l.b16 %v577
    %v2182 = vunpack.c.h.b16 %v577
    %v2183 = vunpack.c.l.b16 %v578
    %v2184 = vunpack.c.h.b16 %v578
    %v2185 = vunpack.c.l.b16 %v579
    %v2186 = vunpack.c.h.b16 %v579
    %v2187 = vunpack.c.l.b16 %v580
    %v2188 = vunpack.c.h.b16 %v580
    %v2189 = vunpack.c.l.b16 %v581
    %v2190 = vunpack.c.h.b16 %v581
    %v2191 = vunpack.c.l.b16 %v582
    %v2192 = vunpack.c.h.b16 %v582
    %v2193 = vunpack.c.l.b16 %v583
    %v2194 = vunpack.c.h.b16 %v583
    %v2195 = vunpack.c.l.b16 %v584
    %v2196 = vunpack.c.h.b16 %v584
    %v2197 = vunpack.c.l.b16 %v585
    %v2198 = vunpack.c.h.b16 %v585
    %v2199 = vunpack.c.l.b16 %v586
    %v2200 = vunpack.c.h.b16 %v586
    %v2201 = vunpack.c.l.b16 %v587
    %v2202 = vunpack.c.h.b16 %v587
    %v2203 = vunpack.c.l.b16 %v588
    %v2204 = vunpack.c.h.b16 %v588
    %v2205 = vunpack.c.l.b16 %v589
    %v2206 = vunpack.c.h.b16 %v589
    %v2207 = vunpack.c.l.b16 %v590
    %v2208 = vunpack.c.h.b16 %v590
    %v2209 = vunpack.c.l.b16 %v591
    %v2210 = vunpack.c.h.b16 %v591
    %v2211 = vunpack.c.l.b16 %v592
    %v2212 = vunpack.c.h.b16 %v592
    %v2213 = vunpack.c.l.b16 %v593
    %v2214 = vunpack.c.h.b16 %v593
    %v2215 = vunpack.c.l.b16 %v594
    %v2216 = vunpack.c.h.b16 %v594
    %v2217 = vunpack.c.l.b16 %v595
    %v2218 = vunpack.c.h.b16 %v595
    %v2219 = vunpack.c.l.b16 %v596
    %v2220 = vunpack.c.h.b16 %v596
    %v2221 = vunpack.c.l.b16 %v597
    %v2222 = vunpack.c.h.b16 %v597
    %v2223 = vunpack.c.l.b16 %v598
    %v2224 = vunpack.c.h.b16 %v598
    %v2225 = vunpack.c.l.b16 %v599
    %v2226 = vunpack.c.h.b16 %v599
    %v2227 = vunpack.c.l.b16 %v600
    %v2228 = vunpack.c.h.b16 %v600
    %v2229 = vunpack.c.l.b16 %v601
    %v2230 = vunpack.c.h.b16 %v601
    %v2231 = vunpack.c.l.b16 %v602
    %v2232 = vunpack.c.h.b16 %v602
    %v2233 = vunpack.c.l.b16 %v603
    %v2234 = vunpack.c.h.b16 %v603
    %v2235 = vunpack.c.l.b16 %v604
    %v2236 = vunpack.c.h.b16 %v604
    %v2237 = vunpack.c.l.b16 %v605
    %v2238 = vunpack.c.h.b16 %v605
    %v2239 = vunpack.c.l.b16 %v606
    %v2240 = vunpack.c.h.b16 %v606
    %v2241 = vunpack.c.l.b16 %v607
    %v2242 = vunpack.c.h.b16 %v607
    %v2243 = vunpack.c.l.b16 %v608
    %v2244 = vunpack.c.h.b16 %v608
    %v2245 = vunpack.c.l.b16 %v609
    %v2246 = vunpack.c.h.b16 %v609
    %v2247 = vunpack.c.l.b16 %v610
    %v2248 = vunpack.c.h.b16 %v610
    %v2249 = vunpack.c.l.b16 %v611
    %v2250 = vunpack.c.h.b16 %v611
    %v2251 = vunpack.c.l.b16 %v612
    %v2252 = vunpack.c.h.b16 %v612
    %v2253 = vunpack.c.l.b16 %v613
    %v2254 = vunpack.c.h.b16 %v613
    %v2255 = vunpack.c.l.b16 %v614
    %v2256 = vunpack.c.h.b16 %v614
    %v2257 = vunpack.c.l.b16 %v615
    %v2258 = vunpack.c.h.b16 %v615
    %v2259 = vunpack.c.l.b16 %v616
    %v2260 = vunpack.c.h.b16 %v616
    %v2261 = vunpack.c.l.b16 %v617
    %v2262 = vunpack.c.h.b16 %v617
    %v2263 = vunpack.c.l.b16 %v618
    %v2264 = vunpack.c.h.b16 %v618
    %v2265 = vpack.c.b16 %v1245, %v1241
    %v2266 = vpack.c.b16 %v1246, %v1242
    %v2267 = vpack.c.b16 %v1247, %v1243
    %v2268 = vpack.c.b16 %v1248, %v1244
    %v2269 = vpack.c.b16 %v1253, %v1249
    %v2270 = vpack.c.b16 %v1254, %v1250
    %v2271 = vpack.c.b16 %v1255, %v1251
    %v2272 = vpack.c.b16 %v1256, %v1252
    %v2273 = vpack.c.b16 %v1261, %v1257
    %v2274 = vpack.c.b16 %v1262, %v1258
    %v2275 = vpack.c.b16 %v1263, %v1259
    %v2276 = vpack.c.b16 %v1264, %v1260
    %v2277 = vpack.c.b16 %v1269, %v1265
    %v2278 = vpack.c.b16 %v1270, %v1266
    %v2279 = vpack.c.b16 %v1271, %v1267
    %v2280 = vpack.c.b16 %v1272, %v1268
    %v2281 = vpack.c.b16 %v1277, %v1273
    %v2282 = vpack.c.b16 %v1278, %v1274
    %v2283 = vpack.c.b16 %v1279, %v1275
    %v2284 = vpack.c.b16 %v1280, %v1276
    %v2285 = vpack.c.b16 %v1285, %v1281
    %v2286 = vpack.c.b16 %v1286, %v1282
    %v2287 = vpack.c.b16 %v1287, %v1283
    %v2288 = vpack.c.b16 %v1288, %v1284
    %v2289 = vpack.c.b16 %v1293, %v1289
    %v2290 = vpack.c.b16 %v1294, %v1290
    %v2291 = vpack.c.b16 %v1295, %v1291
    %v2292 = vpack.c.b16 %v1296, %v1292
    %v2293 = vpack.c.b16 %v1301, %v1297
    %v2294 = vpack.c.b16 %v1302, %v1298
    %v2295 = vpack.c.b16 %v1303, %v1299
    %v2296 = vpack.c.b16 %v1304, %v1300
    %v2297 = vpack.c.b16 %v1309, %v1305
    %v2298 = vpack.c.b16 %v1310, %v1306
    %v2299 = vpack.c.b16 %v1311, %v1307
    %v2300 = vpack.c.b16 %v1312, %v1308
    %v2301 = vpack.c.b16 %v1317, %v1313
    %v2302 = vpack.c.b16 %v1318, %v1314
    %v2303 = vpack.c.b16 %v1319, %v1315
    %v2304 = vpack.c.b16 %v1320, %v1316
    %v2305 = vpack.c.b16 %v1325, %v1321
    %v2306 = vpack.c.b16 %v1326, %v1322
    %v2307 = vpack.c.b16 %v1327, %v1323
    %v2308 = vpack.c.b16 %v1328, %v1324
    %v2309 = vpack.c.b16 %v1333, %v1329
    %v2310 = vpack.c.b16 %v1334, %v1330
    %v2311 = vpack.c.b16 %v1335, %v1331
    %v2312 = vpack.c.b16 %v1336, %v1332
    %v2313 = vpack.c.b16 %v1341, %v1337
    %v2314 = vpack.c.b16 %v1342, %v1338
    %v2315 = vpack.c.b16 %v1343, %v1339
    %v2316 = vpack.c.b16 %v1344, %v1340
    %v2317 = vpack.c.b16 %v1349, %v1345
    %v2318 = vpack.c.b16 %v1350, %v1346
    %v2319 = vpack.c.b16 %v1351, %v1347
    %v2320 = vpack.c.b16 %v1352, %v1348
    %v2321 = vpack.c.b16 %v1357, %v1353
    %v2322 = vpack.c.b16 %v1358, %v1354
    %v2323 = vpack.c.b16 %v1359, %v1355
    %v2324 = vpack.c.b16 %v1360, %v1356
    %v2325 = vpack.c.b16 %v1365, %v1361
    %v2326 = vpack.c.b16 %v1366, %v1362
    %v2327 = vpack.c.b16 %v1367, %v1363
    %v2328 = vpack.c.b16 %v1368, %v1364
    %v2329 = vpack.c.b16 %v1373, %v1369
    %v2330 = vpack.c.b16 %v1374, %v1370
    %v2331 = vpack.c.b16 %v1375, %v1371
    %v2332 = vpack.c.b16 %v1376, %v1372
    %v2333 = vpack.c.b16 %v1381, %v1377
    %v2334 = vpack.c.b16 %v1382, %v1378
    %v2335 = vpack.c.b16 %v1383, %v1379
    %v2336 = vpack.c.b16 %v1384, %v1380
    %v2337 = vpack.c.b16 %v1389, %v1385
    %v2338 = vpack.c.b16 %v1390, %v1386
    %v2339 = vpack.c.b16 %v1391, %v1387
    %v2340 = vpack.c.b16 %v1392, %v1388
    %v2341 = vpack.c.b16 %v1397, %v1393
    %v2342 = vpack.c.b16 %v1398, %v1394
    %v2343 = vpack.c.b16 %v1399, %v1395
    %v2344 = vpack.c.b16 %v1400, %v1396
    %v2345 = vpack.c.b16 %v1405, %v1401
    %v2346 = vpack.c.b16 %v1406, %v1402
    %v2347 = vpack.c.b16 %v1407, %v1403
    %v2348 = vpack.c.b16 %v1408, %v1404
    %v2349 = vpack.c.b16 %v1413, %v1409
    %v2350 = vpack.c.b16 %v1414, %v1410
    %v2351 = vpack.c.b16 %v1415, %v1411
    %v2352 = vpack.c.b16 %v1416, %v1412
    %v2353 = vpack.c.b16 %v1421, %v1417
    %v2354 = vpack.c.b16 %v1422, %v1418
    %v2355 = vpack.c.b16 %v1423, %v1419
    %v2356 = vpack.c.b16 %v1424, %v1420
    %v2357 = vpack.c.b16 %v1429, %v1425
    %v2358 = vpack.c.b16 %v1430, %v1426
    %v2359 = vpack.c.b16 %v1431, %v1427
    %v2360 = vpack.c.b16 %v1432, %v1428
    %v2361 = vpack.c.b16 %v1437, %v1433
    %v2362 = vpack.c.b16 %v1438, %v1434
    %v2363 = vpack.c.b16 %v1439, %v1435
    %v2364 = vpack.c.b16 %v1440, %v1436
    %v2365 = vpack.c.b16 %v1445, %v1441
    %v2366 = vpack.c.b16 %v1446, %v1442
    %v2367 = vpack.c.b16 %v1447, %v1443
    %v2368 = vpack.c.b16 %v1448, %v1444
    %v2369 = vpack.c.b16 %v1453, %v1449
    %v2370 = vpack.c.b16 %v1454, %v1450
    %v2371 = vpack.c.b16 %v1455, %v1451
    %v2372 = vpack.c.b16 %v1456, %v1452
    %v2373 = vpack.c.b16 %v1461, %v1457
    %v2374 = vpack.c.b16 %v1462, %v1458
    %v2375 = vpack.c.b16 %v1463, %v1459
    %v2376 = vpack.c.b16 %v1464, %v1460
    %v2377 = vpack.c.b16 %v1469, %v1465
    %v2378 = vpack.c.b16 %v1470, %v1466
    %v2379 = vpack.c.b16 %v1471, %v1467
    %v2380 = vpack.c.b16 %v1472, %v1468
    %v2381 = vpack.c.b16 %v1477, %v1473
    %v2382 = vpack.c.b16 %v1478, %v1474
    %v2383 = vpack.c.b16 %v1479, %v1475
    %v2384 = vpack.c.b16 %v1480, %v1476
    %v2385 = vpack.c.b16 %v1485, %v1481
    %v2386 = vpack.c.b16 %v1486, %v1482
    %v2387 = vpack.c.b16 %v1487, %v1483
    %v2388 = vpack.c.b16 %v1488, %v1484
    %v2389 = vpack.c.b16 %v1493, %v1489
    %v2390 = vpack.c.b16 %v1494, %v1490
    %v2391 = vpack.c.b16 %v1495, %v1491
    %v2392 = vpack.c.b16 %v1496, %v1492
    %v2393 = vpack.c.b16 %v1501, %v1497
    %v2394 = vpack.c.b16 %v1502, %v1498
    %v2395 = vpack.c.b16 %v1503, %v1499
    %v2396 = vpack.c.b16 %v1504, %v1500
    %v2397 = vpack.c.b16 %v1509, %v1505
    %v2398 = vpack.c.b16 %v1510, %v1506
    %v2399 = vpack.c.b16 %v1511, %v1507
    %v2400 = vpack.c.b16 %v1512, %v1508
    %v2401 = vpack.c.b16 %v1517, %v1513
    %v2402 = vpack.c.b16 %v1518, %v1514
    %v2403 = vpack.c.b16 %v1519, %v1515
    %v2404 = vpack.c.b16 %v1520, %v1516
    %v2405 = vpack.c.b16 %v1525, %v1521
    %v2406 = vpack.c.b16 %v1526, %v1522
    %v2407 = vpack.c.b16 %v1527, %v1523
    %v2408 = vpack.c.b16 %v1528, %v1524
    %v2409 = vpack.c.b16 %v1533, %v1529
    %v2410 = vpack.c.b16 %v1534, %v1530
    %v2411 = vpack.c.b16 %v1535, %v1531
    %v2412 = vpack.c.b16 %v1536, %v1532
    %v2413 = vpack.c.b16 %v1541, %v1537
    %v2414 = vpack.c.b16 %v1542, %v1538
    %v2415 = vpack.c.b16 %v1543, %v1539
    %v2416 = vpack.c.b16 %v1544, %v1540
    %v2417 = vpack.c.b16 %v1549, %v1545
    %v2418 = vpack.c.b16 %v1550, %v1546
    %v2419 = vpack.c.b16 %v1551, %v1547
    %v2420 = vpack.c.b16 %v1552, %v1548
    %v2421 = vpack.c.b16 %v1557, %v1553
    %v2422 = vpack.c.b16 %v1558, %v1554
    %v2423 = vpack.c.b16 %v1559, %v1555
    %v2424 = vpack.c.b16 %v1560, %v1556
    %v2425 = vpack.c.b16 %v1565, %v1561
    %v2426 = vpack.c.b16 %v1566, %v1562
    %v2427 = vpack.c.b16 %v1567, %v1563
    %v2428 = vpack.c.b16 %v1568, %v1564
    %v2429 = vpack.c.b16 %v1573, %v1569
    %v2430 = vpack.c.b16 %v1574, %v1570
    %v2431 = vpack.c.b16 %v1575, %v1571
    %v2432 = vpack.c.b16 %v1576, %v1572
    %v2433 = vpack.c.b16 %v1581, %v1577
    %v2434 = vpack.c.b16 %v1582, %v1578
    %v2435 = vpack.c.b16 %v1583, %v1579
    %v2436 = vpack.c.b16 %v1584, %v1580
    %v2437 = vpack.c.b16 %v1589, %v1585
    %v2438 = vpack.c.b16 %v1590, %v1586
    %v2439 = vpack.c.b16 %v1591, %v1587
    %v2440 = vpack.c.b16 %v1592, %v1588
    %v2441 = vpack.c.b16 %v1597, %v1593
    %v2442 = vpack.c.b16 %v1598, %v1594
    %v2443 = vpack.c.b16 %v1599, %v1595
    %v2444 = vpack.c.b16 %v1600, %v1596
    %v2445 = vpack.c.b16 %v1605, %v1601
    %v2446 = vpack.c.b16 %v1606, %v1602
    %v2447 = vpack.c.b16 %v1607, %v1603
    %v2448 = vpack.c.b16 %v1608, %v1604
    %v2449 = vpack.c.b16 %v1613, %v1609
    %v2450 = vpack.c.b16 %v1614, %v1610
    %v2451 = vpack.c.b16 %v1615, %v1611
    %v2452 = vpack.c.b16 %v1616, %v1612
    %v2453 = vpack.c.b16 %v1621, %v1617
    %v2454 = vpack.c.b16 %v1622, %v1618
    %v2455 = vpack.c.b16 %v1623, %v1619
    %v2456 = vpack.c.b16 %v1624, %v1620
    %v2457 = vpack.c.b16 %v1629, %v1625
    %v2458 = vpack.c.b16 %v1630, %v1626
    %v2459 = vpack.c.b16 %v1631, %v1627
    %v2460 = vpack.c.b16 %v1632, %v1628
    %v2461 = vpack.c.b16 %v1637, %v1633
    %v2462 = vpack.c.b16 %v1638, %v1634
    %v2463 = vpack.c.b16 %v1639, %v1635
    %v2464 = vpack.c.b16 %v1640, %v1636
    %v2465 = vpack.c.b16 %v1645, %v1641
    %v2466 = vpack.c.b16 %v1646, %v1642
    %v2467 = vpack.c.b16 %v1647, %v1643
    %v2468 = vpack.c.b16 %v1648, %v1644
    %v2469 = vpack.c.b16 %v1653, %v1649
    %v2470 = vpack.c.b16 %v1654, %v1650
    %v2471 = vpack.c.b16 %v1655, %v1651
    %v2472 = vpack.c.b16 %v1656, %v1652
    %v2473 = vpack.c.b16 %v1661, %v1657
    %v2474 = vpack.c.b16 %v1662, %v1658
    %v2475 = vpack.c.b16 %v1663, %v1659
    %v2476 = vpack.c.b16 %v1664, %v1660
    %v2477 = vpack.c.b16 %v1669, %v1665
    %v2478 = vpack.c.b16 %v1670, %v1666
    %v2479 = vpack.c.b16 %v1671, %v1667
    %v2480 = vpack.c.b16 %v1672, %v1668
    %v2481 = vpack.c.b16 %v1677, %v1673
    %v2482 = vpack.c.b16 %v1678, %v1674
    %v2483 = vpack.c.b16 %v1679, %v1675
    %v2484 = vpack.c.b16 %v1680, %v1676
    %v2485 = vpack.c.b16 %v1685, %v1681
    %v2486 = vpack.c.b16 %v1686, %v1682
    %v2487 = vpack.c.b16 %v1687, %v1683
    %v2488 = vpack.c.b16 %v1688, %v1684
    %v2489 = vpack.c.b16 %v1693, %v1689
    %v2490 = vpack.c.b16 %v1694, %v1690
    %v2491 = vpack.c.b16 %v1695, %v1691
    %v2492 = vpack.c.b16 %v1696, %v1692
    %v2493 = vpack.c.b16 %v1701, %v1697
    %v2494 = vpack.c.b16 %v1702, %v1698
    %v2495 = vpack.c.b16 %v1703, %v1699
    %v2496 = vpack.c.b16 %v1704, %v1700
    %v2497 = vpack.c.b16 %v1709, %v1705
    %v2498 = vpack.c.b16 %v1710, %v1706
    %v2499 = vpack.c.b16 %v1711, %v1707
    %v2500 = vpack.c.b16 %v1712, %v1708
    %v2501 = vpack.c.b16 %v1717, %v1713
    %v2502 = vpack.c.b16 %v1718, %v1714
    %v2503 = vpack.c.b16 %v1719, %v1715
    %v2504 = vpack.c.b16 %v1720, %v1716
    %v2505 = vpack.c.b16 %v1725, %v1721
    %v2506 = vpack.c.b16 %v1726, %v1722
    %v2507 = vpack.c.b16 %v1727, %v1723
    %v2508 = vpack.c.b16 %v1728, %v1724
    %v2509 = vpack.c.b16 %v1733, %v1729
    %v2510 = vpack.c.b16 %v1734, %v1730
    %v2511 = vpack.c.b16 %v1735, %v1731
    %v2512 = vpack.c.b16 %v1736, %v1732
    %v2513 = vpack.c.b16 %v1741, %v1737
    %v2514 = vpack.c.b16 %v1742, %v1738
    %v2515 = vpack.c.b16 %v1743, %v1739
    %v2516 = vpack.c.b16 %v1744, %v1740
    %v2517 = vpack.c.b16 %v1749, %v1745
    %v2518 = vpack.c.b16 %v1750, %v1746
    %v2519 = vpack.c.b16 %v1751, %v1747
    %v2520 = vpack.c.b16 %v1752, %v1748
    %v2521 = vpack.c.b16 %v1757, %v1753
    %v2522 = vpack.c.b16 %v1758, %v1754
    %v2523 = vpack.c.b16 %v1759, %v1755
    %v2524 = vpack.c.b16 %v1760, %v1756
    %v2525 = vpack.c.b16 %v1765, %v1761
    %v2526 = vpack.c.b16 %v1766, %v1762
    %v2527 = vpack.c.b16 %v1767, %v1763
    %v2528 = vpack.c.b16 %v1768, %v1764
    %v2529 = vpack.c.b16 %v1773, %v1769
    %v2530 = vpack.c.b16 %v1774, %v1770
    %v2531 = vpack.c.b16 %v1775, %v1771
    %v2532 = vpack.c.b16 %v1776, %v1772
    %v2533 = vpack.c.b16 %v1781, %v1777
    %v2534 = vpack.c.b16 %v1782, %v1778
    %v2535 = vpack.c.b16 %v1783, %v1779
    %v2536 = vpack.c.b16 %v1784, %v1780
    %v2537 = vpack.c.b16 %v1789, %v1785
    %v2538 = vpack.c.b16 %v1790, %v1786
    %v2539 = vpack.c.b16 %v1791, %v1787
    %v2540 = vpack.c.b16 %v1792, %v1788
    %v2541 = vpack.c.b16 %v1797, %v1793
    %v2542 = vpack.c.b16 %v1798, %v1794
    %v2543 = vpack.c.b16 %v1799, %v1795
    %v2544 = vpack.c.b16 %v1800, %v1796
    %v2545 = vpack.c.b16 %v1805, %v1801
    %v2546 = vpack.c.b16 %v1806, %v1802
    %v2547 = vpack.c.b16 %v1807, %v1803
    %v2548 = vpack.c.b16 %v1808, %v1804
    %v2549 = vpack.c.b16 %v1813, %v1809
    %v2550 = vpack.c.b16 %v1814, %v1810
    %v2551 = vpack.c.b16 %v1815, %v1811
    %v2552 = vpack.c.b16 %v1816, %v1812
    %v2553 = vpack.c.b16 %v1821, %v1817
    %v2554 = vpack.c.b16 %v1822, %v1818
    %v2555 = vpack.c.b16 %v1823, %v1819
    %v2556 = vpack.c.b16 %v1824, %v1820
    %v2557 = vpack.c.b16 %v1829, %v1825
    %v2558 = vpack.c.b16 %v1830, %v1826
    %v2559 = vpack.c.b16 %v1831, %v1827
    %v2560 = vpack.c.b16 %v1832, %v1828
    %v2561 = vpack.c.b16 %v1837, %v1833
    %v2562 = vpack.c.b16 %v1838, %v1834
    %v2563 = vpack.c.b16 %v1839, %v1835
    %v2564 = vpack.c.b16 %v1840, %v1836
    %v2565 = vpack.c.b16 %v1845, %v1841
    %v2566 = vpack.c.b16 %v1846, %v1842
    %v2567 = vpack.c.b16 %v1847, %v1843
    %v2568 = vpack.c.b16 %v1848, %v1844
    %v2569 = vpack.c.b16 %v1853, %v1849
    %v2570 = vpack.c.b16 %v1854, %v1850
    %v2571 = vpack.c.b16 %v1855, %v1851
    %v2572 = vpack.c.b16 %v1856, %v1852
    %v2573 = vpack.c.b16 %v1861, %v1857
    %v2574 = vpack.c.b16 %v1862, %v1858
    %v2575 = vpack.c.b16 %v1863, %v1859
    %v2576 = vpack.c.b16 %v1864, %v1860
    %v2577 = vpack.c.b16 %v1869, %v1865
    %v2578 = vpack.c.b16 %v1870, %v1866
    %v2579 = vpack.c.b16 %v1871, %v1867
    %v2580 = vpack.c.b16 %v1872, %v1868
    %v2581 = vpack.c.b16 %v1877, %v1873
    %v2582 = vpack.c.b16 %v1878, %v1874
    %v2583 = vpack.c.b16 %v1879, %v1875
    %v2584 = vpack.c.b16 %v1880, %v1876
    %v2585 = vpack.c.b16 %v1885, %v1881
    %v2586 = vpack.c.b16 %v1886, %v1882
    %v2587 = vpack.c.b16 %v1887, %v1883
    %v2588 = vpack.c.b16 %v1888, %v1884
    %v2589 = vpack.c.b16 %v1893, %v1889
    %v2590 = vpack.c.b16 %v1894, %v1890
    %v2591 = vpack.c.b16 %v1895, %v1891
    %v2592 = vpack.c.b16 %v1896, %v1892
    %v2593 = vpack.c.b16 %v1901, %v1897
    %v2594 = vpack.c.b16 %v1902, %v1898
    %v2595 = vpack.c.b16 %v1903, %v1899
    %v2596 = vpack.c.b16 %v1904, %v1900
    %v2597 = vpack.c.b16 %v1909, %v1905
    %v2598 = vpack.c.b16 %v1910, %v1906
    %v2599 = vpack.c.b16 %v1911, %v1907
    %v2600 = vpack.c.b16 %v1912, %v1908
    %v2601 = vpack.c.b16 %v1917, %v1913
    %v2602 = vpack.c.b16 %v1918, %v1914
    %v2603 = vpack.c.b16 %v1919, %v1915
    %v2604 = vpack.c.b16 %v1920, %v1916
    %v2605 = vpack.c.b16 %v1925, %v1921
    %v2606 = vpack.c.b16 %v1926, %v1922
    %v2607 = vpack.c.b16 %v1927, %v1923
    %v2608 = vpack.c.b16 %v1928, %v1924
    %v2609 = vpack.c.b16 %v1933, %v1929
    %v2610 = vpack.c.b16 %v1934, %v1930
    %v2611 = vpack.c.b16 %v1935, %v1931
    %v2612 = vpack.c.b16 %v1936, %v1932
    %v2613 = vpack.c.b16 %v1941, %v1937
    %v2614 = vpack.c.b16 %v1942, %v1938
    %v2615 = vpack.c.b16 %v1943, %v1939
    %v2616 = vpack.c.b16 %v1944, %v1940
    %v2617 = vpack.c.b16 %v1949, %v1945
    %v2618 = vpack.c.b16 %v1950, %v1946
    %v2619 = vpack.c.b16 %v1951, %v1947
    %v2620 = vpack.c.b16 %v1952, %v1948
    %v2621 = vpack.c.b16 %v1957, %v1953
    %v2622 = vpack.c.b16 %v1958, %v1954
    %v2623 = vpack.c.b16 %v1959, %v1955
    %v2624 = vpack.c.b16 %v1960, %v1956
    %v2625 = vpack.c.b16 %v1965, %v1961
    %v2626 = vpack.c.b16 %v1966, %v1962
    %v2627 = vpack.c.b16 %v1967, %v1963
    %v2628 = vpack.c.b16 %v1968, %v1964
    %v2629 = vpack.c.b16 %v1973, %v1969
    %v2630 = vpack.c.b16 %v1974, %v1970
    %v2631 = vpack.c.b16 %v1975, %v1971
    %v2632 = vpack.c.b16 %v1976, %v1972
    %v2633 = vpack.c.b16 %v1981, %v1977
    %v2634 = vpack.c.b16 %v1982, %v1978
    %v2635 = vpack.c.b16 %v1983, %v1979
    %v2636 = vpack.c.b16 %v1984, %v1980
    %v2637 = vpack.c.b16 %v1989, %v1985
    %v2638 = vpack.c.b16 %v1990, %v1986
    %v2639 = vpack.c.b16 %v1991, %v1987
    %v2640 = vpack.c.b16 %v1992, %v1988
    %v2641 = vpack.c.b16 %v1997, %v1993
    %v2642 = vpack.c.b16 %v1998, %v1994
    %v2643 = vpack.c.b16 %v1999, %v1995
    %v2644 = vpack.c.b16 %v2000, %v1996
    %v2645 = vpack.c.b16 %v2005, %v2001
    %v2646 = vpack.c.b16 %v2006, %v2002
    %v2647 = vpack.c.b16 %v2007, %v2003
    %v2648 = vpack.c.b16 %v2008, %v2004
    %v2649 = vpack.c.b16 %v2013, %v2009
    %v2650 = vpack.c.b16 %v2014, %v2010
    %v2651 = vpack.c.b16 %v2015, %v2011
    %v2652 = vpack.c.b16 %v2016, %v2012
    %v2653 = vpack.c.b16 %v2021, %v2017
    %v2654 = vpack.c.b16 %v2022, %v2018
    %v2655 = vpack.c.b16 %v2023, %v2019
    %v2656 = vpack.c.b16 %v2024, %v2020
    %v2657 = vpack.c.b16 %v2029, %v2025
    %v2658 = vpack.c.b16 %v2030, %v2026
    %v2659 = vpack.c.b16 %v2031, %v2027
    %v2660 = vpack.c.b16 %v2032, %v2028
    %v2661 = vpack.c.b16 %v2037, %v2033
    %v2662 = vpack.c.b16 %v2038, %v2034
    %v2663 = vpack.c.b16 %v2039, %v2035
    %v2664 = vpack.c.b16 %v2040, %v2036
    %v2665 = vpack.c.b16 %v2045, %v2041
    %v2666 = vpack.c.b16 %v2046, %v2042
    %v2667 = vpack.c.b16 %v2047, %v2043
    %v2668 = vpack.c.b16 %v2048, %v2044
    %v2669 = vpack.c.b16 %v2053, %v2049
    %v2670 = vpack.c.b16 %v2054, %v2050
    %v2671 = vpack.c.b16 %v2055, %v2051
    %v2672 = vpack.c.b16 %v2056, %v2052
    %v2673 = vpack.c.b16 %v2061, %v2057
    %v2674 = vpack.c.b16 %v2062, %v2058
    %v2675 = vpack.c.b16 %v2063, %v2059
    %v2676 = vpack.c.b16 %v2064, %v2060
    %v2677 = vpack.c.b16 %v2069, %v2065
    %v2678 = vpack.c.b16 %v2070, %v2066
    %v2679 = vpack.c.b16 %v2071, %v2067
    %v2680 = vpack.c.b16 %v2072, %v2068
    %v2681 = vpack.c.b16 %v2077, %v2073
    %v2682 = vpack.c.b16 %v2078, %v2074
    %v2683 = vpack.c.b16 %v2079, %v2075
    %v2684 = vpack.c.b16 %v2080, %v2076
    %v2685 = vpack.c.b16 %v2085, %v2081
    %v2686 = vpack.c.b16 %v2086, %v2082
    %v2687 = vpack.c.b16 %v2087, %v2083
    %v2688 = vpack.c.b16 %v2088, %v2084
    %v2689 = vpack.c.b16 %v2093, %v2089
    %v2690 = vpack.c.b16 %v2094, %v2090
    %v2691 = vpack.c.b16 %v2095, %v2091
    %v2692 = vpack.c.b16 %v2096, %v2092
    %v2693 = vpack.c.b16 %v2101, %v2097
    %v2694 = vpack.c.b16 %v2102, %v2098
    %v2695 = vpack.c.b16 %v2103, %v2099
    %v2696 = vpack.c.b16 %v2104, %v2100
    %v2697 = vpack.c.b16 %v2109, %v2105
    %v2698 = vpack.c.b16 %v2110, %v2106
    %v2699 = vpack.c.b16 %v2111, %v2107
    %v2700 = vpack.c.b16 %v2112, %v2108
    %v2701 = vpack.c.b16 %v2117, %v2113
    %v2702 = vpack.c.b16 %v2118, %v2114
    %v2703 = vpack.c.b16 %v2119, %v2115
    %v2704 = vpack.c.b16 %v2120, %v2116
    %v2705 = vpack.c.b16 %v2125, %v2121
    %v2706 = vpack.c.b16 %v2126, %v2122
    %v2707 = vpack.c.b16 %v2127, %v2123
    %v2708 = vpack.c.b16 %v2128, %v2124
    %v2709 = vpack.c.b16 %v2133, %v2129
    %v2710 = vpack.c.b16 %v2134, %v2130
    %v2711 = vpack.c.b16 %v2135, %v2131
    %v2712 = vpack.c.b16 %v2136, %v2132
    %v2713 = vpack.c.b16 %v2141, %v2137
    %v2714 = vpack.c.b16 %v2142, %v2138
    %v2715 = vpack.c.b16 %v2143, %v2139
    %v2716 = vpack.c.b16 %v2144, %v2140
    %v2717 = vpack.c.b16 %v2149, %v2145
    %v2718 = vpack.c.b16 %v2150, %v2146
    %v2719 = vpack.c.b16 %v2151, %v2147
    %v2720 = vpack.c.b16 %v2152, %v2148
    %v2721 = vpack.c.b16 %v2157, %v2153
    %v2722 = vpack.c.b16 %v2158, %v2154
    %v2723 = vpack.c.b16 %v2159, %v2155
    %v2724 = vpack.c.b16 %v2160, %v2156
    %v2725 = vpack.c.b16 %v2165, %v2161
    %v2726 = vpack.c.b16 %v2166, %v2162
    %v2727 = vpack.c.b16 %v2167, %v2163
    %v2728 = vpack.c.b16 %v2168, %v2164
    %v2729 = vpack.c.b16 %v2173, %v2169
    %v2730 = vpack.c.b16 %v2174, %v2170
    %v2731 = vpack.c.b16 %v2175, %v2171
    %v2732 = vpack.c.b16 %v2176, %v2172
    %v2733 = vpack.c.b16 %v2181, %v2177
    %v2734 = vpack.c.b16 %v2182, %v2178
    %v2735 = vpack.c.b16 %v2183, %v2179
    %v2736 = vpack.c.b16 %v2184, %v2180
    %v2737 = vpack.c.b16 %v2189, %v2185
    %v2738 = vpack.c.b16 %v2190, %v2186
    %v2739 = vpack.c.b16 %v2191, %v2187
    %v2740 = vpack.c.b16 %v2192, %v2188
    %v2741 = vpack.c.b16 %v2197, %v2193
    %v2742 = vpack.c.b16 %v2198, %v2194
    %v2743 = vpack.c.b16 %v2199, %v2195
    %v2744 = vpack.c.b16 %v2200, %v2196
    %v2745 = vpack.c.b16 %v2205, %v2201
    %v2746 = vpack.c.b16 %v2206, %v2202
    %v2747 = vpack.c.b16 %v2207, %v2203
    %v2748 = vpack.c.b16 %v2208, %v2204
    %v2749 = vpack.c.b16 %v2213, %v2209
    %v2750 = vpack.c.b16 %v2214, %v2210
    %v2751 = vpack.c.b16 %v2215, %v2211
    %v2752 = vpack.c.b16 %v2216, %v2212
    %v2753 = vpack.c.b16 %v2221, %v2217
    %v2754 = vpack.c.b16 %v2222, %v2218
    %v2755 = vpack.c.b16 %v2223, %v2219
    %v2756 = vpack.c.b16 %v2224, %v2220
    %v2757 = vpack.c.b16 %v2229, %v2225
    %v2758 = vpack.c.b16 %v2230, %v2226
    %v2759 = vpack.c.b16 %v2231, %v2227
    %v2760 = vpack.c.b16 %v2232, %v2228
    %v2761 = vpack.c.b16 %v2237, %v2233
    %v2762 = vpack.c.b16 %v2238, %v2234
    %v2763 = vpack.c.b16 %v2239, %v2235
    %v2764 = vpack.c.b16 %v2240, %v2236
    %v2765 = vpack.c.b16 %v2245, %v2241
    %v2766 = vpack.c.b16 %v2246, %v2242
    %v2767 = vpack.c.b16 %v2247, %v2243
    %v2768 = vpack.c.b16 %v2248, %v2244
    %v2769 = vpack.c.b16 %v2253, %v2249
    %v2770 = vpack.c.b16 %v2254, %v2250
    %v2771 = vpack.c.b16 %v2255, %v2251
    %v2772 = vpack.c.b16 %v2256, %v2252
    %v2773 = vpack.c.b16 %v2261, %v2257
    %v2774 = vpack.c.b16 %v2262, %v2258
    %v2775 = vpack.c.b16 %v2263, %v2259
    %v2776 = vpack.c.b16 %v2264, %v2260
    %3289 = vmatprep.subr.bf16.mxu0 %v2266
    %3290 = vmatpush1.bf16.msra.mxu0 %v2265
    %3291 = vmatprep.subr.bf16.mxu0 %v2270
    %3292 = vmatpush1.bf16.msra.mxu0 %v2269
    %3293 = vmatprep.subr.bf16.mxu0 %v2274
    %3294 = vmatpush1.bf16.msra.mxu0 %v2273
    %3295 = vmatprep.subr.bf16.mxu0 %v2278
    %3296 = vmatpush1.bf16.msra.mxu0 %v2277
    %3297 = vmatprep.subr.bf16.mxu0 %v2282
    %3298 = vmatpush1.bf16.msra.mxu0 %v2281
    %3299 = vmatprep.subr.bf16.mxu0 %v2286
    %3300 = vmatpush1.bf16.msra.mxu0 %v2285
    %3301 = vmatprep.subr.bf16.mxu0 %v2290
    %3302 = vmatpush1.bf16.msra.mxu0 %v2289
    %3303 = vmatprep.subr.bf16.mxu0 %v2294
    %3304 = vmatpush1.bf16.msra.mxu0 %v2293
    %3305 = vmatprep.subr.bf16.mxu0 %v2298
    %3306 = vmatpush1.bf16.msra.mxu0 %v2297
    %3307 = vmatprep.subr.bf16.mxu0 %v2302
    %3308 = vmatpush1.bf16.msra.mxu0 %v2301
    %3309 = vmatprep.subr.bf16.mxu0 %v2306
    %3310 = vmatpush1.bf16.msra.mxu0 %v2305
    %3311 = vmatprep.subr.bf16.mxu0 %v2310
    %3312 = vmatpush1.bf16.msra.mxu0 %v2309
    %3313 = vmatprep.subr.bf16.mxu0 %v2314
    %3314 = vmatpush1.bf16.msra.mxu0 %v2313
    %3315 = vmatprep.subr.bf16.mxu0 %v2318
    %3316 = vmatpush1.bf16.msra.mxu0 %v2317
    %3317 = vmatprep.subr.bf16.mxu0 %v2322
    %3318 = vmatpush1.bf16.msra.mxu0 %v2321
    %3319 = vmatprep.subr.bf16.mxu0 %v2326
    %3320 = vmatpush1.bf16.msra.mxu0 %v2325
    %3321 = vmatprep.mubr.bf16.mxu0 %v660
    %3322 = vmatmul.mubr.bf16.gmra.mrb[0].mxu0 %v652
    %v3323 = vpop.f32.mrb[0].mxu0
    %v3324 = vadd.f32 %v624, %v3323
    %v3325 = vpop.f32.mrb[0].mxu0
    %v3326 = vadd.f32 %v628, %v3325
    %v3327 = vpop.f32.mrb[0].mxu0
    %v3328 = vpop.f32.mrb[0].mxu0
    %3329 = vdwg.mxu0
    %3330 = vmatprep.subr.bf16.mxu0 %v2330
    %3331 = vmatpush1.bf16.msra.mxu0 %v2329
    %3332 = vmatprep.subr.bf16.mxu0 %v2334
    %3333 = vmatpush1.bf16.msra.mxu0 %v2333
    %3334 = vmatprep.subr.bf16.mxu0 %v2338
    %3335 = vmatpush1.bf16.msra.mxu0 %v2337
    %3336 = vmatprep.subr.bf16.mxu0 %v2342
    %3337 = vmatpush1.bf16.msra.mxu0 %v2341
    %3338 = vmatprep.subr.bf16.mxu0 %v2346
    %3339 = vmatpush1.bf16.msra.mxu0 %v2345
    %3340 = vmatprep.subr.bf16.mxu0 %v2350
    %3341 = vmatpush1.bf16.msra.mxu0 %v2349
    %3342 = vmatprep.subr.bf16.mxu0 %v2354
    %3343 = vmatpush1.bf16.msra.mxu0 %v2353
    %3344 = vmatprep.subr.bf16.mxu0 %v2358
    %3345 = vmatpush1.bf16.msra.mxu0 %v2357
    %3346 = vmatprep.subr.bf16.mxu0 %v2362
    %3347 = vmatpush1.bf16.msra.mxu0 %v2361
    %3348 = vmatprep.subr.bf16.mxu0 %v2366
    %3349 = vmatpush1.bf16.msra.mxu0 %v2365
    %3350 = vmatprep.subr.bf16.mxu0 %v2370
    %3351 = vmatpush1.bf16.msra.mxu0 %v2369
    %3352 = vmatprep.subr.bf16.mxu0 %v2374
    %3353 = vmatpush1.bf16.msra.mxu0 %v2373
    %3354 = vmatprep.subr.bf16.mxu0 %v2378
    %3355 = vmatpush1.bf16.msra.mxu0 %v2377
    %3356 = vmatprep.subr.bf16.mxu0 %v2382
    %3357 = vmatpush1.bf16.msra.mxu0 %v2381
    %3358 = vmatprep.subr.bf16.mxu0 %v2386
    %3359 = vmatpush1.bf16.msra.mxu0 %v2385
    %3360 = vmatprep.subr.bf16.mxu0 %v2390
    %3361 = vmatpush1.bf16.msra.mxu0 %v2389
    %3362 = vmatprep.mubr.bf16.mxu0 %v661
    %3363 = vmatmul.mubr.bf16.gmra.mrb[0].mxu0 %v659
    %v3364 = vpop.f32.mrb[0].mxu0
    %v3365 = vadd.f32 %v3324, %v3364
    %v3366 = vpop.f32.mrb[0].mxu0
    %v3367 = vadd.f32 %v3326, %v3366
    %v3368 = vpop.f32.mrb[0].mxu0
    %v3369 = vpop.f32.mrb[0].mxu0
    %3370 = vdwg.mxu0
    %3371 = vmatprep.subr.bf16.mxu0 %v2394
    %3372 = vmatpush1.bf16.msra.mxu0 %v2393
    %3373 = vmatprep.subr.bf16.mxu0 %v2398
    %3374 = vmatpush1.bf16.msra.mxu0 %v2397
    %3375 = vmatprep.subr.bf16.mxu0 %v2402
    %3376 = vmatpush1.bf16.msra.mxu0 %v2401
    %3377 = vmatprep.subr.bf16.mxu0 %v2406
    %3378 = vmatpush1.bf16.msra.mxu0 %v2405
    %3379 = vmatprep.subr.bf16.mxu0 %v2410
    %3380 = vmatpush1.bf16.msra.mxu0 %v2409
    %3381 = vmatprep.subr.bf16.mxu0 %v2414
    %3382 = vmatpush1.bf16.msra.mxu0 %v2413
    %3383 = vmatprep.subr.bf16.mxu0 %v2418
    %3384 = vmatpush1.bf16.msra.mxu0 %v2417
    %3385 = vmatprep.subr.bf16.mxu0 %v2422
    %3386 = vmatpush1.bf16.msra.mxu0 %v2421
    %3387 = vmatprep.subr.bf16.mxu0 %v2426
    %3388 = vmatpush1.bf16.msra.mxu0 %v2425
    %3389 = vmatprep.subr.bf16.mxu0 %v2430
    %3390 = vmatpush1.bf16.msra.mxu0 %v2429
    %3391 = vmatprep.subr.bf16.mxu0 %v2434
    %3392 = vmatpush1.bf16.msra.mxu0 %v2433
    %3393 = vmatprep.subr.bf16.mxu0 %v2438
    %3394 = vmatpush1.bf16.msra.mxu0 %v2437
    %3395 = vmatprep.subr.bf16.mxu0 %v2442
    %3396 = vmatpush1.bf16.msra.mxu0 %v2441
    %3397 = vmatprep.subr.bf16.mxu0 %v2446
    %3398 = vmatpush1.bf16.msra.mxu0 %v2445
    %3399 = vmatprep.subr.bf16.mxu0 %v2450
    %3400 = vmatpush1.bf16.msra.mxu0 %v2449
    %3401 = vmatprep.subr.bf16.mxu0 %v2454
    %3402 = vmatpush1.bf16.msra.mxu0 %v2453
    %3403 = vmatprep.mubr.bf16.mxu0 %v677
    %3404 = vmatmul.mubr.bf16.gmra.mrb[0].mxu0 %v669
    %v3405 = vpop.f32.mrb[0].mxu0
    %v3406 = vadd.f32 %v3365, %v3405
    %v3407 = vpop.f32.mrb[0].mxu0
    %v3408 = vadd.f32 %v3367, %v3407
    %v3409 = vpop.f32.mrb[0].mxu0
    %v3410 = vpop.f32.mrb[0].mxu0
    %3411 = vdwg.mxu0
    %3412 = vmatprep.subr.bf16.mxu0 %v2458
    %3413 = vmatpush1.bf16.msra.mxu0 %v2457
    %3414 = vmatprep.subr.bf16.mxu0 %v2462
    %3415 = vmatpush1.bf16.msra.mxu0 %v2461
    %3416 = vmatprep.subr.bf16.mxu0 %v2466
    %3417 = vmatpush1.bf16.msra.mxu0 %v2465
    %3418 = vmatprep.subr.bf16.mxu0 %v2470
    %3419 = vmatpush1.bf16.msra.mxu0 %v2469
    %3420 = vmatprep.subr.bf16.mxu0 %v2474
    %3421 = vmatpush1.bf16.msra.mxu0 %v2473
    %3422 = vmatprep.subr.bf16.mxu0 %v2478
    %3423 = vmatpush1.bf16.msra.mxu0 %v2477
    %3424 = vmatprep.subr.bf16.mxu0 %v2482
    %3425 = vmatpush1.bf16.msra.mxu0 %v2481
    %3426 = vmatprep.subr.bf16.mxu0 %v2486
    %3427 = vmatpush1.bf16.msra.mxu0 %v2485
    %3428 = vmatprep.subr.bf16.mxu0 %v2490
    %3429 = vmatpush1.bf16.msra.mxu0 %v2489
    %3430 = vmatprep.subr.bf16.mxu0 %v2494
    %3431 = vmatpush1.bf16.msra.mxu0 %v2493
    %3432 = vmatprep.subr.bf16.mxu0 %v2498
    %3433 = vmatpush1.bf16.msra.mxu0 %v2497
    %3434 = vmatprep.subr.bf16.mxu0 %v2502
    %3435 = vmatpush1.bf16.msra.mxu0 %v2501
    %3436 = vmatprep.subr.bf16.mxu0 %v2506
    %3437 = vmatpush1.bf16.msra.mxu0 %v2505
    %3438 = vmatprep.subr.bf16.mxu0 %v2510
    %3439 = vmatpush1.bf16.msra.mxu0 %v2509
    %3440 = vmatprep.subr.bf16.mxu0 %v2514
    %3441 = vmatpush1.bf16.msra.mxu0 %v2513
    %3442 = vmatprep.subr.bf16.mxu0 %v2518
    %3443 = vmatpush1.bf16.msra.mxu0 %v2517
    %3444 = vmatprep.mubr.bf16.mxu0 %v678
    %3445 = vmatmul.mubr.bf16.gmra.mrb[0].mxu0 %v676
    %v3446 = vpop.f32.mrb[0].mxu0
    %v3447 = vadd.f32 %v3406, %v3446
    %v3448 = vpop.f32.mrb[0].mxu0
    %v3449 = vadd.f32 %v3408, %v3448
    %v3450 = vpop.f32.mrb[0].mxu0
    %v3451 = vpop.f32.mrb[0].mxu0
    %3452 = vdwg.mxu0
    %3453 = vmatprep.subr.bf16.mxu0 %v2522
    %3454 = vmatpush1.bf16.msra.mxu0 %v2521
    %3455 = vmatprep.subr.bf16.mxu0 %v2526
    %3456 = vmatpush1.bf16.msra.mxu0 %v2525
    %3457 = vmatprep.subr.bf16.mxu0 %v2530
    %3458 = vmatpush1.bf16.msra.mxu0 %v2529
    %3459 = vmatprep.subr.bf16.mxu0 %v2534
    %3460 = vmatpush1.bf16.msra.mxu0 %v2533
    %3461 = vmatprep.subr.bf16.mxu0 %v2538
    %3462 = vmatpush1.bf16.msra.mxu0 %v2537
    %3463 = vmatprep.subr.bf16.mxu0 %v2542
    %3464 = vmatpush1.bf16.msra.mxu0 %v2541
    %3465 = vmatprep.subr.bf16.mxu0 %v2546
    %3466 = vmatpush1.bf16.msra.mxu0 %v2545
    %3467 = vmatprep.subr.bf16.mxu0 %v2550
    %3468 = vmatpush1.bf16.msra.mxu0 %v2549
    %3469 = vmatprep.subr.bf16.mxu0 %v2554
    %3470 = vmatpush1.bf16.msra.mxu0 %v2553
    %3471 = vmatprep.subr.bf16.mxu0 %v2558
    %3472 = vmatpush1.bf16.msra.mxu0 %v2557
    %3473 = vmatprep.subr.bf16.mxu0 %v2562
    %3474 = vmatpush1.bf16.msra.mxu0 %v2561
    %3475 = vmatprep.subr.bf16.mxu0 %v2566
    %3476 = vmatpush1.bf16.msra.mxu0 %v2565
    %3477 = vmatprep.subr.bf16.mxu0 %v2570
    %3478 = vmatpush1.bf16.msra.mxu0 %v2569
    %3479 = vmatprep.subr.bf16.mxu0 %v2574
    %3480 = vmatpush1.bf16.msra.mxu0 %v2573
    %3481 = vmatprep.subr.bf16.mxu0 %v2578
    %3482 = vmatpush1.bf16.msra.mxu0 %v2577
    %3483 = vmatprep.subr.bf16.mxu0 %v2582
    %3484 = vmatpush1.bf16.msra.mxu0 %v2581
    %3485 = vmatprep.mubr.bf16.mxu0 %v694
    %3486 = vmatmul.mubr.bf16.gmra.mrb[0].mxu0 %v686
    %v3487 = vpop.f32.mrb[0].mxu0
    %v3488 = vadd.f32 %v3447, %v3487
    %v3489 = vpop.f32.mrb[0].mxu0
    %v3490 = vadd.f32 %v3449, %v3489
    %v3491 = vpop.f32.mrb[0].mxu0
    %v3492 = vpop.f32.mrb[0].mxu0
    %3493 = vdwg.mxu0
    %3494 = vmatprep.subr.bf16.mxu0 %v2586
    %3495 = vmatpush1.bf16.msra.mxu0 %v2585
    %3496 = vmatprep.subr.bf16.mxu0 %v2590
    %3497 = vmatpush1.bf16.msra.mxu0 %v2589
    %3498 = vmatprep.subr.bf16.mxu0 %v2594
    %3499 = vmatpush1.bf16.msra.mxu0 %v2593
    %3500 = vmatprep.subr.bf16.mxu0 %v2598
    %3501 = vmatpush1.bf16.msra.mxu0 %v2597
    %3502 = vmatprep.subr.bf16.mxu0 %v2602
    %3503 = vmatpush1.bf16.msra.mxu0 %v2601
    %3504 = vmatprep.subr.bf16.mxu0 %v2606
    %3505 = vmatpush1.bf16.msra.mxu0 %v2605
    %3506 = vmatprep.subr.bf16.mxu0 %v2610
    %3507 = vmatpush1.bf16.msra.mxu0 %v2609
    %3508 = vmatprep.subr.bf16.mxu0 %v2614
    %3509 = vmatpush1.bf16.msra.mxu0 %v2613
    %3510 = vmatprep.subr.bf16.mxu0 %v2618
    %3511 = vmatpush1.bf16.msra.mxu0 %v2617
    %3512 = vmatprep.subr.bf16.mxu0 %v2622
    %3513 = vmatpush1.bf16.msra.mxu0 %v2621
    %3514 = vmatprep.subr.bf16.mxu0 %v2626
    %3515 = vmatpush1.bf16.msra.mxu0 %v2625
    %3516 = vmatprep.subr.bf16.mxu0 %v2630
    %3517 = vmatpush1.bf16.msra.mxu0 %v2629
    %3518 = vmatprep.subr.bf16.mxu0 %v2634
    %3519 = vmatpush1.bf16.msra.mxu0 %v2633
    %3520 = vmatprep.subr.bf16.mxu0 %v2638
    %3521 = vmatpush1.bf16.msra.mxu0 %v2637
    %3522 = vmatprep.subr.bf16.mxu0 %v2642
    %3523 = vmatpush1.bf16.msra.mxu0 %v2641
    %3524 = vmatprep.subr.bf16.mxu0 %v2646
    %3525 = vmatpush1.bf16.msra.mxu0 %v2645
    %3526 = vmatprep.mubr.bf16.mxu0 %v695
    %3527 = vmatmul.mubr.bf16.gmra.mrb[0].mxu0 %v693
    %v3528 = vpop.f32.mrb[0].mxu0
    %v3529 = vadd.f32 %v3488, %v3528
    %v3530 = vpop.f32.mrb[0].mxu0
    %v3531 = vadd.f32 %v3490, %v3530
    %v3532 = vpop.f32.mrb[0].mxu0
    %v3533 = vpop.f32.mrb[0].mxu0
    %3534 = vdwg.mxu0
    %3535 = vmatprep.subr.bf16.mxu0 %v2650
    %3536 = vmatpush1.bf16.msra.mxu0 %v2649
    %3537 = vmatprep.subr.bf16.mxu0 %v2654
    %3538 = vmatpush1.bf16.msra.mxu0 %v2653
    %3539 = vmatprep.subr.bf16.mxu0 %v2658
    %3540 = vmatpush1.bf16.msra.mxu0 %v2657
    %3541 = vmatprep.subr.bf16.mxu0 %v2662
    %3542 = vmatpush1.bf16.msra.mxu0 %v2661
    %3543 = vmatprep.subr.bf16.mxu0 %v2666
    %3544 = vmatpush1.bf16.msra.mxu0 %v2665
    %3545 = vmatprep.subr.bf16.mxu0 %v2670
    %3546 = vmatpush1.bf16.msra.mxu0 %v2669
    %3547 = vmatprep.subr.bf16.mxu0 %v2674
    %3548 = vmatpush1.bf16.msra.mxu0 %v2673
    %3549 = vmatprep.subr.bf16.mxu0 %v2678
    %3550 = vmatpush1.bf16.msra.mxu0 %v2677
    %3551 = vmatprep.subr.bf16.mxu0 %v2682
    %3552 = vmatpush1.bf16.msra.mxu0 %v2681
    %3553 = vmatprep.subr.bf16.mxu0 %v2686
    %3554 = vmatpush1.bf16.msra.mxu0 %v2685
    %3555 = vmatprep.subr.bf16.mxu0 %v2690
    %3556 = vmatpush1.bf16.msra.mxu0 %v2689
    %3557 = vmatprep.subr.bf16.mxu0 %v2694
    %3558 = vmatpush1.bf16.msra.mxu0 %v2693
    %3559 = vmatprep.subr.bf16.mxu0 %v2698
    %3560 = vmatpush1.bf16.msra.mxu0 %v2697
    %3561 = vmatprep.subr.bf16.mxu0 %v2702
    %3562 = vmatpush1.bf16.msra.mxu0 %v2701
    %3563 = vmatprep.subr.bf16.mxu0 %v2706
    %3564 = vmatpush1.bf16.msra.mxu0 %v2705
    %3565 = vmatprep.subr.bf16.mxu0 %v2710
    %3566 = vmatpush1.bf16.msra.mxu0 %v2709
    %3567 = vmatprep.mubr.bf16.mxu0 %v711
    %3568 = vmatmul.mubr.bf16.gmra.mrb[0].mxu0 %v703
    %v3569 = vpop.f32.mrb[0].mxu0
    %v3570 = vadd.f32 %v3529, %v3569
    %v3571 = vpop.f32.mrb[0].mxu0
    %v3572 = vadd.f32 %v3531, %v3571
    %v3573 = vpop.f32.mrb[0].mxu0
    %v3574 = vpop.f32.mrb[0].mxu0
    %3575 = vdwg.mxu0
    %3576 = vmatprep.subr.bf16.mxu0 %v2714
    %3577 = vmatpush1.bf16.msra.mxu0 %v2713
    %3578 = vmatprep.subr.bf16.mxu0 %v2718
    %3579 = vmatpush1.bf16.msra.mxu0 %v2717
    %3580 = vmatprep.subr.bf16.mxu0 %v2722
    %3581 = vmatpush1.bf16.msra.mxu0 %v2721
    %3582 = vmatprep.subr.bf16.mxu0 %v2726
    %3583 = vmatpush1.bf16.msra.mxu0 %v2725
    %3584 = vmatprep.subr.bf16.mxu0 %v2730
    %3585 = vmatpush1.bf16.msra.mxu0 %v2729
    %3586 = vmatprep.subr.bf16.mxu0 %v2734
    %3587 = vmatpush1.bf16.msra.mxu0 %v2733
    %3588 = vmatprep.subr.bf16.mxu0 %v2738
    %3589 = vmatpush1.bf16.msra.mxu0 %v2737
    %3590 = vmatprep.subr.bf16.mxu0 %v2742
    %3591 = vmatpush1.bf16.msra.mxu0 %v2741
    %3592 = vmatprep.subr.bf16.mxu0 %v2746
    %3593 = vmatpush1.bf16.msra.mxu0 %v2745
    %3594 = vmatprep.subr.bf16.mxu0 %v2750
    %3595 = vmatpush1.bf16.msra.mxu0 %v2749
    %3596 = vmatprep.subr.bf16.mxu0 %v2754
    %3597 = vmatpush1.bf16.msra.mxu0 %v2753
    %3598 = vmatprep.subr.bf16.mxu0 %v2758
    %3599 = vmatpush1.bf16.msra.mxu0 %v2757
    %3600 = vmatprep.subr.bf16.mxu0 %v2762
    %3601 = vmatpush1.bf16.msra.mxu0 %v2761
    %3602 = vmatprep.subr.bf16.mxu0 %v2766
    %3603 = vmatpush1.bf16.msra.mxu0 %v2765
    %3604 = vmatprep.subr.bf16.mxu0 %v2770
    %3605 = vmatpush1.bf16.msra.mxu0 %v2769
    %3606 = vmatprep.subr.bf16.mxu0 %v2774
    %3607 = vmatpush1.bf16.msra.mxu0 %v2773
    %3608 = vmatprep.mubr.bf16.mxu0 %v712
    %3609 = vmatmul.mubr.bf16.gmra.mrb[0].mxu0 %v710
    %v3610 = vpop.f32.mrb[0].mxu0
    %v3611 = vadd.f32 %v3570, %v3610
    %v3612 = vpop.f32.mrb[0].mxu0
    %v3613 = vadd.f32 %v3572, %v3612
    %v3614 = vpop.f32.mrb[0].mxu0
    %v3615 = vpop.f32.mrb[0].mxu0
    %3616 = vdwg.mxu0
    %3617 = vmatprep.subr.bf16.mxu0 %v2268
    %3618 = vmatpush1.bf16.msra.mxu0 %v2267
    %3619 = vmatprep.subr.bf16.mxu0 %v2272
    %3620 = vmatpush1.bf16.msra.mxu0 %v2271
    %3621 = vmatprep.subr.bf16.mxu0 %v2276
    %3622 = vmatpush1.bf16.msra.mxu0 %v2275
    %3623 = vmatprep.subr.bf16.mxu0 %v2280
    %3624 = vmatpush1.bf16.msra.mxu0 %v2279
    %3625 = vmatprep.subr.bf16.mxu0 %v2284
    %3626 = vmatpush1.bf16.msra.mxu0 %v2283
    %3627 = vmatprep.subr.bf16.mxu0 %v2288
    %3628 = vmatpush1.bf16.msra.mxu0 %v2287
    %3629 = vmatprep.subr.bf16.mxu0 %v2292
    %3630 = vmatpush1.bf16.msra.mxu0 %v2291
    %3631 = vmatprep.subr.bf16.mxu0 %v2296
    %3632 = vmatpush1.bf16.msra.mxu0 %v2295
    %3633 = vmatprep.subr.bf16.mxu0 %v2300
    %3634 = vmatpush1.bf16.msra.mxu0 %v2299
    %3635 = vmatprep.subr.bf16.mxu0 %v2304
    %3636 = vmatpush1.bf16.msra.mxu0 %v2303
    %3637 = vmatprep.subr.bf16.mxu0 %v2308
    %3638 = vmatpush1.bf16.msra.mxu0 %v2307
    %3639 = vmatprep.subr.bf16.mxu0 %v2312
    %3640 = vmatpush1.bf16.msra.mxu0 %v2311
    %3641 = vmatprep.subr.bf16.mxu0 %v2316
    %3642 = vmatpush1.bf16.msra.mxu0 %v2315
    %3643 = vmatprep.subr.bf16.mxu0 %v2320
    %3644 = vmatpush1.bf16.msra.mxu0 %v2319
    %3645 = vmatprep.subr.bf16.mxu0 %v2324
    %3646 = vmatpush1.bf16.msra.mxu0 %v2323
    %3647 = vmatprep.subr.bf16.mxu0 %v2328
    %3648 = vmatpush1.bf16.msra.mxu0 %v2327
    %3649 = vmatprep.mubr.bf16.mxu0 %v660
    %3650 = vmatmul.mubr.bf16.gmra.mrb[0].mxu0 %v652
    %v3651 = vpop.f32.mrb[0].mxu0
    %v3652 = vadd.f32 %v632, %v3651
    %v3653 = vpop.f32.mrb[0].mxu0
    %v3654 = vadd.f32 %v636, %v3653
    %v3655 = vpop.f32.mrb[0].mxu0
    %v3656 = vpop.f32.mrb[0].mxu0
    %3657 = vdwg.mxu0
    %3658 = vmatprep.subr.bf16.mxu0 %v2332
    %3659 = vmatpush1.bf16.msra.mxu0 %v2331
    %3660 = vmatprep.subr.bf16.mxu0 %v2336
    %3661 = vmatpush1.bf16.msra.mxu0 %v2335
    %3662 = vmatprep.subr.bf16.mxu0 %v2340
    %3663 = vmatpush1.bf16.msra.mxu0 %v2339
    %3664 = vmatprep.subr.bf16.mxu0 %v2344
    %3665 = vmatpush1.bf16.msra.mxu0 %v2343
    %3666 = vmatprep.subr.bf16.mxu0 %v2348
    %3667 = vmatpush1.bf16.msra.mxu0 %v2347
    %3668 = vmatprep.subr.bf16.mxu0 %v2352
    %3669 = vmatpush1.bf16.msra.mxu0 %v2351
    %3670 = vmatprep.subr.bf16.mxu0 %v2356
    %3671 = vmatpush1.bf16.msra.mxu0 %v2355
    %3672 = vmatprep.subr.bf16.mxu0 %v2360
    %3673 = vmatpush1.bf16.msra.mxu0 %v2359
    %3674 = vmatprep.subr.bf16.mxu0 %v2364
    %3675 = vmatpush1.bf16.msra.mxu0 %v2363
    %3676 = vmatprep.subr.bf16.mxu0 %v2368
    %3677 = vmatpush1.bf16.msra.mxu0 %v2367
    %3678 = vmatprep.subr.bf16.mxu0 %v2372
    %3679 = vmatpush1.bf16.msra.mxu0 %v2371
    %3680 = vmatprep.subr.bf16.mxu0 %v2376
    %3681 = vmatpush1.bf16.msra.mxu0 %v2375
    %3682 = vmatprep.subr.bf16.mxu0 %v2380
    %3683 = vmatpush1.bf16.msra.mxu0 %v2379
    %3684 = vmatprep.subr.bf16.mxu0 %v2384
    %3685 = vmatpush1.bf16.msra.mxu0 %v2383
    %3686 = vmatprep.subr.bf16.mxu0 %v2388
    %3687 = vmatpush1.bf16.msra.mxu0 %v2387
    %3688 = vmatprep.subr.bf16.mxu0 %v2392
    %3689 = vmatpush1.bf16.msra.mxu0 %v2391
    %3690 = vmatprep.mubr.bf16.mxu0 %v661
    %3691 = vmatmul.mubr.bf16.gmra.mrb[0].mxu0 %v659
    %v3692 = vpop.f32.mrb[0].mxu0
    %v3693 = vadd.f32 %v3652, %v3692
    %v3694 = vpop.f32.mrb[0].mxu0
    %v3695 = vadd.f32 %v3654, %v3694
    %v3696 = vpop.f32.mrb[0].mxu0
    %v3697 = vpop.f32.mrb[0].mxu0
    %3698 = vdwg.mxu0
    %3699 = vmatprep.subr.bf16.mxu0 %v2396
    %3700 = vmatpush1.bf16.msra.mxu0 %v2395
    %3701 = vmatprep.subr.bf16.mxu0 %v2400
    %3702 = vmatpush1.bf16.msra.mxu0 %v2399
    %3703 = vmatprep.subr.bf16.mxu0 %v2404
    %3704 = vmatpush1.bf16.msra.mxu0 %v2403
    %3705 = vmatprep.subr.bf16.mxu0 %v2408
    %3706 = vmatpush1.bf16.msra.mxu0 %v2407
    %3707 = vmatprep.subr.bf16.mxu0 %v2412
    %3708 = vmatpush1.bf16.msra.mxu0 %v2411
    %3709 = vmatprep.subr.bf16.mxu0 %v2416
    %3710 = vmatpush1.bf16.msra.mxu0 %v2415
    %3711 = vmatprep.subr.bf16.mxu0 %v2420
    %3712 = vmatpush1.bf16.msra.mxu0 %v2419
    %3713 = vmatprep.subr.bf16.mxu0 %v2424
    %3714 = vmatpush1.bf16.msra.mxu0 %v2423
    %3715 = vmatprep.subr.bf16.mxu0 %v2428
    %3716 = vmatpush1.bf16.msra.mxu0 %v2427
    %3717 = vmatprep.subr.bf16.mxu0 %v2432
    %3718 = vmatpush1.bf16.msra.mxu0 %v2431
    %3719 = vmatprep.subr.bf16.mxu0 %v2436
    %3720 = vmatpush1.bf16.msra.mxu0 %v2435
    %3721 = vmatprep.subr.bf16.mxu0 %v2440
    %3722 = vmatpush1.bf16.msra.mxu0 %v2439
    %3723 = vmatprep.subr.bf16.mxu0 %v2444
    %3724 = vmatpush1.bf16.msra.mxu0 %v2443
    %3725 = vmatprep.subr.bf16.mxu0 %v2448
    %3726 = vmatpush1.bf16.msra.mxu0 %v2447
    %3727 = vmatprep.subr.bf16.mxu0 %v2452
    %3728 = vmatpush1.bf16.msra.mxu0 %v2451
    %3729 = vmatprep.subr.bf16.mxu0 %v2456
    %3730 = vmatpush1.bf16.msra.mxu0 %v2455
    %3731 = vmatprep.mubr.bf16.mxu0 %v677
    %3732 = vmatmul.mubr.bf16.gmra.mrb[0].mxu0 %v669
    %v3733 = vpop.f32.mrb[0].mxu0
    %v3734 = vadd.f32 %v3693, %v3733
    %v3735 = vpop.f32.mrb[0].mxu0
    %v3736 = vadd.f32 %v3695, %v3735
    %v3737 = vpop.f32.mrb[0].mxu0
    %v3738 = vpop.f32.mrb[0].mxu0
    %3739 = vdwg.mxu0
    %3740 = vmatprep.subr.bf16.mxu0 %v2460
    %3741 = vmatpush1.bf16.msra.mxu0 %v2459
    %3742 = vmatprep.subr.bf16.mxu0 %v2464
    %3743 = vmatpush1.bf16.msra.mxu0 %v2463
    %3744 = vmatprep.subr.bf16.mxu0 %v2468
    %3745 = vmatpush1.bf16.msra.mxu0 %v2467
    %3746 = vmatprep.subr.bf16.mxu0 %v2472
    %3747 = vmatpush1.bf16.msra.mxu0 %v2471
    %3748 = vmatprep.subr.bf16.mxu0 %v2476
    %3749 = vmatpush1.bf16.msra.mxu0 %v2475
    %3750 = vmatprep.subr.bf16.mxu0 %v2480
    %3751 = vmatpush1.bf16.msra.mxu0 %v2479
    %3752 = vmatprep.subr.bf16.mxu0 %v2484
    %3753 = vmatpush1.bf16.msra.mxu0 %v2483
    %3754 = vmatprep.subr.bf16.mxu0 %v2488
    %3755 = vmatpush1.bf16.msra.mxu0 %v2487
    %3756 = vmatprep.subr.bf16.mxu0 %v2492
    %3757 = vmatpush1.bf16.msra.mxu0 %v2491
    %3758 = vmatprep.subr.bf16.mxu0 %v2496
    %3759 = vmatpush1.bf16.msra.mxu0 %v2495
    %3760 = vmatprep.subr.bf16.mxu0 %v2500
    %3761 = vmatpush1.bf16.msra.mxu0 %v2499
    %3762 = vmatprep.subr.bf16.mxu0 %v2504
    %3763 = vmatpush1.bf16.msra.mxu0 %v2503
    %3764 = vmatprep.subr.bf16.mxu0 %v2508
    %3765 = vmatpush1.bf16.msra.mxu0 %v2507
    %3766 = vmatprep.subr.bf16.mxu0 %v2512
    %3767 = vmatpush1.bf16.msra.mxu0 %v2511
    %3768 = vmatprep.subr.bf16.mxu0 %v2516
    %3769 = vmatpush1.bf16.msra.mxu0 %v2515
    %3770 = vmatprep.subr.bf16.mxu0 %v2520
    %3771 = vmatpush1.bf16.msra.mxu0 %v2519
    %3772 = vmatprep.mubr.bf16.mxu0 %v678
    %3773 = vmatmul.mubr.bf16.gmra.mrb[0].mxu0 %v676
    %v3774 = vpop.f32.mrb[0].mxu0
    %v3775 = vadd.f32 %v3734, %v3774
    %v3776 = vpop.f32.mrb[0].mxu0
    %v3777 = vadd.f32 %v3736, %v3776
    %v3778 = vpop.f32.mrb[0].mxu0
    %v3779 = vpop.f32.mrb[0].mxu0
    %3780 = vdwg.mxu0
    %3781 = vmatprep.subr.bf16.mxu0 %v2524
    %3782 = vmatpush1.bf16.msra.mxu0 %v2523
    %3783 = vmatprep.subr.bf16.mxu0 %v2528
    %3784 = vmatpush1.bf16.msra.mxu0 %v2527
    %3785 = vmatprep.subr.bf16.mxu0 %v2532
    %3786 = vmatpush1.bf16.msra.mxu0 %v2531
    %3787 = vmatprep.subr.bf16.mxu0 %v2536
    %3788 = vmatpush1.bf16.msra.mxu0 %v2535
    %3789 = vmatprep.subr.bf16.mxu0 %v2540
    %3790 = vmatpush1.bf16.msra.mxu0 %v2539
    %3791 = vmatprep.subr.bf16.mxu0 %v2544
    %3792 = vmatpush1.bf16.msra.mxu0 %v2543
    %3793 = vmatprep.subr.bf16.mxu0 %v2548
    %3794 = vmatpush1.bf16.msra.mxu0 %v2547
    %3795 = vmatprep.subr.bf16.mxu0 %v2552
    %3796 = vmatpush1.bf16.msra.mxu0 %v2551
    %3797 = vmatprep.subr.bf16.mxu0 %v2556
    %3798 = vmatpush1.bf16.msra.mxu0 %v2555
    %3799 = vmatprep.subr.bf16.mxu0 %v2560
    %3800 = vmatpush1.bf16.msra.mxu0 %v2559
    %3801 = vmatprep.subr.bf16.mxu0 %v2564
    %3802 = vmatpush1.bf16.msra.mxu0 %v2563
    %3803 = vmatprep.subr.bf16.mxu0 %v2568
    %3804 = vmatpush1.bf16.msra.mxu0 %v2567
    %3805 = vmatprep.subr.bf16.mxu0 %v2572
    %3806 = vmatpush1.bf16.msra.mxu0 %v2571
    %3807 = vmatprep.subr.bf16.mxu0 %v2576
    %3808 = vmatpush1.bf16.msra.mxu0 %v2575
    %3809 = vmatprep.subr.bf16.mxu0 %v2580
    %3810 = vmatpush1.bf16.msra.mxu0 %v2579
    %3811 = vmatprep.subr.bf16.mxu0 %v2584
    %3812 = vmatpush1.bf16.msra.mxu0 %v2583
    %3813 = vmatprep.mubr.bf16.mxu0 %v694
    %3814 = vmatmul.mubr.bf16.gmra.mrb[0].mxu0 %v686
    %v3815 = vpop.f32.mrb[0].mxu0
    %v3816 = vadd.f32 %v3775, %v3815
    %v3817 = vpop.f32.mrb[0].mxu0
    %v3818 = vadd.f32 %v3777, %v3817
    %v3819 = vpop.f32.mrb[0].mxu0
    %v3820 = vpop.f32.mrb[0].mxu0
    %3821 = vdwg.mxu0
    %3822 = vmatprep.subr.bf16.mxu0 %v2588
    %3823 = vmatpush1.bf16.msra.mxu0 %v2587
    %3824 = vmatprep.subr.bf16.mxu0 %v2592
    %3825 = vmatpush1.bf16.msra.mxu0 %v2591
    %3826 = vmatprep.subr.bf16.mxu0 %v2596
    %3827 = vmatpush1.bf16.msra.mxu0 %v2595
    %3828 = vmatprep.subr.bf16.mxu0 %v2600
    %3829 = vmatpush1.bf16.msra.mxu0 %v2599
    %3830 = vmatprep.subr.bf16.mxu0 %v2604
    %3831 = vmatpush1.bf16.msra.mxu0 %v2603
    %3832 = vmatprep.subr.bf16.mxu0 %v2608
    %3833 = vmatpush1.bf16.msra.mxu0 %v2607
    %3834 = vmatprep.subr.bf16.mxu0 %v2612
    %3835 = vmatpush1.bf16.msra.mxu0 %v2611
    %3836 = vmatprep.subr.bf16.mxu0 %v2616
    %3837 = vmatpush1.bf16.msra.mxu0 %v2615
    %3838 = vmatprep.subr.bf16.mxu0 %v2620
    %3839 = vmatpush1.bf16.msra.mxu0 %v2619
    %3840 = vmatprep.subr.bf16.mxu0 %v2624
    %3841 = vmatpush1.bf16.msra.mxu0 %v2623
    %3842 = vmatprep.subr.bf16.mxu0 %v2628
    %3843 = vmatpush1.bf16.msra.mxu0 %v2627
    %3844 = vmatprep.subr.bf16.mxu0 %v2632
    %3845 = vmatpush1.bf16.msra.mxu0 %v2631
    %3846 = vmatprep.subr.bf16.mxu0 %v2636
    %3847 = vmatpush1.bf16.msra.mxu0 %v2635
    %3848 = vmatprep.subr.bf16.mxu0 %v2640
    %3849 = vmatpush1.bf16.msra.mxu0 %v2639
    %3850 = vmatprep.subr.bf16.mxu0 %v2644
    %3851 = vmatpush1.bf16.msra.mxu0 %v2643
    %3852 = vmatprep.subr.bf16.mxu0 %v2648
    %3853 = vmatpush1.bf16.msra.mxu0 %v2647
    %3854 = vmatprep.mubr.bf16.mxu0 %v695
    %3855 = vmatmul.mubr.bf16.gmra.mrb[0].mxu0 %v693
    %v3856 = vpop.f32.mrb[0].mxu0
    %v3857 = vadd.f32 %v3816, %v3856
    %v3858 = vpop.f32.mrb[0].mxu0
    %v3859 = vadd.f32 %v3818, %v3858
    %v3860 = vpop.f32.mrb[0].mxu0
    %v3861 = vpop.f32.mrb[0].mxu0
    %3862 = vdwg.mxu0
    %3863 = vmatprep.subr.bf16.mxu0 %v2652
    %3864 = vmatpush1.bf16.msra.mxu0 %v2651
    %3865 = vmatprep.subr.bf16.mxu0 %v2656
    %3866 = vmatpush1.bf16.msra.mxu0 %v2655
    %3867 = vmatprep.subr.bf16.mxu0 %v2660
    %3868 = vmatpush1.bf16.msra.mxu0 %v2659
    %3869 = vmatprep.subr.bf16.mxu0 %v2664
    %3870 = vmatpush1.bf16.msra.mxu0 %v2663
    %3871 = vmatprep.subr.bf16.mxu0 %v2668
    %3872 = vmatpush1.bf16.msra.mxu0 %v2667
    %3873 = vmatprep.subr.bf16.mxu0 %v2672
    %3874 = vmatpush1.bf16.msra.mxu0 %v2671
    %3875 = vmatprep.subr.bf16.mxu0 %v2676
    %3876 = vmatpush1.bf16.msra.mxu0 %v2675
    %3877 = vmatprep.subr.bf16.mxu0 %v2680
    %3878 = vmatpush1.bf16.msra.mxu0 %v2679
    %3879 = vmatprep.subr.bf16.mxu0 %v2684
    %3880 = vmatpush1.bf16.msra.mxu0 %v2683
    %3881 = vmatprep.subr.bf16.mxu0 %v2688
    %3882 = vmatpush1.bf16.msra.mxu0 %v2687
    %3883 = vmatprep.subr.bf16.mxu0 %v2692
    %3884 = vmatpush1.bf16.msra.mxu0 %v2691
    %3885 = vmatprep.subr.bf16.mxu0 %v2696
    %3886 = vmatpush1.bf16.msra.mxu0 %v2695
    %3887 = vmatprep.subr.bf16.mxu0 %v2700
    %3888 = vmatpush1.bf16.msra.mxu0 %v2699
    %3889 = vmatprep.subr.bf16.mxu0 %v2704
    %3890 = vmatpush1.bf16.msra.mxu0 %v2703
    %3891 = vmatprep.subr.bf16.mxu0 %v2708
    %3892 = vmatpush1.bf16.msra.mxu0 %v2707
    %3893 = vmatprep.subr.bf16.mxu0 %v2712
    %3894 = vmatpush1.bf16.msra.mxu0 %v2711
    %3895 = vmatprep.mubr.bf16.mxu0 %v711
    %3896 = vmatmul.mubr.bf16.gmra.mrb[0].mxu0 %v703
    %v3897 = vpop.f32.mrb[0].mxu0
    %v3898 = vadd.f32 %v3857, %v3897
    %v3899 = vpop.f32.mrb[0].mxu0
    %v3900 = vadd.f32 %v3859, %v3899
    %v3901 = vpop.f32.mrb[0].mxu0
    %v3902 = vpop.f32.mrb[0].mxu0
    %3903 = vdwg.mxu0
    %3904 = vmatprep.subr.bf16.mxu0 %v2716
    %3905 = vmatpush1.bf16.msra.mxu0 %v2715
    %3906 = vmatprep.subr.bf16.mxu0 %v2720
    %3907 = vmatpush1.bf16.msra.mxu0 %v2719
    %3908 = vmatprep.subr.bf16.mxu0 %v2724
    %3909 = vmatpush1.bf16.msra.mxu0 %v2723
    %3910 = vmatprep.subr.bf16.mxu0 %v2728
    %3911 = vmatpush1.bf16.msra.mxu0 %v2727
    %3912 = vmatprep.subr.bf16.mxu0 %v2732
    %3913 = vmatpush1.bf16.msra.mxu0 %v2731
    %3914 = vmatprep.subr.bf16.mxu0 %v2736
    %3915 = vmatpush1.bf16.msra.mxu0 %v2735
    %3916 = vmatprep.subr.bf16.mxu0 %v2740
    %3917 = vmatpush1.bf16.msra.mxu0 %v2739
    %3918 = vmatprep.subr.bf16.mxu0 %v2744
    %3919 = vmatpush1.bf16.msra.mxu0 %v2743
    %3920 = vmatprep.subr.bf16.mxu0 %v2748
    %3921 = vmatpush1.bf16.msra.mxu0 %v2747
    %3922 = vmatprep.subr.bf16.mxu0 %v2752
    %3923 = vmatpush1.bf16.msra.mxu0 %v2751
    %3924 = vmatprep.subr.bf16.mxu0 %v2756
    %3925 = vmatpush1.bf16.msra.mxu0 %v2755
    %3926 = vmatprep.subr.bf16.mxu0 %v2760
    %3927 = vmatpush1.bf16.msra.mxu0 %v2759
    %3928 = vmatprep.subr.bf16.mxu0 %v2764
    %3929 = vmatpush1.bf16.msra.mxu0 %v2763
    %3930 = vmatprep.subr.bf16.mxu0 %v2768
    %3931 = vmatpush1.bf16.msra.mxu0 %v2767
    %3932 = vmatprep.subr.bf16.mxu0 %v2772
    %3933 = vmatpush1.bf16.msra.mxu0 %v2771
    %3934 = vmatprep.subr.bf16.mxu0 %v2776
    %3935 = vmatpush1.bf16.msra.mxu0 %v2775
    %3936 = vmatprep.mubr.bf16.mxu0 %v712
    %3937 = vmatmul.mubr.bf16.gmra.mrb[0].mxu0 %v710
    %v3938 = vpop.f32.mrb[0].mxu0
    %v3939 = vadd.f32 %v3898, %v3938
    %v3940 = vpop.f32.mrb[0].mxu0
    %v3941 = vadd.f32 %v3900, %v3940
    %v3942 = vpop.f32.mrb[0].mxu0
    %v3943 = vpop.f32.mrb[0].mxu0
    %3944 = vdwg.mxu0
    %v3945 = vmax.f32 %v3611, 0.0
    %v3946 = vmax.f32 %v3613, 0.0
    %v3947 = vmax.f32 %v3939, 0.0
    %v3948 = vmax.f32 %v3941, 0.0
    %v3949 = vpack.c.bf16 %v3945, %v3945
    %v3950 = vpack.c.bf16 %v3946, %v3946
    %v3951 = vpack.c.bf16 %v3947, %v3947
    %v3952 = vpack.c.bf16 %v3948, %v3948
    %v3953 = vld [vmem:[#allocation6] sm:$0xff]
    %v3954 = vld [vmem:[#allocation6 + $0x8] sm:$0xff]
    %v3955 = vld [vmem:[#allocation6 + $0x10] sm:$0xff]
    %v3956 = vld [vmem:[#allocation6 + $0x18] sm:$0xff]
    %v3957 = vld [vmem:[#allocation6 + $0x20] sm:$0xff]
    %v3958 = vld [vmem:[#allocation6 + $0x28] sm:$0xff]
    %v3959 = vld [vmem:[#allocation6 + $0x30] sm:$0xff]
    %v3960 = vld [vmem:[#allocation6 + $0x38] sm:$0xff]
    %v3961 = vld [vmem:[#allocation6 + $0x40] sm:$0xff]
    %v3962 = vld [vmem:[#allocation6 + $0x48] sm:$0xff]
    %v3963 = vld [vmem:[#allocation6 + $0x50] sm:$0xff]
    %v3964 = vld [vmem:[#allocation6 + $0x58] sm:$0xff]
    %v3965 = vld [vmem:[#allocation6 + $0x60] sm:$0xff]
    %v3966 = vld [vmem:[#allocation6 + $0x68] sm:$0xff]
    %v3967 = vld [vmem:[#allocation6 + $0x70] sm:$0xff]
    %v3968 = vld [vmem:[#allocation6 + $0x78] sm:$0xff]
    %v3969 = vld [vmem:[#allocation6 + $0x80] sm:$0xff]
    %v3970 = vld [vmem:[#allocation6 + $0x88] sm:$0xff]
    %v3971 = vld [vmem:[#allocation6 + $0x90] sm:$0xff]
    %v3972 = vld [vmem:[#allocation6 + $0x98] sm:$0xff]
    %v3973 = vld [vmem:[#allocation6 + $0xa0] sm:$0xff]
    %v3974 = vld [vmem:[#allocation6 + $0xa8] sm:$0xff]
    %v3975 = vld [vmem:[#allocation6 + $0xb0] sm:$0xff]
    %v3976 = vld [vmem:[#allocation6 + $0xb8] sm:$0xff]
    %v3977 = vld [vmem:[#allocation6 + $0xc0] sm:$0xff]
    %v3978 = vld [vmem:[#allocation6 + $0xc8] sm:$0xff]
    %v3979 = vld [vmem:[#allocation6 + $0xd0] sm:$0xff]
    %v3980 = vld [vmem:[#allocation6 + $0xd8] sm:$0xff]
    %v3981 = vld [vmem:[#allocation6 + $0xe0] sm:$0xff]
    %v3982 = vld [vmem:[#allocation6 + $0xe8] sm:$0xff]
    %v3983 = vld [vmem:[#allocation6 + $0xf0] sm:$0xff]
    %v3984 = vld [vmem:[#allocation6 + $0xf8] sm:$0xff]
    %v3985 = vld [vmem:[#allocation6 + $0x100] sm:$0xff]
    %v3986 = vld [vmem:[#allocation6 + $0x108] sm:$0xff]
    %v3987 = vld [vmem:[#allocation6 + $0x110] sm:$0xff]
    %v3988 = vld [vmem:[#allocation6 + $0x118] sm:$0xff]
    %v3989 = vld [vmem:[#allocation6 + $0x120] sm:$0xff]
    %v3990 = vld [vmem:[#allocation6 + $0x128] sm:$0xff]
    %v3991 = vld [vmem:[#allocation6 + $0x130] sm:$0xff]
    %v3992 = vld [vmem:[#allocation6 + $0x138] sm:$0xff]
    %v3993 = vld [vmem:[#allocation6 + $0x140] sm:$0xff]
    %v3994 = vld [vmem:[#allocation6 + $0x148] sm:$0xff]
    %v3995 = vld [vmem:[#allocation6 + $0x150] sm:$0xff]
    %v3996 = vld [vmem:[#allocation6 + $0x158] sm:$0xff]
    %v3997 = vld [vmem:[#allocation6 + $0x160] sm:$0xff]
    %v3998 = vld [vmem:[#allocation6 + $0x168] sm:$0xff]
    %v3999 = vld [vmem:[#allocation6 + $0x170] sm:$0xff]
    %v4000 = vld [vmem:[#allocation6 + $0x178] sm:$0xff]
    %v4001 = vld [vmem:[#allocation6 + $0x180] sm:$0xff]
    %v4002 = vld [vmem:[#allocation6 + $0x188] sm:$0xff]
    %v4003 = vld [vmem:[#allocation6 + $0x190] sm:$0xff]
    %v4004 = vld [vmem:[#allocation6 + $0x198] sm:$0xff]
    %v4005 = vld [vmem:[#allocation6 + $0x1a0] sm:$0xff]
    %v4006 = vld [vmem:[#allocation6 + $0x1a8] sm:$0xff]
    %v4007 = vld [vmem:[#allocation6 + $0x1b0] sm:$0xff]
    %v4008 = vld [vmem:[#allocation6 + $0x1b8] sm:$0xff]
    %v4009 = vld [vmem:[#allocation6 + $0x1c0] sm:$0xff]
    %v4010 = vld [vmem:[#allocation6 + $0x1c8] sm:$0xff]
    %v4011 = vld [vmem:[#allocation6 + $0x1d0] sm:$0xff]
    %v4012 = vld [vmem:[#allocation6 + $0x1d8] sm:$0xff]
    %v4013 = vld [vmem:[#allocation6 + $0x1e0] sm:$0xff]
    %v4014 = vld [vmem:[#allocation6 + $0x1e8] sm:$0xff]
    %v4015 = vld [vmem:[#allocation6 + $0x1f0] sm:$0xff]
    %v4016 = vld [vmem:[#allocation6 + $0x1f8] sm:$0xff]
    %v4017 = vld [vmem:[#allocation6 + $0x200] sm:$0xff]
    %v4018 = vld [vmem:[#allocation6 + $0x208] sm:$0xff]
    %v4019 = vld [vmem:[#allocation6 + $0x210] sm:$0xff]
    %v4020 = vld [vmem:[#allocation6 + $0x218] sm:$0xff]
    %v4021 = vld [vmem:[#allocation6 + $0x220] sm:$0xff]
    %v4022 = vld [vmem:[#allocation6 + $0x228] sm:$0xff]
    %v4023 = vld [vmem:[#allocation6 + $0x230] sm:$0xff]
    %v4024 = vld [vmem:[#allocation6 + $0x238] sm:$0xff]
    %v4025 = vld [vmem:[#allocation6 + $0x240] sm:$0xff]
    %v4026 = vld [vmem:[#allocation6 + $0x248] sm:$0xff]
    %v4027 = vld [vmem:[#allocation6 + $0x250] sm:$0xff]
    %v4028 = vld [vmem:[#allocation6 + $0x258] sm:$0xff]
    %v4029 = vld [vmem:[#allocation6 + $0x260] sm:$0xff]
    %v4030 = vld [vmem:[#allocation6 + $0x268] sm:$0xff]
    %v4031 = vld [vmem:[#allocation6 + $0x270] sm:$0xff]
    %v4032 = vld [vmem:[#allocation6 + $0x278] sm:$0xff]
    %v4033 = vld [vmem:[#allocation6 + $0x280] sm:$0xff]
    %v4034 = vld [vmem:[#allocation6 + $0x288] sm:$0xff]
    %v4035 = vld [vmem:[#allocation6 + $0x290] sm:$0xff]
    %v4036 = vld [vmem:[#allocation6 + $0x298] sm:$0xff]
    %v4037 = vld [vmem:[#allocation6 + $0x2a0] sm:$0xff]
    %v4038 = vld [vmem:[#allocation6 + $0x2a8] sm:$0xff]
    %v4039 = vld [vmem:[#allocation6 + $0x2b0] sm:$0xff]
    %v4040 = vld [vmem:[#allocation6 + $0x2b8] sm:$0xff]
    %v4041 = vld [vmem:[#allocation6 + $0x2c0] sm:$0xff]
    %v4042 = vld [vmem:[#allocation6 + $0x2c8] sm:$0xff]
    %v4043 = vld [vmem:[#allocation6 + $0x2d0] sm:$0xff]
    %v4044 = vld [vmem:[#allocation6 + $0x2d8] sm:$0xff]
    %v4045 = vld [vmem:[#allocation6 + $0x2e0] sm:$0xff]
    %v4046 = vld [vmem:[#allocation6 + $0x2e8] sm:$0xff]
    %v4047 = vld [vmem:[#allocation6 + $0x2f0] sm:$0xff]
    %v4048 = vld [vmem:[#allocation6 + $0x2f8] sm:$0xff]
    %v4049 = vld [vmem:[#allocation6 + $0x300] sm:$0xff]
    %v4050 = vld [vmem:[#allocation6 + $0x308] sm:$0xff]
    %v4051 = vld [vmem:[#allocation6 + $0x310] sm:$0xff]
    %v4052 = vld [vmem:[#allocation6 + $0x318] sm:$0xff]
    %v4053 = vld [vmem:[#allocation6 + $0x320] sm:$0xff]
    %v4054 = vld [vmem:[#allocation6 + $0x328] sm:$0xff]
    %v4055 = vld [vmem:[#allocation6 + $0x330] sm:$0xff]
    %v4056 = vld [vmem:[#allocation6 + $0x338] sm:$0xff]
    %v4057 = vld [vmem:[#allocation6 + $0x340] sm:$0xff]
    %v4058 = vld [vmem:[#allocation6 + $0x348] sm:$0xff]
    %v4059 = vld [vmem:[#allocation6 + $0x350] sm:$0xff]
    %v4060 = vld [vmem:[#allocation6 + $0x358] sm:$0xff]
    %v4061 = vld [vmem:[#allocation6 + $0x360] sm:$0xff]
    %v4062 = vld [vmem:[#allocation6 + $0x368] sm:$0xff]
    %v4063 = vld [vmem:[#allocation6 + $0x370] sm:$0xff]
    %v4064 = vld [vmem:[#allocation6 + $0x378] sm:$0xff]
    %v4065 = vld [vmem:[#allocation6 + $0x380] sm:$0xff]
    %v4066 = vld [vmem:[#allocation6 + $0x388] sm:$0xff]
    %v4067 = vld [vmem:[#allocation6 + $0x390] sm:$0xff]
    %v4068 = vld [vmem:[#allocation6 + $0x398] sm:$0xff]
    %v4069 = vld [vmem:[#allocation6 + $0x3a0] sm:$0xff]
    %v4070 = vld [vmem:[#allocation6 + $0x3a8] sm:$0xff]
    %v4071 = vld [vmem:[#allocation6 + $0x3b0] sm:$0xff]
    %v4072 = vld [vmem:[#allocation6 + $0x3b8] sm:$0xff]
    %v4073 = vld [vmem:[#allocation6 + $0x3c0] sm:$0xff]
    %v4074 = vld [vmem:[#allocation6 + $0x3c8] sm:$0xff]
    %v4075 = vld [vmem:[#allocation6 + $0x3d0] sm:$0xff]
    %v4076 = vld [vmem:[#allocation6 + $0x3d8] sm:$0xff]
    %v4077 = vld [vmem:[#allocation6 + $0x3e0] sm:$0xff]
    %v4078 = vld [vmem:[#allocation6 + $0x3e8] sm:$0xff]
    %v4079 = vld [vmem:[#allocation6 + $0x3f0] sm:$0xff]
    %v4080 = vld [vmem:[#allocation6 + $0x3f8] sm:$0xff]
    %v4081 = vld [vmem:[#allocation7] sm:$0xf]
    %v4083 = vlaneseq
    %v4084 = vshrl.u32 %v4083, 7
    %v4085 = vsub.s32 0, %v4084
    %v4086 = vrot.slane %v4081, %v4085
    %v4087 = vlaneseq
    %v4088 = vshrl.u32 %v4087, 7
    %v4089 = vsub.s32 1, %v4088
    %v4090 = vrot.slane %v4081, %v4089
    %v4091 = vlaneseq
    %v4092 = vshrl.u32 %v4091, 7
    %v4093 = vsub.s32 2, %v4092
    %v4094 = vrot.slane %v4081, %v4093
    %v4095 = vlaneseq
    %v4096 = vshrl.u32 %v4095, 7
    %v4097 = vsub.s32 3, %v4096
    %v4098 = vrot.slane %v4081, %v4097
    %v4231 = vunpack.c.l.b16 %v3953
    %v4232 = vunpack.c.h.b16 %v3953
    %v4233 = vunpack.c.l.b16 %v3954
    %v4234 = vunpack.c.h.b16 %v3954
    %v4235 = vunpack.c.l.b16 %v3955
    %v4236 = vunpack.c.h.b16 %v3955
    %v4237 = vunpack.c.l.b16 %v3956
    %v4238 = vunpack.c.h.b16 %v3956
    %v4239 = vunpack.c.l.b16 %v3957
    %v4240 = vunpack.c.h.b16 %v3957
    %v4241 = vunpack.c.l.b16 %v3958
    %v4242 = vunpack.c.h.b16 %v3958
    %v4243 = vunpack.c.l.b16 %v3959
    %v4244 = vunpack.c.h.b16 %v3959
    %v4245 = vunpack.c.l.b16 %v3960
    %v4246 = vunpack.c.h.b16 %v3960
    %v4247 = vunpack.c.l.b16 %v3961
    %v4248 = vunpack.c.h.b16 %v3961
    %v4249 = vunpack.c.l.b16 %v3962
    %v4250 = vunpack.c.h.b16 %v3962
    %v4251 = vunpack.c.l.b16 %v3963
    %v4252 = vunpack.c.h.b16 %v3963
    %v4253 = vunpack.c.l.b16 %v3964
    %v4254 = vunpack.c.h.b16 %v3964
    %v4255 = vunpack.c.l.b16 %v3965
    %v4256 = vunpack.c.h.b16 %v3965
    %v4257 = vunpack.c.l.b16 %v3966
    %v4258 = vunpack.c.h.b16 %v3966
    %v4259 = vunpack.c.l.b16 %v3967
    %v4260 = vunpack.c.h.b16 %v3967
    %v4261 = vunpack.c.l.b16 %v3968
    %v4262 = vunpack.c.h.b16 %v3968
    %v4263 = vunpack.c.l.b16 %v3969
    %v4264 = vunpack.c.h.b16 %v3969
    %v4265 = vunpack.c.l.b16 %v3970
    %v4266 = vunpack.c.h.b16 %v3970
    %v4267 = vunpack.c.l.b16 %v3971
    %v4268 = vunpack.c.h.b16 %v3971
    %v4269 = vunpack.c.l.b16 %v3972
    %v4270 = vunpack.c.h.b16 %v3972
    %v4271 = vunpack.c.l.b16 %v3973
    %v4272 = vunpack.c.h.b16 %v3973
    %v4273 = vunpack.c.l.b16 %v3974
    %v4274 = vunpack.c.h.b16 %v3974
    %v4275 = vunpack.c.l.b16 %v3975
    %v4276 = vunpack.c.h.b16 %v3975
    %v4277 = vunpack.c.l.b16 %v3976
    %v4278 = vunpack.c.h.b16 %v3976
    %v4279 = vunpack.c.l.b16 %v3977
    %v4280 = vunpack.c.h.b16 %v3977
    %v4281 = vunpack.c.l.b16 %v3978
    %v4282 = vunpack.c.h.b16 %v3978
    %v4283 = vunpack.c.l.b16 %v3979
    %v4284 = vunpack.c.h.b16 %v3979
    %v4285 = vunpack.c.l.b16 %v3980
    %v4286 = vunpack.c.h.b16 %v3980
    %v4287 = vunpack.c.l.b16 %v3981
    %v4288 = vunpack.c.h.b16 %v3981
    %v4289 = vunpack.c.l.b16 %v3982
    %v4290 = vunpack.c.h.b16 %v3982
    %v4291 = vunpack.c.l.b16 %v3983
    %v4292 = vunpack.c.h.b16 %v3983
    %v4293 = vunpack.c.l.b16 %v3984
    %v4294 = vunpack.c.h.b16 %v3984
    %v4295 = vunpack.c.l.b16 %v3985
    %v4296 = vunpack.c.h.b16 %v3985
    %v4297 = vunpack.c.l.b16 %v3986
    %v4298 = vunpack.c.h.b16 %v3986
    %v4299 = vunpack.c.l.b16 %v3987
    %v4300 = vunpack.c.h.b16 %v3987
    %v4301 = vunpack.c.l.b16 %v3988
    %v4302 = vunpack.c.h.b16 %v3988
    %v4303 = vunpack.c.l.b16 %v3989
    %v4304 = vunpack.c.h.b16 %v3989
    %v4305 = vunpack.c.l.b16 %v3990
    %v4306 = vunpack.c.h.b16 %v3990
    %v4307 = vunpack.c.l.b16 %v3991
    %v4308 = vunpack.c.h.b16 %v3991
    %v4309 = vunpack.c.l.b16 %v3992
    %v4310 = vunpack.c.h.b16 %v3992
    %v4311 = vunpack.c.l.b16 %v3993
    %v4312 = vunpack.c.h.b16 %v3993
    %v4313 = vunpack.c.l.b16 %v3994
    %v4314 = vunpack.c.h.b16 %v3994
    %v4315 = vunpack.c.l.b16 %v3995
    %v4316 = vunpack.c.h.b16 %v3995
    %v4317 = vunpack.c.l.b16 %v3996
    %v4318 = vunpack.c.h.b16 %v3996
    %v4319 = vunpack.c.l.b16 %v3997
    %v4320 = vunpack.c.h.b16 %v3997
    %v4321 = vunpack.c.l.b16 %v3998
    %v4322 = vunpack.c.h.b16 %v3998
    %v4323 = vunpack.c.l.b16 %v3999
    %v4324 = vunpack.c.h.b16 %v3999
    %v4325 = vunpack.c.l.b16 %v4000
    %v4326 = vunpack.c.h.b16 %v4000
    %v4327 = vunpack.c.l.b16 %v4001
    %v4328 = vunpack.c.h.b16 %v4001
    %v4329 = vunpack.c.l.b16 %v4002
    %v4330 = vunpack.c.h.b16 %v4002
    %v4331 = vunpack.c.l.b16 %v4003
    %v4332 = vunpack.c.h.b16 %v4003
    %v4333 = vunpack.c.l.b16 %v4004
    %v4334 = vunpack.c.h.b16 %v4004
    %v4335 = vunpack.c.l.b16 %v4005
    %v4336 = vunpack.c.h.b16 %v4005
    %v4337 = vunpack.c.l.b16 %v4006
    %v4338 = vunpack.c.h.b16 %v4006
    %v4339 = vunpack.c.l.b16 %v4007
    %v4340 = vunpack.c.h.b16 %v4007
    %v4341 = vunpack.c.l.b16 %v4008
    %v4342 = vunpack.c.h.b16 %v4008
    %v4343 = vunpack.c.l.b16 %v4009
    %v4344 = vunpack.c.h.b16 %v4009
    %v4345 = vunpack.c.l.b16 %v4010
    %v4346 = vunpack.c.h.b16 %v4010
    %v4347 = vunpack.c.l.b16 %v4011
    %v4348 = vunpack.c.h.b16 %v4011
    %v4349 = vunpack.c.l.b16 %v4012
    %v4350 = vunpack.c.h.b16 %v4012
    %v4351 = vunpack.c.l.b16 %v4013
    %v4352 = vunpack.c.h.b16 %v4013
    %v4353 = vunpack.c.l.b16 %v4014
    %v4354 = vunpack.c.h.b16 %v4014
    %v4355 = vunpack.c.l.b16 %v4015
    %v4356 = vunpack.c.h.b16 %v4015
    %v4357 = vunpack.c.l.b16 %v4016
    %v4358 = vunpack.c.h.b16 %v4016
    %v4359 = vunpack.c.l.b16 %v4017
    %v4360 = vunpack.c.h.b16 %v4017
    %v4361 = vunpack.c.l.b16 %v4018
    %v4362 = vunpack.c.h.b16 %v4018
    %v4363 = vunpack.c.l.b16 %v4019
    %v4364 = vunpack.c.h.b16 %v4019
    %v4365 = vunpack.c.l.b16 %v4020
    %v4366 = vunpack.c.h.b16 %v4020
    %v4367 = vunpack.c.l.b16 %v4021
    %v4368 = vunpack.c.h.b16 %v4021
    %v4369 = vunpack.c.l.b16 %v4022
    %v4370 = vunpack.c.h.b16 %v4022
    %v4371 = vunpack.c.l.b16 %v4023
    %v4372 = vunpack.c.h.b16 %v4023
    %v4373 = vunpack.c.l.b16 %v4024
    %v4374 = vunpack.c.h.b16 %v4024
    %v4375 = vunpack.c.l.b16 %v4025
    %v4376 = vunpack.c.h.b16 %v4025
    %v4377 = vunpack.c.l.b16 %v4026
    %v4378 = vunpack.c.h.b16 %v4026
    %v4379 = vunpack.c.l.b16 %v4027
    %v4380 = vunpack.c.h.b16 %v4027
    %v4381 = vunpack.c.l.b16 %v4028
    %v4382 = vunpack.c.h.b16 %v4028
    %v4383 = vunpack.c.l.b16 %v4029
    %v4384 = vunpack.c.h.b16 %v4029
    %v4385 = vunpack.c.l.b16 %v4030
    %v4386 = vunpack.c.h.b16 %v4030
    %v4387 = vunpack.c.l.b16 %v4031
    %v4388 = vunpack.c.h.b16 %v4031
    %v4389 = vunpack.c.l.b16 %v4032
    %v4390 = vunpack.c.h.b16 %v4032
    %v4391 = vunpack.c.l.b16 %v4033
    %v4392 = vunpack.c.h.b16 %v4033
    %v4393 = vunpack.c.l.b16 %v4034
    %v4394 = vunpack.c.h.b16 %v4034
    %v4395 = vunpack.c.l.b16 %v4035
    %v4396 = vunpack.c.h.b16 %v4035
    %v4397 = vunpack.c.l.b16 %v4036
    %v4398 = vunpack.c.h.b16 %v4036
    %v4399 = vunpack.c.l.b16 %v4037
    %v4400 = vunpack.c.h.b16 %v4037
    %v4401 = vunpack.c.l.b16 %v4038
    %v4402 = vunpack.c.h.b16 %v4038
    %v4403 = vunpack.c.l.b16 %v4039
    %v4404 = vunpack.c.h.b16 %v4039
    %v4405 = vunpack.c.l.b16 %v4040
    %v4406 = vunpack.c.h.b16 %v4040
    %v4407 = vunpack.c.l.b16 %v4041
    %v4408 = vunpack.c.h.b16 %v4041
    %v4409 = vunpack.c.l.b16 %v4042
    %v4410 = vunpack.c.h.b16 %v4042
    %v4411 = vunpack.c.l.b16 %v4043
    %v4412 = vunpack.c.h.b16 %v4043
    %v4413 = vunpack.c.l.b16 %v4044
    %v4414 = vunpack.c.h.b16 %v4044
    %v4415 = vunpack.c.l.b16 %v4045
    %v4416 = vunpack.c.h.b16 %v4045
    %v4417 = vunpack.c.l.b16 %v4046
    %v4418 = vunpack.c.h.b16 %v4046
    %v4419 = vunpack.c.l.b16 %v4047
    %v4420 = vunpack.c.h.b16 %v4047
    %v4421 = vunpack.c.l.b16 %v4048
    %v4422 = vunpack.c.h.b16 %v4048
    %v4423 = vunpack.c.l.b16 %v4049
    %v4424 = vunpack.c.h.b16 %v4049
    %v4425 = vunpack.c.l.b16 %v4050
    %v4426 = vunpack.c.h.b16 %v4050
    %v4427 = vunpack.c.l.b16 %v4051
    %v4428 = vunpack.c.h.b16 %v4051
    %v4429 = vunpack.c.l.b16 %v4052
    %v4430 = vunpack.c.h.b16 %v4052
    %v4431 = vunpack.c.l.b16 %v4053
    %v4432 = vunpack.c.h.b16 %v4053
    %v4433 = vunpack.c.l.b16 %v4054
    %v4434 = vunpack.c.h.b16 %v4054
    %v4435 = vunpack.c.l.b16 %v4055
    %v4436 = vunpack.c.h.b16 %v4055
    %v4437 = vunpack.c.l.b16 %v4056
    %v4438 = vunpack.c.h.b16 %v4056
    %v4439 = vunpack.c.l.b16 %v4057
    %v4440 = vunpack.c.h.b16 %v4057
    %v4441 = vunpack.c.l.b16 %v4058
    %v4442 = vunpack.c.h.b16 %v4058
    %v4443 = vunpack.c.l.b16 %v4059
    %v4444 = vunpack.c.h.b16 %v4059
    %v4445 = vunpack.c.l.b16 %v4060
    %v4446 = vunpack.c.h.b16 %v4060
    %v4447 = vunpack.c.l.b16 %v4061
    %v4448 = vunpack.c.h.b16 %v4061
    %v4449 = vunpack.c.l.b16 %v4062
    %v4450 = vunpack.c.h.b16 %v4062
    %v4451 = vunpack.c.l.b16 %v4063
    %v4452 = vunpack.c.h.b16 %v4063
    %v4453 = vunpack.c.l.b16 %v4064
    %v4454 = vunpack.c.h.b16 %v4064
    %v4455 = vunpack.c.l.b16 %v4065
    %v4456 = vunpack.c.h.b16 %v4065
    %v4457 = vunpack.c.l.b16 %v4066
    %v4458 = vunpack.c.h.b16 %v4066
    %v4459 = vunpack.c.l.b16 %v4067
    %v4460 = vunpack.c.h.b16 %v4067
    %v4461 = vunpack.c.l.b16 %v4068
    %v4462 = vunpack.c.h.b16 %v4068
    %v4463 = vunpack.c.l.b16 %v4069
    %v4464 = vunpack.c.h.b16 %v4069
    %v4465 = vunpack.c.l.b16 %v4070
    %v4466 = vunpack.c.h.b16 %v4070
    %v4467 = vunpack.c.l.b16 %v4071
    %v4468 = vunpack.c.h.b16 %v4071
    %v4469 = vunpack.c.l.b16 %v4072
    %v4470 = vunpack.c.h.b16 %v4072
    %v4471 = vunpack.c.l.b16 %v4073
    %v4472 = vunpack.c.h.b16 %v4073
    %v4473 = vunpack.c.l.b16 %v4074
    %v4474 = vunpack.c.h.b16 %v4074
    %v4475 = vunpack.c.l.b16 %v4075
    %v4476 = vunpack.c.h.b16 %v4075
    %v4477 = vunpack.c.l.b16 %v4076
    %v4478 = vunpack.c.h.b16 %v4076
    %v4479 = vunpack.c.l.b16 %v4077
    %v4480 = vunpack.c.h.b16 %v4077
    %v4481 = vunpack.c.l.b16 %v4078
    %v4482 = vunpack.c.h.b16 %v4078
    %v4483 = vunpack.c.l.b16 %v4079
    %v4484 = vunpack.c.h.b16 %v4079
    %v4485 = vunpack.c.l.b16 %v4080
    %v4486 = vunpack.c.h.b16 %v4080
    %v4487 = vpack.c.b16 %v4235, %v4231
    %v4488 = vpack.c.b16 %v4236, %v4232
    %v4489 = vpack.c.b16 %v4237, %v4233
    %v4490 = vpack.c.b16 %v4238, %v4234
    %v4491 = vpack.c.b16 %v4243, %v4239
    %v4492 = vpack.c.b16 %v4244, %v4240
    %v4493 = vpack.c.b16 %v4245, %v4241
    %v4494 = vpack.c.b16 %v4246, %v4242
    %v4495 = vpack.c.b16 %v4251, %v4247
    %v4496 = vpack.c.b16 %v4252, %v4248
    %v4497 = vpack.c.b16 %v4253, %v4249
    %v4498 = vpack.c.b16 %v4254, %v4250
    %v4499 = vpack.c.b16 %v4259, %v4255
    %v4500 = vpack.c.b16 %v4260, %v4256
    %v4501 = vpack.c.b16 %v4261, %v4257
    %v4502 = vpack.c.b16 %v4262, %v4258
    %v4503 = vpack.c.b16 %v4267, %v4263
    %v4504 = vpack.c.b16 %v4268, %v4264
    %v4505 = vpack.c.b16 %v4269, %v4265
    %v4506 = vpack.c.b16 %v4270, %v4266
    %v4507 = vpack.c.b16 %v4275, %v4271
    %v4508 = vpack.c.b16 %v4276, %v4272
    %v4509 = vpack.c.b16 %v4277, %v4273
    %v4510 = vpack.c.b16 %v4278, %v4274
    %v4511 = vpack.c.b16 %v4283, %v4279
    %v4512 = vpack.c.b16 %v4284, %v4280
    %v4513 = vpack.c.b16 %v4285, %v4281
    %v4514 = vpack.c.b16 %v4286, %v4282
    %v4515 = vpack.c.b16 %v4291, %v4287
    %v4516 = vpack.c.b16 %v4292, %v4288
    %v4517 = vpack.c.b16 %v4293, %v4289
    %v4518 = vpack.c.b16 %v4294, %v4290
    %v4519 = vpack.c.b16 %v4299, %v4295
    %v4520 = vpack.c.b16 %v4300, %v4296
    %v4521 = vpack.c.b16 %v4301, %v4297
    %v4522 = vpack.c.b16 %v4302, %v4298
    %v4523 = vpack.c.b16 %v4307, %v4303
    %v4524 = vpack.c.b16 %v4308, %v4304
    %v4525 = vpack.c.b16 %v4309, %v4305
    %v4526 = vpack.c.b16 %v4310, %v4306
    %v4527 = vpack.c.b16 %v4315, %v4311
    %v4528 = vpack.c.b16 %v4316, %v4312
    %v4529 = vpack.c.b16 %v4317, %v4313
    %v4530 = vpack.c.b16 %v4318, %v4314
    %v4531 = vpack.c.b16 %v4323, %v4319
    %v4532 = vpack.c.b16 %v4324, %v4320
    %v4533 = vpack.c.b16 %v4325, %v4321
    %v4534 = vpack.c.b16 %v4326, %v4322
    %v4535 = vpack.c.b16 %v4331, %v4327
    %v4536 = vpack.c.b16 %v4332, %v4328
    %v4537 = vpack.c.b16 %v4333, %v4329
    %v4538 = vpack.c.b16 %v4334, %v4330
    %v4539 = vpack.c.b16 %v4339, %v4335
    %v4540 = vpack.c.b16 %v4340, %v4336
    %v4541 = vpack.c.b16 %v4341, %v4337
    %v4542 = vpack.c.b16 %v4342, %v4338
    %v4543 = vpack.c.b16 %v4347, %v4343
    %v4544 = vpack.c.b16 %v4348, %v4344
    %v4545 = vpack.c.b16 %v4349, %v4345
    %v4546 = vpack.c.b16 %v4350, %v4346
    %v4547 = vpack.c.b16 %v4355, %v4351
    %v4548 = vpack.c.b16 %v4356, %v4352
    %v4549 = vpack.c.b16 %v4357, %v4353
    %v4550 = vpack.c.b16 %v4358, %v4354
    %v4551 = vpack.c.b16 %v4363, %v4359
    %v4552 = vpack.c.b16 %v4364, %v4360
    %v4553 = vpack.c.b16 %v4365, %v4361
    %v4554 = vpack.c.b16 %v4366, %v4362
    %v4555 = vpack.c.b16 %v4371, %v4367
    %v4556 = vpack.c.b16 %v4372, %v4368
    %v4557 = vpack.c.b16 %v4373, %v4369
    %v4558 = vpack.c.b16 %v4374, %v4370
    %v4559 = vpack.c.b16 %v4379, %v4375
    %v4560 = vpack.c.b16 %v4380, %v4376
    %v4561 = vpack.c.b16 %v4381, %v4377
    %v4562 = vpack.c.b16 %v4382, %v4378
    %v4563 = vpack.c.b16 %v4387, %v4383
    %v4564 = vpack.c.b16 %v4388, %v4384
    %v4565 = vpack.c.b16 %v4389, %v4385
    %v4566 = vpack.c.b16 %v4390, %v4386
    %v4567 = vpack.c.b16 %v4395, %v4391
    %v4568 = vpack.c.b16 %v4396, %v4392
    %v4569 = vpack.c.b16 %v4397, %v4393
    %v4570 = vpack.c.b16 %v4398, %v4394
    %v4571 = vpack.c.b16 %v4403, %v4399
    %v4572 = vpack.c.b16 %v4404, %v4400
    %v4573 = vpack.c.b16 %v4405, %v4401
    %v4574 = vpack.c.b16 %v4406, %v4402
    %v4575 = vpack.c.b16 %v4411, %v4407
    %v4576 = vpack.c.b16 %v4412, %v4408
    %v4577 = vpack.c.b16 %v4413, %v4409
    %v4578 = vpack.c.b16 %v4414, %v4410
    %v4579 = vpack.c.b16 %v4419, %v4415
    %v4580 = vpack.c.b16 %v4420, %v4416
    %v4581 = vpack.c.b16 %v4421, %v4417
    %v4582 = vpack.c.b16 %v4422, %v4418
    %v4583 = vpack.c.b16 %v4427, %v4423
    %v4584 = vpack.c.b16 %v4428, %v4424
    %v4585 = vpack.c.b16 %v4429, %v4425
    %v4586 = vpack.c.b16 %v4430, %v4426
    %v4587 = vpack.c.b16 %v4435, %v4431
    %v4588 = vpack.c.b16 %v4436, %v4432
    %v4589 = vpack.c.b16 %v4437, %v4433
    %v4590 = vpack.c.b16 %v4438, %v4434
    %v4591 = vpack.c.b16 %v4443, %v4439
    %v4592 = vpack.c.b16 %v4444, %v4440
    %v4593 = vpack.c.b16 %v4445, %v4441
    %v4594 = vpack.c.b16 %v4446, %v4442
    %v4595 = vpack.c.b16 %v4451, %v4447
    %v4596 = vpack.c.b16 %v4452, %v4448
    %v4597 = vpack.c.b16 %v4453, %v4449
    %v4598 = vpack.c.b16 %v4454, %v4450
    %v4599 = vpack.c.b16 %v4459, %v4455
    %v4600 = vpack.c.b16 %v4460, %v4456
    %v4601 = vpack.c.b16 %v4461, %v4457
    %v4602 = vpack.c.b16 %v4462, %v4458
    %v4603 = vpack.c.b16 %v4467, %v4463
    %v4604 = vpack.c.b16 %v4468, %v4464
    %v4605 = vpack.c.b16 %v4469, %v4465
    %v4606 = vpack.c.b16 %v4470, %v4466
    %v4607 = vpack.c.b16 %v4475, %v4471
    %v4608 = vpack.c.b16 %v4476, %v4472
    %v4609 = vpack.c.b16 %v4477, %v4473
    %v4610 = vpack.c.b16 %v4478, %v4474
    %v4611 = vpack.c.b16 %v4483, %v4479
    %v4612 = vpack.c.b16 %v4484, %v4480
    %v4613 = vpack.c.b16 %v4485, %v4481
    %v4614 = vpack.c.b16 %v4486, %v4482
    %4743 = vmatprep.subr.bf16.mxu0 %v4488
    %4744 = vmatpush1.bf16.msra.mxu0 %v4487
    %4745 = vmatprep.subr.bf16.mxu0 %v4492
    %4746 = vmatpush1.bf16.msra.mxu0 %v4491
    %4747 = vmatprep.subr.bf16.mxu0 %v4496
    %4748 = vmatpush1.bf16.msra.mxu0 %v4495
    %4749 = vmatprep.subr.bf16.mxu0 %v4500
    %4750 = vmatpush1.bf16.msra.mxu0 %v4499
    %4751 = vmatprep.subr.bf16.mxu0 %v4504
    %4752 = vmatpush1.bf16.msra.mxu0 %v4503
    %4753 = vmatprep.subr.bf16.mxu0 %v4508
    %4754 = vmatpush1.bf16.msra.mxu0 %v4507
    %4755 = vmatprep.subr.bf16.mxu0 %v4512
    %4756 = vmatpush1.bf16.msra.mxu0 %v4511
    %4757 = vmatprep.subr.bf16.mxu0 %v4516
    %4758 = vmatpush1.bf16.msra.mxu0 %v4515
    %4759 = vmatprep.subr.bf16.mxu0 %v4520
    %4760 = vmatpush1.bf16.msra.mxu0 %v4519
    %4761 = vmatprep.subr.bf16.mxu0 %v4524
    %4762 = vmatpush1.bf16.msra.mxu0 %v4523
    %4763 = vmatprep.subr.bf16.mxu0 %v4528
    %4764 = vmatpush1.bf16.msra.mxu0 %v4527
    %4765 = vmatprep.subr.bf16.mxu0 %v4532
    %4766 = vmatpush1.bf16.msra.mxu0 %v4531
    %4767 = vmatprep.subr.bf16.mxu0 %v4536
    %4768 = vmatpush1.bf16.msra.mxu0 %v4535
    %4769 = vmatprep.subr.bf16.mxu0 %v4540
    %4770 = vmatpush1.bf16.msra.mxu0 %v4539
    %4771 = vmatprep.subr.bf16.mxu0 %v4544
    %4772 = vmatpush1.bf16.msra.mxu0 %v4543
    %4773 = vmatprep.subr.bf16.mxu0 %v4548
    %4774 = vmatpush1.bf16.msra.mxu0 %v4547
    %4775 = vmatprep.mubr.bf16.mxu0 %v3950
    %4776 = vmatmul.mubr.bf16.gmra.mrb[0].mxu0 %v3949
    %v4777 = vpop.f32.mrb[0].mxu0
    %v4778 = vadd.f32 %v4086, %v4777
    %v4779 = vpop.f32.mrb[0].mxu0
    %v4780 = vadd.f32 %v4090, %v4779
    %v4781 = vpop.f32.mrb[0].mxu0
    %v4782 = vpop.f32.mrb[0].mxu0
    %4783 = vdwg.mxu0
    %4784 = vmatprep.subr.bf16.mxu0 %v4552
    %4785 = vmatpush1.bf16.msra.mxu0 %v4551
    %4786 = vmatprep.subr.bf16.mxu0 %v4556
    %4787 = vmatpush1.bf16.msra.mxu0 %v4555
    %4788 = vmatprep.subr.bf16.mxu0 %v4560
    %4789 = vmatpush1.bf16.msra.mxu0 %v4559
    %4790 = vmatprep.subr.bf16.mxu0 %v4564
    %4791 = vmatpush1.bf16.msra.mxu0 %v4563
    %4792 = vmatprep.subr.bf16.mxu0 %v4568
    %4793 = vmatpush1.bf16.msra.mxu0 %v4567
    %4794 = vmatprep.subr.bf16.mxu0 %v4572
    %4795 = vmatpush1.bf16.msra.mxu0 %v4571
    %4796 = vmatprep.subr.bf16.mxu0 %v4576
    %4797 = vmatpush1.bf16.msra.mxu0 %v4575
    %4798 = vmatprep.subr.bf16.mxu0 %v4580
    %4799 = vmatpush1.bf16.msra.mxu0 %v4579
    %4800 = vmatprep.subr.bf16.mxu0 %v4584
    %4801 = vmatpush1.bf16.msra.mxu0 %v4583
    %4802 = vmatprep.subr.bf16.mxu0 %v4588
    %4803 = vmatpush1.bf16.msra.mxu0 %v4587
    %4804 = vmatprep.subr.bf16.mxu0 %v4592
    %4805 = vmatpush1.bf16.msra.mxu0 %v4591
    %4806 = vmatprep.subr.bf16.mxu0 %v4596
    %4807 = vmatpush1.bf16.msra.mxu0 %v4595
    %4808 = vmatprep.subr.bf16.mxu0 %v4600
    %4809 = vmatpush1.bf16.msra.mxu0 %v4599
    %4810 = vmatprep.subr.bf16.mxu0 %v4604
    %4811 = vmatpush1.bf16.msra.mxu0 %v4603
    %4812 = vmatprep.subr.bf16.mxu0 %v4608
    %4813 = vmatpush1.bf16.msra.mxu0 %v4607
    %4814 = vmatprep.subr.bf16.mxu0 %v4612
    %4815 = vmatpush1.bf16.msra.mxu0 %v4611
    %4816 = vmatprep.mubr.bf16.mxu0 %v3952
    %4817 = vmatmul.mubr.bf16.gmra.mrb[0].mxu0 %v3951
    %v4818 = vpop.f32.mrb[0].mxu0
    %v4819 = vadd.f32 %v4778, %v4818
    %v4820 = vpop.f32.mrb[0].mxu0
    %v4821 = vadd.f32 %v4780, %v4820
    %v4822 = vpop.f32.mrb[0].mxu0
    %v4823 = vpop.f32.mrb[0].mxu0
    %4824 = vdwg.mxu0
    %4825 = vmatprep.subr.bf16.mxu0 %v4490
    %4826 = vmatpush1.bf16.msra.mxu0 %v4489
    %4827 = vmatprep.subr.bf16.mxu0 %v4494
    %4828 = vmatpush1.bf16.msra.mxu0 %v4493
    %4829 = vmatprep.subr.bf16.mxu0 %v4498
    %4830 = vmatpush1.bf16.msra.mxu0 %v4497
    %4831 = vmatprep.subr.bf16.mxu0 %v4502
    %4832 = vmatpush1.bf16.msra.mxu0 %v4501
    %4833 = vmatprep.subr.bf16.mxu0 %v4506
    %4834 = vmatpush1.bf16.msra.mxu0 %v4505
    %4835 = vmatprep.subr.bf16.mxu0 %v4510
    %4836 = vmatpush1.bf16.msra.mxu0 %v4509
    %4837 = vmatprep.subr.bf16.mxu0 %v4514
    %4838 = vmatpush1.bf16.msra.mxu0 %v4513
    %4839 = vmatprep.subr.bf16.mxu0 %v4518
    %4840 = vmatpush1.bf16.msra.mxu0 %v4517
    %4841 = vmatprep.subr.bf16.mxu0 %v4522
    %4842 = vmatpush1.bf16.msra.mxu0 %v4521
    %4843 = vmatprep.subr.bf16.mxu0 %v4526
    %4844 = vmatpush1.bf16.msra.mxu0 %v4525
    %4845 = vmatprep.subr.bf16.mxu0 %v4530
    %4846 = vmatpush1.bf16.msra.mxu0 %v4529
    %4847 = vmatprep.subr.bf16.mxu0 %v4534
    %4848 = vmatpush1.bf16.msra.mxu0 %v4533
    %4849 = vmatprep.subr.bf16.mxu0 %v4538
    %4850 = vmatpush1.bf16.msra.mxu0 %v4537
    %4851 = vmatprep.subr.bf16.mxu0 %v4542
    %4852 = vmatpush1.bf16.msra.mxu0 %v4541
    %4853 = vmatprep.subr.bf16.mxu0 %v4546
    %4854 = vmatpush1.bf16.msra.mxu0 %v4545
    %4855 = vmatprep.subr.bf16.mxu0 %v4550
    %4856 = vmatpush1.bf16.msra.mxu0 %v4549
    %4857 = vmatprep.mubr.bf16.mxu0 %v3950
    %4858 = vmatmul.mubr.bf16.gmra.mrb[0].mxu0 %v3949
    %v4859 = vpop.f32.mrb[0].mxu0
    %v4860 = vadd.f32 %v4094, %v4859
    %v4861 = vpop.f32.mrb[0].mxu0
    %v4862 = vadd.f32 %v4098, %v4861
    %v4863 = vpop.f32.mrb[0].mxu0
    %v4864 = vpop.f32.mrb[0].mxu0
    %4865 = vdwg.mxu0
    %4866 = vmatprep.subr.bf16.mxu0 %v4554
    %4867 = vmatpush1.bf16.msra.mxu0 %v4553
    %4868 = vmatprep.subr.bf16.mxu0 %v4558
    %4869 = vmatpush1.bf16.msra.mxu0 %v4557
    %4870 = vmatprep.subr.bf16.mxu0 %v4562
    %4871 = vmatpush1.bf16.msra.mxu0 %v4561
    %4872 = vmatprep.subr.bf16.mxu0 %v4566
    %4873 = vmatpush1.bf16.msra.mxu0 %v4565
    %4874 = vmatprep.subr.bf16.mxu0 %v4570
    %4875 = vmatpush1.bf16.msra.mxu0 %v4569
    %4876 = vmatprep.subr.bf16.mxu0 %v4574
    %4877 = vmatpush1.bf16.msra.mxu0 %v4573
    %4878 = vmatprep.subr.bf16.mxu0 %v4578
    %4879 = vmatpush1.bf16.msra.mxu0 %v4577
    %4880 = vmatprep.subr.bf16.mxu0 %v4582
    %4881 = vmatpush1.bf16.msra.mxu0 %v4581
    %4882 = vmatprep.subr.bf16.mxu0 %v4586
    %4883 = vmatpush1.bf16.msra.mxu0 %v4585
    %4884 = vmatprep.subr.bf16.mxu0 %v4590
    %4885 = vmatpush1.bf16.msra.mxu0 %v4589
    %4886 = vmatprep.subr.bf16.mxu0 %v4594
    %4887 = vmatpush1.bf16.msra.mxu0 %v4593
    %4888 = vmatprep.subr.bf16.mxu0 %v4598
    %4889 = vmatpush1.bf16.msra.mxu0 %v4597
    %4890 = vmatprep.subr.bf16.mxu0 %v4602
    %4891 = vmatpush1.bf16.msra.mxu0 %v4601
    %4892 = vmatprep.subr.bf16.mxu0 %v4606
    %4893 = vmatpush1.bf16.msra.mxu0 %v4605
    %4894 = vmatprep.subr.bf16.mxu0 %v4610
    %4895 = vmatpush1.bf16.msra.mxu0 %v4609
    %4896 = vmatprep.subr.bf16.mxu0 %v4614
    %4897 = vmatpush1.bf16.msra.mxu0 %v4613
    %4898 = vmatprep.mubr.bf16.mxu0 %v3952
    %4899 = vmatmul.mubr.bf16.gmra.mrb[0].mxu0 %v3951
    %v4900 = vpop.f32.mrb[0].mxu0
    %v4901 = vadd.f32 %v4860, %v4900
    %v4902 = vpop.f32.mrb[0].mxu0
    %v4903 = vadd.f32 %v4862, %v4902
    %v4904 = vpop.f32.mrb[0].mxu0
    %v4905 = vpop.f32.mrb[0].mxu0
    %4906 = vdwg.mxu0
    %v4907 = vmax.f32 %v4819, 0.0
    %v4908 = vmax.f32 %v4821, 0.0
    %v4909 = vmax.f32 %v4901, 0.0
    %v4910 = vmax.f32 %v4903, 0.0
    %v4911 = vpack.c.bf16 %v4907, %v4907
    %v4912 = vpack.c.bf16 %v4908, %v4908
    %v4913 = vpack.c.bf16 %v4909, %v4909
    %v4914 = vpack.c.bf16 %v4910, %v4910
    %v4915 = vld [vmem:[#allocation9] sm:$0xf]
    %v4916 = vld [vmem:[#allocation9 + $0x4] sm:$0xf]
    %v4917 = vld [vmem:[#allocation9 + $0x8] sm:$0xf]
    %v4918 = vld [vmem:[#allocation9 + $0xc] sm:$0xf]
    %v4919 = vld [vmem:[#allocation9 + $0x10] sm:$0xf]
    %v4920 = vld [vmem:[#allocation9 + $0x14] sm:$0xf]
    %v4921 = vld [vmem:[#allocation9 + $0x18] sm:$0xf]
    %v4922 = vld [vmem:[#allocation9 + $0x1c] sm:$0xf]
    %v4923 = vld [vmem:[#allocation9 + $0x20] sm:$0xf]
    %v4924 = vld [vmem:[#allocation9 + $0x24] sm:$0xf]
    %v4925 = vld [vmem:[#allocation9 + $0x28] sm:$0xf]
    %v4926 = vld [vmem:[#allocation9 + $0x2c] sm:$0xf]
    %v4927 = vld [vmem:[#allocation9 + $0x30] sm:$0xf]
    %v4928 = vld [vmem:[#allocation9 + $0x34] sm:$0xf]
    %v4929 = vld [vmem:[#allocation9 + $0x38] sm:$0xf]
    %v4930 = vld [vmem:[#allocation9 + $0x3c] sm:$0xf]
    %v4931 = vld [vmem:[#allocation9 + $0x40] sm:$0xf]
    %v4932 = vld [vmem:[#allocation9 + $0x44] sm:$0xf]
    %v4933 = vld [vmem:[#allocation9 + $0x48] sm:$0xf]
    %v4934 = vld [vmem:[#allocation9 + $0x4c] sm:$0xf]
    %v4935 = vld [vmem:[#allocation9 + $0x50] sm:$0xf]
    %v4936 = vld [vmem:[#allocation9 + $0x54] sm:$0xf]
    %v4937 = vld [vmem:[#allocation9 + $0x58] sm:$0xf]
    %v4938 = vld [vmem:[#allocation9 + $0x5c] sm:$0xf]
    %v4939 = vld [vmem:[#allocation9 + $0x60] sm:$0xf]
    %v4940 = vld [vmem:[#allocation9 + $0x64] sm:$0xf]
    %v4941 = vld [vmem:[#allocation9 + $0x68] sm:$0xf]
    %v4942 = vld [vmem:[#allocation9 + $0x6c] sm:$0xf]
    %v4943 = vld [vmem:[#allocation9 + $0x70] sm:$0xf]
    %v4944 = vld [vmem:[#allocation9 + $0x74] sm:$0xf]
    %v4945 = vld [vmem:[#allocation9 + $0x78] sm:$0xf]
    %v4946 = vld [vmem:[#allocation9 + $0x7c] sm:$0xf]
    %v4947 = vld [vmem:[#allocation9 + $0x80] sm:$0xf]
    %v4948 = vld [vmem:[#allocation9 + $0x84] sm:$0xf]
    %v4949 = vld [vmem:[#allocation9 + $0x88] sm:$0xf]
    %v4950 = vld [vmem:[#allocation9 + $0x8c] sm:$0xf]
    %v4951 = vld [vmem:[#allocation9 + $0x90] sm:$0xf]
    %v4952 = vld [vmem:[#allocation9 + $0x94] sm:$0xf]
    %v4953 = vld [vmem:[#allocation9 + $0x98] sm:$0xf]
    %v4954 = vld [vmem:[#allocation9 + $0x9c] sm:$0xf]
    %v4955 = vld [vmem:[#allocation9 + $0xa0] sm:$0xf]
    %v4956 = vld [vmem:[#allocation9 + $0xa4] sm:$0xf]
    %v4957 = vld [vmem:[#allocation9 + $0xa8] sm:$0xf]
    %v4958 = vld [vmem:[#allocation9 + $0xac] sm:$0xf]
    %v4959 = vld [vmem:[#allocation9 + $0xb0] sm:$0xf]
    %v4960 = vld [vmem:[#allocation9 + $0xb4] sm:$0xf]
    %v4961 = vld [vmem:[#allocation9 + $0xb8] sm:$0xf]
    %v4962 = vld [vmem:[#allocation9 + $0xbc] sm:$0xf]
    %v4963 = vld [vmem:[#allocation9 + $0xc0] sm:$0xf]
    %v4964 = vld [vmem:[#allocation9 + $0xc4] sm:$0xf]
    %v4965 = vld [vmem:[#allocation9 + $0xc8] sm:$0xf]
    %v4966 = vld [vmem:[#allocation9 + $0xcc] sm:$0xf]
    %v4967 = vld [vmem:[#allocation9 + $0xd0] sm:$0xf]
    %v4968 = vld [vmem:[#allocation9 + $0xd4] sm:$0xf]
    %v4969 = vld [vmem:[#allocation9 + $0xd8] sm:$0xf]
    %v4970 = vld [vmem:[#allocation9 + $0xdc] sm:$0xf]
    %v4971 = vld [vmem:[#allocation9 + $0xe0] sm:$0xf]
    %v4972 = vld [vmem:[#allocation9 + $0xe4] sm:$0xf]
    %v4973 = vld [vmem:[#allocation9 + $0xe8] sm:$0xf]
    %v4974 = vld [vmem:[#allocation9 + $0xec] sm:$0xf]
    %v4975 = vld [vmem:[#allocation9 + $0xf0] sm:$0xf]
    %v4976 = vld [vmem:[#allocation9 + $0xf4] sm:$0xf]
    %v4977 = vld [vmem:[#allocation9 + $0xf8] sm:$0xf]
    %v4978 = vld [vmem:[#allocation9 + $0xfc] sm:$0xf]
    %v4979 = vld [vmem:[#allocation10] sm:$0x1]
    %v4981 = vlaneseq
    %v4982 = vshrl.u32 %v4981, 7
    %v4983 = vsub.s32 0, %v4982
    %v4984 = vrot.slane %v4979, %v4983
    %v5050 = vunpack.c.l.b16 %v4915
    %v5051 = vunpack.c.l.b16 %v4916
    %v5052 = vunpack.c.l.b16 %v4917
    %v5053 = vunpack.c.l.b16 %v4918
    %v5054 = vunpack.c.l.b16 %v4919
    %v5055 = vunpack.c.l.b16 %v4920
    %v5056 = vunpack.c.l.b16 %v4921
    %v5057 = vunpack.c.l.b16 %v4922
    %v5058 = vunpack.c.l.b16 %v4923
    %v5059 = vunpack.c.l.b16 %v4924
    %v5060 = vunpack.c.l.b16 %v4925
    %v5061 = vunpack.c.l.b16 %v4926
    %v5062 = vunpack.c.l.b16 %v4927
    %v5063 = vunpack.c.l.b16 %v4928
    %v5064 = vunpack.c.l.b16 %v4929
    %v5065 = vunpack.c.l.b16 %v4930
    %v5066 = vunpack.c.l.b16 %v4931
    %v5067 = vunpack.c.l.b16 %v4932
    %v5068 = vunpack.c.l.b16 %v4933
    %v5069 = vunpack.c.l.b16 %v4934
    %v5070 = vunpack.c.l.b16 %v4935
    %v5071 = vunpack.c.l.b16 %v4936
    %v5072 = vunpack.c.l.b16 %v4937
    %v5073 = vunpack.c.l.b16 %v4938
    %v5074 = vunpack.c.l.b16 %v4939
    %v5075 = vunpack.c.l.b16 %v4940
    %v5076 = vunpack.c.l.b16 %v4941
    %v5077 = vunpack.c.l.b16 %v4942
    %v5078 = vunpack.c.l.b16 %v4943
    %v5079 = vunpack.c.l.b16 %v4944
    %v5080 = vunpack.c.l.b16 %v4945
    %v5081 = vunpack.c.l.b16 %v4946
    %v5082 = vunpack.c.l.b16 %v4947
    %v5083 = vunpack.c.l.b16 %v4948
    %v5084 = vunpack.c.l.b16 %v4949
    %v5085 = vunpack.c.l.b16 %v4950
    %v5086 = vunpack.c.l.b16 %v4951
    %v5087 = vunpack.c.l.b16 %v4952
    %v5088 = vunpack.c.l.b16 %v4953
    %v5089 = vunpack.c.l.b16 %v4954
    %v5090 = vunpack.c.l.b16 %v4955
    %v5091 = vunpack.c.l.b16 %v4956
    %v5092 = vunpack.c.l.b16 %v4957
    %v5093 = vunpack.c.l.b16 %v4958
    %v5094 = vunpack.c.l.b16 %v4959
    %v5095 = vunpack.c.l.b16 %v4960
    %v5096 = vunpack.c.l.b16 %v4961
    %v5097 = vunpack.c.l.b16 %v4962
    %v5098 = vunpack.c.l.b16 %v4963
    %v5099 = vunpack.c.l.b16 %v4964
    %v5100 = vunpack.c.l.b16 %v4965
    %v5101 = vunpack.c.l.b16 %v4966
    %v5102 = vunpack.c.l.b16 %v4967
    %v5103 = vunpack.c.l.b16 %v4968
    %v5104 = vunpack.c.l.b16 %v4969
    %v5105 = vunpack.c.l.b16 %v4970
    %v5106 = vunpack.c.l.b16 %v4971
    %v5107 = vunpack.c.l.b16 %v4972
    %v5108 = vunpack.c.l.b16 %v4973
    %v5109 = vunpack.c.l.b16 %v4974
    %v5110 = vunpack.c.l.b16 %v4975
    %v5111 = vunpack.c.l.b16 %v4976
    %v5112 = vunpack.c.l.b16 %v4977
    %v5113 = vunpack.c.l.b16 %v4978
    %v5114 = vpack.c.b16 %v5051, %v5050
    %v5115 = vpack.c.b16 %v5053, %v5052
    %v5116 = vpack.c.b16 %v5055, %v5054
    %v5117 = vpack.c.b16 %v5057, %v5056
    %v5118 = vpack.c.b16 %v5059, %v5058
    %v5119 = vpack.c.b16 %v5061, %v5060
    %v5120 = vpack.c.b16 %v5063, %v5062
    %v5121 = vpack.c.b16 %v5065, %v5064
    %v5122 = vpack.c.b16 %v5067, %v5066
    %v5123 = vpack.c.b16 %v5069, %v5068
    %v5124 = vpack.c.b16 %v5071, %v5070
    %v5125 = vpack.c.b16 %v5073, %v5072
    %v5126 = vpack.c.b16 %v5075, %v5074
    %v5127 = vpack.c.b16 %v5077, %v5076
    %v5128 = vpack.c.b16 %v5079, %v5078
    %v5129 = vpack.c.b16 %v5081, %v5080
    %v5130 = vpack.c.b16 %v5083, %v5082
    %v5131 = vpack.c.b16 %v5085, %v5084
    %v5132 = vpack.c.b16 %v5087, %v5086
    %v5133 = vpack.c.b16 %v5089, %v5088
    %v5134 = vpack.c.b16 %v5091, %v5090
    %v5135 = vpack.c.b16 %v5093, %v5092
    %v5136 = vpack.c.b16 %v5095, %v5094
    %v5137 = vpack.c.b16 %v5097, %v5096
    %v5138 = vpack.c.b16 %v5099, %v5098
    %v5139 = vpack.c.b16 %v5101, %v5100
    %v5140 = vpack.c.b16 %v5103, %v5102
    %v5141 = vpack.c.b16 %v5105, %v5104
    %v5142 = vpack.c.b16 %v5107, %v5106
    %v5143 = vpack.c.b16 %v5109, %v5108
    %v5144 = vpack.c.b16 %v5111, %v5110
    %v5145 = vpack.c.b16 %v5113, %v5112
    %5178 = vmatprep.subr.bf16.mxu0 0
    %5179 = vmatpush1.bf16.msra.mxu0 %v5114
    %5180 = vmatprep.subr.bf16.mxu0 0
    %5181 = vmatpush1.bf16.msra.mxu0 %v5115
    %5182 = vmatprep.subr.bf16.mxu0 0
    %5183 = vmatpush1.bf16.msra.mxu0 %v5116
    %5184 = vmatprep.subr.bf16.mxu0 0
    %5185 = vmatpush1.bf16.msra.mxu0 %v5117
    %5186 = vmatprep.subr.bf16.mxu0 0
    %5187 = vmatpush1.bf16.msra.mxu0 %v5118
    %5188 = vmatprep.subr.bf16.mxu0 0
    %5189 = vmatpush1.bf16.msra.mxu0 %v5119
    %5190 = vmatprep.subr.bf16.mxu0 0
    %5191 = vmatpush1.bf16.msra.mxu0 %v5120
    %5192 = vmatprep.subr.bf16.mxu0 0
    %5193 = vmatpush1.bf16.msra.mxu0 %v5121
    %5194 = vmatprep.subr.bf16.mxu0 0
    %5195 = vmatpush1.bf16.msra.mxu0 %v5122
    %5196 = vmatprep.subr.bf16.mxu0 0
    %5197 = vmatpush1.bf16.msra.mxu0 %v5123
    %5198 = vmatprep.subr.bf16.mxu0 0
    %5199 = vmatpush1.bf16.msra.mxu0 %v5124
    %5200 = vmatprep.subr.bf16.mxu0 0
    %5201 = vmatpush1.bf16.msra.mxu0 %v5125
    %5202 = vmatprep.subr.bf16.mxu0 0
    %5203 = vmatpush1.bf16.msra.mxu0 %v5126
    %5204 = vmatprep.subr.bf16.mxu0 0
    %5205 = vmatpush1.bf16.msra.mxu0 %v5127
    %5206 = vmatprep.subr.bf16.mxu0 0
    %5207 = vmatpush1.bf16.msra.mxu0 %v5128
    %5208 = vmatprep.subr.bf16.mxu0 0
    %5209 = vmatpush1.bf16.msra.mxu0 %v5129
    %5210 = vmatprep.mubr.bf16.mxu0 %v4912
    %5211 = vmatmul.mubr.bf16.gmra.mrb[0].mxu0 %v4911
    %v5212 = vpop.f32.mrb[0].mxu0
    %v5213 = vadd.f32 %v4984, %v5212
    %v5214 = vpop.f32.mrb[0].mxu0
    %v5215 = vpop.f32.mrb[0].mxu0
    %v5216 = vpop.f32.mrb[0].mxu0
    %5217 = vdwg.mxu0
    %5218 = vmatprep.subr.bf16.mxu0 0
    %5219 = vmatpush1.bf16.msra.mxu0 %v5130
    %5220 = vmatprep.subr.bf16.mxu0 0
    %5221 = vmatpush1.bf16.msra.mxu0 %v5131
    %5222 = vmatprep.subr.bf16.mxu0 0
    %5223 = vmatpush1.bf16.msra.mxu0 %v5132
    %5224 = vmatprep.subr.bf16.mxu0 0
    %5225 = vmatpush1.bf16.msra.mxu0 %v5133
    %5226 = vmatprep.subr.bf16.mxu0 0
    %5227 = vmatpush1.bf16.msra.mxu0 %v5134
    %5228 = vmatprep.subr.bf16.mxu0 0
    %5229 = vmatpush1.bf16.msra.mxu0 %v5135
    %5230 = vmatprep.subr.bf16.mxu0 0
    %5231 = vmatpush1.bf16.msra.mxu0 %v5136
    %5232 = vmatprep.subr.bf16.mxu0 0
    %5233 = vmatpush1.bf16.msra.mxu0 %v5137
    %5234 = vmatprep.subr.bf16.mxu0 0
    %5235 = vmatpush1.bf16.msra.mxu0 %v5138
    %5236 = vmatprep.subr.bf16.mxu0 0
    %5237 = vmatpush1.bf16.msra.mxu0 %v5139
    %5238 = vmatprep.subr.bf16.mxu0 0
    %5239 = vmatpush1.bf16.msra.mxu0 %v5140
    %5240 = vmatprep.subr.bf16.mxu0 0
    %5241 = vmatpush1.bf16.msra.mxu0 %v5141
    %5242 = vmatprep.subr.bf16.mxu0 0
    %5243 = vmatpush1.bf16.msra.mxu0 %v5142
    %5244 = vmatprep.subr.bf16.mxu0 0
    %5245 = vmatpush1.bf16.msra.mxu0 %v5143
    %5246 = vmatprep.subr.bf16.mxu0 0
    %5247 = vmatpush1.bf16.msra.mxu0 %v5144
    %5248 = vmatprep.subr.bf16.mxu0 0
    %5249 = vmatpush1.bf16.msra.mxu0 %v5145
    %5250 = vmatprep.mubr.bf16.mxu0 %v4914
    %5251 = vmatmul.mubr.bf16.gmra.mrb[0].mxu0 %v4913
    %v5252 = vpop.f32.mrb[0].mxu0
    %v5253 = vadd.f32 %v5213, %v5252
    %v5254 = vpop.f32.mrb[0].mxu0
    %v5255 = vpop.f32.mrb[0].mxu0
    %v5256 = vpop.f32.mrb[0].mxu0
    %5257 = vdwg.mxu0
    %5258 = vst [vmem:[%s7] sm:$0xf] %v5253
    // Predicated region
    $region54: #{siamese_forward.3} parent=1 // pred_check
      _
    $region55: #{siamese_forward.3} parent=1 // pred_check_branch
      %5260 = sbr.rel (0) target = $region57
    $region56: #{siamese_forward.3} parent=1 // pred_region
      _
    $region57: #{siamese_forward.3} parent=1 // pred_fallthru
      _
    // Predicated region
    $region58: #{siamese_forward.3} parent=1 // pred_check
      _
    $region59: #{siamese_forward.3} parent=1 // pred_check_branch
      %5262 = sbr.rel (0) target = $region61
    $region60: #{siamese_forward.3} parent=1 // pred_region
      _
    $region61: #{siamese_forward.3} parent=1 // pred_fallthru
      _
    %5263 = vsyncpa [#allocation3], 1
    %5264 = vsyncpa [#allocation5], 1
    %5265 = vsyncpa [#allocation8], 1
    %5266 = vsyncpa [#allocation11], 1

</llo_original>
